<compile_context>
chip_gen: v7x
topology: tpu7x:2x2x1
jax: 0.10.0
libtpu: 0.0.40
codegen_flags: <defaults>
</compile_context>

<pallas_src>
import functools
import math

import jax
import jax.numpy as jnp
from jax.experimental import pallas as pl
from jax.experimental.pallas import tpu as pltpu
from jax.scipy.linalg import block_diag

# ---------------- config (mirrors MACEDescriptor config_routine) -------------
NUM_ELEMENTS = 4            # Z  (num_elements)
HIDDEN_CHANNELS = 16        # F  (hidden_irreps = "16x0e")
MAX_ELL = 2
NUM_L = MAX_ELL + 1         # 3  (l = 0,1,2)
L_DIM = (MAX_ELL + 1) ** 2  # 9  (lm components)
RADIAL_DIM = 8              # radial_embedding.out_dim
RADIAL_MLP = [16, 16, 16]   # radial_mlp
CORRELATION = 3
NUM_INTERACTIONS = 2
AVG_NUM_NEIGHBORS = 8.0
P1, P2, P3 = 1, 3, 3        # symmetric-contraction paths per correlation order
NUM_P = P1 + P2 + P3        # 7


# ------------------------------ fused kernel ----------------------------------
def _mace_fused_kernel(
        h0_ref, ohe_ref, ohb_ref, sh_ref, rad_ref, send_ref, recv_ref,
        wup_ref, wsc_ref, wm0_ref, wm1_ref, wm2_ref, wm3_ref, blin_ref,
        wcall_ref, wprod_ref,
        gsc_ref, kf_ref, mexp_ref, texp_ref,
        xsel_ref, tileb_ref, u23_ref, s3_ref,
        out_ref, xr_ref):
    f32 = jnp.float32
    dot = functools.partial(jnp.dot, preferred_element_type=f32)
    F, L = HIDDEN_CHANNELS, L_DIM
    FW = F * NUM_L                                        # 48
    N = h0_ref.shape[0]

    ohe = ohe_ref[...]                                    # [N, Z*F]
    rad = rad_ref[...]                                    # [E, R]
    send = send_ref[...]                                  # [E, N]
    recv = recv_ref[...]                                  # [N, E]
    gsc, kf, mexp = gsc_ref[...], kf_ref[...], mexp_ref[...]
    xsel, tileb = xsel_ref[...], tileb_ref[...]
    u23, s3 = u23_ref[...], s3_ref[...]

    # ---- layer-independent precompute (review #4c): done once per call ------
    sh_e = dot(sh_ref[...], texp_ref[...])                # [E, F*L]
    # both layers' radial MLPs batched through block-diagonal weights
    t = jax.nn.silu(dot(rad, wm0_ref[...]))
    t = jax.nn.silu(dot(t, wm1_ref[...]))
    t = jax.nn.silu(dot(t, wm2_ref[...]))
    tw_all = dot(t, wm3_ref[...])                         # [E, 2*F*NUM_L]
    # element-dependent contraction-path weights, both layers in one matmul
    wall_all = dot(ohb_ref[...], wcall_ref[...])          # [F*N, 2*NUM_P]

    h = h0_ref[...]                                       # [N, F]
    for li in range(NUM_INTERACTIONS):
        # ------------------------- interaction block -------------------------
        # skip_tp (residual sc): FullyConnectedTP(Fx0e, Zx0e -> Fx0e)
        sc = dot(dot(h, wsc_ref[li]) * ohe, gsc)          # [N, F]
        hu = dot(h, wup_ref[li])                          # [N, F] linear_up (1/sqrt(F) folded)
        tw = tw_all[:, li * FW:(li + 1) * FW]             # [E, F*NUM_L] conv-TP weights
        # gather sender node features (one-hot matmul -> MXU reduction)
        hs = dot(send, hu)                                # [E, F]
        # conv_tp: (F x 0e) (x) SH -> F x (0e+1o+2e), per-edge weighted product
        htw = tw * dot(hs, kf)                            # [E, F*NUM_L]
        mji = dot(htw, mexp) * sh_e                       # [E, F*L]
        # scatter-sum over receivers (one-hot matmul -> MXU)
        msg = dot(recv, mji)                              # [N, F*L]
        # per-l channel-mixing o3.Linear (1/sqrt(F), 1/avg_num_neighbors folded)
        x = dot(msg, blin_ref[li])                        # [N, F*L]  col = c*L + lm

        # ---- relayout [N, F*L] -> [(c,n), L]  (rows r = c*N + n) -------------
        # 16 static slice copies through a small VMEM scratch; removes every
        # kron(eye(F), .)-inflated matmul downstream (review #1).
        for c in range(F):
            xr_ref[c * N:(c + 1) * N, :] = x[:, c * L:(c + 1) * L]
        xr = xr_ref[...]                                  # [F*N, L]

        # -------- symmetric contraction (correlation 1..3), dense factors ----
        xe = dot(xr, xsel)                                # [F*N, 1 + 3L + L*L]
        t1 = xe[:, 0:P1]                                  # [F*N, 1]
        rep3x = xe[:, P1:P1 + L * P3]                     # x[l3] at col l3*P3+p
        rep9x = xe[:, P1 + L * P3:]                       # x[l1] at col l1*L+l2
        q = rep9x * dot(xr, tileb)                        # [F*N, L*L]  x[l1]*x[l2]
        qu = dot(q, u23)                                  # [F*N, P2 + L*P3]
        t2 = qu[:, 0:P2]                                  # [F*N, 3]
        z3 = rep3x * qu[:, P2:]                           # [F*N, L*P3]
        t3 = dot(z3, s3)                                  # [F*N, 3]

        # --------------------------- product block ---------------------------
        base = li * NUM_P
        wall = wall_all[:, base:base + NUM_P]             # [F*N, 7]
        symr = (t1 * wall[:, 0:P1]
                + jnp.sum(t2 * wall[:, P1:P1 + P2], axis=1, keepdims=True)
                + jnp.sum(t3 * wall[:, P1 + P2:NUM_P], axis=1, keepdims=True))
        # channel mixing (sym @ w_prod) folded into the r->(n,c) un-relayout as
        # 16 cheap broadcast outer products (VPU), plus the residual sc.
        wprod = wprod_ref[li]                             # [F, F]
        hn = sc
        for c in range(F):
            hn = hn + symr[c * N:(c + 1) * N, :] * wprod[c:c + 1, :]
        h = hn
        out_ref[:, li * F:(li + 1) * F] = h               # lane-dense final slab only


# --------------------------- parameters / structure ---------------------------
def _lmap():
    rows = []
    for l in range(NUM_L):
        row = jnp.zeros((L_DIM,), jnp.float32)
        row = row.at[l * l:(l + 1) * (l + 1)].set(1.0)
        rows.append(row)
    return jnp.stack(rows)                                # [NUM_L, L]


def _init_raw_params(key):
    """Raw (un-packed) placeholder weights; also used by the plain-JAX reference."""
    F, Z, R, L = HIDDEN_CHANNELS, NUM_ELEMENTS, RADIAL_DIM, L_DIM
    H1, H2, H3 = RADIAL_MLP
    inv_f = 1.0 / math.sqrt(F)
    inv_fz = 1.0 / math.sqrt(F * Z)
    ku, klayers = jax.random.split(key)
    k1, k2, k3 = jax.random.split(ku, 3)
    # TODO(synk): placeholder couplings, not e3nn-exact generalized CG tensors.
    u1 = jax.random.normal(k1, (L, P1), jnp.float32)
    u2 = jax.random.normal(k2, (L, L, P2), jnp.float32)
    u3 = jax.random.normal(k3, (L, L, L, P3), jnp.float32)
    layers = []
    for kl in jax.random.split(klayers, NUM_INTERACTIONS):
        ks = jax.random.split(kl, 11)
        layers.append({
            # scalar normalisations (1/sqrt(F), 1/sqrt(F*Z), 1/avg_num_neighbors,
            # 1/sqrt(fan_in)) are folded into the weights at init time.
            'w_up': jax.random.normal(ks[0], (F, F), jnp.float32) * inv_f,
            'w_sc': jax.random.normal(ks[1], (F, Z * F), jnp.float32) * inv_fz,
            'w_m0': jax.random.normal(ks[2], (R, H1), jnp.float32) / math.sqrt(R),
            'w_m1': jax.random.normal(ks[3], (H1, H2), jnp.float32) / math.sqrt(H1),
            'w_m2': jax.random.normal(ks[4], (H2, H3), jnp.float32) / math.sqrt(H2),
            'w_m3': jax.random.normal(ks[5], (H3, F * NUM_L), jnp.float32) / math.sqrt(H3),
            'w_l': jax.random.normal(ks[6], (NUM_L, F, F), jnp.float32)
                   * (inv_f / AVG_NUM_NEIGHBORS),
            'w_c1': jax.random.normal(ks[7], (Z, P1, F), jnp.float32),
            'w_c2': jax.random.normal(ks[8], (Z, P2, F), jnp.float32),
            'w_c3': jax.random.normal(ks[9], (Z, P3, F), jnp.float32),
            'w_prod': jax.random.normal(ks[10], (F, F), jnp.float32) * inv_f,
        })
    return {'u1': u1, 'u2': u2, 'u3': u3, 'layers': layers}


def _pack_params(raw):
    """Pack raw weights into the small dense operands the kernel consumes."""
    F, Z, L = HIDDEN_CHANNELS, NUM_ELEMENTS, L_DIM
    layers = raw['layers']
    eye_f = jnp.eye(F, dtype=jnp.float32)
    eye_l = jnp.eye(L, dtype=jnp.float32)
    lmap = _lmap()

    def blin(lw):   # per-l channel-mixing linear as one [F*L, F*L] block matrix
        w_lm = jnp.einsum('lm,lcd->mcd', lmap, lw['w_l'])
        return jnp.einsum('mcd,mn->cmdn', w_lm, eye_l).reshape(F * L, F * L)

    def wcall(lw):  # element-dependent path weights, rows = c*Z + z, cols = (k,p)
        pieces = [jnp.transpose(wc, (2, 0, 1)).reshape(F * Z, -1)
                  for wc in (lw['w_c1'], lw['w_c2'], lw['w_c3'])]
        return jnp.concatenate(pieces, axis=1)            # [F*Z, NUM_P]

    stacked = {
        'w_up': jnp.stack([lw['w_up'] for lw in layers]),
        'w_sc': jnp.stack([lw['w_sc'] for lw in layers]),
        'b_lin': jnp.stack([blin(lw) for lw in layers]),
        'w_prod': jnp.stack([lw['w_prod'] for lw in layers]),
    }
    radial = {   # both layers batched via block-diagonal weights (rad is shared)
        'wm0': jnp.concatenate([lw['w_m0'] for lw in layers], axis=1),
        'wm1': block_diag(*[lw['w_m1'] for lw in layers]),
        'wm2': block_diag(*[lw['w_m2'] for lw in layers]),
        'wm3': block_diag(*[lw['w_m3'] for lw in layers]),
    }
    u1, u2, u3 = raw['u1'], raw['u2'], raw['u3']
    rep_a = jnp.kron(eye_l, jnp.ones((1, L), jnp.float32))      # [9, 81] x[l1]
    tile_b = jnp.tile(eye_l, (1, L))                            # [9, 81] x[l2]
    rep_3 = jnp.kron(eye_l, jnp.ones((1, P3), jnp.float32))     # [9, 27] x[l3]
    structure = {
        'g_sc': jnp.tile(eye_f, (Z, 1)),                        # [Z*F, F]
        'k_f': jnp.kron(eye_f, jnp.ones((1, NUM_L), jnp.float32)),
        'm_exp': jnp.kron(eye_f, lmap),                         # [F*NUM_L, F*L]
        't_exp': jnp.tile(eye_l, (1, F)),                       # [L, F*L]
        'xsel': jnp.concatenate([u1, rep_3, rep_a], axis=1),    # [9, 1+27+81]
        'tile_b': tile_b,                                       # [9, 81]
        'u23': jnp.concatenate([u2.reshape(L * L, P2),
                                u3.reshape(L * L, L * P3)], axis=1),  # [81, 30]
        's_3': jnp.tile(jnp.eye(P3, dtype=jnp.float32), (L, 1)),      # [27, 3]
    }
    return {'layers': stacked, 'radial': radial, 'structure': structure,
            'wc_all': jnp.concatenate([wcall(lw) for lw in layers], axis=1)}


# --------------------------------- forward ------------------------------------
def _full_spec(shape):
    nd = len(shape)
    return pl.BlockSpec(shape, lambda i, nd=nd: (0,) * nd)


@jax.jit
def mace_descriptor_forward(edge_index, embeddings, params):
    node_feats = embeddings['nodes']['node_features']     # [N, F]
    one_hot = embeddings['nodes']['one_hot']               # [N, Z]
    sh = embeddings['edges']['angular_embedding']          # [E, L]
    rad = embeddings['edges']['radial_embedding']          # [E, R]
    N = node_feats.shape[0]
    F = HIDDEN_CHANNELS
    sender, receiver = edge_index[0], edge_index[1]
    send_mat = jax.nn.one_hot(sender, N, dtype=jnp.float32)        # [E, N]
    recv_mat = jax.nn.one_hot(receiver, N, dtype=jnp.float32).T    # [N, E]
    ohe = jnp.repeat(one_hot, F, axis=1)                           # [N, Z*F] (z-major)
    # block one-hot for the (channel,node)-row layout of the contraction
    ohb = jnp.kron(jnp.eye(F, dtype=jnp.float32), one_hot)         # [F*N, F*Z]

    s = params['structure']
    w = params['layers']
    r = params['radial']
    inputs = [node_feats, ohe, ohb, sh, rad, send_mat, recv_mat,
              w['w_up'], w['w_sc'], r['wm0'], r['wm1'], r['wm2'], r['wm3'],
              w['b_lin'], params['wc_all'], w['w_prod'],
              s['g_sc'], s['k_f'], s['m_exp'], s['t_exp'],
              s['xsel'], s['tile_b'], s['u23'], s['s_3']]

    node_env = pl.pallas_call(
        _mace_fused_kernel,
        grid=(1,),
        in_specs=[_full_spec(a.shape) for a in inputs],
        out_specs=_full_spec((N, NUM_INTERACTIONS * F)),
        out_shape=jax.ShapeDtypeStruct((N, NUM_INTERACTIONS * F), jnp.float32),
        scratch_shapes=[pltpu.VMEM((F * N, L_DIM), jnp.float32)],
        compiler_params=pltpu.CompilerParams(
            dimension_semantics=("arbitrary",)),
    )(*inputs)
    # torch.cat(node_feats_list, dim=-1) already done in-kernel.
    return {'nodes': {'node_env': node_env}}


# --------------------- plain-JAX reference (validation) -----------------------
def _reference_forward(edge_index, embeddings, raw, packed):
    hi = jax.lax.Precision.HIGHEST
    dot = functools.partial(jnp.dot, precision=hi)
    node_feats = embeddings['nodes']['node_features']
    one_hot = embeddings['nodes']['one_hot']
    sh = embeddings['edges']['angular_embedding']
    rad = embeddings['edges']['radial_embedding']
    N, F, L = node_feats.shape[0], HIDDEN_CHANNELS, L_DIM
    send = jax.nn.one_hot(edge_index[0], N, dtype=jnp.float32)
    recv = jax.nn.one_hot(edge_index[1], N, dtype=jnp.float32).T
    ohe = jnp.repeat(one_hot, F, axis=1)
    s = packed['structure']
    sh_e = dot(sh, s['t_exp'])
    u1, u2, u3 = raw['u1'], raw['u2'], raw['u3']
    h = node_feats
    outs = []
    for li in range(NUM_INTERACTIONS):
        lw = raw['layers'][li]
        sc = dot(dot(h, lw['w_sc']) * ohe, s['g_sc'])
        hu = dot(h, lw['w_up'])
        t = jax.nn.silu(dot(rad, lw['w_m0']))
        t = jax.nn.silu(dot(t, lw['w_m1']))
        t = jax.nn.silu(dot(t, lw['w_m2']))
        tw = dot(t, lw['w_m3'])
        hs = dot(send, hu)
        htw = tw * dot(hs, s['k_f'])
        mji = dot(htw, s['m_exp']) * sh_e
        msg = dot(recv, mji)
        x = dot(msg, packed['layers']['b_lin'][li])
        xn = x.reshape(N, F, L)
        t1 = jnp.einsum('ncl,lp->ncp', xn, u1, precision=hi)
        t2 = jnp.einsum('nci,ncj,ijp->ncp', xn, xn, u2, precision=hi)
        t3 = jnp.einsum('nci,ncj,nck,ijkp->ncp', xn, xn, xn, u3, precision=hi)
        w1 = jnp.einsum('nz,zpc->ncp', one_hot, lw['w_c1'], precision=hi)
        w2 = jnp.einsum('nz,zpc->ncp', one_hot, lw['w_c2'], precision=hi)
        w3 = jnp.einsum('nz,zpc->ncp', one_hot, lw['w_c3'], precision=hi)
        sym = (t1 * w1).sum(-1) + (t2 * w2).sum(-1) + (t3 * w3).sum(-1)
        h = dot(sym, lw['w_prod']) + sc
        outs.append(h)
    return jnp.concatenate(outs, axis=-1)


# ----------------------------------- main --------------------------------------
if __name__ == "__main__":
    key = jax.random.PRNGKey(0)
    (k_param, k_feat, k_sh, k_rad, k_type, k_send, k_recv) = jax.random.split(key, 7)

    N, E = 16, 64
    raw_params = _init_raw_params(k_param)
    params = _pack_params(raw_params)

    node_features = jax.random.normal(k_feat, (N, HIDDEN_CHANNELS), jnp.float32)
    atom_types = jax.random.randint(k_type, (N,), 0, NUM_ELEMENTS)
    one_hot = jax.nn.one_hot(atom_types, NUM_ELEMENTS, dtype=jnp.float32)
    angular = jax.random.normal(k_sh, (E, L_DIM), jnp.float32)
    radial = jax.random.normal(k_rad, (E, RADIAL_DIM), jnp.float32)
    edge_index = jnp.stack([jax.random.randint(k_send, (E,), 0, N),
                            jax.random.randint(k_recv, (E,), 0, N)])

    embeddings = {'nodes': {'node_features': node_features, 'one_hot': one_hot},
                  'edges': {'angular_embedding': angular, 'radial_embedding': radial}}

    out = mace_descriptor_forward(edge_index, embeddings, params)
    env = jax.block_until_ready(out['nodes']['node_env'])
    assert env.shape == (N, HIDDEN_CHANNELS * NUM_INTERACTIONS)
    assert bool(jnp.all(jnp.isfinite(env)))

    # validate all new packings / relayouts against a plain-JAX reference
    ref = jax.block_until_ready(
        _reference_forward(edge_index, embeddings, raw_params, params))
    rel_err = float(jnp.max(jnp.abs(env - ref)) / (jnp.max(jnp.abs(ref)) + 1e-6))
    assert rel_err < 3e-2, f"kernel vs reference mismatch: rel_err={rel_err}"
    print("KERNEL_OK")
</pallas_src>

<mosaic_0001>
module attributes {stable_mosaic.version = 11 : i64} {
  func.func @_mace_fused_kernel(%arg0: i32, %arg1: memref<16x16xf32, #tpu.memory_space<vmem>>, %arg2: memref<16x64xf32, #tpu.memory_space<vmem>>, %arg3: memref<256x64xf32, #tpu.memory_space<vmem>>, %arg4: memref<64x9xf32, #tpu.memory_space<vmem>>, %arg5: memref<64x8xf32, #tpu.memory_space<vmem>>, %arg6: memref<64x16xf32, #tpu.memory_space<vmem>>, %arg7: memref<16x64xf32, #tpu.memory_space<vmem>>, %arg8: memref<2x16x16xf32, #tpu.memory_space<vmem>>, %arg9: memref<2x16x64xf32, #tpu.memory_space<vmem>>, %arg10: memref<8x32xf32, #tpu.memory_space<vmem>>, %arg11: memref<32x32xf32, #tpu.memory_space<vmem>>, %arg12: memref<32x32xf32, #tpu.memory_space<vmem>>, %arg13: memref<32x96xf32, #tpu.memory_space<vmem>>, %arg14: memref<2x144x144xf32, #tpu.memory_space<vmem>>, %arg15: memref<64x14xf32, #tpu.memory_space<vmem>>, %arg16: memref<2x16x16xf32, #tpu.memory_space<vmem>>, %arg17: memref<64x16xf32, #tpu.memory_space<vmem>>, %arg18: memref<16x48xf32, #tpu.memory_space<vmem>>, %arg19: memref<48x144xf32, #tpu.memory_space<vmem>>, %arg20: memref<9x144xf32, #tpu.memory_space<vmem>>, %arg21: memref<9x109xf32, #tpu.memory_space<vmem>>, %arg22: memref<9x81xf32, #tpu.memory_space<vmem>>, %arg23: memref<81x30xf32, #tpu.memory_space<vmem>>, %arg24: memref<27x3xf32, #tpu.memory_space<vmem>>, %arg25: memref<16x32xf32, #tpu.memory_space<vmem>>, %arg26: memref<256x9xf32, #tpu.memory_space<vmem>>) attributes {dimension_semantics = [#tpu.dimension_semantics<arbitrary>], iteration_bounds = array<i64: 1>, scalar_prefetch = 0 : i64, scratch_operands = 1 : i64, tpu.core_type = #tpu.core_type<tc>, window_params = [{pipeline_mode = #tpu.pipeline_mode<synchronous>, transform_indices = @transform_0, window_bounds = array<i64: 16, 16>}, {pipeline_mode = #tpu.pipeline_mode<synchronous>, transform_indices = @transform_1, window_bounds = array<i64: 16, 64>}, {pipeline_mode = #tpu.pipeline_mode<synchronous>, transform_indices = @transform_2, window_bounds = array<i64: 256, 64>}, {pipeline_mode = #tpu.pipeline_mode<synchronous>, transform_indices = @transform_3, window_bounds = array<i64: 64, 9>}, {pipeline_mode = #tpu.pipeline_mode<synchronous>, transform_indices = @transform_4, window_bounds = array<i64: 64, 8>}, {pipeline_mode = #tpu.pipeline_mode<synchronous>, transform_indices = @transform_5, window_bounds = array<i64: 64, 16>}, {pipeline_mode = #tpu.pipeline_mode<synchronous>, transform_indices = @transform_6, window_bounds = array<i64: 16, 64>}, {pipeline_mode = #tpu.pipeline_mode<synchronous>, transform_indices = @transform_7, window_bounds = array<i64: 2, 16, 16>}, {pipeline_mode = #tpu.pipeline_mode<synchronous>, transform_indices = @transform_8, window_bounds = array<i64: 2, 16, 64>}, {pipeline_mode = #tpu.pipeline_mode<synchronous>, transform_indices = @transform_9, window_bounds = array<i64: 8, 32>}, {pipeline_mode = #tpu.pipeline_mode<synchronous>, transform_indices = @transform_10, window_bounds = array<i64: 32, 32>}, {pipeline_mode = #tpu.pipeline_mode<synchronous>, transform_indices = @transform_11, window_bounds = array<i64: 32, 32>}, {pipeline_mode = #tpu.pipeline_mode<synchronous>, transform_indices = @transform_12, window_bounds = array<i64: 32, 96>}, {pipeline_mode = #tpu.pipeline_mode<synchronous>, transform_indices = @transform_13, window_bounds = array<i64: 2, 144, 144>}, {pipeline_mode = #tpu.pipeline_mode<synchronous>, transform_indices = @transform_14, window_bounds = array<i64: 64, 14>}, {pipeline_mode = #tpu.pipeline_mode<synchronous>, transform_indices = @transform_15, window_bounds = array<i64: 2, 16, 16>}, {pipeline_mode = #tpu.pipeline_mode<synchronous>, transform_indices = @transform_16, window_bounds = array<i64: 64, 16>}, {pipeline_mode = #tpu.pipeline_mode<synchronous>, transform_indices = @transform_17, window_bounds = array<i64: 16, 48>}, {pipeline_mode = #tpu.pipeline_mode<synchronous>, transform_indices = @transform_18, window_bounds = array<i64: 48, 144>}, {pipeline_mode = #tpu.pipeline_mode<synchronous>, transform_indices = @transform_19, window_bounds = array<i64: 9, 144>}, {pipeline_mode = #tpu.pipeline_mode<synchronous>, transform_indices = @transform_20, window_bounds = array<i64: 9, 109>}, {pipeline_mode = #tpu.pipeline_mode<synchronous>, transform_indices = @transform_21, window_bounds = array<i64: 9, 81>}, {pipeline_mode = #tpu.pipeline_mode<synchronous>, transform_indices = @transform_22, window_bounds = array<i64: 81, 30>}, {pipeline_mode = #tpu.pipeline_mode<synchronous>, transform_indices = @transform_23, window_bounds = array<i64: 27, 3>}, {pipeline_mode = #tpu.pipeline_mode<synchronous>, transform_indices = @transform_24, window_bounds = array<i64: 16, 32>}]} {
    %c0 = arith.constant 0 : index
    %c0_0 = arith.constant 0 : index
    %0 = vector.load %arg2[%c0, %c0_0] : memref<16x64xf32, #tpu.memory_space<vmem>>, vector<16x64xf32>
    %c0_1 = arith.constant 0 : index
    %c0_2 = arith.constant 0 : index
    %1 = vector.load %arg5[%c0_1, %c0_2] : memref<64x8xf32, #tpu.memory_space<vmem>>, vector<64x8xf32>
    %c0_3 = arith.constant 0 : index
    %c0_4 = arith.constant 0 : index
    %2 = vector.load %arg6[%c0_3, %c0_4] : memref<64x16xf32, #tpu.memory_space<vmem>>, vector<64x16xf32>
    %c0_5 = arith.constant 0 : index
    %c0_6 = arith.constant 0 : index
    %3 = vector.load %arg7[%c0_5, %c0_6] : memref<16x64xf32, #tpu.memory_space<vmem>>, vector<16x64xf32>
    %c0_7 = arith.constant 0 : index
    %c0_8 = arith.constant 0 : index
    %4 = vector.load %arg17[%c0_7, %c0_8] : memref<64x16xf32, #tpu.memory_space<vmem>>, vector<64x16xf32>
    %c0_9 = arith.constant 0 : index
    %c0_10 = arith.constant 0 : index
    %5 = vector.load %arg18[%c0_9, %c0_10] : memref<16x48xf32, #tpu.memory_space<vmem>>, vector<16x48xf32>
    %c0_11 = arith.constant 0 : index
    %c0_12 = arith.constant 0 : index
    %6 = vector.load %arg19[%c0_11, %c0_12] : memref<48x144xf32, #tpu.memory_space<vmem>>, vector<48x144xf32>
    %c0_13 = arith.constant 0 : index
    %c0_14 = arith.constant 0 : index
    %7 = vector.load %arg21[%c0_13, %c0_14] : memref<9x109xf32, #tpu.memory_space<vmem>>, vector<9x109xf32>
    %c0_15 = arith.constant 0 : index
    %c0_16 = arith.constant 0 : index
    %8 = vector.load %arg22[%c0_15, %c0_16] : memref<9x81xf32, #tpu.memory_space<vmem>>, vector<9x81xf32>
    %c0_17 = arith.constant 0 : index
    %c0_18 = arith.constant 0 : index
    %9 = vector.load %arg23[%c0_17, %c0_18] : memref<81x30xf32, #tpu.memory_space<vmem>>, vector<81x30xf32>
    %c0_19 = arith.constant 0 : index
    %c0_20 = arith.constant 0 : index
    %10 = vector.load %arg24[%c0_19, %c0_20] : memref<27x3xf32, #tpu.memory_space<vmem>>, vector<27x3xf32>
    %c0_21 = arith.constant 0 : index
    %c0_22 = arith.constant 0 : index
    %11 = vector.load %arg4[%c0_21, %c0_22] : memref<64x9xf32, #tpu.memory_space<vmem>>, vector<64x9xf32>
    %c0_23 = arith.constant 0 : index
    %c0_24 = arith.constant 0 : index
    %12 = vector.load %arg20[%c0_23, %c0_24] : memref<9x144xf32, #tpu.memory_space<vmem>>, vector<9x144xf32>
    %cst = arith.constant dense<0.000000e+00> : vector<64x144xf32>
    %13 = tpu.matmul %11, %12, %cst {dimension_numbers = #tpu.dot_dimension_numbers<[1], [0], [0], [1], [0, 0, 1, 1], [], []>} : vector<64x9xf32>, vector<9x144xf32>, vector<64x144xf32> -> vector<64x144xf32>
    %c0_25 = arith.constant 0 : index
    %c0_26 = arith.constant 0 : index
    %14 = vector.load %arg10[%c0_25, %c0_26] : memref<8x32xf32, #tpu.memory_space<vmem>>, vector<8x32xf32>
    %cst_27 = arith.constant dense<0.000000e+00> : vector<64x32xf32>
    %15 = tpu.matmul %1, %14, %cst_27 {dimension_numbers = #tpu.dot_dimension_numbers<[1], [0], [0], [1], [0, 0, 1, 1], [], []>} : vector<64x8xf32>, vector<8x32xf32>, vector<64x32xf32> -> vector<64x32xf32>
    %16 = arith.negf %15 : vector<64x32xf32>
    %17 = math.exp %16 : vector<64x32xf32>
    %cst_28 = arith.constant 1.000000e+00 : f32
    %18 = vector.broadcast %cst_28 : f32 to vector<64x32xf32>
    %19 = arith.addf %18, %17 : vector<64x32xf32>
    %20 = arith.divf %18, %19 : vector<64x32xf32>
    %21 = arith.mulf %15, %20 : vector<64x32xf32>
    %c0_29 = arith.constant 0 : index
    %c0_30 = arith.constant 0 : index
    %22 = vector.load %arg11[%c0_29, %c0_30] : memref<32x32xf32, #tpu.memory_space<vmem>>, vector<32x32xf32>
    %cst_31 = arith.constant dense<0.000000e+00> : vector<64x32xf32>
    %23 = tpu.matmul %21, %22, %cst_31 {dimension_numbers = #tpu.dot_dimension_numbers<[1], [0], [0], [1], [0, 0, 1, 1], [], []>} : vector<64x32xf32>, vector<32x32xf32>, vector<64x32xf32> -> vector<64x32xf32>
    %24 = arith.negf %23 : vector<64x32xf32>
    %25 = math.exp %24 : vector<64x32xf32>
    %cst_32 = arith.constant 1.000000e+00 : f32
    %26 = vector.broadcast %cst_32 : f32 to vector<64x32xf32>
    %27 = arith.addf %26, %25 : vector<64x32xf32>
    %28 = arith.divf %26, %27 : vector<64x32xf32>
    %29 = arith.mulf %23, %28 : vector<64x32xf32>
    %c0_33 = arith.constant 0 : index
    %c0_34 = arith.constant 0 : index
    %30 = vector.load %arg12[%c0_33, %c0_34] : memref<32x32xf32, #tpu.memory_space<vmem>>, vector<32x32xf32>
    %cst_35 = arith.constant dense<0.000000e+00> : vector<64x32xf32>
    %31 = tpu.matmul %29, %30, %cst_35 {dimension_numbers = #tpu.dot_dimension_numbers<[1], [0], [0], [1], [0, 0, 1, 1], [], []>} : vector<64x32xf32>, vector<32x32xf32>, vector<64x32xf32> -> vector<64x32xf32>
    %32 = arith.negf %31 : vector<64x32xf32>
    %33 = math.exp %32 : vector<64x32xf32>
    %cst_36 = arith.constant 1.000000e+00 : f32
    %34 = vector.broadcast %cst_36 : f32 to vector<64x32xf32>
    %35 = arith.addf %34, %33 : vector<64x32xf32>
    %36 = arith.divf %34, %35 : vector<64x32xf32>
    %37 = arith.mulf %31, %36 : vector<64x32xf32>
    %c0_37 = arith.constant 0 : index
    %c0_38 = arith.constant 0 : index
    %38 = vector.load %arg13[%c0_37, %c0_38] : memref<32x96xf32, #tpu.memory_space<vmem>>, vector<32x96xf32>
    %cst_39 = arith.constant dense<0.000000e+00> : vector<64x96xf32>
    %39 = tpu.matmul %37, %38, %cst_39 {dimension_numbers = #tpu.dot_dimension_numbers<[1], [0], [0], [1], [0, 0, 1, 1], [], []>} : vector<64x32xf32>, vector<32x96xf32>, vector<64x96xf32> -> vector<64x96xf32>
    %c0_40 = arith.constant 0 : index
    %c0_41 = arith.constant 0 : index
    %40 = vector.load %arg3[%c0_40, %c0_41] : memref<256x64xf32, #tpu.memory_space<vmem>>, vector<256x64xf32>
    %c0_42 = arith.constant 0 : index
    %c0_43 = arith.constant 0 : index
    %41 = vector.load %arg15[%c0_42, %c0_43] : memref<64x14xf32, #tpu.memory_space<vmem>>, vector<64x14xf32>
    %cst_44 = arith.constant dense<0.000000e+00> : vector<256x14xf32>
    %42 = tpu.matmul %40, %41, %cst_44 {dimension_numbers = #tpu.dot_dimension_numbers<[1], [0], [0], [1], [0, 0, 1, 1], [], []>} : vector<256x64xf32>, vector<64x14xf32>, vector<256x14xf32> -> vector<256x14xf32>
    %c0_45 = arith.constant 0 : index
    %c0_46 = arith.constant 0 : index
    %43 = vector.load %arg1[%c0_45, %c0_46] : memref<16x16xf32, #tpu.memory_space<vmem>>, vector<16x16xf32>
    %c0_47 = arith.constant 0 : index
    %c0_48 = arith.constant 0 : index
    %c0_49 = arith.constant 0 : index
    %44 = vector.load %arg9[%c0_47, %c0_48, %c0_49] : memref<2x16x64xf32, #tpu.memory_space<vmem>>, vector<1x16x64xf32>
    %45 = vector.shape_cast %44 : vector<1x16x64xf32> to vector<16x64xf32>
    %cst_50 = arith.constant dense<0.000000e+00> : vector<16x64xf32>
    %46 = tpu.matmul %43, %45, %cst_50 {dimension_numbers = #tpu.dot_dimension_numbers<[1], [0], [0], [1], [0, 0, 1, 1], [], []>} : vector<16x16xf32>, vector<16x64xf32>, vector<16x64xf32> -> vector<16x64xf32>
    %47 = arith.mulf %46, %0 : vector<16x64xf32>
    %cst_51 = arith.constant dense<0.000000e+00> : vector<16x16xf32>
    %48 = tpu.matmul %47, %4, %cst_51 {dimension_numbers = #tpu.dot_dimension_numbers<[1], [0], [0], [1], [0, 0, 1, 1], [], []>} : vector<16x64xf32>, vector<64x16xf32>, vector<16x16xf32> -> vector<16x16xf32>
    %c0_52 = arith.constant 0 : index
    %c0_53 = arith.constant 0 : index
    %c0_54 = arith.constant 0 : index
    %49 = vector.load %arg8[%c0_52, %c0_53, %c0_54] : memref<2x16x16xf32, #tpu.memory_space<vmem>>, vector<1x16x16xf32>
    %50 = vector.shape_cast %49 : vector<1x16x16xf32> to vector<16x16xf32>
    %cst_55 = arith.constant dense<0.000000e+00> : vector<16x16xf32>
    %51 = tpu.matmul %43, %50, %cst_55 {dimension_numbers = #tpu.dot_dimension_numbers<[1], [0], [0], [1], [0, 0, 1, 1], [], []>} : vector<16x16xf32>, vector<16x16xf32>, vector<16x16xf32> -> vector<16x16xf32>
    %52 = vector.extract_strided_slice %39 {offsets = [0, 0], sizes = [64, 48], strides = [1, 1]} : vector<64x96xf32> to vector<64x48xf32>
    %cst_56 = arith.constant dense<0.000000e+00> : vector<64x16xf32>
    %53 = tpu.matmul %2, %51, %cst_56 {dimension_numbers = #tpu.dot_dimension_numbers<[1], [0], [0], [1], [0, 0, 1, 1], [], []>} : vector<64x16xf32>, vector<16x16xf32>, vector<64x16xf32> -> vector<64x16xf32>
    %cst_57 = arith.constant dense<0.000000e+00> : vector<64x48xf32>
    %54 = tpu.matmul %53, %5, %cst_57 {dimension_numbers = #tpu.dot_dimension_numbers<[1], [0], [0], [1], [0, 0, 1, 1], [], []>} : vector<64x16xf32>, vector<16x48xf32>, vector<64x48xf32> -> vector<64x48xf32>
    %55 = arith.mulf %52, %54 : vector<64x48xf32>
    %cst_58 = arith.constant dense<0.000000e+00> : vector<64x144xf32>
    %56 = tpu.matmul %55, %6, %cst_58 {dimension_numbers = #tpu.dot_dimension_numbers<[1], [0], [0], [1], [0, 0, 1, 1], [], []>} : vector<64x48xf32>, vector<48x144xf32>, vector<64x144xf32> -> vector<64x144xf32>
    %57 = arith.mulf %56, %13 : vector<64x144xf32>
    %cst_59 = arith.constant dense<0.000000e+00> : vector<16x144xf32>
    %58 = tpu.matmul %3, %57, %cst_59 {dimension_numbers = #tpu.dot_dimension_numbers<[1], [0], [0], [1], [0, 0, 1, 1], [], []>} : vector<16x64xf32>, vector<64x144xf32>, vector<16x144xf32> -> vector<16x144xf32>
    %c0_60 = arith.constant 0 : index
    %c0_61 = arith.constant 0 : index
    %c0_62 = arith.constant 0 : index
    %59 = vector.load %arg14[%c0_60, %c0_61, %c0_62] : memref<2x144x144xf32, #tpu.memory_space<vmem>>, vector<1x144x144xf32>
    %60 = vector.shape_cast %59 : vector<1x144x144xf32> to vector<144x144xf32>
    %cst_63 = arith.constant dense<0.000000e+00> : vector<16x144xf32>
    %61 = tpu.matmul %58, %60, %cst_63 {dimension_numbers = #tpu.dot_dimension_numbers<[1], [0], [0], [1], [0, 0, 1, 1], [], []>} : vector<16x144xf32>, vector<144x144xf32>, vector<16x144xf32> -> vector<16x144xf32>
    %62 = vector.extract_strided_slice %61 {offsets = [0, 0], sizes = [16, 9], strides = [1, 1]} : vector<16x144xf32> to vector<16x9xf32>
    %c0_64 = arith.constant 0 : index
    %c0_65 = arith.constant 0 : index
    %63 = vector.load %arg26[%c0_64, %c0_65] : memref<256x9xf32, #tpu.memory_space<vmem>>, vector<16x9xf32>
    tpu.vector_store %arg26[%c0_64, %c0_65], %62 {strides = array<i32>} : memref<256x9xf32, #tpu.memory_space<vmem>>, vector<16x9xf32>,
    %64 = vector.extract_strided_slice %61 {offsets = [0, 9], sizes = [16, 9], strides = [1, 1]} : vector<16x144xf32> to vector<16x9xf32>
    %c16 = arith.constant 16 : index
    %c0_66 = arith.constant 0 : index
    %65 = vector.load %arg26[%c16, %c0_66] : memref<256x9xf32, #tpu.memory_space<vmem>>, vector<16x9xf32>
    tpu.vector_store %arg26[%c16, %c0_66], %64 {strides = array<i32>} : memref<256x9xf32, #tpu.memory_space<vmem>>, vector<16x9xf32>,
    %66 = vector.extract_strided_slice %61 {offsets = [0, 18], sizes = [16, 9], strides = [1, 1]} : vector<16x144xf32> to vector<16x9xf32>
    %c32 = arith.constant 32 : index
    %c0_67 = arith.constant 0 : index
    %67 = vector.load %arg26[%c32, %c0_67] : memref<256x9xf32, #tpu.memory_space<vmem>>, vector<16x9xf32>
    tpu.vector_store %arg26[%c32, %c0_67], %66 {strides = array<i32>} : memref<256x9xf32, #tpu.memory_space<vmem>>, vector<16x9xf32>,
    %68 = vector.extract_strided_slice %61 {offsets = [0, 27], sizes = [16, 9], strides = [1, 1]} : vector<16x144xf32> to vector<16x9xf32>
    %c48 = arith.constant 48 : index
    %c0_68 = arith.constant 0 : index
    %69 = vector.load %arg26[%c48, %c0_68] : memref<256x9xf32, #tpu.memory_space<vmem>>, vector<16x9xf32>
    tpu.vector_store %arg26[%c48, %c0_68], %68 {strides = array<i32>} : memref<256x9xf32, #tpu.memory_space<vmem>>, vector<16x9xf32>,
    %70 = vector.extract_strided_slice %61 {offsets = [0, 36], sizes = [16, 9], strides = [1, 1]} : vector<16x144xf32> to vector<16x9xf32>
    %c64 = arith.constant 64 : index
    %c0_69 = arith.constant 0 : index
    %71 = vector.load %arg26[%c64, %c0_69] : memref<256x9xf32, #tpu.memory_space<vmem>>, vector<16x9xf32>
    tpu.vector_store %arg26[%c64, %c0_69], %70 {strides = array<i32>} : memref<256x9xf32, #tpu.memory_space<vmem>>, vector<16x9xf32>,
    %72 = vector.extract_strided_slice %61 {offsets = [0, 45], sizes = [16, 9], strides = [1, 1]} : vector<16x144xf32> to vector<16x9xf32>
    %c80 = arith.constant 80 : index
    %c0_70 = arith.constant 0 : index
    %73 = vector.load %arg26[%c80, %c0_70] : memref<256x9xf32, #tpu.memory_space<vmem>>, vector<16x9xf32>
    tpu.vector_store %arg26[%c80, %c0_70], %72 {strides = array<i32>} : memref<256x9xf32, #tpu.memory_space<vmem>>, vector<16x9xf32>,
    %74 = vector.extract_strided_slice %61 {offsets = [0, 54], sizes = [16, 9], strides = [1, 1]} : vector<16x144xf32> to vector<16x9xf32>
    %c96 = arith.constant 96 : index
    %c0_71 = arith.constant 0 : index
    %75 = vector.load %arg26[%c96, %c0_71] : memref<256x9xf32, #tpu.memory_space<vmem>>, vector<16x9xf32>
    tpu.vector_store %arg26[%c96, %c0_71], %74 {strides = array<i32>} : memref<256x9xf32, #tpu.memory_space<vmem>>, vector<16x9xf32>,
    %76 = vector.extract_strided_slice %61 {offsets = [0, 63], sizes = [16, 9], strides = [1, 1]} : vector<16x144xf32> to vector<16x9xf32>
    %c112 = arith.constant 112 : index
    %c0_72 = arith.constant 0 : index
    %77 = vector.load %arg26[%c112, %c0_72] : memref<256x9xf32, #tpu.memory_space<vmem>>, vector<16x9xf32>
    tpu.vector_store %arg26[%c112, %c0_72], %76 {strides = array<i32>} : memref<256x9xf32, #tpu.memory_space<vmem>>, vector<16x9xf32>,
    %78 = vector.extract_strided_slice %61 {offsets = [0, 72], sizes = [16, 9], strides = [1, 1]} : vector<16x144xf32> to vector<16x9xf32>
    %c128 = arith.constant 128 : index
    %c0_73 = arith.constant 0 : index
    %79 = vector.load %arg26[%c128, %c0_73] : memref<256x9xf32, #tpu.memory_space<vmem>>, vector<16x9xf32>
    tpu.vector_store %arg26[%c128, %c0_73], %78 {strides = array<i32>} : memref<256x9xf32, #tpu.memory_space<vmem>>, vector<16x9xf32>,
    %80 = vector.extract_strided_slice %61 {offsets = [0, 81], sizes = [16, 9], strides = [1, 1]} : vector<16x144xf32> to vector<16x9xf32>
    %c144 = arith.constant 144 : index
    %c0_74 = arith.constant 0 : index
    %81 = vector.load %arg26[%c144, %c0_74] : memref<256x9xf32, #tpu.memory_space<vmem>>, vector<16x9xf32>
    tpu.vector_store %arg26[%c144, %c0_74], %80 {strides = array<i32>} : memref<256x9xf32, #tpu.memory_space<vmem>>, vector<16x9xf32>,
    %82 = vector.extract_strided_slice %61 {offsets = [0, 90], sizes = [16, 9], strides = [1, 1]} : vector<16x144xf32> to vector<16x9xf32>
    %c160 = arith.constant 160 : index
    %c0_75 = arith.constant 0 : index
    %83 = vector.load %arg26[%c160, %c0_75] : memref<256x9xf32, #tpu.memory_space<vmem>>, vector<16x9xf32>
    tpu.vector_store %arg26[%c160, %c0_75], %82 {strides = array<i32>} : memref<256x9xf32, #tpu.memory_space<vmem>>, vector<16x9xf32>,
    %84 = vector.extract_strided_slice %61 {offsets = [0, 99], sizes = [16, 9], strides = [1, 1]} : vector<16x144xf32> to vector<16x9xf32>
    %c176 = arith.constant 176 : index
    %c0_76 = arith.constant 0 : index
    %85 = vector.load %arg26[%c176, %c0_76] : memref<256x9xf32, #tpu.memory_space<vmem>>, vector<16x9xf32>
    tpu.vector_store %arg26[%c176, %c0_76], %84 {strides = array<i32>} : memref<256x9xf32, #tpu.memory_space<vmem>>, vector<16x9xf32>,
    %86 = vector.extract_strided_slice %61 {offsets = [0, 108], sizes = [16, 9], strides = [1, 1]} : vector<16x144xf32> to vector<16x9xf32>
    %c192 = arith.constant 192 : index
    %c0_77 = arith.constant 0 : index
    %87 = vector.load %arg26[%c192, %c0_77] : memref<256x9xf32, #tpu.memory_space<vmem>>, vector<16x9xf32>
    tpu.vector_store %arg26[%c192, %c0_77], %86 {strides = array<i32>} : memref<256x9xf32, #tpu.memory_space<vmem>>, vector<16x9xf32>,
    %88 = vector.extract_strided_slice %61 {offsets = [0, 117], sizes = [16, 9], strides = [1, 1]} : vector<16x144xf32> to vector<16x9xf32>
    %c208 = arith.constant 208 : index
    %c0_78 = arith.constant 0 : index
    %89 = vector.load %arg26[%c208, %c0_78] : memref<256x9xf32, #tpu.memory_space<vmem>>, vector<16x9xf32>
    tpu.vector_store %arg26[%c208, %c0_78], %88 {strides = array<i32>} : memref<256x9xf32, #tpu.memory_space<vmem>>, vector<16x9xf32>,
    %90 = vector.extract_strided_slice %61 {offsets = [0, 126], sizes = [16, 9], strides = [1, 1]} : vector<16x144xf32> to vector<16x9xf32>
    %c224 = arith.constant 224 : index
    %c0_79 = arith.constant 0 : index
    %91 = vector.load %arg26[%c224, %c0_79] : memref<256x9xf32, #tpu.memory_space<vmem>>, vector<16x9xf32>
    tpu.vector_store %arg26[%c224, %c0_79], %90 {strides = array<i32>} : memref<256x9xf32, #tpu.memory_space<vmem>>, vector<16x9xf32>,
    %92 = vector.extract_strided_slice %61 {offsets = [0, 135], sizes = [16, 9], strides = [1, 1]} : vector<16x144xf32> to vector<16x9xf32>
    %c240 = arith.constant 240 : index
    %c0_80 = arith.constant 0 : index
    %93 = vector.load %arg26[%c240, %c0_80] : memref<256x9xf32, #tpu.memory_space<vmem>>, vector<16x9xf32>
    tpu.vector_store %arg26[%c240, %c0_80], %92 {strides = array<i32>} : memref<256x9xf32, #tpu.memory_space<vmem>>, vector<16x9xf32>,
    %c0_81 = arith.constant 0 : index
    %c0_82 = arith.constant 0 : index
    %94 = vector.load %arg26[%c0_81, %c0_82] : memref<256x9xf32, #tpu.memory_space<vmem>>, vector<256x9xf32>
    %cst_83 = arith.constant dense<0.000000e+00> : vector<256x109xf32>
    %95 = tpu.matmul %94, %7, %cst_83 {dimension_numbers = #tpu.dot_dimension_numbers<[1], [0], [0], [1], [0, 0, 1, 1], [], []>} : vector<256x9xf32>, vector<9x109xf32>, vector<256x109xf32> -> vector<256x109xf32>
    %96 = vector.extract_strided_slice %95 {offsets = [0, 0], sizes = [256, 1], strides = [1, 1]} : vector<256x109xf32> to vector<256x1xf32>
    %97 = vector.extract_strided_slice %95 {offsets = [0, 1], sizes = [256, 27], strides = [1, 1]} : vector<256x109xf32> to vector<256x27xf32>
    %98 = vector.extract_strided_slice %95 {offsets = [0, 28], sizes = [256, 81], strides = [1, 1]} : vector<256x109xf32> to vector<256x81xf32>
    %cst_84 = arith.constant dense<0.000000e+00> : vector<256x81xf32>
    %99 = tpu.matmul %94, %8, %cst_84 {dimension_numbers = #tpu.dot_dimension_numbers<[1], [0], [0], [1], [0, 0, 1, 1], [], []>} : vector<256x9xf32>, vector<9x81xf32>, vector<256x81xf32> -> vector<256x81xf32>
    %100 = arith.mulf %98, %99 : vector<256x81xf32>
    %cst_85 = arith.constant dense<0.000000e+00> : vector<256x30xf32>
    %101 = tpu.matmul %100, %9, %cst_85 {dimension_numbers = #tpu.dot_dimension_numbers<[1], [0], [0], [1], [0, 0, 1, 1], [], []>} : vector<256x81xf32>, vector<81x30xf32>, vector<256x30xf32> -> vector<256x30xf32>
    %102 = vector.extract_strided_slice %101 {offsets = [0, 0], sizes = [256, 3], strides = [1, 1]} : vector<256x30xf32> to vector<256x3xf32>
    %103 = vector.extract_strided_slice %101 {offsets = [0, 3], sizes = [256, 27], strides = [1, 1]} : vector<256x30xf32> to vector<256x27xf32>
    %104 = arith.mulf %97, %103 : vector<256x27xf32>
    %cst_86 = arith.constant dense<0.000000e+00> : vector<256x3xf32>
    %105 = tpu.matmul %104, %10, %cst_86 {dimension_numbers = #tpu.dot_dimension_numbers<[1], [0], [0], [1], [0, 0, 1, 1], [], []>} : vector<256x27xf32>, vector<27x3xf32>, vector<256x3xf32> -> vector<256x3xf32>
    %106 = vector.extract_strided_slice %42 {offsets = [0, 0], sizes = [256, 7], strides = [1, 1]} : vector<256x14xf32> to vector<256x7xf32>
    %107 = vector.extract_strided_slice %106 {offsets = [0, 0], sizes = [256, 1], strides = [1, 1]} : vector<256x7xf32> to vector<256x1xf32>
    %108 = arith.mulf %96, %107 : vector<256x1xf32>
    %109 = vector.extract_strided_slice %106 {offsets = [0, 1], sizes = [256, 3], strides = [1, 1]} : vector<256x7xf32> to vector<256x3xf32>
    %110 = arith.mulf %102, %109 : vector<256x3xf32>
    %cst_87 = arith.constant dense<0.000000e+00> : vector<256xf32>
    %111 = vector.multi_reduction <add>, %110, %cst_87 [1] : vector<256x3xf32> to vector<256xf32>
    %112 = vector.shape_cast %111 : vector<256xf32> to vector<256x1xf32>
    %113 = arith.addf %108, %112 : vector<256x1xf32>
    %114 = vector.extract_strided_slice %106 {offsets = [0, 4], sizes = [256, 3], strides = [1, 1]} : vector<256x7xf32> to vector<256x3xf32>
    %115 = arith.mulf %105, %114 : vector<256x3xf32>
    %cst_88 = arith.constant dense<0.000000e+00> : vector<256xf32>
    %116 = vector.multi_reduction <add>, %115, %cst_88 [1] : vector<256x3xf32> to vector<256xf32>
    %117 = vector.shape_cast %116 : vector<256xf32> to vector<256x1xf32>
    %118 = arith.addf %113, %117 : vector<256x1xf32>
    %c0_89 = arith.constant 0 : index
    %c0_90 = arith.constant 0 : index
    %c0_91 = arith.constant 0 : index
    %119 = vector.load %arg16[%c0_89, %c0_90, %c0_91] : memref<2x16x16xf32, #tpu.memory_space<vmem>>, vector<1x16x16xf32>
    %120 = vector.shape_cast %119 : vector<1x16x16xf32> to vector<16x16xf32>
    %121 = vector.extract_strided_slice %118 {offsets = [0, 0], sizes = [16, 1], strides = [1, 1]} : vector<256x1xf32> to vector<16x1xf32>
    %122 = vector.extract_strided_slice %120 {offsets = [0, 0], sizes = [1, 16], strides = [1, 1]} : vector<16x16xf32> to vector<1x16xf32>
    %123 = vector.broadcast %121 : vector<16x1xf32> to vector<16x16xf32>
    %124 = vector.broadcast %122 : vector<1x16xf32> to vector<16x16xf32>
    %125 = arith.mulf %123, %124 : vector<16x16xf32>
    %126 = arith.addf %48, %125 : vector<16x16xf32>
    %127 = vector.extract_strided_slice %118 {offsets = [16, 0], sizes = [16, 1], strides = [1, 1]} : vector<256x1xf32> to vector<16x1xf32>
    %128 = vector.extract_strided_slice %120 {offsets = [1, 0], sizes = [1, 16], strides = [1, 1]} : vector<16x16xf32> to vector<1x16xf32>
    %129 = vector.broadcast %127 : vector<16x1xf32> to vector<16x16xf32>
    %130 = vector.broadcast %128 : vector<1x16xf32> to vector<16x16xf32>
    %131 = arith.mulf %129, %130 : vector<16x16xf32>
    %132 = arith.addf %126, %131 : vector<16x16xf32>
    %133 = vector.extract_strided_slice %118 {offsets = [32, 0], sizes = [16, 1], strides = [1, 1]} : vector<256x1xf32> to vector<16x1xf32>
    %134 = vector.extract_strided_slice %120 {offsets = [2, 0], sizes = [1, 16], strides = [1, 1]} : vector<16x16xf32> to vector<1x16xf32>
    %135 = vector.broadcast %133 : vector<16x1xf32> to vector<16x16xf32>
    %136 = vector.broadcast %134 : vector<1x16xf32> to vector<16x16xf32>
    %137 = arith.mulf %135, %136 : vector<16x16xf32>
    %138 = arith.addf %132, %137 : vector<16x16xf32>
    %139 = vector.extract_strided_slice %118 {offsets = [48, 0], sizes = [16, 1], strides = [1, 1]} : vector<256x1xf32> to vector<16x1xf32>
    %140 = vector.extract_strided_slice %120 {offsets = [3, 0], sizes = [1, 16], strides = [1, 1]} : vector<16x16xf32> to vector<1x16xf32>
    %141 = vector.broadcast %139 : vector<16x1xf32> to vector<16x16xf32>
    %142 = vector.broadcast %140 : vector<1x16xf32> to vector<16x16xf32>
    %143 = arith.mulf %141, %142 : vector<16x16xf32>
    %144 = arith.addf %138, %143 : vector<16x16xf32>
    %145 = vector.extract_strided_slice %118 {offsets = [64, 0], sizes = [16, 1], strides = [1, 1]} : vector<256x1xf32> to vector<16x1xf32>
    %146 = vector.extract_strided_slice %120 {offsets = [4, 0], sizes = [1, 16], strides = [1, 1]} : vector<16x16xf32> to vector<1x16xf32>
    %147 = vector.broadcast %145 : vector<16x1xf32> to vector<16x16xf32>
    %148 = vector.broadcast %146 : vector<1x16xf32> to vector<16x16xf32>
    %149 = arith.mulf %147, %148 : vector<16x16xf32>
    %150 = arith.addf %144, %149 : vector<16x16xf32>
    %151 = vector.extract_strided_slice %118 {offsets = [80, 0], sizes = [16, 1], strides = [1, 1]} : vector<256x1xf32> to vector<16x1xf32>
    %152 = vector.extract_strided_slice %120 {offsets = [5, 0], sizes = [1, 16], strides = [1, 1]} : vector<16x16xf32> to vector<1x16xf32>
    %153 = vector.broadcast %151 : vector<16x1xf32> to vector<16x16xf32>
    %154 = vector.broadcast %152 : vector<1x16xf32> to vector<16x16xf32>
    %155 = arith.mulf %153, %154 : vector<16x16xf32>
    %156 = arith.addf %150, %155 : vector<16x16xf32>
    %157 = vector.extract_strided_slice %118 {offsets = [96, 0], sizes = [16, 1], strides = [1, 1]} : vector<256x1xf32> to vector<16x1xf32>
    %158 = vector.extract_strided_slice %120 {offsets = [6, 0], sizes = [1, 16], strides = [1, 1]} : vector<16x16xf32> to vector<1x16xf32>
    %159 = vector.broadcast %157 : vector<16x1xf32> to vector<16x16xf32>
    %160 = vector.broadcast %158 : vector<1x16xf32> to vector<16x16xf32>
    %161 = arith.mulf %159, %160 : vector<16x16xf32>
    %162 = arith.addf %156, %161 : vector<16x16xf32>
    %163 = vector.extract_strided_slice %118 {offsets = [112, 0], sizes = [16, 1], strides = [1, 1]} : vector<256x1xf32> to vector<16x1xf32>
    %164 = vector.extract_strided_slice %120 {offsets = [7, 0], sizes = [1, 16], strides = [1, 1]} : vector<16x16xf32> to vector<1x16xf32>
    %165 = vector.broadcast %163 : vector<16x1xf32> to vector<16x16xf32>
    %166 = vector.broadcast %164 : vector<1x16xf32> to vector<16x16xf32>
    %167 = arith.mulf %165, %166 : vector<16x16xf32>
    %168 = arith.addf %162, %167 : vector<16x16xf32>
    %169 = vector.extract_strided_slice %118 {offsets = [128, 0], sizes = [16, 1], strides = [1, 1]} : vector<256x1xf32> to vector<16x1xf32>
    %170 = vector.extract_strided_slice %120 {offsets = [8, 0], sizes = [1, 16], strides = [1, 1]} : vector<16x16xf32> to vector<1x16xf32>
    %171 = vector.broadcast %169 : vector<16x1xf32> to vector<16x16xf32>
    %172 = vector.broadcast %170 : vector<1x16xf32> to vector<16x16xf32>
    %173 = arith.mulf %171, %172 : vector<16x16xf32>
    %174 = arith.addf %168, %173 : vector<16x16xf32>
    %175 = vector.extract_strided_slice %118 {offsets = [144, 0], sizes = [16, 1], strides = [1, 1]} : vector<256x1xf32> to vector<16x1xf32>
    %176 = vector.extract_strided_slice %120 {offsets = [9, 0], sizes = [1, 16], strides = [1, 1]} : vector<16x16xf32> to vector<1x16xf32>
    %177 = vector.broadcast %175 : vector<16x1xf32> to vector<16x16xf32>
    %178 = vector.broadcast %176 : vector<1x16xf32> to vector<16x16xf32>
    %179 = arith.mulf %177, %178 : vector<16x16xf32>
    %180 = arith.addf %174, %179 : vector<16x16xf32>
    %181 = vector.extract_strided_slice %118 {offsets = [160, 0], sizes = [16, 1], strides = [1, 1]} : vector<256x1xf32> to vector<16x1xf32>
    %182 = vector.extract_strided_slice %120 {offsets = [10, 0], sizes = [1, 16], strides = [1, 1]} : vector<16x16xf32> to vector<1x16xf32>
    %183 = vector.broadcast %181 : vector<16x1xf32> to vector<16x16xf32>
    %184 = vector.broadcast %182 : vector<1x16xf32> to vector<16x16xf32>
    %185 = arith.mulf %183, %184 : vector<16x16xf32>
    %186 = arith.addf %180, %185 : vector<16x16xf32>
    %187 = vector.extract_strided_slice %118 {offsets = [176, 0], sizes = [16, 1], strides = [1, 1]} : vector<256x1xf32> to vector<16x1xf32>
    %188 = vector.extract_strided_slice %120 {offsets = [11, 0], sizes = [1, 16], strides = [1, 1]} : vector<16x16xf32> to vector<1x16xf32>
    %189 = vector.broadcast %187 : vector<16x1xf32> to vector<16x16xf32>
    %190 = vector.broadcast %188 : vector<1x16xf32> to vector<16x16xf32>
    %191 = arith.mulf %189, %190 : vector<16x16xf32>
    %192 = arith.addf %186, %191 : vector<16x16xf32>
    %193 = vector.extract_strided_slice %118 {offsets = [192, 0], sizes = [16, 1], strides = [1, 1]} : vector<256x1xf32> to vector<16x1xf32>
    %194 = vector.extract_strided_slice %120 {offsets = [12, 0], sizes = [1, 16], strides = [1, 1]} : vector<16x16xf32> to vector<1x16xf32>
    %195 = vector.broadcast %193 : vector<16x1xf32> to vector<16x16xf32>
    %196 = vector.broadcast %194 : vector<1x16xf32> to vector<16x16xf32>
    %197 = arith.mulf %195, %196 : vector<16x16xf32>
    %198 = arith.addf %192, %197 : vector<16x16xf32>
    %199 = vector.extract_strided_slice %118 {offsets = [208, 0], sizes = [16, 1], strides = [1, 1]} : vector<256x1xf32> to vector<16x1xf32>
    %200 = vector.extract_strided_slice %120 {offsets = [13, 0], sizes = [1, 16], strides = [1, 1]} : vector<16x16xf32> to vector<1x16xf32>
    %201 = vector.broadcast %199 : vector<16x1xf32> to vector<16x16xf32>
    %202 = vector.broadcast %200 : vector<1x16xf32> to vector<16x16xf32>
    %203 = arith.mulf %201, %202 : vector<16x16xf32>
    %204 = arith.addf %198, %203 : vector<16x16xf32>
    %205 = vector.extract_strided_slice %118 {offsets = [224, 0], sizes = [16, 1], strides = [1, 1]} : vector<256x1xf32> to vector<16x1xf32>
    %206 = vector.extract_strided_slice %120 {offsets = [14, 0], sizes = [1, 16], strides = [1, 1]} : vector<16x16xf32> to vector<1x16xf32>
    %207 = vector.broadcast %205 : vector<16x1xf32> to vector<16x16xf32>
    %208 = vector.broadcast %206 : vector<1x16xf32> to vector<16x16xf32>
    %209 = arith.mulf %207, %208 : vector<16x16xf32>
    %210 = arith.addf %204, %209 : vector<16x16xf32>
    %211 = vector.extract_strided_slice %118 {offsets = [240, 0], sizes = [16, 1], strides = [1, 1]} : vector<256x1xf32> to vector<16x1xf32>
    %212 = vector.extract_strided_slice %120 {offsets = [15, 0], sizes = [1, 16], strides = [1, 1]} : vector<16x16xf32> to vector<1x16xf32>
    %213 = vector.broadcast %211 : vector<16x1xf32> to vector<16x16xf32>
    %214 = vector.broadcast %212 : vector<1x16xf32> to vector<16x16xf32>
    %215 = arith.mulf %213, %214 : vector<16x16xf32>
    %216 = arith.addf %210, %215 : vector<16x16xf32>
    %c0_92 = arith.constant 0 : index
    %c0_93 = arith.constant 0 : index
    %217 = vector.load %arg25[%c0_92, %c0_93] : memref<16x32xf32, #tpu.memory_space<vmem>>, vector<16x16xf32>
    tpu.vector_store %arg25[%c0_92, %c0_93], %216 {strides = array<i32>} : memref<16x32xf32, #tpu.memory_space<vmem>>, vector<16x16xf32>,
    %c1 = arith.constant 1 : index
    %c0_94 = arith.constant 0 : index
    %c0_95 = arith.constant 0 : index
    %218 = vector.load %arg9[%c1, %c0_94, %c0_95] : memref<2x16x64xf32, #tpu.memory_space<vmem>>, vector<1x16x64xf32>
    %219 = vector.shape_cast %218 : vector<1x16x64xf32> to vector<16x64xf32>
    %cst_96 = arith.constant dense<0.000000e+00> : vector<16x64xf32>
    %220 = tpu.matmul %216, %219, %cst_96 {dimension_numbers = #tpu.dot_dimension_numbers<[1], [0], [0], [1], [0, 0, 1, 1], [], []>} : vector<16x16xf32>, vector<16x64xf32>, vector<16x64xf32> -> vector<16x64xf32>
    %221 = arith.mulf %220, %0 : vector<16x64xf32>
    %cst_97 = arith.constant dense<0.000000e+00> : vector<16x16xf32>
    %222 = tpu.matmul %221, %4, %cst_97 {dimension_numbers = #tpu.dot_dimension_numbers<[1], [0], [0], [1], [0, 0, 1, 1], [], []>} : vector<16x64xf32>, vector<64x16xf32>, vector<16x16xf32> -> vector<16x16xf32>
    %c1_98 = arith.constant 1 : index
    %c0_99 = arith.constant 0 : index
    %c0_100 = arith.constant 0 : index
    %223 = vector.load %arg8[%c1_98, %c0_99, %c0_100] : memref<2x16x16xf32, #tpu.memory_space<vmem>>, vector<1x16x16xf32>
    %224 = vector.shape_cast %223 : vector<1x16x16xf32> to vector<16x16xf32>
    %cst_101 = arith.constant dense<0.000000e+00> : vector<16x16xf32>
    %225 = tpu.matmul %216, %224, %cst_101 {dimension_numbers = #tpu.dot_dimension_numbers<[1], [0], [0], [1], [0, 0, 1, 1], [], []>} : vector<16x16xf32>, vector<16x16xf32>, vector<16x16xf32> -> vector<16x16xf32>
    %226 = vector.extract_strided_slice %39 {offsets = [0, 48], sizes = [64, 48], strides = [1, 1]} : vector<64x96xf32> to vector<64x48xf32>
    %cst_102 = arith.constant dense<0.000000e+00> : vector<64x16xf32>
    %227 = tpu.matmul %2, %225, %cst_102 {dimension_numbers = #tpu.dot_dimension_numbers<[1], [0], [0], [1], [0, 0, 1, 1], [], []>} : vector<64x16xf32>, vector<16x16xf32>, vector<64x16xf32> -> vector<64x16xf32>
    %cst_103 = arith.constant dense<0.000000e+00> : vector<64x48xf32>
    %228 = tpu.matmul %227, %5, %cst_103 {dimension_numbers = #tpu.dot_dimension_numbers<[1], [0], [0], [1], [0, 0, 1, 1], [], []>} : vector<64x16xf32>, vector<16x48xf32>, vector<64x48xf32> -> vector<64x48xf32>
    %229 = arith.mulf %226, %228 : vector<64x48xf32>
    %cst_104 = arith.constant dense<0.000000e+00> : vector<64x144xf32>
    %230 = tpu.matmul %229, %6, %cst_104 {dimension_numbers = #tpu.dot_dimension_numbers<[1], [0], [0], [1], [0, 0, 1, 1], [], []>} : vector<64x48xf32>, vector<48x144xf32>, vector<64x144xf32> -> vector<64x144xf32>
    %231 = arith.mulf %230, %13 : vector<64x144xf32>
    %cst_105 = arith.constant dense<0.000000e+00> : vector<16x144xf32>
    %232 = tpu.matmul %3, %231, %cst_105 {dimension_numbers = #tpu.dot_dimension_numbers<[1], [0], [0], [1], [0, 0, 1, 1], [], []>} : vector<16x64xf32>, vector<64x144xf32>, vector<16x144xf32> -> vector<16x144xf32>
    %c1_106 = arith.constant 1 : index
    %c0_107 = arith.constant 0 : index
    %c0_108 = arith.constant 0 : index
    %233 = vector.load %arg14[%c1_106, %c0_107, %c0_108] : memref<2x144x144xf32, #tpu.memory_space<vmem>>, vector<1x144x144xf32>
    %234 = vector.shape_cast %233 : vector<1x144x144xf32> to vector<144x144xf32>
    %cst_109 = arith.constant dense<0.000000e+00> : vector<16x144xf32>
    %235 = tpu.matmul %232, %234, %cst_109 {dimension_numbers = #tpu.dot_dimension_numbers<[1], [0], [0], [1], [0, 0, 1, 1], [], []>} : vector<16x144xf32>, vector<144x144xf32>, vector<16x144xf32> -> vector<16x144xf32>
    %236 = vector.extract_strided_slice %235 {offsets = [0, 0], sizes = [16, 9], strides = [1, 1]} : vector<16x144xf32> to vector<16x9xf32>
    %c0_110 = arith.constant 0 : index
    %c0_111 = arith.constant 0 : index
    %237 = vector.load %arg26[%c0_110, %c0_111] : memref<256x9xf32, #tpu.memory_space<vmem>>, vector<16x9xf32>
    tpu.vector_store %arg26[%c0_110, %c0_111], %236 {strides = array<i32>} : memref<256x9xf32, #tpu.memory_space<vmem>>, vector<16x9xf32>,
    %238 = vector.extract_strided_slice %235 {offsets = [0, 9], sizes = [16, 9], strides = [1, 1]} : vector<16x144xf32> to vector<16x9xf32>
    %c16_112 = arith.constant 16 : index
    %c0_113 = arith.constant 0 : index
    %239 = vector.load %arg26[%c16_112, %c0_113] : memref<256x9xf32, #tpu.memory_space<vmem>>, vector<16x9xf32>
    tpu.vector_store %arg26[%c16_112, %c0_113], %238 {strides = array<i32>} : memref<256x9xf32, #tpu.memory_space<vmem>>, vector<16x9xf32>,
    %240 = vector.extract_strided_slice %235 {offsets = [0, 18], sizes = [16, 9], strides = [1, 1]} : vector<16x144xf32> to vector<16x9xf32>
    %c32_114 = arith.constant 32 : index
    %c0_115 = arith.constant 0 : index
    %241 = vector.load %arg26[%c32_114, %c0_115] : memref<256x9xf32, #tpu.memory_space<vmem>>, vector<16x9xf32>
    tpu.vector_store %arg26[%c32_114, %c0_115], %240 {strides = array<i32>} : memref<256x9xf32, #tpu.memory_space<vmem>>, vector<16x9xf32>,
    %242 = vector.extract_strided_slice %235 {offsets = [0, 27], sizes = [16, 9], strides = [1, 1]} : vector<16x144xf32> to vector<16x9xf32>
    %c48_116 = arith.constant 48 : index
    %c0_117 = arith.constant 0 : index
    %243 = vector.load %arg26[%c48_116, %c0_117] : memref<256x9xf32, #tpu.memory_space<vmem>>, vector<16x9xf32>
    tpu.vector_store %arg26[%c48_116, %c0_117], %242 {strides = array<i32>} : memref<256x9xf32, #tpu.memory_space<vmem>>, vector<16x9xf32>,
    %244 = vector.extract_strided_slice %235 {offsets = [0, 36], sizes = [16, 9], strides = [1, 1]} : vector<16x144xf32> to vector<16x9xf32>
    %c64_118 = arith.constant 64 : index
    %c0_119 = arith.constant 0 : index
    %245 = vector.load %arg26[%c64_118, %c0_119] : memref<256x9xf32, #tpu.memory_space<vmem>>, vector<16x9xf32>
    tpu.vector_store %arg26[%c64_118, %c0_119], %244 {strides = array<i32>} : memref<256x9xf32, #tpu.memory_space<vmem>>, vector<16x9xf32>,
    %246 = vector.extract_strided_slice %235 {offsets = [0, 45], sizes = [16, 9], strides = [1, 1]} : vector<16x144xf32> to vector<16x9xf32>
    %c80_120 = arith.constant 80 : index
    %c0_121 = arith.constant 0 : index
    %247 = vector.load %arg26[%c80_120, %c0_121] : memref<256x9xf32, #tpu.memory_space<vmem>>, vector<16x9xf32>
    tpu.vector_store %arg26[%c80_120, %c0_121], %246 {strides = array<i32>} : memref<256x9xf32, #tpu.memory_space<vmem>>, vector<16x9xf32>,
    %248 = vector.extract_strided_slice %235 {offsets = [0, 54], sizes = [16, 9], strides = [1, 1]} : vector<16x144xf32> to vector<16x9xf32>
    %c96_122 = arith.constant 96 : index
    %c0_123 = arith.constant 0 : index
    %249 = vector.load %arg26[%c96_122, %c0_123] : memref<256x9xf32, #tpu.memory_space<vmem>>, vector<16x9xf32>
    tpu.vector_store %arg26[%c96_122, %c0_123], %248 {strides = array<i32>} : memref<256x9xf32, #tpu.memory_space<vmem>>, vector<16x9xf32>,
    %250 = vector.extract_strided_slice %235 {offsets = [0, 63], sizes = [16, 9], strides = [1, 1]} : vector<16x144xf32> to vector<16x9xf32>
    %c112_124 = arith.constant 112 : index
    %c0_125 = arith.constant 0 : index
    %251 = vector.load %arg26[%c112_124, %c0_125] : memref<256x9xf32, #tpu.memory_space<vmem>>, vector<16x9xf32>
    tpu.vector_store %arg26[%c112_124, %c0_125], %250 {strides = array<i32>} : memref<256x9xf32, #tpu.memory_space<vmem>>, vector<16x9xf32>,
    %252 = vector.extract_strided_slice %235 {offsets = [0, 72], sizes = [16, 9], strides = [1, 1]} : vector<16x144xf32> to vector<16x9xf32>
    %c128_126 = arith.constant 128 : index
    %c0_127 = arith.constant 0 : index
    %253 = vector.load %arg26[%c128_126, %c0_127] : memref<256x9xf32, #tpu.memory_space<vmem>>, vector<16x9xf32>
    tpu.vector_store %arg26[%c128_126, %c0_127], %252 {strides = array<i32>} : memref<256x9xf32, #tpu.memory_space<vmem>>, vector<16x9xf32>,
    %254 = vector.extract_strided_slice %235 {offsets = [0, 81], sizes = [16, 9], strides = [1, 1]} : vector<16x144xf32> to vector<16x9xf32>
    %c144_128 = arith.constant 144 : index
    %c0_129 = arith.constant 0 : index
    %255 = vector.load %arg26[%c144_128, %c0_129] : memref<256x9xf32, #tpu.memory_space<vmem>>, vector<16x9xf32>
    tpu.vector_store %arg26[%c144_128, %c0_129], %254 {strides = array<i32>} : memref<256x9xf32, #tpu.memory_space<vmem>>, vector<16x9xf32>,
    %256 = vector.extract_strided_slice %235 {offsets = [0, 90], sizes = [16, 9], strides = [1, 1]} : vector<16x144xf32> to vector<16x9xf32>
    %c160_130 = arith.constant 160 : index
    %c0_131 = arith.constant 0 : index
    %257 = vector.load %arg26[%c160_130, %c0_131] : memref<256x9xf32, #tpu.memory_space<vmem>>, vector<16x9xf32>
    tpu.vector_store %arg26[%c160_130, %c0_131], %256 {strides = array<i32>} : memref<256x9xf32, #tpu.memory_space<vmem>>, vector<16x9xf32>,
    %258 = vector.extract_strided_slice %235 {offsets = [0, 99], sizes = [16, 9], strides = [1, 1]} : vector<16x144xf32> to vector<16x9xf32>
    %c176_132 = arith.constant 176 : index
    %c0_133 = arith.constant 0 : index
    %259 = vector.load %arg26[%c176_132, %c0_133] : memref<256x9xf32, #tpu.memory_space<vmem>>, vector<16x9xf32>
    tpu.vector_store %arg26[%c176_132, %c0_133], %258 {strides = array<i32>} : memref<256x9xf32, #tpu.memory_space<vmem>>, vector<16x9xf32>,
    %260 = vector.extract_strided_slice %235 {offsets = [0, 108], sizes = [16, 9], strides = [1, 1]} : vector<16x144xf32> to vector<16x9xf32>
    %c192_134 = arith.constant 192 : index
    %c0_135 = arith.constant 0 : index
    %261 = vector.load %arg26[%c192_134, %c0_135] : memref<256x9xf32, #tpu.memory_space<vmem>>, vector<16x9xf32>
    tpu.vector_store %arg26[%c192_134, %c0_135], %260 {strides = array<i32>} : memref<256x9xf32, #tpu.memory_space<vmem>>, vector<16x9xf32>,
    %262 = vector.extract_strided_slice %235 {offsets = [0, 117], sizes = [16, 9], strides = [1, 1]} : vector<16x144xf32> to vector<16x9xf32>
    %c208_136 = arith.constant 208 : index
    %c0_137 = arith.constant 0 : index
    %263 = vector.load %arg26[%c208_136, %c0_137] : memref<256x9xf32, #tpu.memory_space<vmem>>, vector<16x9xf32>
    tpu.vector_store %arg26[%c208_136, %c0_137], %262 {strides = array<i32>} : memref<256x9xf32, #tpu.memory_space<vmem>>, vector<16x9xf32>,
    %264 = vector.extract_strided_slice %235 {offsets = [0, 126], sizes = [16, 9], strides = [1, 1]} : vector<16x144xf32> to vector<16x9xf32>
    %c224_138 = arith.constant 224 : index
    %c0_139 = arith.constant 0 : index
    %265 = vector.load %arg26[%c224_138, %c0_139] : memref<256x9xf32, #tpu.memory_space<vmem>>, vector<16x9xf32>
    tpu.vector_store %arg26[%c224_138, %c0_139], %264 {strides = array<i32>} : memref<256x9xf32, #tpu.memory_space<vmem>>, vector<16x9xf32>,
    %266 = vector.extract_strided_slice %235 {offsets = [0, 135], sizes = [16, 9], strides = [1, 1]} : vector<16x144xf32> to vector<16x9xf32>
    %c240_140 = arith.constant 240 : index
    %c0_141 = arith.constant 0 : index
    %267 = vector.load %arg26[%c240_140, %c0_141] : memref<256x9xf32, #tpu.memory_space<vmem>>, vector<16x9xf32>
    tpu.vector_store %arg26[%c240_140, %c0_141], %266 {strides = array<i32>} : memref<256x9xf32, #tpu.memory_space<vmem>>, vector<16x9xf32>,
    %c0_142 = arith.constant 0 : index
    %c0_143 = arith.constant 0 : index
    %268 = vector.load %arg26[%c0_142, %c0_143] : memref<256x9xf32, #tpu.memory_space<vmem>>, vector<256x9xf32>
    %cst_144 = arith.constant dense<0.000000e+00> : vector<256x109xf32>
    %269 = tpu.matmul %268, %7, %cst_144 {dimension_numbers = #tpu.dot_dimension_numbers<[1], [0], [0], [1], [0, 0, 1, 1], [], []>} : vector<256x9xf32>, vector<9x109xf32>, vector<256x109xf32> -> vector<256x109xf32>
    %270 = vector.extract_strided_slice %269 {offsets = [0, 0], sizes = [256, 1], strides = [1, 1]} : vector<256x109xf32> to vector<256x1xf32>
    %271 = vector.extract_strided_slice %269 {offsets = [0, 1], sizes = [256, 27], strides = [1, 1]} : vector<256x109xf32> to vector<256x27xf32>
    %272 = vector.extract_strided_slice %269 {offsets = [0, 28], sizes = [256, 81], strides = [1, 1]} : vector<256x109xf32> to vector<256x81xf32>
    %cst_145 = arith.constant dense<0.000000e+00> : vector<256x81xf32>
    %273 = tpu.matmul %268, %8, %cst_145 {dimension_numbers = #tpu.dot_dimension_numbers<[1], [0], [0], [1], [0, 0, 1, 1], [], []>} : vector<256x9xf32>, vector<9x81xf32>, vector<256x81xf32> -> vector<256x81xf32>
    %274 = arith.mulf %272, %273 : vector<256x81xf32>
    %cst_146 = arith.constant dense<0.000000e+00> : vector<256x30xf32>
    %275 = tpu.matmul %274, %9, %cst_146 {dimension_numbers = #tpu.dot_dimension_numbers<[1], [0], [0], [1], [0, 0, 1, 1], [], []>} : vector<256x81xf32>, vector<81x30xf32>, vector<256x30xf32> -> vector<256x30xf32>
    %276 = vector.extract_strided_slice %275 {offsets = [0, 0], sizes = [256, 3], strides = [1, 1]} : vector<256x30xf32> to vector<256x3xf32>
    %277 = vector.extract_strided_slice %275 {offsets = [0, 3], sizes = [256, 27], strides = [1, 1]} : vector<256x30xf32> to vector<256x27xf32>
    %278 = arith.mulf %271, %277 : vector<256x27xf32>
    %cst_147 = arith.constant dense<0.000000e+00> : vector<256x3xf32>
    %279 = tpu.matmul %278, %10, %cst_147 {dimension_numbers = #tpu.dot_dimension_numbers<[1], [0], [0], [1], [0, 0, 1, 1], [], []>} : vector<256x27xf32>, vector<27x3xf32>, vector<256x3xf32> -> vector<256x3xf32>
    %280 = vector.extract_strided_slice %42 {offsets = [0, 7], sizes = [256, 7], strides = [1, 1]} : vector<256x14xf32> to vector<256x7xf32>
    %281 = vector.extract_strided_slice %280 {offsets = [0, 0], sizes = [256, 1], strides = [1, 1]} : vector<256x7xf32> to vector<256x1xf32>
    %282 = arith.mulf %270, %281 : vector<256x1xf32>
    %283 = vector.extract_strided_slice %280 {offsets = [0, 1], sizes = [256, 3], strides = [1, 1]} : vector<256x7xf32> to vector<256x3xf32>
    %284 = arith.mulf %276, %283 : vector<256x3xf32>
    %cst_148 = arith.constant dense<0.000000e+00> : vector<256xf32>
    %285 = vector.multi_reduction <add>, %284, %cst_148 [1] : vector<256x3xf32> to vector<256xf32>
    %286 = vector.shape_cast %285 : vector<256xf32> to vector<256x1xf32>
    %287 = arith.addf %282, %286 : vector<256x1xf32>
    %288 = vector.extract_strided_slice %280 {offsets = [0, 4], sizes = [256, 3], strides = [1, 1]} : vector<256x7xf32> to vector<256x3xf32>
    %289 = arith.mulf %279, %288 : vector<256x3xf32>
    %cst_149 = arith.constant dense<0.000000e+00> : vector<256xf32>
    %290 = vector.multi_reduction <add>, %289, %cst_149 [1] : vector<256x3xf32> to vector<256xf32>
    %291 = vector.shape_cast %290 : vector<256xf32> to vector<256x1xf32>
    %292 = arith.addf %287, %291 : vector<256x1xf32>
    %c1_150 = arith.constant 1 : index
    %c0_151 = arith.constant 0 : index
    %c0_152 = arith.constant 0 : index
    %293 = vector.load %arg16[%c1_150, %c0_151, %c0_152] : memref<2x16x16xf32, #tpu.memory_space<vmem>>, vector<1x16x16xf32>
    %294 = vector.shape_cast %293 : vector<1x16x16xf32> to vector<16x16xf32>
    %295 = vector.extract_strided_slice %292 {offsets = [0, 0], sizes = [16, 1], strides = [1, 1]} : vector<256x1xf32> to vector<16x1xf32>
    %296 = vector.extract_strided_slice %294 {offsets = [0, 0], sizes = [1, 16], strides = [1, 1]} : vector<16x16xf32> to vector<1x16xf32>
    %297 = vector.broadcast %295 : vector<16x1xf32> to vector<16x16xf32>
    %298 = vector.broadcast %296 : vector<1x16xf32> to vector<16x16xf32>
    %299 = arith.mulf %297, %298 : vector<16x16xf32>
    %300 = arith.addf %222, %299 : vector<16x16xf32>
    %301 = vector.extract_strided_slice %292 {offsets = [16, 0], sizes = [16, 1], strides = [1, 1]} : vector<256x1xf32> to vector<16x1xf32>
    %302 = vector.extract_strided_slice %294 {offsets = [1, 0], sizes = [1, 16], strides = [1, 1]} : vector<16x16xf32> to vector<1x16xf32>
    %303 = vector.broadcast %301 : vector<16x1xf32> to vector<16x16xf32>
    %304 = vector.broadcast %302 : vector<1x16xf32> to vector<16x16xf32>
    %305 = arith.mulf %303, %304 : vector<16x16xf32>
    %306 = arith.addf %300, %305 : vector<16x16xf32>
    %307 = vector.extract_strided_slice %292 {offsets = [32, 0], sizes = [16, 1], strides = [1, 1]} : vector<256x1xf32> to vector<16x1xf32>
    %308 = vector.extract_strided_slice %294 {offsets = [2, 0], sizes = [1, 16], strides = [1, 1]} : vector<16x16xf32> to vector<1x16xf32>
    %309 = vector.broadcast %307 : vector<16x1xf32> to vector<16x16xf32>
    %310 = vector.broadcast %308 : vector<1x16xf32> to vector<16x16xf32>
    %311 = arith.mulf %309, %310 : vector<16x16xf32>
    %312 = arith.addf %306, %311 : vector<16x16xf32>
    %313 = vector.extract_strided_slice %292 {offsets = [48, 0], sizes = [16, 1], strides = [1, 1]} : vector<256x1xf32> to vector<16x1xf32>
    %314 = vector.extract_strided_slice %294 {offsets = [3, 0], sizes = [1, 16], strides = [1, 1]} : vector<16x16xf32> to vector<1x16xf32>
    %315 = vector.broadcast %313 : vector<16x1xf32> to vector<16x16xf32>
    %316 = vector.broadcast %314 : vector<1x16xf32> to vector<16x16xf32>
    %317 = arith.mulf %315, %316 : vector<16x16xf32>
    %318 = arith.addf %312, %317 : vector<16x16xf32>
    %319 = vector.extract_strided_slice %292 {offsets = [64, 0], sizes = [16, 1], strides = [1, 1]} : vector<256x1xf32> to vector<16x1xf32>
    %320 = vector.extract_strided_slice %294 {offsets = [4, 0], sizes = [1, 16], strides = [1, 1]} : vector<16x16xf32> to vector<1x16xf32>
    %321 = vector.broadcast %319 : vector<16x1xf32> to vector<16x16xf32>
    %322 = vector.broadcast %320 : vector<1x16xf32> to vector<16x16xf32>
    %323 = arith.mulf %321, %322 : vector<16x16xf32>
    %324 = arith.addf %318, %323 : vector<16x16xf32>
    %325 = vector.extract_strided_slice %292 {offsets = [80, 0], sizes = [16, 1], strides = [1, 1]} : vector<256x1xf32> to vector<16x1xf32>
    %326 = vector.extract_strided_slice %294 {offsets = [5, 0], sizes = [1, 16], strides = [1, 1]} : vector<16x16xf32> to vector<1x16xf32>
    %327 = vector.broadcast %325 : vector<16x1xf32> to vector<16x16xf32>
    %328 = vector.broadcast %326 : vector<1x16xf32> to vector<16x16xf32>
    %329 = arith.mulf %327, %328 : vector<16x16xf32>
    %330 = arith.addf %324, %329 : vector<16x16xf32>
    %331 = vector.extract_strided_slice %292 {offsets = [96, 0], sizes = [16, 1], strides = [1, 1]} : vector<256x1xf32> to vector<16x1xf32>
    %332 = vector.extract_strided_slice %294 {offsets = [6, 0], sizes = [1, 16], strides = [1, 1]} : vector<16x16xf32> to vector<1x16xf32>
    %333 = vector.broadcast %331 : vector<16x1xf32> to vector<16x16xf32>
    %334 = vector.broadcast %332 : vector<1x16xf32> to vector<16x16xf32>
    %335 = arith.mulf %333, %334 : vector<16x16xf32>
    %336 = arith.addf %330, %335 : vector<16x16xf32>
    %337 = vector.extract_strided_slice %292 {offsets = [112, 0], sizes = [16, 1], strides = [1, 1]} : vector<256x1xf32> to vector<16x1xf32>
    %338 = vector.extract_strided_slice %294 {offsets = [7, 0], sizes = [1, 16], strides = [1, 1]} : vector<16x16xf32> to vector<1x16xf32>
    %339 = vector.broadcast %337 : vector<16x1xf32> to vector<16x16xf32>
    %340 = vector.broadcast %338 : vector<1x16xf32> to vector<16x16xf32>
    %341 = arith.mulf %339, %340 : vector<16x16xf32>
    %342 = arith.addf %336, %341 : vector<16x16xf32>
    %343 = vector.extract_strided_slice %292 {offsets = [128, 0], sizes = [16, 1], strides = [1, 1]} : vector<256x1xf32> to vector<16x1xf32>
    %344 = vector.extract_strided_slice %294 {offsets = [8, 0], sizes = [1, 16], strides = [1, 1]} : vector<16x16xf32> to vector<1x16xf32>
    %345 = vector.broadcast %343 : vector<16x1xf32> to vector<16x16xf32>
    %346 = vector.broadcast %344 : vector<1x16xf32> to vector<16x16xf32>
    %347 = arith.mulf %345, %346 : vector<16x16xf32>
    %348 = arith.addf %342, %347 : vector<16x16xf32>
    %349 = vector.extract_strided_slice %292 {offsets = [144, 0], sizes = [16, 1], strides = [1, 1]} : vector<256x1xf32> to vector<16x1xf32>
    %350 = vector.extract_strided_slice %294 {offsets = [9, 0], sizes = [1, 16], strides = [1, 1]} : vector<16x16xf32> to vector<1x16xf32>
    %351 = vector.broadcast %349 : vector<16x1xf32> to vector<16x16xf32>
    %352 = vector.broadcast %350 : vector<1x16xf32> to vector<16x16xf32>
    %353 = arith.mulf %351, %352 : vector<16x16xf32>
    %354 = arith.addf %348, %353 : vector<16x16xf32>
    %355 = vector.extract_strided_slice %292 {offsets = [160, 0], sizes = [16, 1], strides = [1, 1]} : vector<256x1xf32> to vector<16x1xf32>
    %356 = vector.extract_strided_slice %294 {offsets = [10, 0], sizes = [1, 16], strides = [1, 1]} : vector<16x16xf32> to vector<1x16xf32>
    %357 = vector.broadcast %355 : vector<16x1xf32> to vector<16x16xf32>
    %358 = vector.broadcast %356 : vector<1x16xf32> to vector<16x16xf32>
    %359 = arith.mulf %357, %358 : vector<16x16xf32>
    %360 = arith.addf %354, %359 : vector<16x16xf32>
    %361 = vector.extract_strided_slice %292 {offsets = [176, 0], sizes = [16, 1], strides = [1, 1]} : vector<256x1xf32> to vector<16x1xf32>
    %362 = vector.extract_strided_slice %294 {offsets = [11, 0], sizes = [1, 16], strides = [1, 1]} : vector<16x16xf32> to vector<1x16xf32>
    %363 = vector.broadcast %361 : vector<16x1xf32> to vector<16x16xf32>
    %364 = vector.broadcast %362 : vector<1x16xf32> to vector<16x16xf32>
    %365 = arith.mulf %363, %364 : vector<16x16xf32>
    %366 = arith.addf %360, %365 : vector<16x16xf32>
    %367 = vector.extract_strided_slice %292 {offsets = [192, 0], sizes = [16, 1], strides = [1, 1]} : vector<256x1xf32> to vector<16x1xf32>
    %368 = vector.extract_strided_slice %294 {offsets = [12, 0], sizes = [1, 16], strides = [1, 1]} : vector<16x16xf32> to vector<1x16xf32>
    %369 = vector.broadcast %367 : vector<16x1xf32> to vector<16x16xf32>
    %370 = vector.broadcast %368 : vector<1x16xf32> to vector<16x16xf32>
    %371 = arith.mulf %369, %370 : vector<16x16xf32>
    %372 = arith.addf %366, %371 : vector<16x16xf32>
    %373 = vector.extract_strided_slice %292 {offsets = [208, 0], sizes = [16, 1], strides = [1, 1]} : vector<256x1xf32> to vector<16x1xf32>
    %374 = vector.extract_strided_slice %294 {offsets = [13, 0], sizes = [1, 16], strides = [1, 1]} : vector<16x16xf32> to vector<1x16xf32>
    %375 = vector.broadcast %373 : vector<16x1xf32> to vector<16x16xf32>
    %376 = vector.broadcast %374 : vector<1x16xf32> to vector<16x16xf32>
    %377 = arith.mulf %375, %376 : vector<16x16xf32>
    %378 = arith.addf %372, %377 : vector<16x16xf32>
    %379 = vector.extract_strided_slice %292 {offsets = [224, 0], sizes = [16, 1], strides = [1, 1]} : vector<256x1xf32> to vector<16x1xf32>
    %380 = vector.extract_strided_slice %294 {offsets = [14, 0], sizes = [1, 16], strides = [1, 1]} : vector<16x16xf32> to vector<1x16xf32>
    %381 = vector.broadcast %379 : vector<16x1xf32> to vector<16x16xf32>
    %382 = vector.broadcast %380 : vector<1x16xf32> to vector<16x16xf32>
    %383 = arith.mulf %381, %382 : vector<16x16xf32>
    %384 = arith.addf %378, %383 : vector<16x16xf32>
    %385 = vector.extract_strided_slice %292 {offsets = [240, 0], sizes = [16, 1], strides = [1, 1]} : vector<256x1xf32> to vector<16x1xf32>
    %386 = vector.extract_strided_slice %294 {offsets = [15, 0], sizes = [1, 16], strides = [1, 1]} : vector<16x16xf32> to vector<1x16xf32>
    %387 = vector.broadcast %385 : vector<16x1xf32> to vector<16x16xf32>
    %388 = vector.broadcast %386 : vector<1x16xf32> to vector<16x16xf32>
    %389 = arith.mulf %387, %388 : vector<16x16xf32>
    %390 = arith.addf %384, %389 : vector<16x16xf32>
    %c0_153 = arith.constant 0 : index
    %c16_154 = arith.constant 16 : index
    %391 = vector.load %arg25[%c0_153, %c16_154] : memref<16x32xf32, #tpu.memory_space<vmem>>, vector<16x16xf32>
    tpu.vector_store %arg25[%c0_153, %c16_154], %390 {strides = array<i32>} : memref<16x32xf32, #tpu.memory_space<vmem>>, vector<16x16xf32>,
    return
  }
  func.func @transform_0(%arg0: i32) -> (i32, i32) {
    %c0_i32 = arith.constant 0 : i32
    %c0_i32_0 = arith.constant 0 : i32
    %c0_i32_1 = arith.constant 0 : i32
    return %c0_i32, %c0_i32_0 : i32, i32
  }
  func.func @transform_1(%arg0: i32) -> (i32, i32) {
    %c0_i32 = arith.constant 0 : i32
    %c0_i32_0 = arith.constant 0 : i32
    %c0_i32_1 = arith.constant 0 : i32
    return %c0_i32, %c0_i32_0 : i32, i32
  }
  func.func @transform_2(%arg0: i32) -> (i32, i32) {
    %c0_i32 = arith.constant 0 : i32
    %c0_i32_0 = arith.constant 0 : i32
    %c0_i32_1 = arith.constant 0 : i32
    return %c0_i32, %c0_i32_0 : i32, i32
  }
  func.func @transform_3(%arg0: i32) -> (i32, i32) {
    %c0_i32 = arith.constant 0 : i32
    %c0_i32_0 = arith.constant 0 : i32
    %c0_i32_1 = arith.constant 0 : i32
    return %c0_i32, %c0_i32_0 : i32, i32
  }
  func.func @transform_4(%arg0: i32) -> (i32, i32) {
    %c0_i32 = arith.constant 0 : i32
    %c0_i32_0 = arith.constant 0 : i32
    %c0_i32_1 = arith.constant 0 : i32
    return %c0_i32, %c0_i32_0 : i32, i32
  }
  func.func @transform_5(%arg0: i32) -> (i32, i32) {
    %c0_i32 = arith.constant 0 : i32
    %c0_i32_0 = arith.constant 0 : i32
    %c0_i32_1 = arith.constant 0 : i32
    return %c0_i32, %c0_i32_0 : i32, i32
  }
  func.func @transform_6(%arg0: i32) -> (i32, i32) {
    %c0_i32 = arith.constant 0 : i32
    %c0_i32_0 = arith.constant 0 : i32
    %c0_i32_1 = arith.constant 0 : i32
    return %c0_i32, %c0_i32_0 : i32, i32
  }
  func.func @transform_7(%arg0: i32) -> (i32, i32, i32) {
    %c0_i32 = arith.constant 0 : i32
    %c0_i32_0 = arith.constant 0 : i32
    %c0_i32_1 = arith.constant 0 : i32
    %c0_i32_2 = arith.constant 0 : i32
    return %c0_i32, %c0_i32_0, %c0_i32_1 : i32, i32, i32
  }
  func.func @transform_8(%arg0: i32) -> (i32, i32, i32) {
    %c0_i32 = arith.constant 0 : i32
    %c0_i32_0 = arith.constant 0 : i32
    %c0_i32_1 = arith.constant 0 : i32
    %c0_i32_2 = arith.constant 0 : i32
    return %c0_i32, %c0_i32_0, %c0_i32_1 : i32, i32, i32
  }
  func.func @transform_9(%arg0: i32) -> (i32, i32) {
    %c0_i32 = arith.constant 0 : i32
    %c0_i32_0 = arith.constant 0 : i32
    %c0_i32_1 = arith.constant 0 : i32
    return %c0_i32, %c0_i32_0 : i32, i32
  }
  func.func @transform_10(%arg0: i32) -> (i32, i32) {
    %c0_i32 = arith.constant 0 : i32
    %c0_i32_0 = arith.constant 0 : i32
    %c0_i32_1 = arith.constant 0 : i32
    return %c0_i32, %c0_i32_0 : i32, i32
  }
  func.func @transform_11(%arg0: i32) -> (i32, i32) {
    %c0_i32 = arith.constant 0 : i32
    %c0_i32_0 = arith.constant 0 : i32
    %c0_i32_1 = arith.constant 0 : i32
    return %c0_i32, %c0_i32_0 : i32, i32
  }
  func.func @transform_12(%arg0: i32) -> (i32, i32) {
    %c0_i32 = arith.constant 0 : i32
    %c0_i32_0 = arith.constant 0 : i32
    %c0_i32_1 = arith.constant 0 : i32
    return %c0_i32, %c0_i32_0 : i32, i32
  }
  func.func @transform_13(%arg0: i32) -> (i32, i32, i32) {
    %c0_i32 = arith.constant 0 : i32
    %c0_i32_0 = arith.constant 0 : i32
    %c0_i32_1 = arith.constant 0 : i32
    %c0_i32_2 = arith.constant 0 : i32
    return %c0_i32, %c0_i32_0, %c0_i32_1 : i32, i32, i32
  }
  func.func @transform_14(%arg0: i32) -> (i32, i32) {
    %c0_i32 = arith.constant 0 : i32
    %c0_i32_0 = arith.constant 0 : i32
    %c0_i32_1 = arith.constant 0 : i32
    return %c0_i32, %c0_i32_0 : i32, i32
  }
  func.func @transform_15(%arg0: i32) -> (i32, i32, i32) {
    %c0_i32 = arith.constant 0 : i32
    %c0_i32_0 = arith.constant 0 : i32
    %c0_i32_1 = arith.constant 0 : i32
    %c0_i32_2 = arith.constant 0 : i32
    return %c0_i32, %c0_i32_0, %c0_i32_1 : i32, i32, i32
  }
  func.func @transform_16(%arg0: i32) -> (i32, i32) {
    %c0_i32 = arith.constant 0 : i32
    %c0_i32_0 = arith.constant 0 : i32
    %c0_i32_1 = arith.constant 0 : i32
    return %c0_i32, %c0_i32_0 : i32, i32
  }
  func.func @transform_17(%arg0: i32) -> (i32, i32) {
    %c0_i32 = arith.constant 0 : i32
    %c0_i32_0 = arith.constant 0 : i32
    %c0_i32_1 = arith.constant 0 : i32
    return %c0_i32, %c0_i32_0 : i32, i32
  }
  func.func @transform_18(%arg0: i32) -> (i32, i32) {
    %c0_i32 = arith.constant 0 : i32
    %c0_i32_0 = arith.constant 0 : i32
    %c0_i32_1 = arith.constant 0 : i32
    return %c0_i32, %c0_i32_0 : i32, i32
  }
  func.func @transform_19(%arg0: i32) -> (i32, i32) {
    %c0_i32 = arith.constant 0 : i32
    %c0_i32_0 = arith.constant 0 : i32
    %c0_i32_1 = arith.constant 0 : i32
    return %c0_i32, %c0_i32_0 : i32, i32
  }
  func.func @transform_20(%arg0: i32) -> (i32, i32) {
    %c0_i32 = arith.constant 0 : i32
    %c0_i32_0 = arith.constant 0 : i32
    %c0_i32_1 = arith.constant 0 : i32
    return %c0_i32, %c0_i32_0 : i32, i32
  }
  func.func @transform_21(%arg0: i32) -> (i32, i32) {
    %c0_i32 = arith.constant 0 : i32
    %c0_i32_0 = arith.constant 0 : i32
    %c0_i32_1 = arith.constant 0 : i32
    return %c0_i32, %c0_i32_0 : i32, i32
  }
  func.func @transform_22(%arg0: i32) -> (i32, i32) {
    %c0_i32 = arith.constant 0 : i32
    %c0_i32_0 = arith.constant 0 : i32
    %c0_i32_1 = arith.constant 0 : i32
    return %c0_i32, %c0_i32_0 : i32, i32
  }
  func.func @transform_23(%arg0: i32) -> (i32, i32) {
    %c0_i32 = arith.constant 0 : i32
    %c0_i32_0 = arith.constant 0 : i32
    %c0_i32_1 = arith.constant 0 : i32
    return %c0_i32, %c0_i32_0 : i32, i32
  }
  func.func @transform_24(%arg0: i32) -> (i32, i32) {
    %c0_i32 = arith.constant 0 : i32
    %c0_i32_0 = arith.constant 0 : i32
    %c0_i32_1 = arith.constant 0 : i32
    return %c0_i32, %c0_i32_0 : i32, i32
  }
}

</mosaic_0001>

<llo_original>
// kernel: mace_descriptor_forward.1
$region0: #{mace_descriptor_forward.1}
  #allocation0 [shape = 'u32[]', space=smem, size = 0x4, offset = 0x4, fixed_abs, tag = 'smem constant byte address 0x4 - core index']
  #allocation1 [shape = 'u32[144,128]{1,0:T(1,128)}', space=vmem, size = 0x12000, scoped, tag = 'internal scratch']
  #allocation2 [shape = 'f32[256,9]{1,0:T(8,128)}', space=vmem, size = 0x20000, scoped, tag = 'scratch operand']
  %s0 = inlined_call_operand.vmem [shape: f32[16,16], index: 0, kind: input, shape index: {}]
  %s1 = inlined_call_operand.vmem [shape: f32[16,64], index: 1, kind: input, shape index: {}]
  %s2 = inlined_call_operand.vmem [shape: f32[256,64], index: 2, kind: input, shape index: {}]
  %s3 = inlined_call_operand.vmem [shape: f32[64,9], index: 3, kind: input, shape index: {}]
  %s4 = inlined_call_operand.vmem [shape: f32[64,8], index: 4, kind: input, shape index: {}]
  %s5 = inlined_call_operand.vmem [shape: f32[64,16], index: 5, kind: input, shape index: {}]
  %s6 = inlined_call_operand.vmem [shape: f32[16,64], index: 6, kind: input, shape index: {}]
  %s7 = inlined_call_operand.vmem [shape: f32[2,16,16], index: 7, kind: input, shape index: {}]
  %s8 = inlined_call_operand.vmem [shape: f32[2,16,64], index: 8, kind: input, shape index: {}]
  %s9 = inlined_call_operand.vmem [shape: f32[8,32], index: 9, kind: input, shape index: {}]
  %s10 = inlined_call_operand.vmem [shape: f32[32,32], index: 10, kind: input, shape index: {}]
  %s11 = inlined_call_operand.vmem [shape: f32[32,32], index: 11, kind: input, shape index: {}]
  %s12 = inlined_call_operand.vmem [shape: f32[32,96], index: 12, kind: input, shape index: {}]
  %s13 = inlined_call_operand.vmem [shape: f32[2,144,144], index: 13, kind: input, shape index: {}]
  %s14 = inlined_call_operand.vmem [shape: f32[64,14], index: 14, kind: input, shape index: {}]
  %s15 = inlined_call_operand.vmem [shape: f32[2,16,16], index: 15, kind: input, shape index: {}]
  %s16 = inlined_call_operand.vmem [shape: f32[64,16], index: 16, kind: input, shape index: {}]
  %s17 = inlined_call_operand.vmem [shape: f32[16,48], index: 17, kind: input, shape index: {}]
  %s18 = inlined_call_operand.vmem [shape: f32[48,144], index: 18, kind: input, shape index: {}]
  %s19 = inlined_call_operand.vmem [shape: f32[9,144], index: 19, kind: input, shape index: {}]
  %s20 = inlined_call_operand.vmem [shape: f32[9,109], index: 20, kind: input, shape index: {}]
  %s21 = inlined_call_operand.vmem [shape: f32[9,81], index: 21, kind: input, shape index: {}]
  %s22 = inlined_call_operand.vmem [shape: f32[81,30], index: 22, kind: input, shape index: {}]
  %s23 = inlined_call_operand.vmem [shape: f32[27,3], index: 23, kind: input, shape index: {}]
  %s24 = inlined_call_operand.hbm [shape: f32[16,32], index: 24, kind: output, shape index: {}]
  %s25 = sld [smem:[#allocation0]]
  $region106: #{mace_descriptor_forward.1} parent=0
    _
  %s27 = ssub.s32 1, %s25
  %s28 = scalar_select 0, %s27, %s25
  $region1: #{mace_descriptor_forward.1} parent=0
    #allocation3 [shape = 'u8[8192]{0}', space=vmem, size = 0x2000, scoped, tag = 'output window, operand 0, single buffered']
    #allocation4 [shape = 's32[1]{0}', space=sflag, size = 0x4, scoped, tag = 'scoped memory for mace_descriptor_forward.1']
    %29 = vsyncpa [#allocation4], 0
    // Predicated region
    $region2: #{mace_descriptor_forward.1} parent=1 // pred_check
      _
    $region3: #{mace_descriptor_forward.1} parent=1 // pred_check_branch
      %31 = sbr.rel (0) target = $region5
    $region4: #{mace_descriptor_forward.1} parent=1 // pred_region
      _
    $region5: #{mace_descriptor_forward.1} parent=1 // pred_fallthru
      _
    // Predicated region
    $region6: #{mace_descriptor_forward.1} parent=1 // pred_check
      _
    $region7: #{mace_descriptor_forward.1} parent=1 // pred_check_branch
      %33 = sbr.rel (0) target = $region9
    $region8: #{mace_descriptor_forward.1} parent=1 // pred_region
      _
    $region9: #{mace_descriptor_forward.1} parent=1 // pred_fallthru
      _
    // Predicated region
    $region10: #{mace_descriptor_forward.1} parent=1 // pred_check
      _
    $region11: #{mace_descriptor_forward.1} parent=1 // pred_check_branch
      %35 = sbr.rel (0) target = $region13
    $region12: #{mace_descriptor_forward.1} parent=1 // pred_region
      _
    $region13: #{mace_descriptor_forward.1} parent=1 // pred_fallthru
      _
    // Predicated region
    $region14: #{mace_descriptor_forward.1} parent=1 // pred_check
      _
    $region15: #{mace_descriptor_forward.1} parent=1 // pred_check_branch
      %37 = sbr.rel (0) target = $region17
    $region16: #{mace_descriptor_forward.1} parent=1 // pred_region
      _
    $region17: #{mace_descriptor_forward.1} parent=1 // pred_fallthru
      _
    // Predicated region
    $region18: #{mace_descriptor_forward.1} parent=1 // pred_check
      _
    $region19: #{mace_descriptor_forward.1} parent=1 // pred_check_branch
      %39 = sbr.rel (0) target = $region21
    $region20: #{mace_descriptor_forward.1} parent=1 // pred_region
      _
    $region21: #{mace_descriptor_forward.1} parent=1 // pred_fallthru
      _
    // Predicated region
    $region22: #{mace_descriptor_forward.1} parent=1 // pred_check
      _
    $region23: #{mace_descriptor_forward.1} parent=1 // pred_check_branch
      %41 = sbr.rel (0) target = $region25
    $region24: #{mace_descriptor_forward.1} parent=1 // pred_region
      _
    $region25: #{mace_descriptor_forward.1} parent=1 // pred_fallthru
      _
    // Predicated region
    $region26: #{mace_descriptor_forward.1} parent=1 // pred_check
      _
    $region27: #{mace_descriptor_forward.1} parent=1 // pred_check_branch
      %43 = sbr.rel (0) target = $region29
    $region28: #{mace_descriptor_forward.1} parent=1 // pred_region
      _
    $region29: #{mace_descriptor_forward.1} parent=1 // pred_fallthru
      _
    // Predicated region
    $region30: #{mace_descriptor_forward.1} parent=1 // pred_check
      _
    $region31: #{mace_descriptor_forward.1} parent=1 // pred_check_branch
      %45 = sbr.rel (0) target = $region33
    $region32: #{mace_descriptor_forward.1} parent=1 // pred_region
      _
    $region33: #{mace_descriptor_forward.1} parent=1 // pred_fallthru
      _
    // Predicated region
    $region34: #{mace_descriptor_forward.1} parent=1 // pred_check
      _
    $region35: #{mace_descriptor_forward.1} parent=1 // pred_check_branch
      %47 = sbr.rel (0) target = $region37
    $region36: #{mace_descriptor_forward.1} parent=1 // pred_region
      _
    $region37: #{mace_descriptor_forward.1} parent=1 // pred_fallthru
      _
    // Predicated region
    $region38: #{mace_descriptor_forward.1} parent=1 // pred_check
      _
    $region39: #{mace_descriptor_forward.1} parent=1 // pred_check_branch
      %49 = sbr.rel (0) target = $region41
    $region40: #{mace_descriptor_forward.1} parent=1 // pred_region
      _
    $region41: #{mace_descriptor_forward.1} parent=1 // pred_fallthru
      _
    // Predicated region
    $region42: #{mace_descriptor_forward.1} parent=1 // pred_check
      _
    $region43: #{mace_descriptor_forward.1} parent=1 // pred_check_branch
      %51 = sbr.rel (0) target = $region45
    $region44: #{mace_descriptor_forward.1} parent=1 // pred_region
      _
    $region45: #{mace_descriptor_forward.1} parent=1 // pred_fallthru
      _
    // Predicated region
    $region46: #{mace_descriptor_forward.1} parent=1 // pred_check
      _
    $region47: #{mace_descriptor_forward.1} parent=1 // pred_check_branch
      %53 = sbr.rel (0) target = $region49
    $region48: #{mace_descriptor_forward.1} parent=1 // pred_region
      _
    $region49: #{mace_descriptor_forward.1} parent=1 // pred_fallthru
      _
    // Predicated region
    $region50: #{mace_descriptor_forward.1} parent=1 // pred_check
      _
    $region51: #{mace_descriptor_forward.1} parent=1 // pred_check_branch
      %55 = sbr.rel (0) target = $region53
    $region52: #{mace_descriptor_forward.1} parent=1 // pred_region
      _
    $region53: #{mace_descriptor_forward.1} parent=1 // pred_fallthru
      _
    // Predicated region
    $region54: #{mace_descriptor_forward.1} parent=1 // pred_check
      _
    $region55: #{mace_descriptor_forward.1} parent=1 // pred_check_branch
      %57 = sbr.rel (0) target = $region57
    $region56: #{mace_descriptor_forward.1} parent=1 // pred_region
      _
    $region57: #{mace_descriptor_forward.1} parent=1 // pred_fallthru
      _
    // Predicated region
    $region58: #{mace_descriptor_forward.1} parent=1 // pred_check
      _
    $region59: #{mace_descriptor_forward.1} parent=1 // pred_check_branch
      %59 = sbr.rel (0) target = $region61
    $region60: #{mace_descriptor_forward.1} parent=1 // pred_region
      _
    $region61: #{mace_descriptor_forward.1} parent=1 // pred_fallthru
      _
    // Predicated region
    $region62: #{mace_descriptor_forward.1} parent=1 // pred_check
      _
    $region63: #{mace_descriptor_forward.1} parent=1 // pred_check_branch
      %61 = sbr.rel (0) target = $region65
    $region64: #{mace_descriptor_forward.1} parent=1 // pred_region
      _
    $region65: #{mace_descriptor_forward.1} parent=1 // pred_fallthru
      _
    // Predicated region
    $region66: #{mace_descriptor_forward.1} parent=1 // pred_check
      _
    $region67: #{mace_descriptor_forward.1} parent=1 // pred_check_branch
      %63 = sbr.rel (0) target = $region69
    $region68: #{mace_descriptor_forward.1} parent=1 // pred_region
      _
    $region69: #{mace_descriptor_forward.1} parent=1 // pred_fallthru
      _
    // Predicated region
    $region70: #{mace_descriptor_forward.1} parent=1 // pred_check
      _
    $region71: #{mace_descriptor_forward.1} parent=1 // pred_check_branch
      %65 = sbr.rel (0) target = $region73
    $region72: #{mace_descriptor_forward.1} parent=1 // pred_region
      _
    $region73: #{mace_descriptor_forward.1} parent=1 // pred_fallthru
      _
    // Predicated region
    $region74: #{mace_descriptor_forward.1} parent=1 // pred_check
      _
    $region75: #{mace_descriptor_forward.1} parent=1 // pred_check_branch
      %67 = sbr.rel (0) target = $region77
    $region76: #{mace_descriptor_forward.1} parent=1 // pred_region
      _
    $region77: #{mace_descriptor_forward.1} parent=1 // pred_fallthru
      _
    // Predicated region
    $region78: #{mace_descriptor_forward.1} parent=1 // pred_check
      _
    $region79: #{mace_descriptor_forward.1} parent=1 // pred_check_branch
      %69 = sbr.rel (0) target = $region81
    $region80: #{mace_descriptor_forward.1} parent=1 // pred_region
      _
    $region81: #{mace_descriptor_forward.1} parent=1 // pred_fallthru
      _
    // Predicated region
    $region82: #{mace_descriptor_forward.1} parent=1 // pred_check
      _
    $region83: #{mace_descriptor_forward.1} parent=1 // pred_check_branch
      %71 = sbr.rel (0) target = $region85
    $region84: #{mace_descriptor_forward.1} parent=1 // pred_region
      _
    $region85: #{mace_descriptor_forward.1} parent=1 // pred_fallthru
      _
    // Predicated region
    $region86: #{mace_descriptor_forward.1} parent=1 // pred_check
      _
    $region87: #{mace_descriptor_forward.1} parent=1 // pred_check_branch
      %73 = sbr.rel (0) target = $region89
    $region88: #{mace_descriptor_forward.1} parent=1 // pred_region
      _
    $region89: #{mace_descriptor_forward.1} parent=1 // pred_fallthru
      _
    // Predicated region
    $region90: #{mace_descriptor_forward.1} parent=1 // pred_check
      _
    $region91: #{mace_descriptor_forward.1} parent=1 // pred_check_branch
      %75 = sbr.rel (0) target = $region93
    $region92: #{mace_descriptor_forward.1} parent=1 // pred_region
      _
    $region93: #{mace_descriptor_forward.1} parent=1 // pred_fallthru
      _
    // Predicated region
    $region94: #{mace_descriptor_forward.1} parent=1 // pred_check
      _
    $region95: #{mace_descriptor_forward.1} parent=1 // pred_check_branch
      %77 = sbr.rel (0) target = $region97
    $region96: #{mace_descriptor_forward.1} parent=1 // pred_region
      _
    $region97: #{mace_descriptor_forward.1} parent=1 // pred_fallthru
      _
    %v78 = vld [vmem:[%s1] sm:$0xff]
    %v79 = vld [vmem:[%s1 + $0x8] sm:$0xff]
    %v80 = vld [vmem:[%s4] sm:$0xff]
    %v81 = vld [vmem:[%s4 + $0x8] sm:$0xff]
    %v82 = vld [vmem:[%s4 + $0x10] sm:$0xff]
    %v83 = vld [vmem:[%s4 + $0x18] sm:$0xff]
    %v84 = vld [vmem:[%s4 + $0x20] sm:$0xff]
    %v85 = vld [vmem:[%s4 + $0x28] sm:$0xff]
    %v86 = vld [vmem:[%s4 + $0x30] sm:$0xff]
    %v87 = vld [vmem:[%s4 + $0x38] sm:$0xff]
    %v88 = vld [vmem:[%s5] sm:$0xff]
    %v89 = vld [vmem:[%s5 + $0x8] sm:$0xff]
    %v90 = vld [vmem:[%s5 + $0x10] sm:$0xff]
    %v91 = vld [vmem:[%s5 + $0x18] sm:$0xff]
    %v92 = vld [vmem:[%s5 + $0x20] sm:$0xff]
    %v93 = vld [vmem:[%s5 + $0x28] sm:$0xff]
    %v94 = vld [vmem:[%s5 + $0x30] sm:$0xff]
    %v95 = vld [vmem:[%s5 + $0x38] sm:$0xff]
    %v96 = vld [vmem:[%s6] sm:$0xff]
    %v97 = vld [vmem:[%s6 + $0x8] sm:$0xff]
    %v98 = vld [vmem:[%s16] sm:$0xff]
    %v99 = vld [vmem:[%s16 + $0x8] sm:$0xff]
    %v100 = vld [vmem:[%s16 + $0x10] sm:$0xff]
    %v101 = vld [vmem:[%s16 + $0x18] sm:$0xff]
    %v102 = vld [vmem:[%s16 + $0x20] sm:$0xff]
    %v103 = vld [vmem:[%s16 + $0x28] sm:$0xff]
    %v104 = vld [vmem:[%s16 + $0x30] sm:$0xff]
    %v105 = vld [vmem:[%s16 + $0x38] sm:$0xff]
    %v106 = vld [vmem:[%s17] sm:$0xff]
    %v107 = vld [vmem:[%s17 + $0x8] sm:$0xff]
    %v108 = vld [vmem:[%s18] sm:$0xff]
    %v109 = vld [vmem:[%s18 + $0x8] sm:$0xff]
    %v110 = vld [vmem:[%s18 + $0x10] sm:$0xff]
    %v111 = vld [vmem:[%s18 + $0x18] sm:$0xff]
    %v112 = vld [vmem:[%s18 + $0x20] sm:$0xff]
    %v113 = vld [vmem:[%s18 + $0x28] sm:$0xff]
    %v114 = vld [vmem:[%s18 + $0x30] sm:$0xff]
    %v115 = vld [vmem:[%s18 + $0x38] sm:$0xff]
    %v116 = vld [vmem:[%s18 + $0x40] sm:$0xff]
    %v117 = vld [vmem:[%s18 + $0x48] sm:$0xff]
    %v118 = vld [vmem:[%s18 + $0x50] sm:$0xff]
    %v119 = vld [vmem:[%s18 + $0x58] sm:$0xff]
    %v120 = vld [vmem:[%s20] sm:$0xff]
    %v121 = vld [vmem:[%s20 + $0x8] sm:$0x1]
    %v122 = vld [vmem:[%s21] sm:$0xff]
    %v123 = vld [vmem:[%s21 + $0x8] sm:$0x1]
    %v124 = vld [vmem:[%s22] sm:$0xff]
    %v125 = vld [vmem:[%s22 + $0x8] sm:$0xff]
    %v126 = vld [vmem:[%s22 + $0x10] sm:$0xff]
    %v127 = vld [vmem:[%s22 + $0x18] sm:$0xff]
    %v128 = vld [vmem:[%s22 + $0x20] sm:$0xff]
    %v129 = vld [vmem:[%s22 + $0x28] sm:$0xff]
    %v130 = vld [vmem:[%s22 + $0x30] sm:$0xff]
    %v131 = vld [vmem:[%s22 + $0x38] sm:$0xff]
    %v132 = vld [vmem:[%s22 + $0x40] sm:$0xff]
    %v133 = vld [vmem:[%s22 + $0x48] sm:$0xff]
    %v134 = vld [vmem:[%s22 + $0x50] sm:$0x1]
    %v135 = vld [vmem:[%s23] sm:$0xff]
    %v136 = vld [vmem:[%s23 + $0x8] sm:$0xff]
    %v137 = vld [vmem:[%s23 + $0x10] sm:$0xff]
    %v138 = vld [vmem:[%s23 + $0x18] sm:$0x7]
    %v139 = vld [vmem:[%s3] sm:$0xff]
    %v140 = vld [vmem:[%s3 + $0x8] sm:$0xff]
    %v141 = vld [vmem:[%s3 + $0x10] sm:$0xff]
    %v142 = vld [vmem:[%s3 + $0x18] sm:$0xff]
    %v143 = vld [vmem:[%s3 + $0x20] sm:$0xff]
    %v144 = vld [vmem:[%s3 + $0x28] sm:$0xff]
    %v145 = vld [vmem:[%s3 + $0x30] sm:$0xff]
    %v146 = vld [vmem:[%s3 + $0x38] sm:$0xff]
    %v147 = vld [vmem:[%s19] sm:$0xff]
    %v148 = vld [vmem:[%s19 + $0x8] sm:$0xff]
    %v149 = vld [vmem:[%s19 + $0x10] sm:$0x1]
    %v150 = vld [vmem:[%s19 + $0x18] sm:$0x1]
    %vm151 = vcmask 72704
    %v153 = vsel %vm151, %v139, 0
    %v156 = vsel %vm151, %v140, 0
    %v159 = vsel %vm151, %v141, 0
    %v162 = vsel %vm151, %v142, 0
    %v165 = vsel %vm151, %v143, 0
    %v168 = vsel %vm151, %v144, 0
    %v171 = vsel %vm151, %v145, 0
    %v174 = vsel %vm151, %v146, 0
    %vm176 = vcmask 1040384
    %v178 = vsel %vm176, %v149, 0
    %v181 = vsel %vm176, %v150, 0
    %183 = vmatprep.subr.mxu0 %v148
    %184 = vmatpush1.msra.mxu0 %v147
    %185 = vmatprep.subr.mxu0 %v181
    %186 = vmatpush1.msra.mxu0 %v178
    %187 = vmatprep.subr.mxu0 0.0
    %188 = vmatpush1.msra.mxu0 0.0
    %189 = vmatprep.subr.mxu0 0.0
    %190 = vmatpush1.msra.mxu0 0.0
    %191 = vmatprep.subr.mxu0 0.0
    %192 = vmatpush1.msra.mxu0 0.0
    %193 = vmatprep.subr.mxu0 0.0
    %194 = vmatpush1.msra.mxu0 0.0
    %195 = vmatprep.subr.mxu0 0.0
    %196 = vmatpush1.msra.mxu0 0.0
    %197 = vmatprep.subr.mxu0 0.0
    %198 = vmatpush1.msra.mxu0 0.0
    %199 = vmatprep.subr.mxu0 0.0
    %200 = vmatpush1.msra.mxu0 0.0
    %201 = vmatprep.subr.mxu0 0.0
    %202 = vmatpush1.msra.mxu0 0.0
    %203 = vmatprep.subr.mxu0 0.0
    %204 = vmatpush1.msra.mxu0 0.0
    %205 = vmatprep.subr.mxu0 0.0
    %206 = vmatpush1.msra.mxu0 0.0
    %207 = vmatprep.subr.mxu0 0.0
    %208 = vmatpush1.msra.mxu0 0.0
    %209 = vmatprep.subr.mxu0 0.0
    %210 = vmatpush1.msra.mxu0 0.0
    %211 = vmatprep.subr.mxu0 0.0
    %212 = vmatpush1.msra.mxu0 0.0
    %213 = vmatprep.subr.mxu0 0.0
    %214 = vmatpush1.msra.mxu0 0.0
    %215 = vmatprep.subr.mxu0 0.0
    %216 = vmatpush1.msra.mxu0 0.0
    %217 = vmatprep.subr.mxu0 0.0
    %218 = vmatpush1.msra.mxu0 0.0
    %219 = vmatprep.subr.mxu0 0.0
    %220 = vmatpush1.msra.mxu0 0.0
    %221 = vmatprep.subr.mxu0 0.0
    %222 = vmatpush1.msra.mxu0 0.0
    %223 = vmatprep.subr.mxu0 0.0
    %224 = vmatpush1.msra.mxu0 0.0
    %225 = vmatprep.subr.mxu0 0.0
    %226 = vmatpush1.msra.mxu0 0.0
    %227 = vmatprep.subr.mxu0 0.0
    %228 = vmatpush1.msra.mxu0 0.0
    %229 = vmatprep.subr.mxu0 0.0
    %230 = vmatpush1.msra.mxu0 0.0
    %231 = vmatprep.subr.mxu0 0.0
    %232 = vmatpush1.msra.mxu0 0.0
    %233 = vmatprep.subr.mxu0 0.0
    %234 = vmatpush1.msra.mxu0 0.0
    %235 = vmatprep.subr.mxu0 0.0
    %236 = vmatpush1.msra.mxu0 0.0
    %237 = vmatprep.subr.mxu0 0.0
    %238 = vmatpush1.msra.mxu0 0.0
    %239 = vmatprep.subr.mxu0 0.0
    %240 = vmatpush1.msra.mxu0 0.0
    %241 = vmatprep.subr.mxu0 0.0
    %242 = vmatpush1.msra.mxu0 0.0
    %243 = vmatprep.subr.mxu0 0.0
    %244 = vmatpush1.msra.mxu0 0.0
    %245 = vmatprep.subr.mxu0 0.0
    %246 = vmatpush1.msra.mxu0 0.0
    %247 = vmatprep.mubr.f32.mxu0 0.0
    %248 = vmatmul.mubr.f32.gmra.mrb[0].mxu0 %v153
    %v249 = vpop.f32.mrb[0].mxu0
    %v250 = vadd.f32 0.0, %v249
    %v251 = vpop.f32.mrb[0].mxu0
    %v252 = vadd.f32 0.0, %v251
    %253 = vmatprep.mubr.f32.mxu0 0.0
    %254 = vmatmul.mubr.f32.gmra.mrb[0].mxu0 %v156
    %v255 = vpop.f32.mrb[0].mxu0
    %v256 = vadd.f32 0.0, %v255
    %v257 = vpop.f32.mrb[0].mxu0
    %v258 = vadd.f32 0.0, %v257
    %259 = vmatprep.mubr.f32.mxu0 0.0
    %260 = vmatmul.mubr.f32.gmra.mrb[0].mxu0 %v159
    %v261 = vpop.f32.mrb[0].mxu0
    %v262 = vadd.f32 0.0, %v261
    %v263 = vpop.f32.mrb[0].mxu0
    %v264 = vadd.f32 0.0, %v263
    %265 = vmatprep.mubr.f32.mxu0 0.0
    %266 = vmatmul.mubr.f32.gmra.mrb[0].mxu0 %v162
    %v267 = vpop.f32.mrb[0].mxu0
    %v268 = vadd.f32 0.0, %v267
    %v269 = vpop.f32.mrb[0].mxu0
    %v270 = vadd.f32 0.0, %v269
    %271 = vmatprep.mubr.f32.mxu0 0.0
    %272 = vmatmul.mubr.f32.gmra.mrb[0].mxu0 %v165
    %v273 = vpop.f32.mrb[0].mxu0
    %v274 = vadd.f32 0.0, %v273
    %v275 = vpop.f32.mrb[0].mxu0
    %v276 = vadd.f32 0.0, %v275
    %277 = vmatprep.mubr.f32.mxu0 0.0
    %278 = vmatmul.mubr.f32.gmra.mrb[0].mxu0 %v168
    %v279 = vpop.f32.mrb[0].mxu0
    %v280 = vadd.f32 0.0, %v279
    %v281 = vpop.f32.mrb[0].mxu0
    %v282 = vadd.f32 0.0, %v281
    %283 = vmatprep.mubr.f32.mxu0 0.0
    %284 = vmatmul.mubr.f32.gmra.mrb[0].mxu0 %v171
    %v285 = vpop.f32.mrb[0].mxu0
    %v286 = vadd.f32 0.0, %v285
    %v287 = vpop.f32.mrb[0].mxu0
    %v288 = vadd.f32 0.0, %v287
    %289 = vmatprep.mubr.f32.mxu0 0.0
    %290 = vmatmul.mubr.f32.gmra.mrb[0].mxu0 %v174
    %v291 = vpop.f32.mrb[0].mxu0
    %v292 = vadd.f32 0.0, %v291
    %v293 = vpop.f32.mrb[0].mxu0
    %v294 = vadd.f32 0.0, %v293
    %295 = vdwg.mxu0
    %v296 = vld [vmem:[%s9] sm:$0xff]
    %vm297 = vcmask 64512
    %v299 = vsel %vm297, %v80, 0
    %v302 = vsel %vm297, %v81, 0
    %v305 = vsel %vm297, %v82, 0
    %v308 = vsel %vm297, %v83, 0
    %v311 = vsel %vm297, %v84, 0
    %v314 = vsel %vm297, %v85, 0
    %v317 = vsel %vm297, %v86, 0
    %v320 = vsel %vm297, %v87, 0
    %322 = vmatprep.subr.mxu0 0.0
    %323 = vmatpush1.msra.mxu0 %v296
    %324 = vmatprep.subr.mxu0 0.0
    %325 = vmatpush1.msra.mxu0 0.0
    %326 = vmatprep.subr.mxu0 0.0
    %327 = vmatpush1.msra.mxu0 0.0
    %328 = vmatprep.subr.mxu0 0.0
    %329 = vmatpush1.msra.mxu0 0.0
    %330 = vmatprep.subr.mxu0 0.0
    %331 = vmatpush1.msra.mxu0 0.0
    %332 = vmatprep.subr.mxu0 0.0
    %333 = vmatpush1.msra.mxu0 0.0
    %334 = vmatprep.subr.mxu0 0.0
    %335 = vmatpush1.msra.mxu0 0.0
    %336 = vmatprep.subr.mxu0 0.0
    %337 = vmatpush1.msra.mxu0 0.0
    %338 = vmatprep.subr.mxu0 0.0
    %339 = vmatpush1.msra.mxu0 0.0
    %340 = vmatprep.subr.mxu0 0.0
    %341 = vmatpush1.msra.mxu0 0.0
    %342 = vmatprep.subr.mxu0 0.0
    %343 = vmatpush1.msra.mxu0 0.0
    %344 = vmatprep.subr.mxu0 0.0
    %345 = vmatpush1.msra.mxu0 0.0
    %346 = vmatprep.subr.mxu0 0.0
    %347 = vmatpush1.msra.mxu0 0.0
    %348 = vmatprep.subr.mxu0 0.0
    %349 = vmatpush1.msra.mxu0 0.0
    %350 = vmatprep.subr.mxu0 0.0
    %351 = vmatpush1.msra.mxu0 0.0
    %352 = vmatprep.subr.mxu0 0.0
    %353 = vmatpush1.msra.mxu0 0.0
    %354 = vmatprep.subr.mxu0 0.0
    %355 = vmatpush1.msra.mxu0 0.0
    %356 = vmatprep.subr.mxu0 0.0
    %357 = vmatpush1.msra.mxu0 0.0
    %358 = vmatprep.subr.mxu0 0.0
    %359 = vmatpush1.msra.mxu0 0.0
    %360 = vmatprep.subr.mxu0 0.0
    %361 = vmatpush1.msra.mxu0 0.0
    %362 = vmatprep.subr.mxu0 0.0
    %363 = vmatpush1.msra.mxu0 0.0
    %364 = vmatprep.subr.mxu0 0.0
    %365 = vmatpush1.msra.mxu0 0.0
    %366 = vmatprep.subr.mxu0 0.0
    %367 = vmatpush1.msra.mxu0 0.0
    %368 = vmatprep.subr.mxu0 0.0
    %369 = vmatpush1.msra.mxu0 0.0
    %370 = vmatprep.subr.mxu0 0.0
    %371 = vmatpush1.msra.mxu0 0.0
    %372 = vmatprep.subr.mxu0 0.0
    %373 = vmatpush1.msra.mxu0 0.0
    %374 = vmatprep.subr.mxu0 0.0
    %375 = vmatpush1.msra.mxu0 0.0
    %376 = vmatprep.subr.mxu0 0.0
    %377 = vmatpush1.msra.mxu0 0.0
    %378 = vmatprep.subr.mxu0 0.0
    %379 = vmatpush1.msra.mxu0 0.0
    %380 = vmatprep.subr.mxu0 0.0
    %381 = vmatpush1.msra.mxu0 0.0
    %382 = vmatprep.subr.mxu0 0.0
    %383 = vmatpush1.msra.mxu0 0.0
    %384 = vmatprep.subr.mxu0 0.0
    %385 = vmatpush1.msra.mxu0 0.0
    %386 = vmatprep.mubr.f32.mxu0 0.0
    %387 = vmatmul.mubr.f32.gmra.mrb[0].mxu0 %v299
    %v388 = vpop.f32.mrb[0].mxu0
    %v389 = vadd.f32 0.0, %v388
    %v390 = vpop.f32.mrb[0].mxu0
    %391 = vmatprep.mubr.f32.mxu0 0.0
    %392 = vmatmul.mubr.f32.gmra.mrb[0].mxu0 %v302
    %v393 = vpop.f32.mrb[0].mxu0
    %v394 = vadd.f32 0.0, %v393
    %v395 = vpop.f32.mrb[0].mxu0
    %396 = vmatprep.mubr.f32.mxu0 0.0
    %397 = vmatmul.mubr.f32.gmra.mrb[0].mxu0 %v305
    %v398 = vpop.f32.mrb[0].mxu0
    %v399 = vadd.f32 0.0, %v398
    %v400 = vpop.f32.mrb[0].mxu0
    %401 = vmatprep.mubr.f32.mxu0 0.0
    %402 = vmatmul.mubr.f32.gmra.mrb[0].mxu0 %v308
    %v403 = vpop.f32.mrb[0].mxu0
    %v404 = vadd.f32 0.0, %v403
    %v405 = vpop.f32.mrb[0].mxu0
    %406 = vmatprep.mubr.f32.mxu0 0.0
    %407 = vmatmul.mubr.f32.gmra.mrb[0].mxu0 %v311
    %v408 = vpop.f32.mrb[0].mxu0
    %v409 = vadd.f32 0.0, %v408
    %v410 = vpop.f32.mrb[0].mxu0
    %411 = vmatprep.mubr.f32.mxu0 0.0
    %412 = vmatmul.mubr.f32.gmra.mrb[0].mxu0 %v314
    %v413 = vpop.f32.mrb[0].mxu0
    %v414 = vadd.f32 0.0, %v413
    %v415 = vpop.f32.mrb[0].mxu0
    %416 = vmatprep.mubr.f32.mxu0 0.0
    %417 = vmatmul.mubr.f32.gmra.mrb[0].mxu0 %v317
    %v418 = vpop.f32.mrb[0].mxu0
    %v419 = vadd.f32 0.0, %v418
    %v420 = vpop.f32.mrb[0].mxu0
    %421 = vmatprep.mubr.f32.mxu0 0.0
    %422 = vmatmul.mubr.f32.gmra.mrb[0].mxu0 %v320
    %v423 = vpop.f32.mrb[0].mxu0
    %v424 = vadd.f32 0.0, %v423
    %v425 = vpop.f32.mrb[0].mxu0
    %426 = vdwg.mxu0
    %v427 = vxor.u32 %v389, 2147483648
    %v428 = vxor.u32 %v394, 2147483648
    %v429 = vxor.u32 %v399, 2147483648
    %v430 = vxor.u32 %v404, 2147483648
    %v431 = vxor.u32 %v409, 2147483648
    %v432 = vxor.u32 %v414, 2147483648
    %v433 = vxor.u32 %v419, 2147483648
    %v434 = vxor.u32 %v424, 2147483648
    %v435 = vmul.f32 %v427, 1.442695
    %v436 = vpow.pop %v435
    %v437 = vmul.f32 %v428, 1.442695
    %v438 = vpow.pop %v437
    %v439 = vmul.f32 %v429, 1.442695
    %v440 = vpow.pop %v439
    %v441 = vmul.f32 %v430, 1.442695
    %v442 = vpow.pop %v441
    %v443 = vmul.f32 %v431, 1.442695
    %v444 = vpow.pop %v443
    %v445 = vmul.f32 %v432, 1.442695
    %v446 = vpow.pop %v445
    %v447 = vmul.f32 %v433, 1.442695
    %v448 = vpow.pop %v447
    %v449 = vmul.f32 %v434, 1.442695
    %v450 = vpow.pop %v449
    %v451 = vadd.f32 %v436, 1.0
    %v452 = vadd.f32 %v438, 1.0
    %v453 = vadd.f32 %v440, 1.0
    %v454 = vadd.f32 %v442, 1.0
    %v455 = vadd.f32 %v444, 1.0
    %v456 = vadd.f32 %v446, 1.0
    %v457 = vadd.f32 %v448, 1.0
    %v458 = vadd.f32 %v450, 1.0
    %v459 = vrcp.pop %v451
    %v460 = vmul.f32 1.0, %v459
    %v461 = vrcp.pop %v452
    %v462 = vmul.f32 1.0, %v461
    %v463 = vrcp.pop %v453
    %v464 = vmul.f32 1.0, %v463
    %v465 = vrcp.pop %v454
    %v466 = vmul.f32 1.0, %v465
    %v467 = vrcp.pop %v455
    %v468 = vmul.f32 1.0, %v467
    %v469 = vrcp.pop %v456
    %v470 = vmul.f32 1.0, %v469
    %v471 = vrcp.pop %v457
    %v472 = vmul.f32 1.0, %v471
    %v473 = vrcp.pop %v458
    %v474 = vmul.f32 1.0, %v473
    %v475 = vmul.f32 %v389, %v460
    %v476 = vmul.f32 %v394, %v462
    %v477 = vmul.f32 %v399, %v464
    %v478 = vmul.f32 %v404, %v466
    %v479 = vmul.f32 %v409, %v468
    %v480 = vmul.f32 %v414, %v470
    %v481 = vmul.f32 %v419, %v472
    %v482 = vmul.f32 %v424, %v474
    %v483 = vld [vmem:[%s10] sm:$0xff]
    %v484 = vld [vmem:[%s10 + $0x8] sm:$0xff]
    %v485 = vld [vmem:[%s10 + $0x10] sm:$0xff]
    %v486 = vld [vmem:[%s10 + $0x18] sm:$0xff]
    %vm487 = vcmask 261120
    %v489 = vsel %vm487, %v475, 0
    %v492 = vsel %vm487, %v476, 0
    %v495 = vsel %vm487, %v477, 0
    %v498 = vsel %vm487, %v478, 0
    %v501 = vsel %vm487, %v479, 0
    %v504 = vsel %vm487, %v480, 0
    %v507 = vsel %vm487, %v481, 0
    %v510 = vsel %vm487, %v482, 0
    %512 = vmatprep.subr.mxu0 0.0
    %513 = vmatpush1.msra.mxu0 %v483
    %514 = vmatprep.subr.mxu0 0.0
    %515 = vmatpush1.msra.mxu0 %v484
    %516 = vmatprep.subr.mxu0 0.0
    %517 = vmatpush1.msra.mxu0 %v485
    %518 = vmatprep.subr.mxu0 0.0
    %519 = vmatpush1.msra.mxu0 %v486
    %520 = vmatprep.subr.mxu0 0.0
    %521 = vmatpush1.msra.mxu0 0.0
    %522 = vmatprep.subr.mxu0 0.0
    %523 = vmatpush1.msra.mxu0 0.0
    %524 = vmatprep.subr.mxu0 0.0
    %525 = vmatpush1.msra.mxu0 0.0
    %526 = vmatprep.subr.mxu0 0.0
    %527 = vmatpush1.msra.mxu0 0.0
    %528 = vmatprep.subr.mxu0 0.0
    %529 = vmatpush1.msra.mxu0 0.0
    %530 = vmatprep.subr.mxu0 0.0
    %531 = vmatpush1.msra.mxu0 0.0
    %532 = vmatprep.subr.mxu0 0.0
    %533 = vmatpush1.msra.mxu0 0.0
    %534 = vmatprep.subr.mxu0 0.0
    %535 = vmatpush1.msra.mxu0 0.0
    %536 = vmatprep.subr.mxu0 0.0
    %537 = vmatpush1.msra.mxu0 0.0
    %538 = vmatprep.subr.mxu0 0.0
    %539 = vmatpush1.msra.mxu0 0.0
    %540 = vmatprep.subr.mxu0 0.0
    %541 = vmatpush1.msra.mxu0 0.0
    %542 = vmatprep.subr.mxu0 0.0
    %543 = vmatpush1.msra.mxu0 0.0
    %544 = vmatprep.subr.mxu0 0.0
    %545 = vmatpush1.msra.mxu0 0.0
    %546 = vmatprep.subr.mxu0 0.0
    %547 = vmatpush1.msra.mxu0 0.0
    %548 = vmatprep.subr.mxu0 0.0
    %549 = vmatpush1.msra.mxu0 0.0
    %550 = vmatprep.subr.mxu0 0.0
    %551 = vmatpush1.msra.mxu0 0.0
    %552 = vmatprep.subr.mxu0 0.0
    %553 = vmatpush1.msra.mxu0 0.0
    %554 = vmatprep.subr.mxu0 0.0
    %555 = vmatpush1.msra.mxu0 0.0
    %556 = vmatprep.subr.mxu0 0.0
    %557 = vmatpush1.msra.mxu0 0.0
    %558 = vmatprep.subr.mxu0 0.0
    %559 = vmatpush1.msra.mxu0 0.0
    %560 = vmatprep.subr.mxu0 0.0
    %561 = vmatpush1.msra.mxu0 0.0
    %562 = vmatprep.subr.mxu0 0.0
    %563 = vmatpush1.msra.mxu0 0.0
    %564 = vmatprep.subr.mxu0 0.0
    %565 = vmatpush1.msra.mxu0 0.0
    %566 = vmatprep.subr.mxu0 0.0
    %567 = vmatpush1.msra.mxu0 0.0
    %568 = vmatprep.subr.mxu0 0.0
    %569 = vmatpush1.msra.mxu0 0.0
    %570 = vmatprep.subr.mxu0 0.0
    %571 = vmatpush1.msra.mxu0 0.0
    %572 = vmatprep.subr.mxu0 0.0
    %573 = vmatpush1.msra.mxu0 0.0
    %574 = vmatprep.subr.mxu0 0.0
    %575 = vmatpush1.msra.mxu0 0.0
    %576 = vmatprep.mubr.f32.mxu0 0.0
    %577 = vmatmul.mubr.f32.gmra.mrb[0].mxu0 %v489
    %v578 = vpop.f32.mrb[0].mxu0
    %v579 = vadd.f32 0.0, %v578
    %v580 = vpop.f32.mrb[0].mxu0
    %581 = vmatprep.mubr.f32.mxu0 0.0
    %582 = vmatmul.mubr.f32.gmra.mrb[0].mxu0 %v492
    %v583 = vpop.f32.mrb[0].mxu0
    %v584 = vadd.f32 0.0, %v583
    %v585 = vpop.f32.mrb[0].mxu0
    %586 = vmatprep.mubr.f32.mxu0 0.0
    %587 = vmatmul.mubr.f32.gmra.mrb[0].mxu0 %v495
    %v588 = vpop.f32.mrb[0].mxu0
    %v589 = vadd.f32 0.0, %v588
    %v590 = vpop.f32.mrb[0].mxu0
    %591 = vmatprep.mubr.f32.mxu0 0.0
    %592 = vmatmul.mubr.f32.gmra.mrb[0].mxu0 %v498
    %v593 = vpop.f32.mrb[0].mxu0
    %v594 = vadd.f32 0.0, %v593
    %v595 = vpop.f32.mrb[0].mxu0
    %596 = vmatprep.mubr.f32.mxu0 0.0
    %597 = vmatmul.mubr.f32.gmra.mrb[0].mxu0 %v501
    %v598 = vpop.f32.mrb[0].mxu0
    %v599 = vadd.f32 0.0, %v598
    %v600 = vpop.f32.mrb[0].mxu0
    %601 = vmatprep.mubr.f32.mxu0 0.0
    %602 = vmatmul.mubr.f32.gmra.mrb[0].mxu0 %v504
    %v603 = vpop.f32.mrb[0].mxu0
    %v604 = vadd.f32 0.0, %v603
    %v605 = vpop.f32.mrb[0].mxu0
    %606 = vmatprep.mubr.f32.mxu0 0.0
    %607 = vmatmul.mubr.f32.gmra.mrb[0].mxu0 %v507
    %v608 = vpop.f32.mrb[0].mxu0
    %v609 = vadd.f32 0.0, %v608
    %v610 = vpop.f32.mrb[0].mxu0
    %611 = vmatprep.mubr.f32.mxu0 0.0
    %612 = vmatmul.mubr.f32.gmra.mrb[0].mxu0 %v510
    %v613 = vpop.f32.mrb[0].mxu0
    %v614 = vadd.f32 0.0, %v613
    %v615 = vpop.f32.mrb[0].mxu0
    %616 = vdwg.mxu0
    %v617 = vxor.u32 %v579, 2147483648
    %v618 = vxor.u32 %v584, 2147483648
    %v619 = vxor.u32 %v589, 2147483648
    %v620 = vxor.u32 %v594, 2147483648
    %v621 = vxor.u32 %v599, 2147483648
    %v622 = vxor.u32 %v604, 2147483648
    %v623 = vxor.u32 %v609, 2147483648
    %v624 = vxor.u32 %v614, 2147483648
    %v625 = vmul.f32 %v617, 1.442695
    %v626 = vpow.pop %v625
    %v627 = vmul.f32 %v618, 1.442695
    %v628 = vpow.pop %v627
    %v629 = vmul.f32 %v619, 1.442695
    %v630 = vpow.pop %v629
    %v631 = vmul.f32 %v620, 1.442695
    %v632 = vpow.pop %v631
    %v633 = vmul.f32 %v621, 1.442695
    %v634 = vpow.pop %v633
    %v635 = vmul.f32 %v622, 1.442695
    %v636 = vpow.pop %v635
    %v637 = vmul.f32 %v623, 1.442695
    %v638 = vpow.pop %v637
    %v639 = vmul.f32 %v624, 1.442695
    %v640 = vpow.pop %v639
    %v641 = vadd.f32 %v626, 1.0
    %v642 = vadd.f32 %v628, 1.0
    %v643 = vadd.f32 %v630, 1.0
    %v644 = vadd.f32 %v632, 1.0
    %v645 = vadd.f32 %v634, 1.0
    %v646 = vadd.f32 %v636, 1.0
    %v647 = vadd.f32 %v638, 1.0
    %v648 = vadd.f32 %v640, 1.0
    %v649 = vrcp.pop %v641
    %v650 = vmul.f32 1.0, %v649
    %v651 = vrcp.pop %v642
    %v652 = vmul.f32 1.0, %v651
    %v653 = vrcp.pop %v643
    %v654 = vmul.f32 1.0, %v653
    %v655 = vrcp.pop %v644
    %v656 = vmul.f32 1.0, %v655
    %v657 = vrcp.pop %v645
    %v658 = vmul.f32 1.0, %v657
    %v659 = vrcp.pop %v646
    %v660 = vmul.f32 1.0, %v659
    %v661 = vrcp.pop %v647
    %v662 = vmul.f32 1.0, %v661
    %v663 = vrcp.pop %v648
    %v664 = vmul.f32 1.0, %v663
    %v665 = vmul.f32 %v579, %v650
    %v666 = vmul.f32 %v584, %v652
    %v667 = vmul.f32 %v589, %v654
    %v668 = vmul.f32 %v594, %v656
    %v669 = vmul.f32 %v599, %v658
    %v670 = vmul.f32 %v604, %v660
    %v671 = vmul.f32 %v609, %v662
    %v672 = vmul.f32 %v614, %v664
    %v673 = vld [vmem:[%s11] sm:$0xff]
    %v674 = vld [vmem:[%s11 + $0x8] sm:$0xff]
    %v675 = vld [vmem:[%s11 + $0x10] sm:$0xff]
    %v676 = vld [vmem:[%s11 + $0x18] sm:$0xff]
    %v678 = vsel %vm487, %v665, 0
    %v681 = vsel %vm487, %v666, 0
    %v684 = vsel %vm487, %v667, 0
    %v687 = vsel %vm487, %v668, 0
    %v690 = vsel %vm487, %v669, 0
    %v693 = vsel %vm487, %v670, 0
    %v696 = vsel %vm487, %v671, 0
    %v699 = vsel %vm487, %v672, 0
    %701 = vmatprep.subr.mxu0 0.0
    %702 = vmatpush1.msra.mxu0 %v673
    %703 = vmatprep.subr.mxu0 0.0
    %704 = vmatpush1.msra.mxu0 %v674
    %705 = vmatprep.subr.mxu0 0.0
    %706 = vmatpush1.msra.mxu0 %v675
    %707 = vmatprep.subr.mxu0 0.0
    %708 = vmatpush1.msra.mxu0 %v676
    %709 = vmatprep.subr.mxu0 0.0
    %710 = vmatpush1.msra.mxu0 0.0
    %711 = vmatprep.subr.mxu0 0.0
    %712 = vmatpush1.msra.mxu0 0.0
    %713 = vmatprep.subr.mxu0 0.0
    %714 = vmatpush1.msra.mxu0 0.0
    %715 = vmatprep.subr.mxu0 0.0
    %716 = vmatpush1.msra.mxu0 0.0
    %717 = vmatprep.subr.mxu0 0.0
    %718 = vmatpush1.msra.mxu0 0.0
    %719 = vmatprep.subr.mxu0 0.0
    %720 = vmatpush1.msra.mxu0 0.0
    %721 = vmatprep.subr.mxu0 0.0
    %722 = vmatpush1.msra.mxu0 0.0
    %723 = vmatprep.subr.mxu0 0.0
    %724 = vmatpush1.msra.mxu0 0.0
    %725 = vmatprep.subr.mxu0 0.0
    %726 = vmatpush1.msra.mxu0 0.0
    %727 = vmatprep.subr.mxu0 0.0
    %728 = vmatpush1.msra.mxu0 0.0
    %729 = vmatprep.subr.mxu0 0.0
    %730 = vmatpush1.msra.mxu0 0.0
    %731 = vmatprep.subr.mxu0 0.0
    %732 = vmatpush1.msra.mxu0 0.0
    %733 = vmatprep.subr.mxu0 0.0
    %734 = vmatpush1.msra.mxu0 0.0
    %735 = vmatprep.subr.mxu0 0.0
    %736 = vmatpush1.msra.mxu0 0.0
    %737 = vmatprep.subr.mxu0 0.0
    %738 = vmatpush1.msra.mxu0 0.0
    %739 = vmatprep.subr.mxu0 0.0
    %740 = vmatpush1.msra.mxu0 0.0
    %741 = vmatprep.subr.mxu0 0.0
    %742 = vmatpush1.msra.mxu0 0.0
    %743 = vmatprep.subr.mxu0 0.0
    %744 = vmatpush1.msra.mxu0 0.0
    %745 = vmatprep.subr.mxu0 0.0
    %746 = vmatpush1.msra.mxu0 0.0
    %747 = vmatprep.subr.mxu0 0.0
    %748 = vmatpush1.msra.mxu0 0.0
    %749 = vmatprep.subr.mxu0 0.0
    %750 = vmatpush1.msra.mxu0 0.0
    %751 = vmatprep.subr.mxu0 0.0
    %752 = vmatpush1.msra.mxu0 0.0
    %753 = vmatprep.subr.mxu0 0.0
    %754 = vmatpush1.msra.mxu0 0.0
    %755 = vmatprep.subr.mxu0 0.0
    %756 = vmatpush1.msra.mxu0 0.0
    %757 = vmatprep.subr.mxu0 0.0
    %758 = vmatpush1.msra.mxu0 0.0
    %759 = vmatprep.subr.mxu0 0.0
    %760 = vmatpush1.msra.mxu0 0.0
    %761 = vmatprep.subr.mxu0 0.0
    %762 = vmatpush1.msra.mxu0 0.0
    %763 = vmatprep.subr.mxu0 0.0
    %764 = vmatpush1.msra.mxu0 0.0
    %765 = vmatprep.mubr.f32.mxu0 0.0
    %766 = vmatmul.mubr.f32.gmra.mrb[0].mxu0 %v678
    %v767 = vpop.f32.mrb[0].mxu0
    %v768 = vadd.f32 0.0, %v767
    %v769 = vpop.f32.mrb[0].mxu0
    %770 = vmatprep.mubr.f32.mxu0 0.0
    %771 = vmatmul.mubr.f32.gmra.mrb[0].mxu0 %v681
    %v772 = vpop.f32.mrb[0].mxu0
    %v773 = vadd.f32 0.0, %v772
    %v774 = vpop.f32.mrb[0].mxu0
    %775 = vmatprep.mubr.f32.mxu0 0.0
    %776 = vmatmul.mubr.f32.gmra.mrb[0].mxu0 %v684
    %v777 = vpop.f32.mrb[0].mxu0
    %v778 = vadd.f32 0.0, %v777
    %v779 = vpop.f32.mrb[0].mxu0
    %780 = vmatprep.mubr.f32.mxu0 0.0
    %781 = vmatmul.mubr.f32.gmra.mrb[0].mxu0 %v687
    %v782 = vpop.f32.mrb[0].mxu0
    %v783 = vadd.f32 0.0, %v782
    %v784 = vpop.f32.mrb[0].mxu0
    %785 = vmatprep.mubr.f32.mxu0 0.0
    %786 = vmatmul.mubr.f32.gmra.mrb[0].mxu0 %v690
    %v787 = vpop.f32.mrb[0].mxu0
    %v788 = vadd.f32 0.0, %v787
    %v789 = vpop.f32.mrb[0].mxu0
    %790 = vmatprep.mubr.f32.mxu0 0.0
    %791 = vmatmul.mubr.f32.gmra.mrb[0].mxu0 %v693
    %v792 = vpop.f32.mrb[0].mxu0
    %v793 = vadd.f32 0.0, %v792
    %v794 = vpop.f32.mrb[0].mxu0
    %795 = vmatprep.mubr.f32.mxu0 0.0
    %796 = vmatmul.mubr.f32.gmra.mrb[0].mxu0 %v696
    %v797 = vpop.f32.mrb[0].mxu0
    %v798 = vadd.f32 0.0, %v797
    %v799 = vpop.f32.mrb[0].mxu0
    %800 = vmatprep.mubr.f32.mxu0 0.0
    %801 = vmatmul.mubr.f32.gmra.mrb[0].mxu0 %v699
    %v802 = vpop.f32.mrb[0].mxu0
    %v803 = vadd.f32 0.0, %v802
    %v804 = vpop.f32.mrb[0].mxu0
    %805 = vdwg.mxu0
    %v806 = vxor.u32 %v768, 2147483648
    %v807 = vxor.u32 %v773, 2147483648
    %v808 = vxor.u32 %v778, 2147483648
    %v809 = vxor.u32 %v783, 2147483648
    %v810 = vxor.u32 %v788, 2147483648
    %v811 = vxor.u32 %v793, 2147483648
    %v812 = vxor.u32 %v798, 2147483648
    %v813 = vxor.u32 %v803, 2147483648
    %v814 = vmul.f32 %v806, 1.442695
    %v815 = vpow.pop %v814
    %v816 = vmul.f32 %v807, 1.442695
    %v817 = vpow.pop %v816
    %v818 = vmul.f32 %v808, 1.442695
    %v819 = vpow.pop %v818
    %v820 = vmul.f32 %v809, 1.442695
    %v821 = vpow.pop %v820
    %v822 = vmul.f32 %v810, 1.442695
    %v823 = vpow.pop %v822
    %v824 = vmul.f32 %v811, 1.442695
    %v825 = vpow.pop %v824
    %v826 = vmul.f32 %v812, 1.442695
    %v827 = vpow.pop %v826
    %v828 = vmul.f32 %v813, 1.442695
    %v829 = vpow.pop %v828
    %v830 = vadd.f32 %v815, 1.0
    %v831 = vadd.f32 %v817, 1.0
    %v832 = vadd.f32 %v819, 1.0
    %v833 = vadd.f32 %v821, 1.0
    %v834 = vadd.f32 %v823, 1.0
    %v835 = vadd.f32 %v825, 1.0
    %v836 = vadd.f32 %v827, 1.0
    %v837 = vadd.f32 %v829, 1.0
    %v838 = vrcp.pop %v830
    %v839 = vmul.f32 1.0, %v838
    %v840 = vrcp.pop %v831
    %v841 = vmul.f32 1.0, %v840
    %v842 = vrcp.pop %v832
    %v843 = vmul.f32 1.0, %v842
    %v844 = vrcp.pop %v833
    %v845 = vmul.f32 1.0, %v844
    %v846 = vrcp.pop %v834
    %v847 = vmul.f32 1.0, %v846
    %v848 = vrcp.pop %v835
    %v849 = vmul.f32 1.0, %v848
    %v850 = vrcp.pop %v836
    %v851 = vmul.f32 1.0, %v850
    %v852 = vrcp.pop %v837
    %v853 = vmul.f32 1.0, %v852
    %v854 = vmul.f32 %v768, %v839
    %v855 = vmul.f32 %v773, %v841
    %v856 = vmul.f32 %v778, %v843
    %v857 = vmul.f32 %v783, %v845
    %v858 = vmul.f32 %v788, %v847
    %v859 = vmul.f32 %v793, %v849
    %v860 = vmul.f32 %v798, %v851
    %v861 = vmul.f32 %v803, %v853
    %v862 = vld [vmem:[%s12] sm:$0xff]
    %v863 = vld [vmem:[%s12 + $0x8] sm:$0xff]
    %v864 = vld [vmem:[%s12 + $0x10] sm:$0xff]
    %v865 = vld [vmem:[%s12 + $0x18] sm:$0xff]
    %v867 = vsel %vm487, %v854, 0
    %v870 = vsel %vm487, %v855, 0
    %v873 = vsel %vm487, %v856, 0
    %v876 = vsel %vm487, %v857, 0
    %v879 = vsel %vm487, %v858, 0
    %v882 = vsel %vm487, %v859, 0
    %v885 = vsel %vm487, %v860, 0
    %v888 = vsel %vm487, %v861, 0
    %890 = vmatprep.subr.mxu0 0.0
    %891 = vmatpush1.msra.mxu0 %v862
    %892 = vmatprep.subr.mxu0 0.0
    %893 = vmatpush1.msra.mxu0 %v863
    %894 = vmatprep.subr.mxu0 0.0
    %895 = vmatpush1.msra.mxu0 %v864
    %896 = vmatprep.subr.mxu0 0.0
    %897 = vmatpush1.msra.mxu0 %v865
    %898 = vmatprep.subr.mxu0 0.0
    %899 = vmatpush1.msra.mxu0 0.0
    %900 = vmatprep.subr.mxu0 0.0
    %901 = vmatpush1.msra.mxu0 0.0
    %902 = vmatprep.subr.mxu0 0.0
    %903 = vmatpush1.msra.mxu0 0.0
    %904 = vmatprep.subr.mxu0 0.0
    %905 = vmatpush1.msra.mxu0 0.0
    %906 = vmatprep.subr.mxu0 0.0
    %907 = vmatpush1.msra.mxu0 0.0
    %908 = vmatprep.subr.mxu0 0.0
    %909 = vmatpush1.msra.mxu0 0.0
    %910 = vmatprep.subr.mxu0 0.0
    %911 = vmatpush1.msra.mxu0 0.0
    %912 = vmatprep.subr.mxu0 0.0
    %913 = vmatpush1.msra.mxu0 0.0
    %914 = vmatprep.subr.mxu0 0.0
    %915 = vmatpush1.msra.mxu0 0.0
    %916 = vmatprep.subr.mxu0 0.0
    %917 = vmatpush1.msra.mxu0 0.0
    %918 = vmatprep.subr.mxu0 0.0
    %919 = vmatpush1.msra.mxu0 0.0
    %920 = vmatprep.subr.mxu0 0.0
    %921 = vmatpush1.msra.mxu0 0.0
    %922 = vmatprep.subr.mxu0 0.0
    %923 = vmatpush1.msra.mxu0 0.0
    %924 = vmatprep.subr.mxu0 0.0
    %925 = vmatpush1.msra.mxu0 0.0
    %926 = vmatprep.subr.mxu0 0.0
    %927 = vmatpush1.msra.mxu0 0.0
    %928 = vmatprep.subr.mxu0 0.0
    %929 = vmatpush1.msra.mxu0 0.0
    %930 = vmatprep.subr.mxu0 0.0
    %931 = vmatpush1.msra.mxu0 0.0
    %932 = vmatprep.subr.mxu0 0.0
    %933 = vmatpush1.msra.mxu0 0.0
    %934 = vmatprep.subr.mxu0 0.0
    %935 = vmatpush1.msra.mxu0 0.0
    %936 = vmatprep.subr.mxu0 0.0
    %937 = vmatpush1.msra.mxu0 0.0
    %938 = vmatprep.subr.mxu0 0.0
    %939 = vmatpush1.msra.mxu0 0.0
    %940 = vmatprep.subr.mxu0 0.0
    %941 = vmatpush1.msra.mxu0 0.0
    %942 = vmatprep.subr.mxu0 0.0
    %943 = vmatpush1.msra.mxu0 0.0
    %944 = vmatprep.subr.mxu0 0.0
    %945 = vmatpush1.msra.mxu0 0.0
    %946 = vmatprep.subr.mxu0 0.0
    %947 = vmatpush1.msra.mxu0 0.0
    %948 = vmatprep.subr.mxu0 0.0
    %949 = vmatpush1.msra.mxu0 0.0
    %950 = vmatprep.subr.mxu0 0.0
    %951 = vmatpush1.msra.mxu0 0.0
    %952 = vmatprep.subr.mxu0 0.0
    %953 = vmatpush1.msra.mxu0 0.0
    %954 = vmatprep.mubr.f32.mxu0 0.0
    %955 = vmatmul.mubr.f32.gmra.mrb[0].mxu0 %v867
    %v956 = vpop.f32.mrb[0].mxu0
    %v957 = vadd.f32 0.0, %v956
    %v958 = vpop.f32.mrb[0].mxu0
    %959 = vmatprep.mubr.f32.mxu0 0.0
    %960 = vmatmul.mubr.f32.gmra.mrb[0].mxu0 %v870
    %v961 = vpop.f32.mrb[0].mxu0
    %v962 = vadd.f32 0.0, %v961
    %v963 = vpop.f32.mrb[0].mxu0
    %964 = vmatprep.mubr.f32.mxu0 0.0
    %965 = vmatmul.mubr.f32.gmra.mrb[0].mxu0 %v873
    %v966 = vpop.f32.mrb[0].mxu0
    %v967 = vadd.f32 0.0, %v966
    %v968 = vpop.f32.mrb[0].mxu0
    %969 = vmatprep.mubr.f32.mxu0 0.0
    %970 = vmatmul.mubr.f32.gmra.mrb[0].mxu0 %v876
    %v971 = vpop.f32.mrb[0].mxu0
    %v972 = vadd.f32 0.0, %v971
    %v973 = vpop.f32.mrb[0].mxu0
    %974 = vmatprep.mubr.f32.mxu0 0.0
    %975 = vmatmul.mubr.f32.gmra.mrb[0].mxu0 %v879
    %v976 = vpop.f32.mrb[0].mxu0
    %v977 = vadd.f32 0.0, %v976
    %v978 = vpop.f32.mrb[0].mxu0
    %979 = vmatprep.mubr.f32.mxu0 0.0
    %980 = vmatmul.mubr.f32.gmra.mrb[0].mxu0 %v882
    %v981 = vpop.f32.mrb[0].mxu0
    %v982 = vadd.f32 0.0, %v981
    %v983 = vpop.f32.mrb[0].mxu0
    %984 = vmatprep.mubr.f32.mxu0 0.0
    %985 = vmatmul.mubr.f32.gmra.mrb[0].mxu0 %v885
    %v986 = vpop.f32.mrb[0].mxu0
    %v987 = vadd.f32 0.0, %v986
    %v988 = vpop.f32.mrb[0].mxu0
    %989 = vmatprep.mubr.f32.mxu0 0.0
    %990 = vmatmul.mubr.f32.gmra.mrb[0].mxu0 %v888
    %v991 = vpop.f32.mrb[0].mxu0
    %v992 = vadd.f32 0.0, %v991
    %v993 = vpop.f32.mrb[0].mxu0
    %994 = vdwg.mxu0
    %v995 = vld [vmem:[%s2] sm:$0xff]
    %v996 = vld [vmem:[%s2 + $0x8] sm:$0xff]
    %v997 = vld [vmem:[%s2 + $0x10] sm:$0xff]
    %v998 = vld [vmem:[%s2 + $0x18] sm:$0xff]
    %v999 = vld [vmem:[%s2 + $0x20] sm:$0xff]
    %v1000 = vld [vmem:[%s2 + $0x28] sm:$0xff]
    %v1001 = vld [vmem:[%s2 + $0x30] sm:$0xff]
    %v1002 = vld [vmem:[%s2 + $0x38] sm:$0xff]
    %v1003 = vld [vmem:[%s2 + $0x40] sm:$0xff]
    %v1004 = vld [vmem:[%s2 + $0x48] sm:$0xff]
    %v1005 = vld [vmem:[%s2 + $0x50] sm:$0xff]
    %v1006 = vld [vmem:[%s2 + $0x58] sm:$0xff]
    %v1007 = vld [vmem:[%s2 + $0x60] sm:$0xff]
    %v1008 = vld [vmem:[%s2 + $0x68] sm:$0xff]
    %v1009 = vld [vmem:[%s2 + $0x70] sm:$0xff]
    %v1010 = vld [vmem:[%s2 + $0x78] sm:$0xff]
    %v1011 = vld [vmem:[%s2 + $0x80] sm:$0xff]
    %v1012 = vld [vmem:[%s2 + $0x88] sm:$0xff]
    %v1013 = vld [vmem:[%s2 + $0x90] sm:$0xff]
    %v1014 = vld [vmem:[%s2 + $0x98] sm:$0xff]
    %v1015 = vld [vmem:[%s2 + $0xa0] sm:$0xff]
    %v1016 = vld [vmem:[%s2 + $0xa8] sm:$0xff]
    %v1017 = vld [vmem:[%s2 + $0xb0] sm:$0xff]
    %v1018 = vld [vmem:[%s2 + $0xb8] sm:$0xff]
    %v1019 = vld [vmem:[%s2 + $0xc0] sm:$0xff]
    %v1020 = vld [vmem:[%s2 + $0xc8] sm:$0xff]
    %v1021 = vld [vmem:[%s2 + $0xd0] sm:$0xff]
    %v1022 = vld [vmem:[%s2 + $0xd8] sm:$0xff]
    %v1023 = vld [vmem:[%s2 + $0xe0] sm:$0xff]
    %v1024 = vld [vmem:[%s2 + $0xe8] sm:$0xff]
    %v1025 = vld [vmem:[%s2 + $0xf0] sm:$0xff]
    %v1026 = vld [vmem:[%s2 + $0xf8] sm:$0xff]
    %v1027 = vld [vmem:[%s14] sm:$0xff]
    %v1028 = vld [vmem:[%s14 + $0x8] sm:$0xff]
    %v1029 = vld [vmem:[%s14 + $0x10] sm:$0xff]
    %v1030 = vld [vmem:[%s14 + $0x18] sm:$0xff]
    %v1031 = vld [vmem:[%s14 + $0x20] sm:$0xff]
    %v1032 = vld [vmem:[%s14 + $0x28] sm:$0xff]
    %v1033 = vld [vmem:[%s14 + $0x30] sm:$0xff]
    %v1034 = vld [vmem:[%s14 + $0x38] sm:$0xff]
    %vm1035 = vcmask 523264
    %v1037 = vsel %vm1035, %v995, 0
    %v1040 = vsel %vm1035, %v996, 0
    %v1043 = vsel %vm1035, %v997, 0
    %v1046 = vsel %vm1035, %v998, 0
    %v1049 = vsel %vm1035, %v999, 0
    %v1052 = vsel %vm1035, %v1000, 0
    %v1055 = vsel %vm1035, %v1001, 0
    %v1058 = vsel %vm1035, %v1002, 0
    %v1061 = vsel %vm1035, %v1003, 0
    %v1064 = vsel %vm1035, %v1004, 0
    %v1067 = vsel %vm1035, %v1005, 0
    %v1070 = vsel %vm1035, %v1006, 0
    %v1073 = vsel %vm1035, %v1007, 0
    %v1076 = vsel %vm1035, %v1008, 0
    %v1079 = vsel %vm1035, %v1009, 0
    %v1082 = vsel %vm1035, %v1010, 0
    %v1085 = vsel %vm1035, %v1011, 0
    %v1088 = vsel %vm1035, %v1012, 0
    %v1091 = vsel %vm1035, %v1013, 0
    %v1094 = vsel %vm1035, %v1014, 0
    %v1097 = vsel %vm1035, %v1015, 0
    %v1100 = vsel %vm1035, %v1016, 0
    %v1103 = vsel %vm1035, %v1017, 0
    %v1106 = vsel %vm1035, %v1018, 0
    %v1109 = vsel %vm1035, %v1019, 0
    %v1112 = vsel %vm1035, %v1020, 0
    %v1115 = vsel %vm1035, %v1021, 0
    %v1118 = vsel %vm1035, %v1022, 0
    %v1121 = vsel %vm1035, %v1023, 0
    %v1124 = vsel %vm1035, %v1024, 0
    %v1127 = vsel %vm1035, %v1025, 0
    %v1130 = vsel %vm1035, %v1026, 0
    %1132 = vmatprep.subr.mxu0 0.0
    %1133 = vmatpush1.msra.mxu0 %v1027
    %1134 = vmatprep.subr.mxu0 0.0
    %1135 = vmatpush1.msra.mxu0 %v1028
    %1136 = vmatprep.subr.mxu0 0.0
    %1137 = vmatpush1.msra.mxu0 %v1029
    %1138 = vmatprep.subr.mxu0 0.0
    %1139 = vmatpush1.msra.mxu0 %v1030
    %1140 = vmatprep.subr.mxu0 0.0
    %1141 = vmatpush1.msra.mxu0 %v1031
    %1142 = vmatprep.subr.mxu0 0.0
    %1143 = vmatpush1.msra.mxu0 %v1032
    %1144 = vmatprep.subr.mxu0 0.0
    %1145 = vmatpush1.msra.mxu0 %v1033
    %1146 = vmatprep.subr.mxu0 0.0
    %1147 = vmatpush1.msra.mxu0 %v1034
    %1148 = vmatprep.subr.mxu0 0.0
    %1149 = vmatpush1.msra.mxu0 0.0
    %1150 = vmatprep.subr.mxu0 0.0
    %1151 = vmatpush1.msra.mxu0 0.0
    %1152 = vmatprep.subr.mxu0 0.0
    %1153 = vmatpush1.msra.mxu0 0.0
    %1154 = vmatprep.subr.mxu0 0.0
    %1155 = vmatpush1.msra.mxu0 0.0
    %1156 = vmatprep.subr.mxu0 0.0
    %1157 = vmatpush1.msra.mxu0 0.0
    %1158 = vmatprep.subr.mxu0 0.0
    %1159 = vmatpush1.msra.mxu0 0.0
    %1160 = vmatprep.subr.mxu0 0.0
    %1161 = vmatpush1.msra.mxu0 0.0
    %1162 = vmatprep.subr.mxu0 0.0
    %1163 = vmatpush1.msra.mxu0 0.0
    %1164 = vmatprep.subr.mxu0 0.0
    %1165 = vmatpush1.msra.mxu0 0.0
    %1166 = vmatprep.subr.mxu0 0.0
    %1167 = vmatpush1.msra.mxu0 0.0
    %1168 = vmatprep.subr.mxu0 0.0
    %1169 = vmatpush1.msra.mxu0 0.0
    %1170 = vmatprep.subr.mxu0 0.0
    %1171 = vmatpush1.msra.mxu0 0.0
    %1172 = vmatprep.subr.mxu0 0.0
    %1173 = vmatpush1.msra.mxu0 0.0
    %1174 = vmatprep.subr.mxu0 0.0
    %1175 = vmatpush1.msra.mxu0 0.0
    %1176 = vmatprep.subr.mxu0 0.0
    %1177 = vmatpush1.msra.mxu0 0.0
    %1178 = vmatprep.subr.mxu0 0.0
    %1179 = vmatpush1.msra.mxu0 0.0
    %1180 = vmatprep.subr.mxu0 0.0
    %1181 = vmatpush1.msra.mxu0 0.0
    %1182 = vmatprep.subr.mxu0 0.0
    %1183 = vmatpush1.msra.mxu0 0.0
    %1184 = vmatprep.subr.mxu0 0.0
    %1185 = vmatpush1.msra.mxu0 0.0
    %1186 = vmatprep.subr.mxu0 0.0
    %1187 = vmatpush1.msra.mxu0 0.0
    %1188 = vmatprep.subr.mxu0 0.0
    %1189 = vmatpush1.msra.mxu0 0.0
    %1190 = vmatprep.subr.mxu0 0.0
    %1191 = vmatpush1.msra.mxu0 0.0
    %1192 = vmatprep.subr.mxu0 0.0
    %1193 = vmatpush1.msra.mxu0 0.0
    %1194 = vmatprep.subr.mxu0 0.0
    %1195 = vmatpush1.msra.mxu0 0.0
    %1196 = vmatprep.mubr.f32.mxu0 0.0
    %1197 = vmatmul.mubr.f32.gmra.mrb[0].mxu0 %v1037
    %v1198 = vpop.f32.mrb[0].mxu0
    %v1199 = vadd.f32 0.0, %v1198
    %v1200 = vpop.f32.mrb[0].mxu0
    %1201 = vmatprep.mubr.f32.mxu0 0.0
    %1202 = vmatmul.mubr.f32.gmra.mrb[0].mxu0 %v1040
    %v1203 = vpop.f32.mrb[0].mxu0
    %v1204 = vadd.f32 0.0, %v1203
    %v1205 = vpop.f32.mrb[0].mxu0
    %1206 = vmatprep.mubr.f32.mxu0 0.0
    %1207 = vmatmul.mubr.f32.gmra.mrb[0].mxu0 %v1043
    %v1208 = vpop.f32.mrb[0].mxu0
    %v1209 = vadd.f32 0.0, %v1208
    %v1210 = vpop.f32.mrb[0].mxu0
    %1211 = vmatprep.mubr.f32.mxu0 0.0
    %1212 = vmatmul.mubr.f32.gmra.mrb[0].mxu0 %v1046
    %v1213 = vpop.f32.mrb[0].mxu0
    %v1214 = vadd.f32 0.0, %v1213
    %v1215 = vpop.f32.mrb[0].mxu0
    %1216 = vmatprep.mubr.f32.mxu0 0.0
    %1217 = vmatmul.mubr.f32.gmra.mrb[0].mxu0 %v1049
    %v1218 = vpop.f32.mrb[0].mxu0
    %v1219 = vadd.f32 0.0, %v1218
    %v1220 = vpop.f32.mrb[0].mxu0
    %1221 = vmatprep.mubr.f32.mxu0 0.0
    %1222 = vmatmul.mubr.f32.gmra.mrb[0].mxu0 %v1052
    %v1223 = vpop.f32.mrb[0].mxu0
    %v1224 = vadd.f32 0.0, %v1223
    %v1225 = vpop.f32.mrb[0].mxu0
    %1226 = vmatprep.mubr.f32.mxu0 0.0
    %1227 = vmatmul.mubr.f32.gmra.mrb[0].mxu0 %v1055
    %v1228 = vpop.f32.mrb[0].mxu0
    %v1229 = vadd.f32 0.0, %v1228
    %v1230 = vpop.f32.mrb[0].mxu0
    %1231 = vmatprep.mubr.f32.mxu0 0.0
    %1232 = vmatmul.mubr.f32.gmra.mrb[0].mxu0 %v1058
    %v1233 = vpop.f32.mrb[0].mxu0
    %v1234 = vadd.f32 0.0, %v1233
    %v1235 = vpop.f32.mrb[0].mxu0
    %1236 = vmatprep.mubr.f32.mxu0 0.0
    %1237 = vmatmul.mubr.f32.gmra.mrb[0].mxu0 %v1061
    %v1238 = vpop.f32.mrb[0].mxu0
    %v1239 = vadd.f32 0.0, %v1238
    %v1240 = vpop.f32.mrb[0].mxu0
    %1241 = vmatprep.mubr.f32.mxu0 0.0
    %1242 = vmatmul.mubr.f32.gmra.mrb[0].mxu0 %v1064
    %v1243 = vpop.f32.mrb[0].mxu0
    %v1244 = vadd.f32 0.0, %v1243
    %v1245 = vpop.f32.mrb[0].mxu0
    %1246 = vmatprep.mubr.f32.mxu0 0.0
    %1247 = vmatmul.mubr.f32.gmra.mrb[0].mxu0 %v1067
    %v1248 = vpop.f32.mrb[0].mxu0
    %v1249 = vadd.f32 0.0, %v1248
    %v1250 = vpop.f32.mrb[0].mxu0
    %1251 = vmatprep.mubr.f32.mxu0 0.0
    %1252 = vmatmul.mubr.f32.gmra.mrb[0].mxu0 %v1070
    %v1253 = vpop.f32.mrb[0].mxu0
    %v1254 = vadd.f32 0.0, %v1253
    %v1255 = vpop.f32.mrb[0].mxu0
    %1256 = vmatprep.mubr.f32.mxu0 0.0
    %1257 = vmatmul.mubr.f32.gmra.mrb[0].mxu0 %v1073
    %v1258 = vpop.f32.mrb[0].mxu0
    %v1259 = vadd.f32 0.0, %v1258
    %v1260 = vpop.f32.mrb[0].mxu0
    %1261 = vmatprep.mubr.f32.mxu0 0.0
    %1262 = vmatmul.mubr.f32.gmra.mrb[0].mxu0 %v1076
    %v1263 = vpop.f32.mrb[0].mxu0
    %v1264 = vadd.f32 0.0, %v1263
    %v1265 = vpop.f32.mrb[0].mxu0
    %1266 = vmatprep.mubr.f32.mxu0 0.0
    %1267 = vmatmul.mubr.f32.gmra.mrb[0].mxu0 %v1079
    %v1268 = vpop.f32.mrb[0].mxu0
    %v1269 = vadd.f32 0.0, %v1268
    %v1270 = vpop.f32.mrb[0].mxu0
    %1271 = vmatprep.mubr.f32.mxu0 0.0
    %1272 = vmatmul.mubr.f32.gmra.mrb[0].mxu0 %v1082
    %v1273 = vpop.f32.mrb[0].mxu0
    %v1274 = vadd.f32 0.0, %v1273
    %v1275 = vpop.f32.mrb[0].mxu0
    %1276 = vmatprep.mubr.f32.mxu0 0.0
    %1277 = vmatmul.mubr.f32.gmra.mrb[0].mxu0 %v1085
    %v1278 = vpop.f32.mrb[0].mxu0
    %v1279 = vadd.f32 0.0, %v1278
    %v1280 = vpop.f32.mrb[0].mxu0
    %1281 = vmatprep.mubr.f32.mxu0 0.0
    %1282 = vmatmul.mubr.f32.gmra.mrb[0].mxu0 %v1088
    %v1283 = vpop.f32.mrb[0].mxu0
    %v1284 = vadd.f32 0.0, %v1283
    %v1285 = vpop.f32.mrb[0].mxu0
    %1286 = vmatprep.mubr.f32.mxu0 0.0
    %1287 = vmatmul.mubr.f32.gmra.mrb[0].mxu0 %v1091
    %v1288 = vpop.f32.mrb[0].mxu0
    %v1289 = vadd.f32 0.0, %v1288
    %v1290 = vpop.f32.mrb[0].mxu0
    %1291 = vmatprep.mubr.f32.mxu0 0.0
    %1292 = vmatmul.mubr.f32.gmra.mrb[0].mxu0 %v1094
    %v1293 = vpop.f32.mrb[0].mxu0
    %v1294 = vadd.f32 0.0, %v1293
    %v1295 = vpop.f32.mrb[0].mxu0
    %1296 = vmatprep.mubr.f32.mxu0 0.0
    %1297 = vmatmul.mubr.f32.gmra.mrb[0].mxu0 %v1097
    %v1298 = vpop.f32.mrb[0].mxu0
    %v1299 = vadd.f32 0.0, %v1298
    %v1300 = vpop.f32.mrb[0].mxu0
    %1301 = vmatprep.mubr.f32.mxu0 0.0
    %1302 = vmatmul.mubr.f32.gmra.mrb[0].mxu0 %v1100
    %v1303 = vpop.f32.mrb[0].mxu0
    %v1304 = vadd.f32 0.0, %v1303
    %v1305 = vpop.f32.mrb[0].mxu0
    %1306 = vmatprep.mubr.f32.mxu0 0.0
    %1307 = vmatmul.mubr.f32.gmra.mrb[0].mxu0 %v1103
    %v1308 = vpop.f32.mrb[0].mxu0
    %v1309 = vadd.f32 0.0, %v1308
    %v1310 = vpop.f32.mrb[0].mxu0
    %1311 = vmatprep.mubr.f32.mxu0 0.0
    %1312 = vmatmul.mubr.f32.gmra.mrb[0].mxu0 %v1106
    %v1313 = vpop.f32.mrb[0].mxu0
    %v1314 = vadd.f32 0.0, %v1313
    %v1315 = vpop.f32.mrb[0].mxu0
    %1316 = vmatprep.mubr.f32.mxu0 0.0
    %1317 = vmatmul.mubr.f32.gmra.mrb[0].mxu0 %v1109
    %v1318 = vpop.f32.mrb[0].mxu0
    %v1319 = vadd.f32 0.0, %v1318
    %v1320 = vpop.f32.mrb[0].mxu0
    %1321 = vmatprep.mubr.f32.mxu0 0.0
    %1322 = vmatmul.mubr.f32.gmra.mrb[0].mxu0 %v1112
    %v1323 = vpop.f32.mrb[0].mxu0
    %v1324 = vadd.f32 0.0, %v1323
    %v1325 = vpop.f32.mrb[0].mxu0
    %1326 = vmatprep.mubr.f32.mxu0 0.0
    %1327 = vmatmul.mubr.f32.gmra.mrb[0].mxu0 %v1115
    %v1328 = vpop.f32.mrb[0].mxu0
    %v1329 = vadd.f32 0.0, %v1328
    %v1330 = vpop.f32.mrb[0].mxu0
    %1331 = vmatprep.mubr.f32.mxu0 0.0
    %1332 = vmatmul.mubr.f32.gmra.mrb[0].mxu0 %v1118
    %v1333 = vpop.f32.mrb[0].mxu0
    %v1334 = vadd.f32 0.0, %v1333
    %v1335 = vpop.f32.mrb[0].mxu0
    %1336 = vmatprep.mubr.f32.mxu0 0.0
    %1337 = vmatmul.mubr.f32.gmra.mrb[0].mxu0 %v1121
    %v1338 = vpop.f32.mrb[0].mxu0
    %v1339 = vadd.f32 0.0, %v1338
    %v1340 = vpop.f32.mrb[0].mxu0
    %1341 = vmatprep.mubr.f32.mxu0 0.0
    %1342 = vmatmul.mubr.f32.gmra.mrb[0].mxu0 %v1124
    %v1343 = vpop.f32.mrb[0].mxu0
    %v1344 = vadd.f32 0.0, %v1343
    %v1345 = vpop.f32.mrb[0].mxu0
    %1346 = vmatprep.mubr.f32.mxu0 0.0
    %1347 = vmatmul.mubr.f32.gmra.mrb[0].mxu0 %v1127
    %v1348 = vpop.f32.mrb[0].mxu0
    %v1349 = vadd.f32 0.0, %v1348
    %v1350 = vpop.f32.mrb[0].mxu0
    %1351 = vmatprep.mubr.f32.mxu0 0.0
    %1352 = vmatmul.mubr.f32.gmra.mrb[0].mxu0 %v1130
    %v1353 = vpop.f32.mrb[0].mxu0
    %v1354 = vadd.f32 0.0, %v1353
    %v1355 = vpop.f32.mrb[0].mxu0
    %1356 = vdwg.mxu0
    %v1357 = vld [vmem:[%s0] sm:$0xff]
    %v1358 = vld [vmem:[%s0 + $0x8] sm:$0xff]
    %v1359 = vld [vmem:[%s8] sm:$0xff]
    %v1360 = vld [vmem:[%s8 + $0x8] sm:$0xff]
    %vm1361 = vcmask 130048
    %v1363 = vsel %vm1361, %v1357, 0
    %v1366 = vsel %vm1361, %v1358, 0
    %1368 = vmatprep.subr.mxu0 0.0
    %1369 = vmatpush1.msra.mxu0 %v1359
    %1370 = vmatprep.subr.mxu0 0.0
    %1371 = vmatpush1.msra.mxu0 %v1360
    %1372 = vmatprep.subr.mxu0 0.0
    %1373 = vmatpush1.msra.mxu0 0.0
    %1374 = vmatprep.subr.mxu0 0.0
    %1375 = vmatpush1.msra.mxu0 0.0
    %1376 = vmatprep.subr.mxu0 0.0
    %1377 = vmatpush1.msra.mxu0 0.0
    %1378 = vmatprep.subr.mxu0 0.0
    %1379 = vmatpush1.msra.mxu0 0.0
    %1380 = vmatprep.subr.mxu0 0.0
    %1381 = vmatpush1.msra.mxu0 0.0
    %1382 = vmatprep.subr.mxu0 0.0
    %1383 = vmatpush1.msra.mxu0 0.0
    %1384 = vmatprep.subr.mxu0 0.0
    %1385 = vmatpush1.msra.mxu0 0.0
    %1386 = vmatprep.subr.mxu0 0.0
    %1387 = vmatpush1.msra.mxu0 0.0
    %1388 = vmatprep.subr.mxu0 0.0
    %1389 = vmatpush1.msra.mxu0 0.0
    %1390 = vmatprep.subr.mxu0 0.0
    %1391 = vmatpush1.msra.mxu0 0.0
    %1392 = vmatprep.subr.mxu0 0.0
    %1393 = vmatpush1.msra.mxu0 0.0
    %1394 = vmatprep.subr.mxu0 0.0
    %1395 = vmatpush1.msra.mxu0 0.0
    %1396 = vmatprep.subr.mxu0 0.0
    %1397 = vmatpush1.msra.mxu0 0.0
    %1398 = vmatprep.subr.mxu0 0.0
    %1399 = vmatpush1.msra.mxu0 0.0
    %1400 = vmatprep.subr.mxu0 0.0
    %1401 = vmatpush1.msra.mxu0 0.0
    %1402 = vmatprep.subr.mxu0 0.0
    %1403 = vmatpush1.msra.mxu0 0.0
    %1404 = vmatprep.subr.mxu0 0.0
    %1405 = vmatpush1.msra.mxu0 0.0
    %1406 = vmatprep.subr.mxu0 0.0
    %1407 = vmatpush1.msra.mxu0 0.0
    %1408 = vmatprep.subr.mxu0 0.0
    %1409 = vmatpush1.msra.mxu0 0.0
    %1410 = vmatprep.subr.mxu0 0.0
    %1411 = vmatpush1.msra.mxu0 0.0
    %1412 = vmatprep.subr.mxu0 0.0
    %1413 = vmatpush1.msra.mxu0 0.0
    %1414 = vmatprep.subr.mxu0 0.0
    %1415 = vmatpush1.msra.mxu0 0.0
    %1416 = vmatprep.subr.mxu0 0.0
    %1417 = vmatpush1.msra.mxu0 0.0
    %1418 = vmatprep.subr.mxu0 0.0
    %1419 = vmatpush1.msra.mxu0 0.0
    %1420 = vmatprep.subr.mxu0 0.0
    %1421 = vmatpush1.msra.mxu0 0.0
    %1422 = vmatprep.subr.mxu0 0.0
    %1423 = vmatpush1.msra.mxu0 0.0
    %1424 = vmatprep.subr.mxu0 0.0
    %1425 = vmatpush1.msra.mxu0 0.0
    %1426 = vmatprep.subr.mxu0 0.0
    %1427 = vmatpush1.msra.mxu0 0.0
    %1428 = vmatprep.subr.mxu0 0.0
    %1429 = vmatpush1.msra.mxu0 0.0
    %1430 = vmatprep.subr.mxu0 0.0
    %1431 = vmatpush1.msra.mxu0 0.0
    %1432 = vmatprep.mubr.f32.mxu0 0.0
    %1433 = vmatmul.mubr.f32.gmra.mrb[0].mxu0 %v1363
    %v1434 = vpop.f32.mrb[0].mxu0
    %v1435 = vadd.f32 0.0, %v1434
    %v1436 = vpop.f32.mrb[0].mxu0
    %1437 = vmatprep.mubr.f32.mxu0 0.0
    %1438 = vmatmul.mubr.f32.gmra.mrb[0].mxu0 %v1366
    %v1439 = vpop.f32.mrb[0].mxu0
    %v1440 = vadd.f32 0.0, %v1439
    %v1441 = vpop.f32.mrb[0].mxu0
    %1442 = vdwg.mxu0
    %v1443 = vmul.f32 %v1435, %v78
    %v1444 = vmul.f32 %v1440, %v79
    %v1445 = vld [vmem:[%s7] sm:$0xff]
    %v1446 = vld [vmem:[%s7 + $0x8] sm:$0xff]
    %1447 = vmatprep.subr.mxu0 0.0
    %1448 = vmatpush1.msra.mxu0 %v1445
    %1449 = vmatprep.subr.mxu0 0.0
    %1450 = vmatpush1.msra.mxu0 %v1446
    %1451 = vmatprep.subr.mxu0 0.0
    %1452 = vmatpush1.msra.mxu0 0.0
    %1453 = vmatprep.subr.mxu0 0.0
    %1454 = vmatpush1.msra.mxu0 0.0
    %1455 = vmatprep.subr.mxu0 0.0
    %1456 = vmatpush1.msra.mxu0 0.0
    %1457 = vmatprep.subr.mxu0 0.0
    %1458 = vmatpush1.msra.mxu0 0.0
    %1459 = vmatprep.subr.mxu0 0.0
    %1460 = vmatpush1.msra.mxu0 0.0
    %1461 = vmatprep.subr.mxu0 0.0
    %1462 = vmatpush1.msra.mxu0 0.0
    %1463 = vmatprep.subr.mxu0 0.0
    %1464 = vmatpush1.msra.mxu0 0.0
    %1465 = vmatprep.subr.mxu0 0.0
    %1466 = vmatpush1.msra.mxu0 0.0
    %1467 = vmatprep.subr.mxu0 0.0
    %1468 = vmatpush1.msra.mxu0 0.0
    %1469 = vmatprep.subr.mxu0 0.0
    %1470 = vmatpush1.msra.mxu0 0.0
    %1471 = vmatprep.subr.mxu0 0.0
    %1472 = vmatpush1.msra.mxu0 0.0
    %1473 = vmatprep.subr.mxu0 0.0
    %1474 = vmatpush1.msra.mxu0 0.0
    %1475 = vmatprep.subr.mxu0 0.0
    %1476 = vmatpush1.msra.mxu0 0.0
    %1477 = vmatprep.subr.mxu0 0.0
    %1478 = vmatpush1.msra.mxu0 0.0
    %1479 = vmatprep.subr.mxu0 0.0
    %1480 = vmatpush1.msra.mxu0 0.0
    %1481 = vmatprep.subr.mxu0 0.0
    %1482 = vmatpush1.msra.mxu0 0.0
    %1483 = vmatprep.subr.mxu0 0.0
    %1484 = vmatpush1.msra.mxu0 0.0
    %1485 = vmatprep.subr.mxu0 0.0
    %1486 = vmatpush1.msra.mxu0 0.0
    %1487 = vmatprep.subr.mxu0 0.0
    %1488 = vmatpush1.msra.mxu0 0.0
    %1489 = vmatprep.subr.mxu0 0.0
    %1490 = vmatpush1.msra.mxu0 0.0
    %1491 = vmatprep.subr.mxu0 0.0
    %1492 = vmatpush1.msra.mxu0 0.0
    %1493 = vmatprep.subr.mxu0 0.0
    %1494 = vmatpush1.msra.mxu0 0.0
    %1495 = vmatprep.subr.mxu0 0.0
    %1496 = vmatpush1.msra.mxu0 0.0
    %1497 = vmatprep.subr.mxu0 0.0
    %1498 = vmatpush1.msra.mxu0 0.0
    %1499 = vmatprep.subr.mxu0 0.0
    %1500 = vmatpush1.msra.mxu0 0.0
    %1501 = vmatprep.subr.mxu0 0.0
    %1502 = vmatpush1.msra.mxu0 0.0
    %1503 = vmatprep.subr.mxu0 0.0
    %1504 = vmatpush1.msra.mxu0 0.0
    %1505 = vmatprep.subr.mxu0 0.0
    %1506 = vmatpush1.msra.mxu0 0.0
    %1507 = vmatprep.subr.mxu0 0.0
    %1508 = vmatpush1.msra.mxu0 0.0
    %1509 = vmatprep.subr.mxu0 0.0
    %1510 = vmatpush1.msra.mxu0 0.0
    %1511 = vmatprep.mubr.f32.mxu0 0.0
    %1512 = vmatmul.mubr.f32.gmra.mrb[0].mxu0 %v1363
    %v1513 = vpop.f32.mrb[0].mxu0
    %v1514 = vadd.f32 0.0, %v1513
    %v1515 = vpop.f32.mrb[0].mxu0
    %1516 = vmatprep.mubr.f32.mxu0 0.0
    %1517 = vmatmul.mubr.f32.gmra.mrb[0].mxu0 %v1366
    %v1518 = vpop.f32.mrb[0].mxu0
    %v1519 = vadd.f32 0.0, %v1518
    %v1520 = vpop.f32.mrb[0].mxu0
    %1521 = vdwg.mxu0
    %v1523 = vsel %vm1361, %v88, 0
    %v1526 = vsel %vm1361, %v89, 0
    %v1529 = vsel %vm1361, %v90, 0
    %v1532 = vsel %vm1361, %v91, 0
    %v1535 = vsel %vm1361, %v92, 0
    %v1538 = vsel %vm1361, %v93, 0
    %v1541 = vsel %vm1361, %v94, 0
    %v1544 = vsel %vm1361, %v95, 0
    %1546 = vmatprep.subr.mxu0 0.0
    %1547 = vmatpush1.msra.mxu0 %v1514
    %1548 = vmatprep.subr.mxu0 0.0
    %1549 = vmatpush1.msra.mxu0 %v1519
    %1550 = vmatprep.subr.mxu0 0.0
    %1551 = vmatpush1.msra.mxu0 0.0
    %1552 = vmatprep.subr.mxu0 0.0
    %1553 = vmatpush1.msra.mxu0 0.0
    %1554 = vmatprep.subr.mxu0 0.0
    %1555 = vmatpush1.msra.mxu0 0.0
    %1556 = vmatprep.subr.mxu0 0.0
    %1557 = vmatpush1.msra.mxu0 0.0
    %1558 = vmatprep.subr.mxu0 0.0
    %1559 = vmatpush1.msra.mxu0 0.0
    %1560 = vmatprep.subr.mxu0 0.0
    %1561 = vmatpush1.msra.mxu0 0.0
    %1562 = vmatprep.subr.mxu0 0.0
    %1563 = vmatpush1.msra.mxu0 0.0
    %1564 = vmatprep.subr.mxu0 0.0
    %1565 = vmatpush1.msra.mxu0 0.0
    %1566 = vmatprep.subr.mxu0 0.0
    %1567 = vmatpush1.msra.mxu0 0.0
    %1568 = vmatprep.subr.mxu0 0.0
    %1569 = vmatpush1.msra.mxu0 0.0
    %1570 = vmatprep.subr.mxu0 0.0
    %1571 = vmatpush1.msra.mxu0 0.0
    %1572 = vmatprep.subr.mxu0 0.0
    %1573 = vmatpush1.msra.mxu0 0.0
    %1574 = vmatprep.subr.mxu0 0.0
    %1575 = vmatpush1.msra.mxu0 0.0
    %1576 = vmatprep.subr.mxu0 0.0
    %1577 = vmatpush1.msra.mxu0 0.0
    %1578 = vmatprep.subr.mxu0 0.0
    %1579 = vmatpush1.msra.mxu0 0.0
    %1580 = vmatprep.subr.mxu0 0.0
    %1581 = vmatpush1.msra.mxu0 0.0
    %1582 = vmatprep.subr.mxu0 0.0
    %1583 = vmatpush1.msra.mxu0 0.0
    %1584 = vmatprep.subr.mxu0 0.0
    %1585 = vmatpush1.msra.mxu0 0.0
    %1586 = vmatprep.subr.mxu0 0.0
    %1587 = vmatpush1.msra.mxu0 0.0
    %1588 = vmatprep.subr.mxu0 0.0
    %1589 = vmatpush1.msra.mxu0 0.0
    %1590 = vmatprep.subr.mxu0 0.0
    %1591 = vmatpush1.msra.mxu0 0.0
    %1592 = vmatprep.subr.mxu0 0.0
    %1593 = vmatpush1.msra.mxu0 0.0
    %1594 = vmatprep.subr.mxu0 0.0
    %1595 = vmatpush1.msra.mxu0 0.0
    %1596 = vmatprep.subr.mxu0 0.0
    %1597 = vmatpush1.msra.mxu0 0.0
    %1598 = vmatprep.subr.mxu0 0.0
    %1599 = vmatpush1.msra.mxu0 0.0
    %1600 = vmatprep.subr.mxu0 0.0
    %1601 = vmatpush1.msra.mxu0 0.0
    %1602 = vmatprep.subr.mxu0 0.0
    %1603 = vmatpush1.msra.mxu0 0.0
    %1604 = vmatprep.subr.mxu0 0.0
    %1605 = vmatpush1.msra.mxu0 0.0
    %1606 = vmatprep.subr.mxu0 0.0
    %1607 = vmatpush1.msra.mxu0 0.0
    %1608 = vmatprep.subr.mxu0 0.0
    %1609 = vmatpush1.msra.mxu0 0.0
    %1610 = vmatprep.mubr.f32.mxu0 0.0
    %1611 = vmatmul.mubr.f32.gmra.mrb[0].mxu0 %v1523
    %v1612 = vpop.f32.mrb[0].mxu0
    %v1613 = vadd.f32 0.0, %v1612
    %v1614 = vpop.f32.mrb[0].mxu0
    %1615 = vmatprep.mubr.f32.mxu0 0.0
    %1616 = vmatmul.mubr.f32.gmra.mrb[0].mxu0 %v1526
    %v1617 = vpop.f32.mrb[0].mxu0
    %v1618 = vadd.f32 0.0, %v1617
    %v1619 = vpop.f32.mrb[0].mxu0
    %1620 = vmatprep.mubr.f32.mxu0 0.0
    %1621 = vmatmul.mubr.f32.gmra.mrb[0].mxu0 %v1529
    %v1622 = vpop.f32.mrb[0].mxu0
    %v1623 = vadd.f32 0.0, %v1622
    %v1624 = vpop.f32.mrb[0].mxu0
    %1625 = vmatprep.mubr.f32.mxu0 0.0
    %1626 = vmatmul.mubr.f32.gmra.mrb[0].mxu0 %v1532
    %v1627 = vpop.f32.mrb[0].mxu0
    %v1628 = vadd.f32 0.0, %v1627
    %v1629 = vpop.f32.mrb[0].mxu0
    %1630 = vmatprep.mubr.f32.mxu0 0.0
    %1631 = vmatmul.mubr.f32.gmra.mrb[0].mxu0 %v1535
    %v1632 = vpop.f32.mrb[0].mxu0
    %v1633 = vadd.f32 0.0, %v1632
    %v1634 = vpop.f32.mrb[0].mxu0
    %1635 = vmatprep.mubr.f32.mxu0 0.0
    %1636 = vmatmul.mubr.f32.gmra.mrb[0].mxu0 %v1538
    %v1637 = vpop.f32.mrb[0].mxu0
    %v1638 = vadd.f32 0.0, %v1637
    %v1639 = vpop.f32.mrb[0].mxu0
    %1640 = vmatprep.mubr.f32.mxu0 0.0
    %1641 = vmatmul.mubr.f32.gmra.mrb[0].mxu0 %v1541
    %v1642 = vpop.f32.mrb[0].mxu0
    %v1643 = vadd.f32 0.0, %v1642
    %v1644 = vpop.f32.mrb[0].mxu0
    %1645 = vmatprep.mubr.f32.mxu0 0.0
    %1646 = vmatmul.mubr.f32.gmra.mrb[0].mxu0 %v1544
    %v1647 = vpop.f32.mrb[0].mxu0
    %v1648 = vadd.f32 0.0, %v1647
    %v1649 = vpop.f32.mrb[0].mxu0
    %1650 = vdwg.mxu0
    %v1652 = vsel %vm1361, %v1613, 0
    %v1655 = vsel %vm1361, %v1618, 0
    %v1658 = vsel %vm1361, %v1623, 0
    %v1661 = vsel %vm1361, %v1628, 0
    %v1664 = vsel %vm1361, %v1633, 0
    %v1667 = vsel %vm1361, %v1638, 0
    %v1670 = vsel %vm1361, %v1643, 0
    %v1673 = vsel %vm1361, %v1648, 0
    %1675 = vmatprep.subr.mxu0 0.0
    %1676 = vmatpush1.msra.mxu0 %v106
    %1677 = vmatprep.subr.mxu0 0.0
    %1678 = vmatpush1.msra.mxu0 %v107
    %1679 = vmatprep.subr.mxu0 0.0
    %1680 = vmatpush1.msra.mxu0 0.0
    %1681 = vmatprep.subr.mxu0 0.0
    %1682 = vmatpush1.msra.mxu0 0.0
    %1683 = vmatprep.subr.mxu0 0.0
    %1684 = vmatpush1.msra.mxu0 0.0
    %1685 = vmatprep.subr.mxu0 0.0
    %1686 = vmatpush1.msra.mxu0 0.0
    %1687 = vmatprep.subr.mxu0 0.0
    %1688 = vmatpush1.msra.mxu0 0.0
    %1689 = vmatprep.subr.mxu0 0.0
    %1690 = vmatpush1.msra.mxu0 0.0
    %1691 = vmatprep.subr.mxu0 0.0
    %1692 = vmatpush1.msra.mxu0 0.0
    %1693 = vmatprep.subr.mxu0 0.0
    %1694 = vmatpush1.msra.mxu0 0.0
    %1695 = vmatprep.subr.mxu0 0.0
    %1696 = vmatpush1.msra.mxu0 0.0
    %1697 = vmatprep.subr.mxu0 0.0
    %1698 = vmatpush1.msra.mxu0 0.0
    %1699 = vmatprep.subr.mxu0 0.0
    %1700 = vmatpush1.msra.mxu0 0.0
    %1701 = vmatprep.subr.mxu0 0.0
    %1702 = vmatpush1.msra.mxu0 0.0
    %1703 = vmatprep.subr.mxu0 0.0
    %1704 = vmatpush1.msra.mxu0 0.0
    %1705 = vmatprep.subr.mxu0 0.0
    %1706 = vmatpush1.msra.mxu0 0.0
    %1707 = vmatprep.subr.mxu0 0.0
    %1708 = vmatpush1.msra.mxu0 0.0
    %1709 = vmatprep.subr.mxu0 0.0
    %1710 = vmatpush1.msra.mxu0 0.0
    %1711 = vmatprep.subr.mxu0 0.0
    %1712 = vmatpush1.msra.mxu0 0.0
    %1713 = vmatprep.subr.mxu0 0.0
    %1714 = vmatpush1.msra.mxu0 0.0
    %1715 = vmatprep.subr.mxu0 0.0
    %1716 = vmatpush1.msra.mxu0 0.0
    %1717 = vmatprep.subr.mxu0 0.0
    %1718 = vmatpush1.msra.mxu0 0.0
    %1719 = vmatprep.subr.mxu0 0.0
    %1720 = vmatpush1.msra.mxu0 0.0
    %1721 = vmatprep.subr.mxu0 0.0
    %1722 = vmatpush1.msra.mxu0 0.0
    %1723 = vmatprep.subr.mxu0 0.0
    %1724 = vmatpush1.msra.mxu0 0.0
    %1725 = vmatprep.subr.mxu0 0.0
    %1726 = vmatpush1.msra.mxu0 0.0
    %1727 = vmatprep.subr.mxu0 0.0
    %1728 = vmatpush1.msra.mxu0 0.0
    %1729 = vmatprep.subr.mxu0 0.0
    %1730 = vmatpush1.msra.mxu0 0.0
    %1731 = vmatprep.subr.mxu0 0.0
    %1732 = vmatpush1.msra.mxu0 0.0
    %1733 = vmatprep.subr.mxu0 0.0
    %1734 = vmatpush1.msra.mxu0 0.0
    %1735 = vmatprep.subr.mxu0 0.0
    %1736 = vmatpush1.msra.mxu0 0.0
    %1737 = vmatprep.subr.mxu0 0.0
    %1738 = vmatpush1.msra.mxu0 0.0
    %1739 = vmatprep.mubr.f32.mxu0 0.0
    %1740 = vmatmul.mubr.f32.gmra.mrb[0].mxu0 %v1652
    %v1741 = vpop.f32.mrb[0].mxu0
    %v1742 = vadd.f32 0.0, %v1741
    %v1743 = vpop.f32.mrb[0].mxu0
    %1744 = vmatprep.mubr.f32.mxu0 0.0
    %1745 = vmatmul.mubr.f32.gmra.mrb[0].mxu0 %v1655
    %v1746 = vpop.f32.mrb[0].mxu0
    %v1747 = vadd.f32 0.0, %v1746
    %v1748 = vpop.f32.mrb[0].mxu0
    %1749 = vmatprep.mubr.f32.mxu0 0.0
    %1750 = vmatmul.mubr.f32.gmra.mrb[0].mxu0 %v1658
    %v1751 = vpop.f32.mrb[0].mxu0
    %v1752 = vadd.f32 0.0, %v1751
    %v1753 = vpop.f32.mrb[0].mxu0
    %1754 = vmatprep.mubr.f32.mxu0 0.0
    %1755 = vmatmul.mubr.f32.gmra.mrb[0].mxu0 %v1661
    %v1756 = vpop.f32.mrb[0].mxu0
    %v1757 = vadd.f32 0.0, %v1756
    %v1758 = vpop.f32.mrb[0].mxu0
    %1759 = vmatprep.mubr.f32.mxu0 0.0
    %1760 = vmatmul.mubr.f32.gmra.mrb[0].mxu0 %v1664
    %v1761 = vpop.f32.mrb[0].mxu0
    %v1762 = vadd.f32 0.0, %v1761
    %v1763 = vpop.f32.mrb[0].mxu0
    %1764 = vmatprep.mubr.f32.mxu0 0.0
    %1765 = vmatmul.mubr.f32.gmra.mrb[0].mxu0 %v1667
    %v1766 = vpop.f32.mrb[0].mxu0
    %v1767 = vadd.f32 0.0, %v1766
    %v1768 = vpop.f32.mrb[0].mxu0
    %1769 = vmatprep.mubr.f32.mxu0 0.0
    %1770 = vmatmul.mubr.f32.gmra.mrb[0].mxu0 %v1670
    %v1771 = vpop.f32.mrb[0].mxu0
    %v1772 = vadd.f32 0.0, %v1771
    %v1773 = vpop.f32.mrb[0].mxu0
    %1774 = vmatprep.mubr.f32.mxu0 0.0
    %1775 = vmatmul.mubr.f32.gmra.mrb[0].mxu0 %v1673
    %v1776 = vpop.f32.mrb[0].mxu0
    %v1777 = vadd.f32 0.0, %v1776
    %v1778 = vpop.f32.mrb[0].mxu0
    %1779 = vdwg.mxu0
    %v1780 = vmul.f32 %v957, %v1742
    %v1781 = vmul.f32 %v962, %v1747
    %v1782 = vmul.f32 %v967, %v1752
    %v1783 = vmul.f32 %v972, %v1757
    %v1784 = vmul.f32 %v977, %v1762
    %v1785 = vmul.f32 %v982, %v1767
    %v1786 = vmul.f32 %v987, %v1772
    %v1787 = vmul.f32 %v992, %v1777
    %vm1788 = vcmask 392192
    %v1790 = vsel %vm1788, %v1780, 0
    %v1793 = vsel %vm1788, %v1781, 0
    %v1796 = vsel %vm1788, %v1782, 0
    %v1799 = vsel %vm1788, %v1783, 0
    %v1802 = vsel %vm1788, %v1784, 0
    %v1805 = vsel %vm1788, %v1785, 0
    %v1808 = vsel %vm1788, %v1786, 0
    %v1811 = vsel %vm1788, %v1787, 0
    %1813 = vmatprep.subr.mxu0 %v109
    %1814 = vmatpush1.msra.mxu0 %v108
    %1815 = vmatprep.subr.mxu0 %v111
    %1816 = vmatpush1.msra.mxu0 %v110
    %1817 = vmatprep.subr.mxu0 %v113
    %1818 = vmatpush1.msra.mxu0 %v112
    %1819 = vmatprep.subr.mxu0 %v115
    %1820 = vmatpush1.msra.mxu0 %v114
    %1821 = vmatprep.subr.mxu0 %v117
    %1822 = vmatpush1.msra.mxu0 %v116
    %1823 = vmatprep.subr.mxu0 %v119
    %1824 = vmatpush1.msra.mxu0 %v118
    %1825 = vmatprep.subr.mxu0 0.0
    %1826 = vmatpush1.msra.mxu0 0.0
    %1827 = vmatprep.subr.mxu0 0.0
    %1828 = vmatpush1.msra.mxu0 0.0
    %1829 = vmatprep.subr.mxu0 0.0
    %1830 = vmatpush1.msra.mxu0 0.0
    %1831 = vmatprep.subr.mxu0 0.0
    %1832 = vmatpush1.msra.mxu0 0.0
    %1833 = vmatprep.subr.mxu0 0.0
    %1834 = vmatpush1.msra.mxu0 0.0
    %1835 = vmatprep.subr.mxu0 0.0
    %1836 = vmatpush1.msra.mxu0 0.0
    %1837 = vmatprep.subr.mxu0 0.0
    %1838 = vmatpush1.msra.mxu0 0.0
    %1839 = vmatprep.subr.mxu0 0.0
    %1840 = vmatpush1.msra.mxu0 0.0
    %1841 = vmatprep.subr.mxu0 0.0
    %1842 = vmatpush1.msra.mxu0 0.0
    %1843 = vmatprep.subr.mxu0 0.0
    %1844 = vmatpush1.msra.mxu0 0.0
    %1845 = vmatprep.subr.mxu0 0.0
    %1846 = vmatpush1.msra.mxu0 0.0
    %1847 = vmatprep.subr.mxu0 0.0
    %1848 = vmatpush1.msra.mxu0 0.0
    %1849 = vmatprep.subr.mxu0 0.0
    %1850 = vmatpush1.msra.mxu0 0.0
    %1851 = vmatprep.subr.mxu0 0.0
    %1852 = vmatpush1.msra.mxu0 0.0
    %1853 = vmatprep.subr.mxu0 0.0
    %1854 = vmatpush1.msra.mxu0 0.0
    %1855 = vmatprep.subr.mxu0 0.0
    %1856 = vmatpush1.msra.mxu0 0.0
    %1857 = vmatprep.subr.mxu0 0.0
    %1858 = vmatpush1.msra.mxu0 0.0
    %1859 = vmatprep.subr.mxu0 0.0
    %1860 = vmatpush1.msra.mxu0 0.0
    %1861 = vmatprep.subr.mxu0 0.0
    %1862 = vmatpush1.msra.mxu0 0.0
    %1863 = vmatprep.subr.mxu0 0.0
    %1864 = vmatpush1.msra.mxu0 0.0
    %1865 = vmatprep.subr.mxu0 0.0
    %1866 = vmatpush1.msra.mxu0 0.0
    %1867 = vmatprep.subr.mxu0 0.0
    %1868 = vmatpush1.msra.mxu0 0.0
    %1869 = vmatprep.subr.mxu0 0.0
    %1870 = vmatpush1.msra.mxu0 0.0
    %1871 = vmatprep.subr.mxu0 0.0
    %1872 = vmatpush1.msra.mxu0 0.0
    %1873 = vmatprep.subr.mxu0 0.0
    %1874 = vmatpush1.msra.mxu0 0.0
    %1875 = vmatprep.subr.mxu0 0.0
    %1876 = vmatpush1.msra.mxu0 0.0
    %1877 = vmatprep.mubr.f32.mxu0 0.0
    %1878 = vmatmul.mubr.f32.gmra.mrb[0].mxu0 %v1790
    %v1879 = vpop.f32.mrb[0].mxu0
    %v1880 = vadd.f32 0.0, %v1879
    %v1881 = vpop.f32.mrb[0].mxu0
    %v1882 = vadd.f32 0.0, %v1881
    %1883 = vmatprep.mubr.f32.mxu0 0.0
    %1884 = vmatmul.mubr.f32.gmra.mrb[0].mxu0 %v1793
    %v1885 = vpop.f32.mrb[0].mxu0
    %v1886 = vadd.f32 0.0, %v1885
    %v1887 = vpop.f32.mrb[0].mxu0
    %v1888 = vadd.f32 0.0, %v1887
    %1889 = vmatprep.mubr.f32.mxu0 0.0
    %1890 = vmatmul.mubr.f32.gmra.mrb[0].mxu0 %v1796
    %v1891 = vpop.f32.mrb[0].mxu0
    %v1892 = vadd.f32 0.0, %v1891
    %v1893 = vpop.f32.mrb[0].mxu0
    %v1894 = vadd.f32 0.0, %v1893
    %1895 = vmatprep.mubr.f32.mxu0 0.0
    %1896 = vmatmul.mubr.f32.gmra.mrb[0].mxu0 %v1799
    %v1897 = vpop.f32.mrb[0].mxu0
    %v1898 = vadd.f32 0.0, %v1897
    %v1899 = vpop.f32.mrb[0].mxu0
    %v1900 = vadd.f32 0.0, %v1899
    %1901 = vmatprep.mubr.f32.mxu0 0.0
    %1902 = vmatmul.mubr.f32.gmra.mrb[0].mxu0 %v1802
    %v1903 = vpop.f32.mrb[0].mxu0
    %v1904 = vadd.f32 0.0, %v1903
    %v1905 = vpop.f32.mrb[0].mxu0
    %v1906 = vadd.f32 0.0, %v1905
    %1907 = vmatprep.mubr.f32.mxu0 0.0
    %1908 = vmatmul.mubr.f32.gmra.mrb[0].mxu0 %v1805
    %v1909 = vpop.f32.mrb[0].mxu0
    %v1910 = vadd.f32 0.0, %v1909
    %v1911 = vpop.f32.mrb[0].mxu0
    %v1912 = vadd.f32 0.0, %v1911
    %1913 = vmatprep.mubr.f32.mxu0 0.0
    %1914 = vmatmul.mubr.f32.gmra.mrb[0].mxu0 %v1808
    %v1915 = vpop.f32.mrb[0].mxu0
    %v1916 = vadd.f32 0.0, %v1915
    %v1917 = vpop.f32.mrb[0].mxu0
    %v1918 = vadd.f32 0.0, %v1917
    %1919 = vmatprep.mubr.f32.mxu0 0.0
    %1920 = vmatmul.mubr.f32.gmra.mrb[0].mxu0 %v1811
    %v1921 = vpop.f32.mrb[0].mxu0
    %v1922 = vadd.f32 0.0, %v1921
    %v1923 = vpop.f32.mrb[0].mxu0
    %v1924 = vadd.f32 0.0, %v1923
    %1925 = vdwg.mxu0
    %v1926 = vmul.f32 %v1880, %v250
    %v1927 = vmul.f32 %v1882, %v252
    %v1928 = vmul.f32 %v1886, %v256
    %v1929 = vmul.f32 %v1888, %v258
    %v1930 = vmul.f32 %v1892, %v262
    %v1931 = vmul.f32 %v1894, %v264
    %v1932 = vmul.f32 %v1898, %v268
    %v1933 = vmul.f32 %v1900, %v270
    %v1934 = vmul.f32 %v1904, %v274
    %v1935 = vmul.f32 %v1906, %v276
    %v1936 = vmul.f32 %v1910, %v280
    %v1937 = vmul.f32 %v1912, %v282
    %v1938 = vmul.f32 %v1916, %v286
    %v1939 = vmul.f32 %v1918, %v288
    %v1940 = vmul.f32 %v1922, %v292
    %v1941 = vmul.f32 %v1924, %v294
    %v1943 = vsel %vm1035, %v96, 0
    %v1946 = vsel %vm1035, %v97, 0
    %1948 = vmatprep.subr.mxu0 %v1927
    %1949 = vmatpush1.msra.mxu0 %v1926
    %1950 = vmatprep.subr.mxu0 %v1929
    %1951 = vmatpush1.msra.mxu0 %v1928
    %1952 = vmatprep.subr.mxu0 %v1931
    %1953 = vmatpush1.msra.mxu0 %v1930
    %1954 = vmatprep.subr.mxu0 %v1933
    %1955 = vmatpush1.msra.mxu0 %v1932
    %1956 = vmatprep.subr.mxu0 %v1935
    %1957 = vmatpush1.msra.mxu0 %v1934
    %1958 = vmatprep.subr.mxu0 %v1937
    %1959 = vmatpush1.msra.mxu0 %v1936
    %1960 = vmatprep.subr.mxu0 %v1939
    %1961 = vmatpush1.msra.mxu0 %v1938
    %1962 = vmatprep.subr.mxu0 %v1941
    %1963 = vmatpush1.msra.mxu0 %v1940
    %1964 = vmatprep.subr.mxu0 0.0
    %1965 = vmatpush1.msra.mxu0 0.0
    %1966 = vmatprep.subr.mxu0 0.0
    %1967 = vmatpush1.msra.mxu0 0.0
    %1968 = vmatprep.subr.mxu0 0.0
    %1969 = vmatpush1.msra.mxu0 0.0
    %1970 = vmatprep.subr.mxu0 0.0
    %1971 = vmatpush1.msra.mxu0 0.0
    %1972 = vmatprep.subr.mxu0 0.0
    %1973 = vmatpush1.msra.mxu0 0.0
    %1974 = vmatprep.subr.mxu0 0.0
    %1975 = vmatpush1.msra.mxu0 0.0
    %1976 = vmatprep.subr.mxu0 0.0
    %1977 = vmatpush1.msra.mxu0 0.0
    %1978 = vmatprep.subr.mxu0 0.0
    %1979 = vmatpush1.msra.mxu0 0.0
    %1980 = vmatprep.subr.mxu0 0.0
    %1981 = vmatpush1.msra.mxu0 0.0
    %1982 = vmatprep.subr.mxu0 0.0
    %1983 = vmatpush1.msra.mxu0 0.0
    %1984 = vmatprep.subr.mxu0 0.0
    %1985 = vmatpush1.msra.mxu0 0.0
    %1986 = vmatprep.subr.mxu0 0.0
    %1987 = vmatpush1.msra.mxu0 0.0
    %1988 = vmatprep.subr.mxu0 0.0
    %1989 = vmatpush1.msra.mxu0 0.0
    %1990 = vmatprep.subr.mxu0 0.0
    %1991 = vmatpush1.msra.mxu0 0.0
    %1992 = vmatprep.subr.mxu0 0.0
    %1993 = vmatpush1.msra.mxu0 0.0
    %1994 = vmatprep.subr.mxu0 0.0
    %1995 = vmatpush1.msra.mxu0 0.0
    %1996 = vmatprep.subr.mxu0 0.0
    %1997 = vmatpush1.msra.mxu0 0.0
    %1998 = vmatprep.subr.mxu0 0.0
    %1999 = vmatpush1.msra.mxu0 0.0
    %2000 = vmatprep.subr.mxu0 0.0
    %2001 = vmatpush1.msra.mxu0 0.0
    %2002 = vmatprep.subr.mxu0 0.0
    %2003 = vmatpush1.msra.mxu0 0.0
    %2004 = vmatprep.subr.mxu0 0.0
    %2005 = vmatpush1.msra.mxu0 0.0
    %2006 = vmatprep.subr.mxu0 0.0
    %2007 = vmatpush1.msra.mxu0 0.0
    %2008 = vmatprep.subr.mxu0 0.0
    %2009 = vmatpush1.msra.mxu0 0.0
    %2010 = vmatprep.subr.mxu0 0.0
    %2011 = vmatpush1.msra.mxu0 0.0
    %2012 = vmatprep.mubr.f32.mxu0 0.0
    %2013 = vmatmul.mubr.f32.gmra.mrb[0].mxu0 %v1943
    %v2014 = vpop.f32.mrb[0].mxu0
    %v2015 = vadd.f32 0.0, %v2014
    %v2016 = vpop.f32.mrb[0].mxu0
    %v2017 = vadd.f32 0.0, %v2016
    %2018 = vmatprep.mubr.f32.mxu0 0.0
    %2019 = vmatmul.mubr.f32.gmra.mrb[0].mxu0 %v1946
    %v2020 = vpop.f32.mrb[0].mxu0
    %v2021 = vadd.f32 0.0, %v2020
    %v2022 = vpop.f32.mrb[0].mxu0
    %v2023 = vadd.f32 0.0, %v2022
    %2024 = vdwg.mxu0
    %v2025 = vld [vmem:[%s13] sm:$0xff]
    %v2026 = vld [vmem:[%s13 + $0x8] sm:$0xff]
    %v2027 = vld [vmem:[%s13 + $0x10] sm:$0xff]
    %v2028 = vld [vmem:[%s13 + $0x18] sm:$0xff]
    %v2029 = vld [vmem:[%s13 + $0x20] sm:$0xff]
    %v2030 = vld [vmem:[%s13 + $0x28] sm:$0xff]
    %v2031 = vld [vmem:[%s13 + $0x30] sm:$0xff]
    %v2032 = vld [vmem:[%s13 + $0x38] sm:$0xff]
    %v2033 = vld [vmem:[%s13 + $0x40] sm:$0xff]
    %v2034 = vld [vmem:[%s13 + $0x48] sm:$0xff]
    %v2035 = vld [vmem:[%s13 + $0x50] sm:$0xff]
    %v2036 = vld [vmem:[%s13 + $0x58] sm:$0xff]
    %v2037 = vld [vmem:[%s13 + $0x60] sm:$0xff]
    %v2038 = vld [vmem:[%s13 + $0x68] sm:$0xff]
    %v2039 = vld [vmem:[%s13 + $0x70] sm:$0xff]
    %v2040 = vld [vmem:[%s13 + $0x78] sm:$0xff]
    %v2041 = vld [vmem:[%s13 + $0x80] sm:$0xff]
    %v2042 = vld [vmem:[%s13 + $0x88] sm:$0xff]
    %v2043 = vld [vmem:[%s13 + $0x90] sm:$0xff]
    %v2044 = vld [vmem:[%s13 + $0x98] sm:$0xff]
    %v2045 = vld [vmem:[%s13 + $0xa0] sm:$0xff]
    %v2046 = vld [vmem:[%s13 + $0xa8] sm:$0xff]
    %v2047 = vld [vmem:[%s13 + $0xb0] sm:$0xff]
    %v2048 = vld [vmem:[%s13 + $0xb8] sm:$0xff]
    %v2049 = vld [vmem:[%s13 + $0xc0] sm:$0xff]
    %v2050 = vld [vmem:[%s13 + $0xc8] sm:$0xff]
    %v2051 = vld [vmem:[%s13 + $0xd0] sm:$0xff]
    %v2052 = vld [vmem:[%s13 + $0xd8] sm:$0xff]
    %v2053 = vld [vmem:[%s13 + $0xe0] sm:$0xff]
    %v2054 = vld [vmem:[%s13 + $0xe8] sm:$0xff]
    %v2055 = vld [vmem:[%s13 + $0xf0] sm:$0xff]
    %v2056 = vld [vmem:[%s13 + $0xf8] sm:$0xff]
    %v2057 = vld [vmem:[%s13 + $0x100] sm:$0xff]
    %v2058 = vld [vmem:[%s13 + $0x108] sm:$0xff]
    %v2059 = vld [vmem:[%s13 + $0x110] sm:$0xff]
    %v2060 = vld [vmem:[%s13 + $0x118] sm:$0xff]
    %v2062 = vsel %vm1361, %v2017, 0
    %v2065 = vsel %vm1361, %v2023, 0
    %2067 = vmatprep.subr.mxu0 %v2026
    %2068 = vmatpush1.msra.mxu0 %v2025
    %2069 = vmatprep.subr.mxu0 %v2028
    %2070 = vmatpush1.msra.mxu0 %v2027
    %2071 = vmatprep.subr.mxu0 %v2030
    %2072 = vmatpush1.msra.mxu0 %v2029
    %2073 = vmatprep.subr.mxu0 %v2032
    %2074 = vmatpush1.msra.mxu0 %v2031
    %2075 = vmatprep.subr.mxu0 %v2034
    %2076 = vmatpush1.msra.mxu0 %v2033
    %2077 = vmatprep.subr.mxu0 %v2036
    %2078 = vmatpush1.msra.mxu0 %v2035
    %2079 = vmatprep.subr.mxu0 %v2038
    %2080 = vmatpush1.msra.mxu0 %v2037
    %2081 = vmatprep.subr.mxu0 %v2040
    %2082 = vmatpush1.msra.mxu0 %v2039
    %2083 = vmatprep.subr.mxu0 %v2042
    %2084 = vmatpush1.msra.mxu0 %v2041
    %2085 = vmatprep.subr.mxu0 %v2044
    %2086 = vmatpush1.msra.mxu0 %v2043
    %2087 = vmatprep.subr.mxu0 %v2046
    %2088 = vmatpush1.msra.mxu0 %v2045
    %2089 = vmatprep.subr.mxu0 %v2048
    %2090 = vmatpush1.msra.mxu0 %v2047
    %2091 = vmatprep.subr.mxu0 %v2050
    %2092 = vmatpush1.msra.mxu0 %v2049
    %2093 = vmatprep.subr.mxu0 %v2052
    %2094 = vmatpush1.msra.mxu0 %v2051
    %2095 = vmatprep.subr.mxu0 %v2054
    %2096 = vmatpush1.msra.mxu0 %v2053
    %2097 = vmatprep.subr.mxu0 %v2056
    %2098 = vmatpush1.msra.mxu0 %v2055
    %2099 = vmatprep.subr.mxu0 %v2058
    %2100 = vmatpush1.msra.mxu0 %v2057
    %2101 = vmatprep.subr.mxu0 %v2060
    %2102 = vmatpush1.msra.mxu0 %v2059
    %2103 = vmatprep.subr.mxu0 0.0
    %2104 = vmatpush1.msra.mxu0 0.0
    %2105 = vmatprep.subr.mxu0 0.0
    %2106 = vmatpush1.msra.mxu0 0.0
    %2107 = vmatprep.subr.mxu0 0.0
    %2108 = vmatpush1.msra.mxu0 0.0
    %2109 = vmatprep.subr.mxu0 0.0
    %2110 = vmatpush1.msra.mxu0 0.0
    %2111 = vmatprep.subr.mxu0 0.0
    %2112 = vmatpush1.msra.mxu0 0.0
    %2113 = vmatprep.subr.mxu0 0.0
    %2114 = vmatpush1.msra.mxu0 0.0
    %2115 = vmatprep.subr.mxu0 0.0
    %2116 = vmatpush1.msra.mxu0 0.0
    %2117 = vmatprep.subr.mxu0 0.0
    %2118 = vmatpush1.msra.mxu0 0.0
    %2119 = vmatprep.subr.mxu0 0.0
    %2120 = vmatpush1.msra.mxu0 0.0
    %2121 = vmatprep.subr.mxu0 0.0
    %2122 = vmatpush1.msra.mxu0 0.0
    %2123 = vmatprep.subr.mxu0 0.0
    %2124 = vmatpush1.msra.mxu0 0.0
    %2125 = vmatprep.subr.mxu0 0.0
    %2126 = vmatpush1.msra.mxu0 0.0
    %2127 = vmatprep.subr.mxu0 0.0
    %2128 = vmatpush1.msra.mxu0 0.0
    %2129 = vmatprep.subr.mxu0 0.0
    %2130 = vmatpush1.msra.mxu0 0.0
    %2131 = vmatprep.mubr.f32.mxu0 %v2062
    %2132 = vmatmul.mubr.f32.gmra.mrb[0].mxu0 %v2015
    %v2133 = vpop.f32.mrb[0].mxu0
    %v2134 = vadd.f32 0.0, %v2133
    %v2135 = vpop.f32.mrb[0].mxu0
    %v2136 = vadd.f32 0.0, %v2135
    %2137 = vmatprep.mubr.f32.mxu0 %v2065
    %2138 = vmatmul.mubr.f32.gmra.mrb[0].mxu0 %v2021
    %v2139 = vpop.f32.mrb[0].mxu0
    %v2140 = vadd.f32 0.0, %v2139
    %v2141 = vpop.f32.mrb[0].mxu0
    %v2142 = vadd.f32 0.0, %v2141
    %2143 = vdwg.mxu0
    %2144 = vst.msk [vmem:[#allocation2] sm:$0xff] %vm151, %v2134
    %2145 = vst.msk [vmem:[#allocation2 + $0x8] sm:$0xff] %vm151, %v2140
    %2148 = vrot.lane.b32.xlu0 %v2134, 119
    %v2149 = vpop.permute.xlu0 %2148
    %2150 = vrot.lane.b32.xlu0 %v2140, 119
    %v2151 = vpop.permute.xlu0 %2150
    %2154 = vst.msk [vmem:[#allocation2 + $0x10] sm:$0xff] %vm151, %v2149
    %2155 = vst.msk [vmem:[#allocation2 + $0x18] sm:$0xff] %vm151, %v2151
    %2156 = vrot.lane.b32.xlu0 %v2134, 110
    %v2157 = vpop.permute.xlu0 %2156
    %2158 = vrot.lane.b32.xlu0 %v2140, 110
    %v2159 = vpop.permute.xlu0 %2158
    %2162 = vst.msk [vmem:[#allocation2 + $0x20] sm:$0xff] %vm151, %v2157
    %2163 = vst.msk [vmem:[#allocation2 + $0x28] sm:$0xff] %vm151, %v2159
    %2164 = vrot.lane.b32.xlu0 %v2134, 101
    %v2165 = vpop.permute.xlu0 %2164
    %2166 = vrot.lane.b32.xlu0 %v2140, 101
    %v2167 = vpop.permute.xlu0 %2166
    %2170 = vst.msk [vmem:[#allocation2 + $0x30] sm:$0xff] %vm151, %v2165
    %2171 = vst.msk [vmem:[#allocation2 + $0x38] sm:$0xff] %vm151, %v2167
    %2172 = vrot.lane.b32.xlu0 %v2134, 92
    %v2173 = vpop.permute.xlu0 %2172
    %2174 = vrot.lane.b32.xlu0 %v2140, 92
    %v2175 = vpop.permute.xlu0 %2174
    %2178 = vst.msk [vmem:[#allocation2 + $0x40] sm:$0xff] %vm151, %v2173
    %2179 = vst.msk [vmem:[#allocation2 + $0x48] sm:$0xff] %vm151, %v2175
    %2180 = vrot.lane.b32.xlu0 %v2134, 83
    %v2181 = vpop.permute.xlu0 %2180
    %2182 = vrot.lane.b32.xlu0 %v2140, 83
    %v2183 = vpop.permute.xlu0 %2182
    %2186 = vst.msk [vmem:[#allocation2 + $0x50] sm:$0xff] %vm151, %v2181
    %2187 = vst.msk [vmem:[#allocation2 + $0x58] sm:$0xff] %vm151, %v2183
    %2188 = vrot.lane.b32.xlu0 %v2134, 74
    %v2189 = vpop.permute.xlu0 %2188
    %2190 = vrot.lane.b32.xlu0 %v2140, 74
    %v2191 = vpop.permute.xlu0 %2190
    %2194 = vst.msk [vmem:[#allocation2 + $0x60] sm:$0xff] %vm151, %v2189
    %2195 = vst.msk [vmem:[#allocation2 + $0x68] sm:$0xff] %vm151, %v2191
    %2196 = vrot.lane.b32.xlu0 %v2134, 65
    %v2197 = vpop.permute.xlu0 %2196
    %2198 = vrot.lane.b32.xlu0 %v2140, 65
    %v2199 = vpop.permute.xlu0 %2198
    %2202 = vst.msk [vmem:[#allocation2 + $0x70] sm:$0xff] %vm151, %v2197
    %2203 = vst.msk [vmem:[#allocation2 + $0x78] sm:$0xff] %vm151, %v2199
    %2204 = vrot.lane.b32.xlu0 %v2134, 56
    %v2205 = vpop.permute.xlu0 %2204
    %2206 = vrot.lane.b32.xlu0 %v2140, 56
    %v2207 = vpop.permute.xlu0 %2206
    %2210 = vst.msk [vmem:[#allocation2 + $0x80] sm:$0xff] %vm151, %v2205
    %2211 = vst.msk [vmem:[#allocation2 + $0x88] sm:$0xff] %vm151, %v2207
    %2212 = vrot.lane.b32.xlu0 %v2134, 47
    %v2213 = vpop.permute.xlu0 %2212
    %2214 = vrot.lane.b32.xlu0 %v2140, 47
    %v2215 = vpop.permute.xlu0 %2214
    %2218 = vst.msk [vmem:[#allocation2 + $0x90] sm:$0xff] %vm151, %v2213
    %2219 = vst.msk [vmem:[#allocation2 + $0x98] sm:$0xff] %vm151, %v2215
    %2220 = vrot.lane.b32.xlu0 %v2134, 38
    %v2221 = vpop.permute.xlu0 %2220
    %2222 = vrot.lane.b32.xlu0 %v2140, 38
    %v2223 = vpop.permute.xlu0 %2222
    %2226 = vst.msk [vmem:[#allocation2 + $0xa0] sm:$0xff] %vm151, %v2221
    %2227 = vst.msk [vmem:[#allocation2 + $0xa8] sm:$0xff] %vm151, %v2223
    %2228 = vrot.lane.b32.xlu0 %v2134, 29
    %v2229 = vpop.permute.xlu0 %2228
    %2230 = vrot.lane.b32.xlu0 %v2140, 29
    %v2231 = vpop.permute.xlu0 %2230
    %2234 = vst.msk [vmem:[#allocation2 + $0xb0] sm:$0xff] %vm151, %v2229
    %2235 = vst.msk [vmem:[#allocation2 + $0xb8] sm:$0xff] %vm151, %v2231
    %2236 = vrot.lane.b32.xlu0 %v2134, 20
    %v2237 = vpop.permute.xlu0 %2236
    %2238 = vrot.lane.b32.xlu0 %v2140, 20
    %v2239 = vpop.permute.xlu0 %2238
    %2242 = vst.msk [vmem:[#allocation2 + $0xc0] sm:$0xff] %vm151, %v2237
    %2243 = vst.msk [vmem:[#allocation2 + $0xc8] sm:$0xff] %vm151, %v2239
    %2244 = vrot.lane.b32.xlu0 %v2134, 11
    %v2245 = vpop.permute.xlu0 %2244
    %2246 = vrot.lane.b32.xlu0 %v2140, 11
    %v2247 = vpop.permute.xlu0 %2246
    %2250 = vst.msk [vmem:[#allocation2 + $0xd0] sm:$0xff] %vm151, %v2245
    %2251 = vst.msk [vmem:[#allocation2 + $0xd8] sm:$0xff] %vm151, %v2247
    %2254 = vrot.lane.b32.xlu0 %v2134, 2
    %v2255 = vpop.permute.xlu0 %2254
    %2256 = vrot.lane.b32.xlu0 %v2136, 2
    %v2257 = vpop.permute.xlu0 %2256
    %2258 = vrot.lane.b32.xlu0 %v2140, 2
    %v2259 = vpop.permute.xlu0 %2258
    %2260 = vrot.lane.b32.xlu0 %v2142, 2
    %v2261 = vpop.permute.xlu0 %2260
    %vm2262 = vcmask 15360
    %v2263 = vsel %vm2262, %v2255, %v2257
    %v2264 = vsel %vm2262, %v2259, %v2261
    %2267 = vst.msk [vmem:[#allocation2 + $0xe0] sm:$0xff] %vm151, %v2263
    %2268 = vst.msk [vmem:[#allocation2 + $0xe8] sm:$0xff] %vm151, %v2264
    %2269 = vrot.lane.b32.xlu0 %v2136, 121
    %v2270 = vpop.permute.xlu0 %2269
    %2271 = vrot.lane.b32.xlu0 %v2142, 121
    %v2272 = vpop.permute.xlu0 %2271
    %2275 = vst.msk [vmem:[#allocation2 + $0xf0] sm:$0xff] %vm151, %v2270
    %2276 = vst.msk [vmem:[#allocation2 + $0xf8] sm:$0xff] %vm151, %v2272
    %v2277 = vld [vmem:[#allocation2] sm:$0xff]
    %v2278 = vld [vmem:[#allocation2 + $0x8] sm:$0xff]
    %v2279 = vld [vmem:[#allocation2 + $0x10] sm:$0xff]
    %v2280 = vld [vmem:[#allocation2 + $0x18] sm:$0xff]
    %v2281 = vld [vmem:[#allocation2 + $0x20] sm:$0xff]
    %v2282 = vld [vmem:[#allocation2 + $0x28] sm:$0xff]
    %v2283 = vld [vmem:[#allocation2 + $0x30] sm:$0xff]
    %v2284 = vld [vmem:[#allocation2 + $0x38] sm:$0xff]
    %v2285 = vld [vmem:[#allocation2 + $0x40] sm:$0xff]
    %v2286 = vld [vmem:[#allocation2 + $0x48] sm:$0xff]
    %v2287 = vld [vmem:[#allocation2 + $0x50] sm:$0xff]
    %v2288 = vld [vmem:[#allocation2 + $0x58] sm:$0xff]
    %v2289 = vld [vmem:[#allocation2 + $0x60] sm:$0xff]
    %v2290 = vld [vmem:[#allocation2 + $0x68] sm:$0xff]
    %v2291 = vld [vmem:[#allocation2 + $0x70] sm:$0xff]
    %v2292 = vld [vmem:[#allocation2 + $0x78] sm:$0xff]
    %v2293 = vld [vmem:[#allocation2 + $0x80] sm:$0xff]
    %v2294 = vld [vmem:[#allocation2 + $0x88] sm:$0xff]
    %v2295 = vld [vmem:[#allocation2 + $0x90] sm:$0xff]
    %v2296 = vld [vmem:[#allocation2 + $0x98] sm:$0xff]
    %v2297 = vld [vmem:[#allocation2 + $0xa0] sm:$0xff]
    %v2298 = vld [vmem:[#allocation2 + $0xa8] sm:$0xff]
    %v2299 = vld [vmem:[#allocation2 + $0xb0] sm:$0xff]
    %v2300 = vld [vmem:[#allocation2 + $0xb8] sm:$0xff]
    %v2301 = vld [vmem:[#allocation2 + $0xc0] sm:$0xff]
    %v2302 = vld [vmem:[#allocation2 + $0xc8] sm:$0xff]
    %v2303 = vld [vmem:[#allocation2 + $0xd0] sm:$0xff]
    %v2304 = vld [vmem:[#allocation2 + $0xd8] sm:$0xff]
    %v2305 = vld [vmem:[#allocation2 + $0xe0] sm:$0xff]
    %v2306 = vld [vmem:[#allocation2 + $0xe8] sm:$0xff]
    %v2307 = vld [vmem:[#allocation2 + $0xf0] sm:$0xff]
    %v2308 = vld [vmem:[#allocation2 + $0xf8] sm:$0xff]
    %v2310 = vsel %vm151, %v2277, 0
    %v2313 = vsel %vm151, %v2278, 0
    %v2316 = vsel %vm151, %v2279, 0
    %v2319 = vsel %vm151, %v2280, 0
    %v2322 = vsel %vm151, %v2281, 0
    %v2325 = vsel %vm151, %v2282, 0
    %v2328 = vsel %vm151, %v2283, 0
    %v2331 = vsel %vm151, %v2284, 0
    %v2334 = vsel %vm151, %v2285, 0
    %v2337 = vsel %vm151, %v2286, 0
    %v2340 = vsel %vm151, %v2287, 0
    %v2343 = vsel %vm151, %v2288, 0
    %v2346 = vsel %vm151, %v2289, 0
    %v2349 = vsel %vm151, %v2290, 0
    %v2352 = vsel %vm151, %v2291, 0
    %v2355 = vsel %vm151, %v2292, 0
    %v2358 = vsel %vm151, %v2293, 0
    %v2361 = vsel %vm151, %v2294, 0
    %v2364 = vsel %vm151, %v2295, 0
    %v2367 = vsel %vm151, %v2296, 0
    %v2370 = vsel %vm151, %v2297, 0
    %v2373 = vsel %vm151, %v2298, 0
    %v2376 = vsel %vm151, %v2299, 0
    %v2379 = vsel %vm151, %v2300, 0
    %v2382 = vsel %vm151, %v2301, 0
    %v2385 = vsel %vm151, %v2302, 0
    %v2388 = vsel %vm151, %v2303, 0
    %v2391 = vsel %vm151, %v2304, 0
    %v2394 = vsel %vm151, %v2305, 0
    %v2397 = vsel %vm151, %v2306, 0
    %v2400 = vsel %vm151, %v2307, 0
    %v2403 = vsel %vm151, %v2308, 0
    %v2406 = vsel %vm176, %v121, 0
    %2408 = vmatprep.subr.mxu0 0.0
    %2409 = vmatpush1.msra.mxu0 %v120
    %2410 = vmatprep.subr.mxu0 0.0
    %2411 = vmatpush1.msra.mxu0 %v2406
    %2412 = vmatprep.subr.mxu0 0.0
    %2413 = vmatpush1.msra.mxu0 0.0
    %2414 = vmatprep.subr.mxu0 0.0
    %2415 = vmatpush1.msra.mxu0 0.0
    %2416 = vmatprep.subr.mxu0 0.0
    %2417 = vmatpush1.msra.mxu0 0.0
    %2418 = vmatprep.subr.mxu0 0.0
    %2419 = vmatpush1.msra.mxu0 0.0
    %2420 = vmatprep.subr.mxu0 0.0
    %2421 = vmatpush1.msra.mxu0 0.0
    %2422 = vmatprep.subr.mxu0 0.0
    %2423 = vmatpush1.msra.mxu0 0.0
    %2424 = vmatprep.subr.mxu0 0.0
    %2425 = vmatpush1.msra.mxu0 0.0
    %2426 = vmatprep.subr.mxu0 0.0
    %2427 = vmatpush1.msra.mxu0 0.0
    %2428 = vmatprep.subr.mxu0 0.0
    %2429 = vmatpush1.msra.mxu0 0.0
    %2430 = vmatprep.subr.mxu0 0.0
    %2431 = vmatpush1.msra.mxu0 0.0
    %2432 = vmatprep.subr.mxu0 0.0
    %2433 = vmatpush1.msra.mxu0 0.0
    %2434 = vmatprep.subr.mxu0 0.0
    %2435 = vmatpush1.msra.mxu0 0.0
    %2436 = vmatprep.subr.mxu0 0.0
    %2437 = vmatpush1.msra.mxu0 0.0
    %2438 = vmatprep.subr.mxu0 0.0
    %2439 = vmatpush1.msra.mxu0 0.0
    %2440 = vmatprep.subr.mxu0 0.0
    %2441 = vmatpush1.msra.mxu0 0.0
    %2442 = vmatprep.subr.mxu0 0.0
    %2443 = vmatpush1.msra.mxu0 0.0
    %2444 = vmatprep.subr.mxu0 0.0
    %2445 = vmatpush1.msra.mxu0 0.0
    %2446 = vmatprep.subr.mxu0 0.0
    %2447 = vmatpush1.msra.mxu0 0.0
    %2448 = vmatprep.subr.mxu0 0.0
    %2449 = vmatpush1.msra.mxu0 0.0
    %2450 = vmatprep.subr.mxu0 0.0
    %2451 = vmatpush1.msra.mxu0 0.0
    %2452 = vmatprep.subr.mxu0 0.0
    %2453 = vmatpush1.msra.mxu0 0.0
    %2454 = vmatprep.subr.mxu0 0.0
    %2455 = vmatpush1.msra.mxu0 0.0
    %2456 = vmatprep.subr.mxu0 0.0
    %2457 = vmatpush1.msra.mxu0 0.0
    %2458 = vmatprep.subr.mxu0 0.0
    %2459 = vmatpush1.msra.mxu0 0.0
    %2460 = vmatprep.subr.mxu0 0.0
    %2461 = vmatpush1.msra.mxu0 0.0
    %2462 = vmatprep.subr.mxu0 0.0
    %2463 = vmatpush1.msra.mxu0 0.0
    %2464 = vmatprep.subr.mxu0 0.0
    %2465 = vmatpush1.msra.mxu0 0.0
    %2466 = vmatprep.subr.mxu0 0.0
    %2467 = vmatpush1.msra.mxu0 0.0
    %2468 = vmatprep.subr.mxu0 0.0
    %2469 = vmatpush1.msra.mxu0 0.0
    %2470 = vmatprep.subr.mxu0 0.0
    %2471 = vmatpush1.msra.mxu0 0.0
    %2472 = vmatprep.mubr.f32.mxu0 0.0
    %2473 = vmatmul.mubr.f32.gmra.mrb[0].mxu0 %v2310
    %v2474 = vpop.f32.mrb[0].mxu0
    %v2475 = vadd.f32 0.0, %v2474
    %v2476 = vpop.f32.mrb[0].mxu0
    %2477 = vmatprep.mubr.f32.mxu0 0.0
    %2478 = vmatmul.mubr.f32.gmra.mrb[0].mxu0 %v2313
    %v2479 = vpop.f32.mrb[0].mxu0
    %v2480 = vadd.f32 0.0, %v2479
    %v2481 = vpop.f32.mrb[0].mxu0
    %2482 = vmatprep.mubr.f32.mxu0 0.0
    %2483 = vmatmul.mubr.f32.gmra.mrb[0].mxu0 %v2316
    %v2484 = vpop.f32.mrb[0].mxu0
    %v2485 = vadd.f32 0.0, %v2484
    %v2486 = vpop.f32.mrb[0].mxu0
    %2487 = vmatprep.mubr.f32.mxu0 0.0
    %2488 = vmatmul.mubr.f32.gmra.mrb[0].mxu0 %v2319
    %v2489 = vpop.f32.mrb[0].mxu0
    %v2490 = vadd.f32 0.0, %v2489
    %v2491 = vpop.f32.mrb[0].mxu0
    %2492 = vmatprep.mubr.f32.mxu0 0.0
    %2493 = vmatmul.mubr.f32.gmra.mrb[0].mxu0 %v2322
    %v2494 = vpop.f32.mrb[0].mxu0
    %v2495 = vadd.f32 0.0, %v2494
    %v2496 = vpop.f32.mrb[0].mxu0
    %2497 = vmatprep.mubr.f32.mxu0 0.0
    %2498 = vmatmul.mubr.f32.gmra.mrb[0].mxu0 %v2325
    %v2499 = vpop.f32.mrb[0].mxu0
    %v2500 = vadd.f32 0.0, %v2499
    %v2501 = vpop.f32.mrb[0].mxu0
    %2502 = vmatprep.mubr.f32.mxu0 0.0
    %2503 = vmatmul.mubr.f32.gmra.mrb[0].mxu0 %v2328
    %v2504 = vpop.f32.mrb[0].mxu0
    %v2505 = vadd.f32 0.0, %v2504
    %v2506 = vpop.f32.mrb[0].mxu0
    %2507 = vmatprep.mubr.f32.mxu0 0.0
    %2508 = vmatmul.mubr.f32.gmra.mrb[0].mxu0 %v2331
    %v2509 = vpop.f32.mrb[0].mxu0
    %v2510 = vadd.f32 0.0, %v2509
    %v2511 = vpop.f32.mrb[0].mxu0
    %2512 = vmatprep.mubr.f32.mxu0 0.0
    %2513 = vmatmul.mubr.f32.gmra.mrb[0].mxu0 %v2334
    %v2514 = vpop.f32.mrb[0].mxu0
    %v2515 = vadd.f32 0.0, %v2514
    %v2516 = vpop.f32.mrb[0].mxu0
    %2517 = vmatprep.mubr.f32.mxu0 0.0
    %2518 = vmatmul.mubr.f32.gmra.mrb[0].mxu0 %v2337
    %v2519 = vpop.f32.mrb[0].mxu0
    %v2520 = vadd.f32 0.0, %v2519
    %v2521 = vpop.f32.mrb[0].mxu0
    %2522 = vmatprep.mubr.f32.mxu0 0.0
    %2523 = vmatmul.mubr.f32.gmra.mrb[0].mxu0 %v2340
    %v2524 = vpop.f32.mrb[0].mxu0
    %v2525 = vadd.f32 0.0, %v2524
    %v2526 = vpop.f32.mrb[0].mxu0
    %2527 = vmatprep.mubr.f32.mxu0 0.0
    %2528 = vmatmul.mubr.f32.gmra.mrb[0].mxu0 %v2343
    %v2529 = vpop.f32.mrb[0].mxu0
    %v2530 = vadd.f32 0.0, %v2529
    %v2531 = vpop.f32.mrb[0].mxu0
    %2532 = vmatprep.mubr.f32.mxu0 0.0
    %2533 = vmatmul.mubr.f32.gmra.mrb[0].mxu0 %v2346
    %v2534 = vpop.f32.mrb[0].mxu0
    %v2535 = vadd.f32 0.0, %v2534
    %v2536 = vpop.f32.mrb[0].mxu0
    %2537 = vmatprep.mubr.f32.mxu0 0.0
    %2538 = vmatmul.mubr.f32.gmra.mrb[0].mxu0 %v2349
    %v2539 = vpop.f32.mrb[0].mxu0
    %v2540 = vadd.f32 0.0, %v2539
    %v2541 = vpop.f32.mrb[0].mxu0
    %2542 = vmatprep.mubr.f32.mxu0 0.0
    %2543 = vmatmul.mubr.f32.gmra.mrb[0].mxu0 %v2352
    %v2544 = vpop.f32.mrb[0].mxu0
    %v2545 = vadd.f32 0.0, %v2544
    %v2546 = vpop.f32.mrb[0].mxu0
    %2547 = vmatprep.mubr.f32.mxu0 0.0
    %2548 = vmatmul.mubr.f32.gmra.mrb[0].mxu0 %v2355
    %v2549 = vpop.f32.mrb[0].mxu0
    %v2550 = vadd.f32 0.0, %v2549
    %v2551 = vpop.f32.mrb[0].mxu0
    %2552 = vmatprep.mubr.f32.mxu0 0.0
    %2553 = vmatmul.mubr.f32.gmra.mrb[0].mxu0 %v2358
    %v2554 = vpop.f32.mrb[0].mxu0
    %v2555 = vadd.f32 0.0, %v2554
    %v2556 = vpop.f32.mrb[0].mxu0
    %2557 = vmatprep.mubr.f32.mxu0 0.0
    %2558 = vmatmul.mubr.f32.gmra.mrb[0].mxu0 %v2361
    %v2559 = vpop.f32.mrb[0].mxu0
    %v2560 = vadd.f32 0.0, %v2559
    %v2561 = vpop.f32.mrb[0].mxu0
    %2562 = vmatprep.mubr.f32.mxu0 0.0
    %2563 = vmatmul.mubr.f32.gmra.mrb[0].mxu0 %v2364
    %v2564 = vpop.f32.mrb[0].mxu0
    %v2565 = vadd.f32 0.0, %v2564
    %v2566 = vpop.f32.mrb[0].mxu0
    %2567 = vmatprep.mubr.f32.mxu0 0.0
    %2568 = vmatmul.mubr.f32.gmra.mrb[0].mxu0 %v2367
    %v2569 = vpop.f32.mrb[0].mxu0
    %v2570 = vadd.f32 0.0, %v2569
    %v2571 = vpop.f32.mrb[0].mxu0
    %2572 = vmatprep.mubr.f32.mxu0 0.0
    %2573 = vmatmul.mubr.f32.gmra.mrb[0].mxu0 %v2370
    %v2574 = vpop.f32.mrb[0].mxu0
    %v2575 = vadd.f32 0.0, %v2574
    %v2576 = vpop.f32.mrb[0].mxu0
    %2577 = vmatprep.mubr.f32.mxu0 0.0
    %2578 = vmatmul.mubr.f32.gmra.mrb[0].mxu0 %v2373
    %v2579 = vpop.f32.mrb[0].mxu0
    %v2580 = vadd.f32 0.0, %v2579
    %v2581 = vpop.f32.mrb[0].mxu0
    %2582 = vmatprep.mubr.f32.mxu0 0.0
    %2583 = vmatmul.mubr.f32.gmra.mrb[0].mxu0 %v2376
    %v2584 = vpop.f32.mrb[0].mxu0
    %v2585 = vadd.f32 0.0, %v2584
    %v2586 = vpop.f32.mrb[0].mxu0
    %2587 = vmatprep.mubr.f32.mxu0 0.0
    %2588 = vmatmul.mubr.f32.gmra.mrb[0].mxu0 %v2379
    %v2589 = vpop.f32.mrb[0].mxu0
    %v2590 = vadd.f32 0.0, %v2589
    %v2591 = vpop.f32.mrb[0].mxu0
    %2592 = vmatprep.mubr.f32.mxu0 0.0
    %2593 = vmatmul.mubr.f32.gmra.mrb[0].mxu0 %v2382
    %v2594 = vpop.f32.mrb[0].mxu0
    %v2595 = vadd.f32 0.0, %v2594
    %v2596 = vpop.f32.mrb[0].mxu0
    %2597 = vmatprep.mubr.f32.mxu0 0.0
    %2598 = vmatmul.mubr.f32.gmra.mrb[0].mxu0 %v2385
    %v2599 = vpop.f32.mrb[0].mxu0
    %v2600 = vadd.f32 0.0, %v2599
    %v2601 = vpop.f32.mrb[0].mxu0
    %2602 = vmatprep.mubr.f32.mxu0 0.0
    %2603 = vmatmul.mubr.f32.gmra.mrb[0].mxu0 %v2388
    %v2604 = vpop.f32.mrb[0].mxu0
    %v2605 = vadd.f32 0.0, %v2604
    %v2606 = vpop.f32.mrb[0].mxu0
    %2607 = vmatprep.mubr.f32.mxu0 0.0
    %2608 = vmatmul.mubr.f32.gmra.mrb[0].mxu0 %v2391
    %v2609 = vpop.f32.mrb[0].mxu0
    %v2610 = vadd.f32 0.0, %v2609
    %v2611 = vpop.f32.mrb[0].mxu0
    %2612 = vmatprep.mubr.f32.mxu0 0.0
    %2613 = vmatmul.mubr.f32.gmra.mrb[0].mxu0 %v2394
    %v2614 = vpop.f32.mrb[0].mxu0
    %v2615 = vadd.f32 0.0, %v2614
    %v2616 = vpop.f32.mrb[0].mxu0
    %2617 = vmatprep.mubr.f32.mxu0 0.0
    %2618 = vmatmul.mubr.f32.gmra.mrb[0].mxu0 %v2397
    %v2619 = vpop.f32.mrb[0].mxu0
    %v2620 = vadd.f32 0.0, %v2619
    %v2621 = vpop.f32.mrb[0].mxu0
    %2622 = vmatprep.mubr.f32.mxu0 0.0
    %2623 = vmatmul.mubr.f32.gmra.mrb[0].mxu0 %v2400
    %v2624 = vpop.f32.mrb[0].mxu0
    %v2625 = vadd.f32 0.0, %v2624
    %v2626 = vpop.f32.mrb[0].mxu0
    %2627 = vmatprep.mubr.f32.mxu0 0.0
    %2628 = vmatmul.mubr.f32.gmra.mrb[0].mxu0 %v2403
    %v2629 = vpop.f32.mrb[0].mxu0
    %v2630 = vadd.f32 0.0, %v2629
    %v2631 = vpop.f32.mrb[0].mxu0
    %2632 = vdwg.mxu0
    %v2634 = vsel %vm176, %v123, 0
    %2636 = vmatprep.subr.mxu0 0.0
    %2637 = vmatpush1.msra.mxu0 %v122
    %2638 = vmatprep.subr.mxu0 0.0
    %2639 = vmatpush1.msra.mxu0 %v2634
    %2640 = vmatprep.subr.mxu0 0.0
    %2641 = vmatpush1.msra.mxu0 0.0
    %2642 = vmatprep.subr.mxu0 0.0
    %2643 = vmatpush1.msra.mxu0 0.0
    %2644 = vmatprep.subr.mxu0 0.0
    %2645 = vmatpush1.msra.mxu0 0.0
    %2646 = vmatprep.subr.mxu0 0.0
    %2647 = vmatpush1.msra.mxu0 0.0
    %2648 = vmatprep.subr.mxu0 0.0
    %2649 = vmatpush1.msra.mxu0 0.0
    %2650 = vmatprep.subr.mxu0 0.0
    %2651 = vmatpush1.msra.mxu0 0.0
    %2652 = vmatprep.subr.mxu0 0.0
    %2653 = vmatpush1.msra.mxu0 0.0
    %2654 = vmatprep.subr.mxu0 0.0
    %2655 = vmatpush1.msra.mxu0 0.0
    %2656 = vmatprep.subr.mxu0 0.0
    %2657 = vmatpush1.msra.mxu0 0.0
    %2658 = vmatprep.subr.mxu0 0.0
    %2659 = vmatpush1.msra.mxu0 0.0
    %2660 = vmatprep.subr.mxu0 0.0
    %2661 = vmatpush1.msra.mxu0 0.0
    %2662 = vmatprep.subr.mxu0 0.0
    %2663 = vmatpush1.msra.mxu0 0.0
    %2664 = vmatprep.subr.mxu0 0.0
    %2665 = vmatpush1.msra.mxu0 0.0
    %2666 = vmatprep.subr.mxu0 0.0
    %2667 = vmatpush1.msra.mxu0 0.0
    %2668 = vmatprep.subr.mxu0 0.0
    %2669 = vmatpush1.msra.mxu0 0.0
    %2670 = vmatprep.subr.mxu0 0.0
    %2671 = vmatpush1.msra.mxu0 0.0
    %2672 = vmatprep.subr.mxu0 0.0
    %2673 = vmatpush1.msra.mxu0 0.0
    %2674 = vmatprep.subr.mxu0 0.0
    %2675 = vmatpush1.msra.mxu0 0.0
    %2676 = vmatprep.subr.mxu0 0.0
    %2677 = vmatpush1.msra.mxu0 0.0
    %2678 = vmatprep.subr.mxu0 0.0
    %2679 = vmatpush1.msra.mxu0 0.0
    %2680 = vmatprep.subr.mxu0 0.0
    %2681 = vmatpush1.msra.mxu0 0.0
    %2682 = vmatprep.subr.mxu0 0.0
    %2683 = vmatpush1.msra.mxu0 0.0
    %2684 = vmatprep.subr.mxu0 0.0
    %2685 = vmatpush1.msra.mxu0 0.0
    %2686 = vmatprep.subr.mxu0 0.0
    %2687 = vmatpush1.msra.mxu0 0.0
    %2688 = vmatprep.subr.mxu0 0.0
    %2689 = vmatpush1.msra.mxu0 0.0
    %2690 = vmatprep.subr.mxu0 0.0
    %2691 = vmatpush1.msra.mxu0 0.0
    %2692 = vmatprep.subr.mxu0 0.0
    %2693 = vmatpush1.msra.mxu0 0.0
    %2694 = vmatprep.subr.mxu0 0.0
    %2695 = vmatpush1.msra.mxu0 0.0
    %2696 = vmatprep.subr.mxu0 0.0
    %2697 = vmatpush1.msra.mxu0 0.0
    %2698 = vmatprep.subr.mxu0 0.0
    %2699 = vmatpush1.msra.mxu0 0.0
    %2700 = vmatprep.mubr.f32.mxu0 0.0
    %2701 = vmatmul.mubr.f32.gmra.mrb[0].mxu0 %v2310
    %v2702 = vpop.f32.mrb[0].mxu0
    %v2703 = vadd.f32 0.0, %v2702
    %v2704 = vpop.f32.mrb[0].mxu0
    %2705 = vmatprep.mubr.f32.mxu0 0.0
    %2706 = vmatmul.mubr.f32.gmra.mrb[0].mxu0 %v2313
    %v2707 = vpop.f32.mrb[0].mxu0
    %v2708 = vadd.f32 0.0, %v2707
    %v2709 = vpop.f32.mrb[0].mxu0
    %2710 = vmatprep.mubr.f32.mxu0 0.0
    %2711 = vmatmul.mubr.f32.gmra.mrb[0].mxu0 %v2316
    %v2712 = vpop.f32.mrb[0].mxu0
    %v2713 = vadd.f32 0.0, %v2712
    %v2714 = vpop.f32.mrb[0].mxu0
    %2715 = vmatprep.mubr.f32.mxu0 0.0
    %2716 = vmatmul.mubr.f32.gmra.mrb[0].mxu0 %v2319
    %v2717 = vpop.f32.mrb[0].mxu0
    %v2718 = vadd.f32 0.0, %v2717
    %v2719 = vpop.f32.mrb[0].mxu0
    %2720 = vmatprep.mubr.f32.mxu0 0.0
    %2721 = vmatmul.mubr.f32.gmra.mrb[0].mxu0 %v2322
    %v2722 = vpop.f32.mrb[0].mxu0
    %v2723 = vadd.f32 0.0, %v2722
    %v2724 = vpop.f32.mrb[0].mxu0
    %2725 = vmatprep.mubr.f32.mxu0 0.0
    %2726 = vmatmul.mubr.f32.gmra.mrb[0].mxu0 %v2325
    %v2727 = vpop.f32.mrb[0].mxu0
    %v2728 = vadd.f32 0.0, %v2727
    %v2729 = vpop.f32.mrb[0].mxu0
    %2730 = vmatprep.mubr.f32.mxu0 0.0
    %2731 = vmatmul.mubr.f32.gmra.mrb[0].mxu0 %v2328
    %v2732 = vpop.f32.mrb[0].mxu0
    %v2733 = vadd.f32 0.0, %v2732
    %v2734 = vpop.f32.mrb[0].mxu0
    %2735 = vmatprep.mubr.f32.mxu0 0.0
    %2736 = vmatmul.mubr.f32.gmra.mrb[0].mxu0 %v2331
    %v2737 = vpop.f32.mrb[0].mxu0
    %v2738 = vadd.f32 0.0, %v2737
    %v2739 = vpop.f32.mrb[0].mxu0
    %2740 = vmatprep.mubr.f32.mxu0 0.0
    %2741 = vmatmul.mubr.f32.gmra.mrb[0].mxu0 %v2334
    %v2742 = vpop.f32.mrb[0].mxu0
    %v2743 = vadd.f32 0.0, %v2742
    %v2744 = vpop.f32.mrb[0].mxu0
    %2745 = vmatprep.mubr.f32.mxu0 0.0
    %2746 = vmatmul.mubr.f32.gmra.mrb[0].mxu0 %v2337
    %v2747 = vpop.f32.mrb[0].mxu0
    %v2748 = vadd.f32 0.0, %v2747
    %v2749 = vpop.f32.mrb[0].mxu0
    %2750 = vmatprep.mubr.f32.mxu0 0.0
    %2751 = vmatmul.mubr.f32.gmra.mrb[0].mxu0 %v2340
    %v2752 = vpop.f32.mrb[0].mxu0
    %v2753 = vadd.f32 0.0, %v2752
    %v2754 = vpop.f32.mrb[0].mxu0
    %2755 = vmatprep.mubr.f32.mxu0 0.0
    %2756 = vmatmul.mubr.f32.gmra.mrb[0].mxu0 %v2343
    %v2757 = vpop.f32.mrb[0].mxu0
    %v2758 = vadd.f32 0.0, %v2757
    %v2759 = vpop.f32.mrb[0].mxu0
    %2760 = vmatprep.mubr.f32.mxu0 0.0
    %2761 = vmatmul.mubr.f32.gmra.mrb[0].mxu0 %v2346
    %v2762 = vpop.f32.mrb[0].mxu0
    %v2763 = vadd.f32 0.0, %v2762
    %v2764 = vpop.f32.mrb[0].mxu0
    %2765 = vmatprep.mubr.f32.mxu0 0.0
    %2766 = vmatmul.mubr.f32.gmra.mrb[0].mxu0 %v2349
    %v2767 = vpop.f32.mrb[0].mxu0
    %v2768 = vadd.f32 0.0, %v2767
    %v2769 = vpop.f32.mrb[0].mxu0
    %2770 = vmatprep.mubr.f32.mxu0 0.0
    %2771 = vmatmul.mubr.f32.gmra.mrb[0].mxu0 %v2352
    %v2772 = vpop.f32.mrb[0].mxu0
    %v2773 = vadd.f32 0.0, %v2772
    %v2774 = vpop.f32.mrb[0].mxu0
    %2775 = vmatprep.mubr.f32.mxu0 0.0
    %2776 = vmatmul.mubr.f32.gmra.mrb[0].mxu0 %v2355
    %v2777 = vpop.f32.mrb[0].mxu0
    %v2778 = vadd.f32 0.0, %v2777
    %v2779 = vpop.f32.mrb[0].mxu0
    %2780 = vmatprep.mubr.f32.mxu0 0.0
    %2781 = vmatmul.mubr.f32.gmra.mrb[0].mxu0 %v2358
    %v2782 = vpop.f32.mrb[0].mxu0
    %v2783 = vadd.f32 0.0, %v2782
    %v2784 = vpop.f32.mrb[0].mxu0
    %2785 = vmatprep.mubr.f32.mxu0 0.0
    %2786 = vmatmul.mubr.f32.gmra.mrb[0].mxu0 %v2361
    %v2787 = vpop.f32.mrb[0].mxu0
    %v2788 = vadd.f32 0.0, %v2787
    %v2789 = vpop.f32.mrb[0].mxu0
    %2790 = vmatprep.mubr.f32.mxu0 0.0
    %2791 = vmatmul.mubr.f32.gmra.mrb[0].mxu0 %v2364
    %v2792 = vpop.f32.mrb[0].mxu0
    %v2793 = vadd.f32 0.0, %v2792
    %v2794 = vpop.f32.mrb[0].mxu0
    %2795 = vmatprep.mubr.f32.mxu0 0.0
    %2796 = vmatmul.mubr.f32.gmra.mrb[0].mxu0 %v2367
    %v2797 = vpop.f32.mrb[0].mxu0
    %v2798 = vadd.f32 0.0, %v2797
    %v2799 = vpop.f32.mrb[0].mxu0
    %2800 = vmatprep.mubr.f32.mxu0 0.0
    %2801 = vmatmul.mubr.f32.gmra.mrb[0].mxu0 %v2370
    %v2802 = vpop.f32.mrb[0].mxu0
    %v2803 = vadd.f32 0.0, %v2802
    %v2804 = vpop.f32.mrb[0].mxu0
    %2805 = vmatprep.mubr.f32.mxu0 0.0
    %2806 = vmatmul.mubr.f32.gmra.mrb[0].mxu0 %v2373
    %v2807 = vpop.f32.mrb[0].mxu0
    %v2808 = vadd.f32 0.0, %v2807
    %v2809 = vpop.f32.mrb[0].mxu0
    %2810 = vmatprep.mubr.f32.mxu0 0.0
    %2811 = vmatmul.mubr.f32.gmra.mrb[0].mxu0 %v2376
    %v2812 = vpop.f32.mrb[0].mxu0
    %v2813 = vadd.f32 0.0, %v2812
    %v2814 = vpop.f32.mrb[0].mxu0
    %2815 = vmatprep.mubr.f32.mxu0 0.0
    %2816 = vmatmul.mubr.f32.gmra.mrb[0].mxu0 %v2379
    %v2817 = vpop.f32.mrb[0].mxu0
    %v2818 = vadd.f32 0.0, %v2817
    %v2819 = vpop.f32.mrb[0].mxu0
    %2820 = vmatprep.mubr.f32.mxu0 0.0
    %2821 = vmatmul.mubr.f32.gmra.mrb[0].mxu0 %v2382
    %v2822 = vpop.f32.mrb[0].mxu0
    %v2823 = vadd.f32 0.0, %v2822
    %v2824 = vpop.f32.mrb[0].mxu0
    %2825 = vmatprep.mubr.f32.mxu0 0.0
    %2826 = vmatmul.mubr.f32.gmra.mrb[0].mxu0 %v2385
    %v2827 = vpop.f32.mrb[0].mxu0
    %v2828 = vadd.f32 0.0, %v2827
    %v2829 = vpop.f32.mrb[0].mxu0
    %2830 = vmatprep.mubr.f32.mxu0 0.0
    %2831 = vmatmul.mubr.f32.gmra.mrb[0].mxu0 %v2388
    %v2832 = vpop.f32.mrb[0].mxu0
    %v2833 = vadd.f32 0.0, %v2832
    %v2834 = vpop.f32.mrb[0].mxu0
    %2835 = vmatprep.mubr.f32.mxu0 0.0
    %2836 = vmatmul.mubr.f32.gmra.mrb[0].mxu0 %v2391
    %v2837 = vpop.f32.mrb[0].mxu0
    %v2838 = vadd.f32 0.0, %v2837
    %v2839 = vpop.f32.mrb[0].mxu0
    %2840 = vmatprep.mubr.f32.mxu0 0.0
    %2841 = vmatmul.mubr.f32.gmra.mrb[0].mxu0 %v2394
    %v2842 = vpop.f32.mrb[0].mxu0
    %v2843 = vadd.f32 0.0, %v2842
    %v2844 = vpop.f32.mrb[0].mxu0
    %2845 = vmatprep.mubr.f32.mxu0 0.0
    %2846 = vmatmul.mubr.f32.gmra.mrb[0].mxu0 %v2397
    %v2847 = vpop.f32.mrb[0].mxu0
    %v2848 = vadd.f32 0.0, %v2847
    %v2849 = vpop.f32.mrb[0].mxu0
    %2850 = vmatprep.mubr.f32.mxu0 0.0
    %2851 = vmatmul.mubr.f32.gmra.mrb[0].mxu0 %v2400
    %v2852 = vpop.f32.mrb[0].mxu0
    %v2853 = vadd.f32 0.0, %v2852
    %v2854 = vpop.f32.mrb[0].mxu0
    %2855 = vmatprep.mubr.f32.mxu0 0.0
    %2856 = vmatmul.mubr.f32.gmra.mrb[0].mxu0 %v2403
    %v2857 = vpop.f32.mrb[0].mxu0
    %v2858 = vadd.f32 0.0, %v2857
    %v2859 = vpop.f32.mrb[0].mxu0
    %2860 = vdwg.mxu0
    %2893 = vrot.lane.b32.xlu0 %v2703, 28
    %v2894 = vpop.permute.xlu0 %2893
    %2895 = vrot.lane.b32.xlu0 %v2708, 28
    %v2896 = vpop.permute.xlu0 %2895
    %2897 = vrot.lane.b32.xlu0 %v2713, 28
    %v2898 = vpop.permute.xlu0 %2897
    %2899 = vrot.lane.b32.xlu0 %v2718, 28
    %v2900 = vpop.permute.xlu0 %2899
    %2901 = vrot.lane.b32.xlu0 %v2723, 28
    %v2902 = vpop.permute.xlu0 %2901
    %2903 = vrot.lane.b32.xlu0 %v2728, 28
    %v2904 = vpop.permute.xlu0 %2903
    %2905 = vrot.lane.b32.xlu0 %v2733, 28
    %v2906 = vpop.permute.xlu0 %2905
    %2907 = vrot.lane.b32.xlu0 %v2738, 28
    %v2908 = vpop.permute.xlu0 %2907
    %2909 = vrot.lane.b32.xlu0 %v2743, 28
    %v2910 = vpop.permute.xlu0 %2909
    %2911 = vrot.lane.b32.xlu0 %v2748, 28
    %v2912 = vpop.permute.xlu0 %2911
    %2913 = vrot.lane.b32.xlu0 %v2753, 28
    %v2914 = vpop.permute.xlu0 %2913
    %2915 = vrot.lane.b32.xlu0 %v2758, 28
    %v2916 = vpop.permute.xlu0 %2915
    %2917 = vrot.lane.b32.xlu0 %v2763, 28
    %v2918 = vpop.permute.xlu0 %2917
    %2919 = vrot.lane.b32.xlu0 %v2768, 28
    %v2920 = vpop.permute.xlu0 %2919
    %2921 = vrot.lane.b32.xlu0 %v2773, 28
    %v2922 = vpop.permute.xlu0 %2921
    %2923 = vrot.lane.b32.xlu0 %v2778, 28
    %v2924 = vpop.permute.xlu0 %2923
    %2925 = vrot.lane.b32.xlu0 %v2783, 28
    %v2926 = vpop.permute.xlu0 %2925
    %2927 = vrot.lane.b32.xlu0 %v2788, 28
    %v2928 = vpop.permute.xlu0 %2927
    %2929 = vrot.lane.b32.xlu0 %v2793, 28
    %v2930 = vpop.permute.xlu0 %2929
    %2931 = vrot.lane.b32.xlu0 %v2798, 28
    %v2932 = vpop.permute.xlu0 %2931
    %2933 = vrot.lane.b32.xlu0 %v2803, 28
    %v2934 = vpop.permute.xlu0 %2933
    %2935 = vrot.lane.b32.xlu0 %v2808, 28
    %v2936 = vpop.permute.xlu0 %2935
    %2937 = vrot.lane.b32.xlu0 %v2813, 28
    %v2938 = vpop.permute.xlu0 %2937
    %2939 = vrot.lane.b32.xlu0 %v2818, 28
    %v2940 = vpop.permute.xlu0 %2939
    %2941 = vrot.lane.b32.xlu0 %v2823, 28
    %v2942 = vpop.permute.xlu0 %2941
    %2943 = vrot.lane.b32.xlu0 %v2828, 28
    %v2944 = vpop.permute.xlu0 %2943
    %2945 = vrot.lane.b32.xlu0 %v2833, 28
    %v2946 = vpop.permute.xlu0 %2945
    %2947 = vrot.lane.b32.xlu0 %v2838, 28
    %v2948 = vpop.permute.xlu0 %2947
    %2949 = vrot.lane.b32.xlu0 %v2843, 28
    %v2950 = vpop.permute.xlu0 %2949
    %2951 = vrot.lane.b32.xlu0 %v2848, 28
    %v2952 = vpop.permute.xlu0 %2951
    %2953 = vrot.lane.b32.xlu0 %v2853, 28
    %v2954 = vpop.permute.xlu0 %2953
    %2955 = vrot.lane.b32.xlu0 %v2858, 28
    %v2956 = vpop.permute.xlu0 %2955
    %v2989 = vmul.f32 %v2475, %v2894
    %v2990 = vmul.f32 %v2480, %v2896
    %v2991 = vmul.f32 %v2485, %v2898
    %v2992 = vmul.f32 %v2490, %v2900
    %v2993 = vmul.f32 %v2495, %v2902
    %v2994 = vmul.f32 %v2500, %v2904
    %v2995 = vmul.f32 %v2505, %v2906
    %v2996 = vmul.f32 %v2510, %v2908
    %v2997 = vmul.f32 %v2515, %v2910
    %v2998 = vmul.f32 %v2520, %v2912
    %v2999 = vmul.f32 %v2525, %v2914
    %v3000 = vmul.f32 %v2530, %v2916
    %v3001 = vmul.f32 %v2535, %v2918
    %v3002 = vmul.f32 %v2540, %v2920
    %v3003 = vmul.f32 %v2545, %v2922
    %v3004 = vmul.f32 %v2550, %v2924
    %v3005 = vmul.f32 %v2555, %v2926
    %v3006 = vmul.f32 %v2560, %v2928
    %v3007 = vmul.f32 %v2565, %v2930
    %v3008 = vmul.f32 %v2570, %v2932
    %v3009 = vmul.f32 %v2575, %v2934
    %v3010 = vmul.f32 %v2580, %v2936
    %v3011 = vmul.f32 %v2585, %v2938
    %v3012 = vmul.f32 %v2590, %v2940
    %v3013 = vmul.f32 %v2595, %v2942
    %v3014 = vmul.f32 %v2600, %v2944
    %v3015 = vmul.f32 %v2605, %v2946
    %v3016 = vmul.f32 %v2610, %v2948
    %v3017 = vmul.f32 %v2615, %v2950
    %v3018 = vmul.f32 %v2620, %v2952
    %v3019 = vmul.f32 %v2625, %v2954
    %v3020 = vmul.f32 %v2630, %v2956
    %3053 = vrot.lane.b32.xlu0 %v2989, 100
    %v3054 = vpop.permute.xlu0 %3053
    %3055 = vrot.lane.b32.xlu0 %v2990, 100
    %v3056 = vpop.permute.xlu0 %3055
    %3057 = vrot.lane.b32.xlu0 %v2991, 100
    %v3058 = vpop.permute.xlu0 %3057
    %3059 = vrot.lane.b32.xlu0 %v2992, 100
    %v3060 = vpop.permute.xlu0 %3059
    %3061 = vrot.lane.b32.xlu0 %v2993, 100
    %v3062 = vpop.permute.xlu0 %3061
    %3063 = vrot.lane.b32.xlu0 %v2994, 100
    %v3064 = vpop.permute.xlu0 %3063
    %3065 = vrot.lane.b32.xlu0 %v2995, 100
    %v3066 = vpop.permute.xlu0 %3065
    %3067 = vrot.lane.b32.xlu0 %v2996, 100
    %v3068 = vpop.permute.xlu0 %3067
    %3069 = vrot.lane.b32.xlu0 %v2997, 100
    %v3070 = vpop.permute.xlu0 %3069
    %3071 = vrot.lane.b32.xlu0 %v2998, 100
    %v3072 = vpop.permute.xlu0 %3071
    %3073 = vrot.lane.b32.xlu0 %v2999, 100
    %v3074 = vpop.permute.xlu0 %3073
    %3075 = vrot.lane.b32.xlu0 %v3000, 100
    %v3076 = vpop.permute.xlu0 %3075
    %3077 = vrot.lane.b32.xlu0 %v3001, 100
    %v3078 = vpop.permute.xlu0 %3077
    %3079 = vrot.lane.b32.xlu0 %v3002, 100
    %v3080 = vpop.permute.xlu0 %3079
    %3081 = vrot.lane.b32.xlu0 %v3003, 100
    %v3082 = vpop.permute.xlu0 %3081
    %3083 = vrot.lane.b32.xlu0 %v3004, 100
    %v3084 = vpop.permute.xlu0 %3083
    %3085 = vrot.lane.b32.xlu0 %v3005, 100
    %v3086 = vpop.permute.xlu0 %3085
    %3087 = vrot.lane.b32.xlu0 %v3006, 100
    %v3088 = vpop.permute.xlu0 %3087
    %3089 = vrot.lane.b32.xlu0 %v3007, 100
    %v3090 = vpop.permute.xlu0 %3089
    %3091 = vrot.lane.b32.xlu0 %v3008, 100
    %v3092 = vpop.permute.xlu0 %3091
    %3093 = vrot.lane.b32.xlu0 %v3009, 100
    %v3094 = vpop.permute.xlu0 %3093
    %3095 = vrot.lane.b32.xlu0 %v3010, 100
    %v3096 = vpop.permute.xlu0 %3095
    %3097 = vrot.lane.b32.xlu0 %v3011, 100
    %v3098 = vpop.permute.xlu0 %3097
    %3099 = vrot.lane.b32.xlu0 %v3012, 100
    %v3100 = vpop.permute.xlu0 %3099
    %3101 = vrot.lane.b32.xlu0 %v3013, 100
    %v3102 = vpop.permute.xlu0 %3101
    %3103 = vrot.lane.b32.xlu0 %v3014, 100
    %v3104 = vpop.permute.xlu0 %3103
    %3105 = vrot.lane.b32.xlu0 %v3015, 100
    %v3106 = vpop.permute.xlu0 %3105
    %3107 = vrot.lane.b32.xlu0 %v3016, 100
    %v3108 = vpop.permute.xlu0 %3107
    %3109 = vrot.lane.b32.xlu0 %v3017, 100
    %v3110 = vpop.permute.xlu0 %3109
    %3111 = vrot.lane.b32.xlu0 %v3018, 100
    %v3112 = vpop.permute.xlu0 %3111
    %3113 = vrot.lane.b32.xlu0 %v3019, 100
    %v3114 = vpop.permute.xlu0 %3113
    %3115 = vrot.lane.b32.xlu0 %v3020, 100
    %v3116 = vpop.permute.xlu0 %3115
    %vm3117 = vcmask 662528
    %v3118 = vsel %vm3117, %v3054, 0
    %v3120 = vsel %vm3117, %v3056, 0
    %v3122 = vsel %vm3117, %v3058, 0
    %v3124 = vsel %vm3117, %v3060, 0
    %v3126 = vsel %vm3117, %v3062, 0
    %v3128 = vsel %vm3117, %v3064, 0
    %v3130 = vsel %vm3117, %v3066, 0
    %v3132 = vsel %vm3117, %v3068, 0
    %v3134 = vsel %vm3117, %v3070, 0
    %v3136 = vsel %vm3117, %v3072, 0
    %v3138 = vsel %vm3117, %v3074, 0
    %v3140 = vsel %vm3117, %v3076, 0
    %v3142 = vsel %vm3117, %v3078, 0
    %v3144 = vsel %vm3117, %v3080, 0
    %v3146 = vsel %vm3117, %v3082, 0
    %v3148 = vsel %vm3117, %v3084, 0
    %v3150 = vsel %vm3117, %v3086, 0
    %v3152 = vsel %vm3117, %v3088, 0
    %v3154 = vsel %vm3117, %v3090, 0
    %v3156 = vsel %vm3117, %v3092, 0
    %v3158 = vsel %vm3117, %v3094, 0
    %v3160 = vsel %vm3117, %v3096, 0
    %v3162 = vsel %vm3117, %v3098, 0
    %v3164 = vsel %vm3117, %v3100, 0
    %v3166 = vsel %vm3117, %v3102, 0
    %v3168 = vsel %vm3117, %v3104, 0
    %v3170 = vsel %vm3117, %v3106, 0
    %v3172 = vsel %vm3117, %v3108, 0
    %v3174 = vsel %vm3117, %v3110, 0
    %v3176 = vsel %vm3117, %v3112, 0
    %v3178 = vsel %vm3117, %v3114, 0
    %v3180 = vsel %vm3117, %v3116, 0
    %v3183 = vsel %vm176, %v134, 0
    %3185 = vmatprep.subr.mxu0 0.0
    %3186 = vmatpush1.msra.mxu0 %v124
    %3187 = vmatprep.subr.mxu0 0.0
    %3188 = vmatpush1.msra.mxu0 %v125
    %3189 = vmatprep.subr.mxu0 0.0
    %3190 = vmatpush1.msra.mxu0 %v126
    %3191 = vmatprep.subr.mxu0 0.0
    %3192 = vmatpush1.msra.mxu0 %v127
    %3193 = vmatprep.subr.mxu0 0.0
    %3194 = vmatpush1.msra.mxu0 %v128
    %3195 = vmatprep.subr.mxu0 0.0
    %3196 = vmatpush1.msra.mxu0 %v129
    %3197 = vmatprep.subr.mxu0 0.0
    %3198 = vmatpush1.msra.mxu0 %v130
    %3199 = vmatprep.subr.mxu0 0.0
    %3200 = vmatpush1.msra.mxu0 %v131
    %3201 = vmatprep.subr.mxu0 0.0
    %3202 = vmatpush1.msra.mxu0 %v132
    %3203 = vmatprep.subr.mxu0 0.0
    %3204 = vmatpush1.msra.mxu0 %v133
    %3205 = vmatprep.subr.mxu0 0.0
    %3206 = vmatpush1.msra.mxu0 %v3183
    %3207 = vmatprep.subr.mxu0 0.0
    %3208 = vmatpush1.msra.mxu0 0.0
    %3209 = vmatprep.subr.mxu0 0.0
    %3210 = vmatpush1.msra.mxu0 0.0
    %3211 = vmatprep.subr.mxu0 0.0
    %3212 = vmatpush1.msra.mxu0 0.0
    %3213 = vmatprep.subr.mxu0 0.0
    %3214 = vmatpush1.msra.mxu0 0.0
    %3215 = vmatprep.subr.mxu0 0.0
    %3216 = vmatpush1.msra.mxu0 0.0
    %3217 = vmatprep.subr.mxu0 0.0
    %3218 = vmatpush1.msra.mxu0 0.0
    %3219 = vmatprep.subr.mxu0 0.0
    %3220 = vmatpush1.msra.mxu0 0.0
    %3221 = vmatprep.subr.mxu0 0.0
    %3222 = vmatpush1.msra.mxu0 0.0
    %3223 = vmatprep.subr.mxu0 0.0
    %3224 = vmatpush1.msra.mxu0 0.0
    %3225 = vmatprep.subr.mxu0 0.0
    %3226 = vmatpush1.msra.mxu0 0.0
    %3227 = vmatprep.subr.mxu0 0.0
    %3228 = vmatpush1.msra.mxu0 0.0
    %3229 = vmatprep.subr.mxu0 0.0
    %3230 = vmatpush1.msra.mxu0 0.0
    %3231 = vmatprep.subr.mxu0 0.0
    %3232 = vmatpush1.msra.mxu0 0.0
    %3233 = vmatprep.subr.mxu0 0.0
    %3234 = vmatpush1.msra.mxu0 0.0
    %3235 = vmatprep.subr.mxu0 0.0
    %3236 = vmatpush1.msra.mxu0 0.0
    %3237 = vmatprep.subr.mxu0 0.0
    %3238 = vmatpush1.msra.mxu0 0.0
    %3239 = vmatprep.subr.mxu0 0.0
    %3240 = vmatpush1.msra.mxu0 0.0
    %3241 = vmatprep.subr.mxu0 0.0
    %3242 = vmatpush1.msra.mxu0 0.0
    %3243 = vmatprep.subr.mxu0 0.0
    %3244 = vmatpush1.msra.mxu0 0.0
    %3245 = vmatprep.subr.mxu0 0.0
    %3246 = vmatpush1.msra.mxu0 0.0
    %3247 = vmatprep.subr.mxu0 0.0
    %3248 = vmatpush1.msra.mxu0 0.0
    %3249 = vmatprep.mubr.f32.mxu0 0.0
    %3250 = vmatmul.mubr.f32.gmra.mrb[0].mxu0 %v3118
    %v3251 = vpop.f32.mrb[0].mxu0
    %v3252 = vadd.f32 0.0, %v3251
    %v3253 = vpop.f32.mrb[0].mxu0
    %3254 = vmatprep.mubr.f32.mxu0 0.0
    %3255 = vmatmul.mubr.f32.gmra.mrb[0].mxu0 %v3120
    %v3256 = vpop.f32.mrb[0].mxu0
    %v3257 = vadd.f32 0.0, %v3256
    %v3258 = vpop.f32.mrb[0].mxu0
    %3259 = vmatprep.mubr.f32.mxu0 0.0
    %3260 = vmatmul.mubr.f32.gmra.mrb[0].mxu0 %v3122
    %v3261 = vpop.f32.mrb[0].mxu0
    %v3262 = vadd.f32 0.0, %v3261
    %v3263 = vpop.f32.mrb[0].mxu0
    %3264 = vmatprep.mubr.f32.mxu0 0.0
    %3265 = vmatmul.mubr.f32.gmra.mrb[0].mxu0 %v3124
    %v3266 = vpop.f32.mrb[0].mxu0
    %v3267 = vadd.f32 0.0, %v3266
    %v3268 = vpop.f32.mrb[0].mxu0
    %3269 = vmatprep.mubr.f32.mxu0 0.0
    %3270 = vmatmul.mubr.f32.gmra.mrb[0].mxu0 %v3126
    %v3271 = vpop.f32.mrb[0].mxu0
    %v3272 = vadd.f32 0.0, %v3271
    %v3273 = vpop.f32.mrb[0].mxu0
    %3274 = vmatprep.mubr.f32.mxu0 0.0
    %3275 = vmatmul.mubr.f32.gmra.mrb[0].mxu0 %v3128
    %v3276 = vpop.f32.mrb[0].mxu0
    %v3277 = vadd.f32 0.0, %v3276
    %v3278 = vpop.f32.mrb[0].mxu0
    %3279 = vmatprep.mubr.f32.mxu0 0.0
    %3280 = vmatmul.mubr.f32.gmra.mrb[0].mxu0 %v3130
    %v3281 = vpop.f32.mrb[0].mxu0
    %v3282 = vadd.f32 0.0, %v3281
    %v3283 = vpop.f32.mrb[0].mxu0
    %3284 = vmatprep.mubr.f32.mxu0 0.0
    %3285 = vmatmul.mubr.f32.gmra.mrb[0].mxu0 %v3132
    %v3286 = vpop.f32.mrb[0].mxu0
    %v3287 = vadd.f32 0.0, %v3286
    %v3288 = vpop.f32.mrb[0].mxu0
    %3289 = vmatprep.mubr.f32.mxu0 0.0
    %3290 = vmatmul.mubr.f32.gmra.mrb[0].mxu0 %v3134
    %v3291 = vpop.f32.mrb[0].mxu0
    %v3292 = vadd.f32 0.0, %v3291
    %v3293 = vpop.f32.mrb[0].mxu0
    %3294 = vmatprep.mubr.f32.mxu0 0.0
    %3295 = vmatmul.mubr.f32.gmra.mrb[0].mxu0 %v3136
    %v3296 = vpop.f32.mrb[0].mxu0
    %v3297 = vadd.f32 0.0, %v3296
    %v3298 = vpop.f32.mrb[0].mxu0
    %3299 = vmatprep.mubr.f32.mxu0 0.0
    %3300 = vmatmul.mubr.f32.gmra.mrb[0].mxu0 %v3138
    %v3301 = vpop.f32.mrb[0].mxu0
    %v3302 = vadd.f32 0.0, %v3301
    %v3303 = vpop.f32.mrb[0].mxu0
    %3304 = vmatprep.mubr.f32.mxu0 0.0
    %3305 = vmatmul.mubr.f32.gmra.mrb[0].mxu0 %v3140
    %v3306 = vpop.f32.mrb[0].mxu0
    %v3307 = vadd.f32 0.0, %v3306
    %v3308 = vpop.f32.mrb[0].mxu0
    %3309 = vmatprep.mubr.f32.mxu0 0.0
    %3310 = vmatmul.mubr.f32.gmra.mrb[0].mxu0 %v3142
    %v3311 = vpop.f32.mrb[0].mxu0
    %v3312 = vadd.f32 0.0, %v3311
    %v3313 = vpop.f32.mrb[0].mxu0
    %3314 = vmatprep.mubr.f32.mxu0 0.0
    %3315 = vmatmul.mubr.f32.gmra.mrb[0].mxu0 %v3144
    %v3316 = vpop.f32.mrb[0].mxu0
    %v3317 = vadd.f32 0.0, %v3316
    %v3318 = vpop.f32.mrb[0].mxu0
    %3319 = vmatprep.mubr.f32.mxu0 0.0
    %3320 = vmatmul.mubr.f32.gmra.mrb[0].mxu0 %v3146
    %v3321 = vpop.f32.mrb[0].mxu0
    %v3322 = vadd.f32 0.0, %v3321
    %v3323 = vpop.f32.mrb[0].mxu0
    %3324 = vmatprep.mubr.f32.mxu0 0.0
    %3325 = vmatmul.mubr.f32.gmra.mrb[0].mxu0 %v3148
    %v3326 = vpop.f32.mrb[0].mxu0
    %v3327 = vadd.f32 0.0, %v3326
    %v3328 = vpop.f32.mrb[0].mxu0
    %3329 = vmatprep.mubr.f32.mxu0 0.0
    %3330 = vmatmul.mubr.f32.gmra.mrb[0].mxu0 %v3150
    %v3331 = vpop.f32.mrb[0].mxu0
    %v3332 = vadd.f32 0.0, %v3331
    %v3333 = vpop.f32.mrb[0].mxu0
    %3334 = vmatprep.mubr.f32.mxu0 0.0
    %3335 = vmatmul.mubr.f32.gmra.mrb[0].mxu0 %v3152
    %v3336 = vpop.f32.mrb[0].mxu0
    %v3337 = vadd.f32 0.0, %v3336
    %v3338 = vpop.f32.mrb[0].mxu0
    %3339 = vmatprep.mubr.f32.mxu0 0.0
    %3340 = vmatmul.mubr.f32.gmra.mrb[0].mxu0 %v3154
    %v3341 = vpop.f32.mrb[0].mxu0
    %v3342 = vadd.f32 0.0, %v3341
    %v3343 = vpop.f32.mrb[0].mxu0
    %3344 = vmatprep.mubr.f32.mxu0 0.0
    %3345 = vmatmul.mubr.f32.gmra.mrb[0].mxu0 %v3156
    %v3346 = vpop.f32.mrb[0].mxu0
    %v3347 = vadd.f32 0.0, %v3346
    %v3348 = vpop.f32.mrb[0].mxu0
    %3349 = vmatprep.mubr.f32.mxu0 0.0
    %3350 = vmatmul.mubr.f32.gmra.mrb[0].mxu0 %v3158
    %v3351 = vpop.f32.mrb[0].mxu0
    %v3352 = vadd.f32 0.0, %v3351
    %v3353 = vpop.f32.mrb[0].mxu0
    %3354 = vmatprep.mubr.f32.mxu0 0.0
    %3355 = vmatmul.mubr.f32.gmra.mrb[0].mxu0 %v3160
    %v3356 = vpop.f32.mrb[0].mxu0
    %v3357 = vadd.f32 0.0, %v3356
    %v3358 = vpop.f32.mrb[0].mxu0
    %3359 = vmatprep.mubr.f32.mxu0 0.0
    %3360 = vmatmul.mubr.f32.gmra.mrb[0].mxu0 %v3162
    %v3361 = vpop.f32.mrb[0].mxu0
    %v3362 = vadd.f32 0.0, %v3361
    %v3363 = vpop.f32.mrb[0].mxu0
    %3364 = vmatprep.mubr.f32.mxu0 0.0
    %3365 = vmatmul.mubr.f32.gmra.mrb[0].mxu0 %v3164
    %v3366 = vpop.f32.mrb[0].mxu0
    %v3367 = vadd.f32 0.0, %v3366
    %v3368 = vpop.f32.mrb[0].mxu0
    %3369 = vmatprep.mubr.f32.mxu0 0.0
    %3370 = vmatmul.mubr.f32.gmra.mrb[0].mxu0 %v3166
    %v3371 = vpop.f32.mrb[0].mxu0
    %v3372 = vadd.f32 0.0, %v3371
    %v3373 = vpop.f32.mrb[0].mxu0
    %3374 = vmatprep.mubr.f32.mxu0 0.0
    %3375 = vmatmul.mubr.f32.gmra.mrb[0].mxu0 %v3168
    %v3376 = vpop.f32.mrb[0].mxu0
    %v3377 = vadd.f32 0.0, %v3376
    %v3378 = vpop.f32.mrb[0].mxu0
    %3379 = vmatprep.mubr.f32.mxu0 0.0
    %3380 = vmatmul.mubr.f32.gmra.mrb[0].mxu0 %v3170
    %v3381 = vpop.f32.mrb[0].mxu0
    %v3382 = vadd.f32 0.0, %v3381
    %v3383 = vpop.f32.mrb[0].mxu0
    %3384 = vmatprep.mubr.f32.mxu0 0.0
    %3385 = vmatmul.mubr.f32.gmra.mrb[0].mxu0 %v3172
    %v3386 = vpop.f32.mrb[0].mxu0
    %v3387 = vadd.f32 0.0, %v3386
    %v3388 = vpop.f32.mrb[0].mxu0
    %3389 = vmatprep.mubr.f32.mxu0 0.0
    %3390 = vmatmul.mubr.f32.gmra.mrb[0].mxu0 %v3174
    %v3391 = vpop.f32.mrb[0].mxu0
    %v3392 = vadd.f32 0.0, %v3391
    %v3393 = vpop.f32.mrb[0].mxu0
    %3394 = vmatprep.mubr.f32.mxu0 0.0
    %3395 = vmatmul.mubr.f32.gmra.mrb[0].mxu0 %v3176
    %v3396 = vpop.f32.mrb[0].mxu0
    %v3397 = vadd.f32 0.0, %v3396
    %v3398 = vpop.f32.mrb[0].mxu0
    %3399 = vmatprep.mubr.f32.mxu0 0.0
    %3400 = vmatmul.mubr.f32.gmra.mrb[0].mxu0 %v3178
    %v3401 = vpop.f32.mrb[0].mxu0
    %v3402 = vadd.f32 0.0, %v3401
    %v3403 = vpop.f32.mrb[0].mxu0
    %3404 = vmatprep.mubr.f32.mxu0 0.0
    %3405 = vmatmul.mubr.f32.gmra.mrb[0].mxu0 %v3180
    %v3406 = vpop.f32.mrb[0].mxu0
    %v3407 = vadd.f32 0.0, %v3406
    %v3408 = vpop.f32.mrb[0].mxu0
    %3409 = vdwg.mxu0
    %3442 = vrot.lane.b32.xlu0 %v3252, 126
    %v3443 = vpop.permute.xlu0 %3442
    %3444 = vrot.lane.b32.xlu0 %v3257, 126
    %v3445 = vpop.permute.xlu0 %3444
    %3446 = vrot.lane.b32.xlu0 %v3262, 126
    %v3447 = vpop.permute.xlu0 %3446
    %3448 = vrot.lane.b32.xlu0 %v3267, 126
    %v3449 = vpop.permute.xlu0 %3448
    %3450 = vrot.lane.b32.xlu0 %v3272, 126
    %v3451 = vpop.permute.xlu0 %3450
    %3452 = vrot.lane.b32.xlu0 %v3277, 126
    %v3453 = vpop.permute.xlu0 %3452
    %3454 = vrot.lane.b32.xlu0 %v3282, 126
    %v3455 = vpop.permute.xlu0 %3454
    %3456 = vrot.lane.b32.xlu0 %v3287, 126
    %v3457 = vpop.permute.xlu0 %3456
    %3458 = vrot.lane.b32.xlu0 %v3292, 126
    %v3459 = vpop.permute.xlu0 %3458
    %3460 = vrot.lane.b32.xlu0 %v3297, 126
    %v3461 = vpop.permute.xlu0 %3460
    %3462 = vrot.lane.b32.xlu0 %v3302, 126
    %v3463 = vpop.permute.xlu0 %3462
    %3464 = vrot.lane.b32.xlu0 %v3307, 126
    %v3465 = vpop.permute.xlu0 %3464
    %3466 = vrot.lane.b32.xlu0 %v3312, 126
    %v3467 = vpop.permute.xlu0 %3466
    %3468 = vrot.lane.b32.xlu0 %v3317, 126
    %v3469 = vpop.permute.xlu0 %3468
    %3470 = vrot.lane.b32.xlu0 %v3322, 126
    %v3471 = vpop.permute.xlu0 %3470
    %3472 = vrot.lane.b32.xlu0 %v3327, 126
    %v3473 = vpop.permute.xlu0 %3472
    %3474 = vrot.lane.b32.xlu0 %v3332, 126
    %v3475 = vpop.permute.xlu0 %3474
    %3476 = vrot.lane.b32.xlu0 %v3337, 126
    %v3477 = vpop.permute.xlu0 %3476
    %3478 = vrot.lane.b32.xlu0 %v3342, 126
    %v3479 = vpop.permute.xlu0 %3478
    %3480 = vrot.lane.b32.xlu0 %v3347, 126
    %v3481 = vpop.permute.xlu0 %3480
    %3482 = vrot.lane.b32.xlu0 %v3352, 126
    %v3483 = vpop.permute.xlu0 %3482
    %3484 = vrot.lane.b32.xlu0 %v3357, 126
    %v3485 = vpop.permute.xlu0 %3484
    %3486 = vrot.lane.b32.xlu0 %v3362, 126
    %v3487 = vpop.permute.xlu0 %3486
    %3488 = vrot.lane.b32.xlu0 %v3367, 126
    %v3489 = vpop.permute.xlu0 %3488
    %3490 = vrot.lane.b32.xlu0 %v3372, 126
    %v3491 = vpop.permute.xlu0 %3490
    %3492 = vrot.lane.b32.xlu0 %v3377, 126
    %v3493 = vpop.permute.xlu0 %3492
    %3494 = vrot.lane.b32.xlu0 %v3382, 126
    %v3495 = vpop.permute.xlu0 %3494
    %3496 = vrot.lane.b32.xlu0 %v3387, 126
    %v3497 = vpop.permute.xlu0 %3496
    %3498 = vrot.lane.b32.xlu0 %v3392, 126
    %v3499 = vpop.permute.xlu0 %3498
    %3500 = vrot.lane.b32.xlu0 %v3397, 126
    %v3501 = vpop.permute.xlu0 %3500
    %3502 = vrot.lane.b32.xlu0 %v3402, 126
    %v3503 = vpop.permute.xlu0 %3502
    %3504 = vrot.lane.b32.xlu0 %v3407, 126
    %v3505 = vpop.permute.xlu0 %3504
    %v3538 = vmul.f32 %v2475, %v3443
    %v3539 = vmul.f32 %v2480, %v3445
    %v3540 = vmul.f32 %v2485, %v3447
    %v3541 = vmul.f32 %v2490, %v3449
    %v3542 = vmul.f32 %v2495, %v3451
    %v3543 = vmul.f32 %v2500, %v3453
    %v3544 = vmul.f32 %v2505, %v3455
    %v3545 = vmul.f32 %v2510, %v3457
    %v3546 = vmul.f32 %v2515, %v3459
    %v3547 = vmul.f32 %v2520, %v3461
    %v3548 = vmul.f32 %v2525, %v3463
    %v3549 = vmul.f32 %v2530, %v3465
    %v3550 = vmul.f32 %v2535, %v3467
    %v3551 = vmul.f32 %v2540, %v3469
    %v3552 = vmul.f32 %v2545, %v3471
    %v3553 = vmul.f32 %v2550, %v3473
    %v3554 = vmul.f32 %v2555, %v3475
    %v3555 = vmul.f32 %v2560, %v3477
    %v3556 = vmul.f32 %v2565, %v3479
    %v3557 = vmul.f32 %v2570, %v3481
    %v3558 = vmul.f32 %v2575, %v3483
    %v3559 = vmul.f32 %v2580, %v3485
    %v3560 = vmul.f32 %v2585, %v3487
    %v3561 = vmul.f32 %v2590, %v3489
    %v3562 = vmul.f32 %v2595, %v3491
    %v3563 = vmul.f32 %v2600, %v3493
    %v3564 = vmul.f32 %v2605, %v3495
    %v3565 = vmul.f32 %v2610, %v3497
    %v3566 = vmul.f32 %v2615, %v3499
    %v3567 = vmul.f32 %v2620, %v3501
    %v3568 = vmul.f32 %v2625, %v3503
    %v3569 = vmul.f32 %v2630, %v3505
    %3602 = vrot.lane.b32.xlu0 %v3538, 127
    %v3603 = vpop.permute.xlu0 %3602
    %3604 = vrot.lane.b32.xlu0 %v3539, 127
    %v3605 = vpop.permute.xlu0 %3604
    %3606 = vrot.lane.b32.xlu0 %v3540, 127
    %v3607 = vpop.permute.xlu0 %3606
    %3608 = vrot.lane.b32.xlu0 %v3541, 127
    %v3609 = vpop.permute.xlu0 %3608
    %3610 = vrot.lane.b32.xlu0 %v3542, 127
    %v3611 = vpop.permute.xlu0 %3610
    %3612 = vrot.lane.b32.xlu0 %v3543, 127
    %v3613 = vpop.permute.xlu0 %3612
    %3614 = vrot.lane.b32.xlu0 %v3544, 127
    %v3615 = vpop.permute.xlu0 %3614
    %3616 = vrot.lane.b32.xlu0 %v3545, 127
    %v3617 = vpop.permute.xlu0 %3616
    %3618 = vrot.lane.b32.xlu0 %v3546, 127
    %v3619 = vpop.permute.xlu0 %3618
    %3620 = vrot.lane.b32.xlu0 %v3547, 127
    %v3621 = vpop.permute.xlu0 %3620
    %3622 = vrot.lane.b32.xlu0 %v3548, 127
    %v3623 = vpop.permute.xlu0 %3622
    %3624 = vrot.lane.b32.xlu0 %v3549, 127
    %v3625 = vpop.permute.xlu0 %3624
    %3626 = vrot.lane.b32.xlu0 %v3550, 127
    %v3627 = vpop.permute.xlu0 %3626
    %3628 = vrot.lane.b32.xlu0 %v3551, 127
    %v3629 = vpop.permute.xlu0 %3628
    %3630 = vrot.lane.b32.xlu0 %v3552, 127
    %v3631 = vpop.permute.xlu0 %3630
    %3632 = vrot.lane.b32.xlu0 %v3553, 127
    %v3633 = vpop.permute.xlu0 %3632
    %3634 = vrot.lane.b32.xlu0 %v3554, 127
    %v3635 = vpop.permute.xlu0 %3634
    %3636 = vrot.lane.b32.xlu0 %v3555, 127
    %v3637 = vpop.permute.xlu0 %3636
    %3638 = vrot.lane.b32.xlu0 %v3556, 127
    %v3639 = vpop.permute.xlu0 %3638
    %3640 = vrot.lane.b32.xlu0 %v3557, 127
    %v3641 = vpop.permute.xlu0 %3640
    %3642 = vrot.lane.b32.xlu0 %v3558, 127
    %v3643 = vpop.permute.xlu0 %3642
    %3644 = vrot.lane.b32.xlu0 %v3559, 127
    %v3645 = vpop.permute.xlu0 %3644
    %3646 = vrot.lane.b32.xlu0 %v3560, 127
    %v3647 = vpop.permute.xlu0 %3646
    %3648 = vrot.lane.b32.xlu0 %v3561, 127
    %v3649 = vpop.permute.xlu0 %3648
    %3650 = vrot.lane.b32.xlu0 %v3562, 127
    %v3651 = vpop.permute.xlu0 %3650
    %3652 = vrot.lane.b32.xlu0 %v3563, 127
    %v3653 = vpop.permute.xlu0 %3652
    %3654 = vrot.lane.b32.xlu0 %v3564, 127
    %v3655 = vpop.permute.xlu0 %3654
    %3656 = vrot.lane.b32.xlu0 %v3565, 127
    %v3657 = vpop.permute.xlu0 %3656
    %3658 = vrot.lane.b32.xlu0 %v3566, 127
    %v3659 = vpop.permute.xlu0 %3658
    %3660 = vrot.lane.b32.xlu0 %v3567, 127
    %v3661 = vpop.permute.xlu0 %3660
    %3662 = vrot.lane.b32.xlu0 %v3568, 127
    %v3663 = vpop.permute.xlu0 %3662
    %3664 = vrot.lane.b32.xlu0 %v3569, 127
    %v3665 = vpop.permute.xlu0 %3664
    %vm3666 = vcmask 220160
    %v3667 = vsel %vm3666, %v3603, 0
    %v3669 = vsel %vm3666, %v3605, 0
    %v3671 = vsel %vm3666, %v3607, 0
    %v3673 = vsel %vm3666, %v3609, 0
    %v3675 = vsel %vm3666, %v3611, 0
    %v3677 = vsel %vm3666, %v3613, 0
    %v3679 = vsel %vm3666, %v3615, 0
    %v3681 = vsel %vm3666, %v3617, 0
    %v3683 = vsel %vm3666, %v3619, 0
    %v3685 = vsel %vm3666, %v3621, 0
    %v3687 = vsel %vm3666, %v3623, 0
    %v3689 = vsel %vm3666, %v3625, 0
    %v3691 = vsel %vm3666, %v3627, 0
    %v3693 = vsel %vm3666, %v3629, 0
    %v3695 = vsel %vm3666, %v3631, 0
    %v3697 = vsel %vm3666, %v3633, 0
    %v3699 = vsel %vm3666, %v3635, 0
    %v3701 = vsel %vm3666, %v3637, 0
    %v3703 = vsel %vm3666, %v3639, 0
    %v3705 = vsel %vm3666, %v3641, 0
    %v3707 = vsel %vm3666, %v3643, 0
    %v3709 = vsel %vm3666, %v3645, 0
    %v3711 = vsel %vm3666, %v3647, 0
    %v3713 = vsel %vm3666, %v3649, 0
    %v3715 = vsel %vm3666, %v3651, 0
    %v3717 = vsel %vm3666, %v3653, 0
    %v3719 = vsel %vm3666, %v3655, 0
    %v3721 = vsel %vm3666, %v3657, 0
    %v3723 = vsel %vm3666, %v3659, 0
    %v3725 = vsel %vm3666, %v3661, 0
    %v3727 = vsel %vm3666, %v3663, 0
    %v3729 = vsel %vm3666, %v3665, 0
    %vm3731 = vcmask 1042432
    %v3733 = vsel %vm3731, %v138, 0
    %3735 = vmatprep.subr.mxu0 0.0
    %3736 = vmatpush1.msra.mxu0 %v135
    %3737 = vmatprep.subr.mxu0 0.0
    %3738 = vmatpush1.msra.mxu0 %v136
    %3739 = vmatprep.subr.mxu0 0.0
    %3740 = vmatpush1.msra.mxu0 %v137
    %3741 = vmatprep.subr.mxu0 0.0
    %3742 = vmatpush1.msra.mxu0 %v3733
    %3743 = vmatprep.subr.mxu0 0.0
    %3744 = vmatpush1.msra.mxu0 0.0
    %3745 = vmatprep.subr.mxu0 0.0
    %3746 = vmatpush1.msra.mxu0 0.0
    %3747 = vmatprep.subr.mxu0 0.0
    %3748 = vmatpush1.msra.mxu0 0.0
    %3749 = vmatprep.subr.mxu0 0.0
    %3750 = vmatpush1.msra.mxu0 0.0
    %3751 = vmatprep.subr.mxu0 0.0
    %3752 = vmatpush1.msra.mxu0 0.0
    %3753 = vmatprep.subr.mxu0 0.0
    %3754 = vmatpush1.msra.mxu0 0.0
    %3755 = vmatprep.subr.mxu0 0.0
    %3756 = vmatpush1.msra.mxu0 0.0
    %3757 = vmatprep.subr.mxu0 0.0
    %3758 = vmatpush1.msra.mxu0 0.0
    %3759 = vmatprep.subr.mxu0 0.0
    %3760 = vmatpush1.msra.mxu0 0.0
    %3761 = vmatprep.subr.mxu0 0.0
    %3762 = vmatpush1.msra.mxu0 0.0
    %3763 = vmatprep.subr.mxu0 0.0
    %3764 = vmatpush1.msra.mxu0 0.0
    %3765 = vmatprep.subr.mxu0 0.0
    %3766 = vmatpush1.msra.mxu0 0.0
    %3767 = vmatprep.subr.mxu0 0.0
    %3768 = vmatpush1.msra.mxu0 0.0
    %3769 = vmatprep.subr.mxu0 0.0
    %3770 = vmatpush1.msra.mxu0 0.0
    %3771 = vmatprep.subr.mxu0 0.0
    %3772 = vmatpush1.msra.mxu0 0.0
    %3773 = vmatprep.subr.mxu0 0.0
    %3774 = vmatpush1.msra.mxu0 0.0
    %3775 = vmatprep.subr.mxu0 0.0
    %3776 = vmatpush1.msra.mxu0 0.0
    %3777 = vmatprep.subr.mxu0 0.0
    %3778 = vmatpush1.msra.mxu0 0.0
    %3779 = vmatprep.subr.mxu0 0.0
    %3780 = vmatpush1.msra.mxu0 0.0
    %3781 = vmatprep.subr.mxu0 0.0
    %3782 = vmatpush1.msra.mxu0 0.0
    %3783 = vmatprep.subr.mxu0 0.0
    %3784 = vmatpush1.msra.mxu0 0.0
    %3785 = vmatprep.subr.mxu0 0.0
    %3786 = vmatpush1.msra.mxu0 0.0
    %3787 = vmatprep.subr.mxu0 0.0
    %3788 = vmatpush1.msra.mxu0 0.0
    %3789 = vmatprep.subr.mxu0 0.0
    %3790 = vmatpush1.msra.mxu0 0.0
    %3791 = vmatprep.subr.mxu0 0.0
    %3792 = vmatpush1.msra.mxu0 0.0
    %3793 = vmatprep.subr.mxu0 0.0
    %3794 = vmatpush1.msra.mxu0 0.0
    %3795 = vmatprep.subr.mxu0 0.0
    %3796 = vmatpush1.msra.mxu0 0.0
    %3797 = vmatprep.subr.mxu0 0.0
    %3798 = vmatpush1.msra.mxu0 0.0
    %3799 = vmatprep.mubr.f32.mxu0 0.0
    %3800 = vmatmul.mubr.f32.gmra.mrb[0].mxu0 %v3667
    %v3801 = vpop.f32.mrb[0].mxu0
    %v3802 = vadd.f32 0.0, %v3801
    %v3803 = vpop.f32.mrb[0].mxu0
    %3804 = vmatprep.mubr.f32.mxu0 0.0
    %3805 = vmatmul.mubr.f32.gmra.mrb[0].mxu0 %v3669
    %v3806 = vpop.f32.mrb[0].mxu0
    %v3807 = vadd.f32 0.0, %v3806
    %v3808 = vpop.f32.mrb[0].mxu0
    %3809 = vmatprep.mubr.f32.mxu0 0.0
    %3810 = vmatmul.mubr.f32.gmra.mrb[0].mxu0 %v3671
    %v3811 = vpop.f32.mrb[0].mxu0
    %v3812 = vadd.f32 0.0, %v3811
    %v3813 = vpop.f32.mrb[0].mxu0
    %3814 = vmatprep.mubr.f32.mxu0 0.0
    %3815 = vmatmul.mubr.f32.gmra.mrb[0].mxu0 %v3673
    %v3816 = vpop.f32.mrb[0].mxu0
    %v3817 = vadd.f32 0.0, %v3816
    %v3818 = vpop.f32.mrb[0].mxu0
    %3819 = vmatprep.mubr.f32.mxu0 0.0
    %3820 = vmatmul.mubr.f32.gmra.mrb[0].mxu0 %v3675
    %v3821 = vpop.f32.mrb[0].mxu0
    %v3822 = vadd.f32 0.0, %v3821
    %v3823 = vpop.f32.mrb[0].mxu0
    %3824 = vmatprep.mubr.f32.mxu0 0.0
    %3825 = vmatmul.mubr.f32.gmra.mrb[0].mxu0 %v3677
    %v3826 = vpop.f32.mrb[0].mxu0
    %v3827 = vadd.f32 0.0, %v3826
    %v3828 = vpop.f32.mrb[0].mxu0
    %3829 = vmatprep.mubr.f32.mxu0 0.0
    %3830 = vmatmul.mubr.f32.gmra.mrb[0].mxu0 %v3679
    %v3831 = vpop.f32.mrb[0].mxu0
    %v3832 = vadd.f32 0.0, %v3831
    %v3833 = vpop.f32.mrb[0].mxu0
    %3834 = vmatprep.mubr.f32.mxu0 0.0
    %3835 = vmatmul.mubr.f32.gmra.mrb[0].mxu0 %v3681
    %v3836 = vpop.f32.mrb[0].mxu0
    %v3837 = vadd.f32 0.0, %v3836
    %v3838 = vpop.f32.mrb[0].mxu0
    %3839 = vmatprep.mubr.f32.mxu0 0.0
    %3840 = vmatmul.mubr.f32.gmra.mrb[0].mxu0 %v3683
    %v3841 = vpop.f32.mrb[0].mxu0
    %v3842 = vadd.f32 0.0, %v3841
    %v3843 = vpop.f32.mrb[0].mxu0
    %3844 = vmatprep.mubr.f32.mxu0 0.0
    %3845 = vmatmul.mubr.f32.gmra.mrb[0].mxu0 %v3685
    %v3846 = vpop.f32.mrb[0].mxu0
    %v3847 = vadd.f32 0.0, %v3846
    %v3848 = vpop.f32.mrb[0].mxu0
    %3849 = vmatprep.mubr.f32.mxu0 0.0
    %3850 = vmatmul.mubr.f32.gmra.mrb[0].mxu0 %v3687
    %v3851 = vpop.f32.mrb[0].mxu0
    %v3852 = vadd.f32 0.0, %v3851
    %v3853 = vpop.f32.mrb[0].mxu0
    %3854 = vmatprep.mubr.f32.mxu0 0.0
    %3855 = vmatmul.mubr.f32.gmra.mrb[0].mxu0 %v3689
    %v3856 = vpop.f32.mrb[0].mxu0
    %v3857 = vadd.f32 0.0, %v3856
    %v3858 = vpop.f32.mrb[0].mxu0
    %3859 = vmatprep.mubr.f32.mxu0 0.0
    %3860 = vmatmul.mubr.f32.gmra.mrb[0].mxu0 %v3691
    %v3861 = vpop.f32.mrb[0].mxu0
    %v3862 = vadd.f32 0.0, %v3861
    %v3863 = vpop.f32.mrb[0].mxu0
    %3864 = vmatprep.mubr.f32.mxu0 0.0
    %3865 = vmatmul.mubr.f32.gmra.mrb[0].mxu0 %v3693
    %v3866 = vpop.f32.mrb[0].mxu0
    %v3867 = vadd.f32 0.0, %v3866
    %v3868 = vpop.f32.mrb[0].mxu0
    %3869 = vmatprep.mubr.f32.mxu0 0.0
    %3870 = vmatmul.mubr.f32.gmra.mrb[0].mxu0 %v3695
    %v3871 = vpop.f32.mrb[0].mxu0
    %v3872 = vadd.f32 0.0, %v3871
    %v3873 = vpop.f32.mrb[0].mxu0
    %3874 = vmatprep.mubr.f32.mxu0 0.0
    %3875 = vmatmul.mubr.f32.gmra.mrb[0].mxu0 %v3697
    %v3876 = vpop.f32.mrb[0].mxu0
    %v3877 = vadd.f32 0.0, %v3876
    %v3878 = vpop.f32.mrb[0].mxu0
    %3879 = vmatprep.mubr.f32.mxu0 0.0
    %3880 = vmatmul.mubr.f32.gmra.mrb[0].mxu0 %v3699
    %v3881 = vpop.f32.mrb[0].mxu0
    %v3882 = vadd.f32 0.0, %v3881
    %v3883 = vpop.f32.mrb[0].mxu0
    %3884 = vmatprep.mubr.f32.mxu0 0.0
    %3885 = vmatmul.mubr.f32.gmra.mrb[0].mxu0 %v3701
    %v3886 = vpop.f32.mrb[0].mxu0
    %v3887 = vadd.f32 0.0, %v3886
    %v3888 = vpop.f32.mrb[0].mxu0
    %3889 = vmatprep.mubr.f32.mxu0 0.0
    %3890 = vmatmul.mubr.f32.gmra.mrb[0].mxu0 %v3703
    %v3891 = vpop.f32.mrb[0].mxu0
    %v3892 = vadd.f32 0.0, %v3891
    %v3893 = vpop.f32.mrb[0].mxu0
    %3894 = vmatprep.mubr.f32.mxu0 0.0
    %3895 = vmatmul.mubr.f32.gmra.mrb[0].mxu0 %v3705
    %v3896 = vpop.f32.mrb[0].mxu0
    %v3897 = vadd.f32 0.0, %v3896
    %v3898 = vpop.f32.mrb[0].mxu0
    %3899 = vmatprep.mubr.f32.mxu0 0.0
    %3900 = vmatmul.mubr.f32.gmra.mrb[0].mxu0 %v3707
    %v3901 = vpop.f32.mrb[0].mxu0
    %v3902 = vadd.f32 0.0, %v3901
    %v3903 = vpop.f32.mrb[0].mxu0
    %3904 = vmatprep.mubr.f32.mxu0 0.0
    %3905 = vmatmul.mubr.f32.gmra.mrb[0].mxu0 %v3709
    %v3906 = vpop.f32.mrb[0].mxu0
    %v3907 = vadd.f32 0.0, %v3906
    %v3908 = vpop.f32.mrb[0].mxu0
    %3909 = vmatprep.mubr.f32.mxu0 0.0
    %3910 = vmatmul.mubr.f32.gmra.mrb[0].mxu0 %v3711
    %v3911 = vpop.f32.mrb[0].mxu0
    %v3912 = vadd.f32 0.0, %v3911
    %v3913 = vpop.f32.mrb[0].mxu0
    %3914 = vmatprep.mubr.f32.mxu0 0.0
    %3915 = vmatmul.mubr.f32.gmra.mrb[0].mxu0 %v3713
    %v3916 = vpop.f32.mrb[0].mxu0
    %v3917 = vadd.f32 0.0, %v3916
    %v3918 = vpop.f32.mrb[0].mxu0
    %3919 = vmatprep.mubr.f32.mxu0 0.0
    %3920 = vmatmul.mubr.f32.gmra.mrb[0].mxu0 %v3715
    %v3921 = vpop.f32.mrb[0].mxu0
    %v3922 = vadd.f32 0.0, %v3921
    %v3923 = vpop.f32.mrb[0].mxu0
    %3924 = vmatprep.mubr.f32.mxu0 0.0
    %3925 = vmatmul.mubr.f32.gmra.mrb[0].mxu0 %v3717
    %v3926 = vpop.f32.mrb[0].mxu0
    %v3927 = vadd.f32 0.0, %v3926
    %v3928 = vpop.f32.mrb[0].mxu0
    %3929 = vmatprep.mubr.f32.mxu0 0.0
    %3930 = vmatmul.mubr.f32.gmra.mrb[0].mxu0 %v3719
    %v3931 = vpop.f32.mrb[0].mxu0
    %v3932 = vadd.f32 0.0, %v3931
    %v3933 = vpop.f32.mrb[0].mxu0
    %3934 = vmatprep.mubr.f32.mxu0 0.0
    %3935 = vmatmul.mubr.f32.gmra.mrb[0].mxu0 %v3721
    %v3936 = vpop.f32.mrb[0].mxu0
    %v3937 = vadd.f32 0.0, %v3936
    %v3938 = vpop.f32.mrb[0].mxu0
    %3939 = vmatprep.mubr.f32.mxu0 0.0
    %3940 = vmatmul.mubr.f32.gmra.mrb[0].mxu0 %v3723
    %v3941 = vpop.f32.mrb[0].mxu0
    %v3942 = vadd.f32 0.0, %v3941
    %v3943 = vpop.f32.mrb[0].mxu0
    %3944 = vmatprep.mubr.f32.mxu0 0.0
    %3945 = vmatmul.mubr.f32.gmra.mrb[0].mxu0 %v3725
    %v3946 = vpop.f32.mrb[0].mxu0
    %v3947 = vadd.f32 0.0, %v3946
    %v3948 = vpop.f32.mrb[0].mxu0
    %3949 = vmatprep.mubr.f32.mxu0 0.0
    %3950 = vmatmul.mubr.f32.gmra.mrb[0].mxu0 %v3727
    %v3951 = vpop.f32.mrb[0].mxu0
    %v3952 = vadd.f32 0.0, %v3951
    %v3953 = vpop.f32.mrb[0].mxu0
    %3954 = vmatprep.mubr.f32.mxu0 0.0
    %3955 = vmatmul.mubr.f32.gmra.mrb[0].mxu0 %v3729
    %v3956 = vpop.f32.mrb[0].mxu0
    %v3957 = vadd.f32 0.0, %v3956
    %v3958 = vpop.f32.mrb[0].mxu0
    %3959 = vdwg.mxu0
    %v3960 = vmul.f32 %v2475, %v1199
    %v3961 = vmul.f32 %v2480, %v1204
    %v3962 = vmul.f32 %v2485, %v1209
    %v3963 = vmul.f32 %v2490, %v1214
    %v3964 = vmul.f32 %v2495, %v1219
    %v3965 = vmul.f32 %v2500, %v1224
    %v3966 = vmul.f32 %v2505, %v1229
    %v3967 = vmul.f32 %v2510, %v1234
    %v3968 = vmul.f32 %v2515, %v1239
    %v3969 = vmul.f32 %v2520, %v1244
    %v3970 = vmul.f32 %v2525, %v1249
    %v3971 = vmul.f32 %v2530, %v1254
    %v3972 = vmul.f32 %v2535, %v1259
    %v3973 = vmul.f32 %v2540, %v1264
    %v3974 = vmul.f32 %v2545, %v1269
    %v3975 = vmul.f32 %v2550, %v1274
    %v3976 = vmul.f32 %v2555, %v1279
    %v3977 = vmul.f32 %v2560, %v1284
    %v3978 = vmul.f32 %v2565, %v1289
    %v3979 = vmul.f32 %v2570, %v1294
    %v3980 = vmul.f32 %v2575, %v1299
    %v3981 = vmul.f32 %v2580, %v1304
    %v3982 = vmul.f32 %v2585, %v1309
    %v3983 = vmul.f32 %v2590, %v1314
    %v3984 = vmul.f32 %v2595, %v1319
    %v3985 = vmul.f32 %v2600, %v1324
    %v3986 = vmul.f32 %v2605, %v1329
    %v3987 = vmul.f32 %v2610, %v1334
    %v3988 = vmul.f32 %v2615, %v1339
    %v3989 = vmul.f32 %v2620, %v1344
    %v3990 = vmul.f32 %v2625, %v1349
    %v3991 = vmul.f32 %v2630, %v1354
    %4024 = vrot.lane.b32.xlu0 %v1199, 127
    %v4025 = vpop.permute.xlu0 %4024
    %4026 = vrot.lane.b32.xlu0 %v1204, 127
    %v4027 = vpop.permute.xlu0 %4026
    %4028 = vrot.lane.b32.xlu0 %v1209, 127
    %v4029 = vpop.permute.xlu0 %4028
    %4030 = vrot.lane.b32.xlu0 %v1214, 127
    %v4031 = vpop.permute.xlu0 %4030
    %4032 = vrot.lane.b32.xlu0 %v1219, 127
    %v4033 = vpop.permute.xlu0 %4032
    %4034 = vrot.lane.b32.xlu0 %v1224, 127
    %v4035 = vpop.permute.xlu0 %4034
    %4036 = vrot.lane.b32.xlu0 %v1229, 127
    %v4037 = vpop.permute.xlu0 %4036
    %4038 = vrot.lane.b32.xlu0 %v1234, 127
    %v4039 = vpop.permute.xlu0 %4038
    %4040 = vrot.lane.b32.xlu0 %v1239, 127
    %v4041 = vpop.permute.xlu0 %4040
    %4042 = vrot.lane.b32.xlu0 %v1244, 127
    %v4043 = vpop.permute.xlu0 %4042
    %4044 = vrot.lane.b32.xlu0 %v1249, 127
    %v4045 = vpop.permute.xlu0 %4044
    %4046 = vrot.lane.b32.xlu0 %v1254, 127
    %v4047 = vpop.permute.xlu0 %4046
    %4048 = vrot.lane.b32.xlu0 %v1259, 127
    %v4049 = vpop.permute.xlu0 %4048
    %4050 = vrot.lane.b32.xlu0 %v1264, 127
    %v4051 = vpop.permute.xlu0 %4050
    %4052 = vrot.lane.b32.xlu0 %v1269, 127
    %v4053 = vpop.permute.xlu0 %4052
    %4054 = vrot.lane.b32.xlu0 %v1274, 127
    %v4055 = vpop.permute.xlu0 %4054
    %4056 = vrot.lane.b32.xlu0 %v1279, 127
    %v4057 = vpop.permute.xlu0 %4056
    %4058 = vrot.lane.b32.xlu0 %v1284, 127
    %v4059 = vpop.permute.xlu0 %4058
    %4060 = vrot.lane.b32.xlu0 %v1289, 127
    %v4061 = vpop.permute.xlu0 %4060
    %4062 = vrot.lane.b32.xlu0 %v1294, 127
    %v4063 = vpop.permute.xlu0 %4062
    %4064 = vrot.lane.b32.xlu0 %v1299, 127
    %v4065 = vpop.permute.xlu0 %4064
    %4066 = vrot.lane.b32.xlu0 %v1304, 127
    %v4067 = vpop.permute.xlu0 %4066
    %4068 = vrot.lane.b32.xlu0 %v1309, 127
    %v4069 = vpop.permute.xlu0 %4068
    %4070 = vrot.lane.b32.xlu0 %v1314, 127
    %v4071 = vpop.permute.xlu0 %4070
    %4072 = vrot.lane.b32.xlu0 %v1319, 127
    %v4073 = vpop.permute.xlu0 %4072
    %4074 = vrot.lane.b32.xlu0 %v1324, 127
    %v4075 = vpop.permute.xlu0 %4074
    %4076 = vrot.lane.b32.xlu0 %v1329, 127
    %v4077 = vpop.permute.xlu0 %4076
    %4078 = vrot.lane.b32.xlu0 %v1334, 127
    %v4079 = vpop.permute.xlu0 %4078
    %4080 = vrot.lane.b32.xlu0 %v1339, 127
    %v4081 = vpop.permute.xlu0 %4080
    %4082 = vrot.lane.b32.xlu0 %v1344, 127
    %v4083 = vpop.permute.xlu0 %4082
    %4084 = vrot.lane.b32.xlu0 %v1349, 127
    %v4085 = vpop.permute.xlu0 %4084
    %4086 = vrot.lane.b32.xlu0 %v1354, 127
    %v4087 = vpop.permute.xlu0 %4086
    %v4120 = vmul.f32 %v3252, %v4025
    %v4121 = vmul.f32 %v3257, %v4027
    %v4122 = vmul.f32 %v3262, %v4029
    %v4123 = vmul.f32 %v3267, %v4031
    %v4124 = vmul.f32 %v3272, %v4033
    %v4125 = vmul.f32 %v3277, %v4035
    %v4126 = vmul.f32 %v3282, %v4037
    %v4127 = vmul.f32 %v3287, %v4039
    %v4128 = vmul.f32 %v3292, %v4041
    %v4129 = vmul.f32 %v3297, %v4043
    %v4130 = vmul.f32 %v3302, %v4045
    %v4131 = vmul.f32 %v3307, %v4047
    %v4132 = vmul.f32 %v3312, %v4049
    %v4133 = vmul.f32 %v3317, %v4051
    %v4134 = vmul.f32 %v3322, %v4053
    %v4135 = vmul.f32 %v3327, %v4055
    %v4136 = vmul.f32 %v3332, %v4057
    %v4137 = vmul.f32 %v3337, %v4059
    %v4138 = vmul.f32 %v3342, %v4061
    %v4139 = vmul.f32 %v3347, %v4063
    %v4140 = vmul.f32 %v3352, %v4065
    %v4141 = vmul.f32 %v3357, %v4067
    %v4142 = vmul.f32 %v3362, %v4069
    %v4143 = vmul.f32 %v3367, %v4071
    %v4144 = vmul.f32 %v3372, %v4073
    %v4145 = vmul.f32 %v3377, %v4075
    %v4146 = vmul.f32 %v3382, %v4077
    %v4147 = vmul.f32 %v3387, %v4079
    %v4148 = vmul.f32 %v3392, %v4081
    %v4149 = vmul.f32 %v3397, %v4083
    %v4150 = vmul.f32 %v3402, %v4085
    %v4151 = vmul.f32 %v3407, %v4087
    %vm4152 = vcmask 23552
    %v4153 = vsel %vm4152, %v4120, 0.0
    %4154 = vadd.xlane.f32.xlu0 %v4153
    %v4155 = vpop.xlane.xlu0 %4154
    %v4156 = vsel %vm4152, %v4121, 0.0
    %4157 = vadd.xlane.f32.xlu0 %v4156
    %v4158 = vpop.xlane.xlu0 %4157
    %v4159 = vsel %vm4152, %v4122, 0.0
    %4160 = vadd.xlane.f32.xlu0 %v4159
    %v4161 = vpop.xlane.xlu0 %4160
    %v4162 = vsel %vm4152, %v4123, 0.0
    %4163 = vadd.xlane.f32.xlu0 %v4162
    %v4164 = vpop.xlane.xlu0 %4163
    %v4165 = vsel %vm4152, %v4124, 0.0
    %4166 = vadd.xlane.f32.xlu0 %v4165
    %v4167 = vpop.xlane.xlu0 %4166
    %v4168 = vsel %vm4152, %v4125, 0.0
    %4169 = vadd.xlane.f32.xlu0 %v4168
    %v4170 = vpop.xlane.xlu0 %4169
    %v4171 = vsel %vm4152, %v4126, 0.0
    %4172 = vadd.xlane.f32.xlu0 %v4171
    %v4173 = vpop.xlane.xlu0 %4172
    %v4174 = vsel %vm4152, %v4127, 0.0
    %4175 = vadd.xlane.f32.xlu0 %v4174
    %v4176 = vpop.xlane.xlu0 %4175
    %v4177 = vsel %vm4152, %v4128, 0.0
    %4178 = vadd.xlane.f32.xlu0 %v4177
    %v4179 = vpop.xlane.xlu0 %4178
    %v4180 = vsel %vm4152, %v4129, 0.0
    %4181 = vadd.xlane.f32.xlu0 %v4180
    %v4182 = vpop.xlane.xlu0 %4181
    %v4183 = vsel %vm4152, %v4130, 0.0
    %4184 = vadd.xlane.f32.xlu0 %v4183
    %v4185 = vpop.xlane.xlu0 %4184
    %v4186 = vsel %vm4152, %v4131, 0.0
    %4187 = vadd.xlane.f32.xlu0 %v4186
    %v4188 = vpop.xlane.xlu0 %4187
    %v4189 = vsel %vm4152, %v4132, 0.0
    %4190 = vadd.xlane.f32.xlu0 %v4189
    %v4191 = vpop.xlane.xlu0 %4190
    %v4192 = vsel %vm4152, %v4133, 0.0
    %4193 = vadd.xlane.f32.xlu0 %v4192
    %v4194 = vpop.xlane.xlu0 %4193
    %v4195 = vsel %vm4152, %v4134, 0.0
    %4196 = vadd.xlane.f32.xlu0 %v4195
    %v4197 = vpop.xlane.xlu0 %4196
    %v4198 = vsel %vm4152, %v4135, 0.0
    %4199 = vadd.xlane.f32.xlu0 %v4198
    %v4200 = vpop.xlane.xlu0 %4199
    %v4201 = vsel %vm4152, %v4136, 0.0
    %4202 = vadd.xlane.f32.xlu0 %v4201
    %v4203 = vpop.xlane.xlu0 %4202
    %v4204 = vsel %vm4152, %v4137, 0.0
    %4205 = vadd.xlane.f32.xlu0 %v4204
    %v4206 = vpop.xlane.xlu0 %4205
    %v4207 = vsel %vm4152, %v4138, 0.0
    %4208 = vadd.xlane.f32.xlu0 %v4207
    %v4209 = vpop.xlane.xlu0 %4208
    %v4210 = vsel %vm4152, %v4139, 0.0
    %4211 = vadd.xlane.f32.xlu0 %v4210
    %v4212 = vpop.xlane.xlu0 %4211
    %v4213 = vsel %vm4152, %v4140, 0.0
    %4214 = vadd.xlane.f32.xlu0 %v4213
    %v4215 = vpop.xlane.xlu0 %4214
    %v4216 = vsel %vm4152, %v4141, 0.0
    %4217 = vadd.xlane.f32.xlu0 %v4216
    %v4218 = vpop.xlane.xlu0 %4217
    %v4219 = vsel %vm4152, %v4142, 0.0
    %4220 = vadd.xlane.f32.xlu0 %v4219
    %v4221 = vpop.xlane.xlu0 %4220
    %v4222 = vsel %vm4152, %v4143, 0.0
    %4223 = vadd.xlane.f32.xlu0 %v4222
    %v4224 = vpop.xlane.xlu0 %4223
    %v4225 = vsel %vm4152, %v4144, 0.0
    %4226 = vadd.xlane.f32.xlu0 %v4225
    %v4227 = vpop.xlane.xlu0 %4226
    %v4228 = vsel %vm4152, %v4145, 0.0
    %4229 = vadd.xlane.f32.xlu0 %v4228
    %v4230 = vpop.xlane.xlu0 %4229
    %v4231 = vsel %vm4152, %v4146, 0.0
    %4232 = vadd.xlane.f32.xlu0 %v4231
    %v4233 = vpop.xlane.xlu0 %4232
    %v4234 = vsel %vm4152, %v4147, 0.0
    %4235 = vadd.xlane.f32.xlu0 %v4234
    %v4236 = vpop.xlane.xlu0 %4235
    %v4237 = vsel %vm4152, %v4148, 0.0
    %4238 = vadd.xlane.f32.xlu0 %v4237
    %v4239 = vpop.xlane.xlu0 %4238
    %v4240 = vsel %vm4152, %v4149, 0.0
    %4241 = vadd.xlane.f32.xlu0 %v4240
    %v4242 = vpop.xlane.xlu0 %4241
    %v4243 = vsel %vm4152, %v4150, 0.0
    %4244 = vadd.xlane.f32.xlu0 %v4243
    %v4245 = vpop.xlane.xlu0 %4244
    %v4246 = vsel %vm4152, %v4151, 0.0
    %4247 = vadd.xlane.f32.xlu0 %v4246
    %v4248 = vpop.xlane.xlu0 %4247
    %v4249 = vadd.f32 %v3960, %v4155
    %v4250 = vadd.f32 %v3961, %v4158
    %v4251 = vadd.f32 %v3962, %v4161
    %v4252 = vadd.f32 %v3963, %v4164
    %v4253 = vadd.f32 %v3964, %v4167
    %v4254 = vadd.f32 %v3965, %v4170
    %v4255 = vadd.f32 %v3966, %v4173
    %v4256 = vadd.f32 %v3967, %v4176
    %v4257 = vadd.f32 %v3968, %v4179
    %v4258 = vadd.f32 %v3969, %v4182
    %v4259 = vadd.f32 %v3970, %v4185
    %v4260 = vadd.f32 %v3971, %v4188
    %v4261 = vadd.f32 %v3972, %v4191
    %v4262 = vadd.f32 %v3973, %v4194
    %v4263 = vadd.f32 %v3974, %v4197
    %v4264 = vadd.f32 %v3975, %v4200
    %v4265 = vadd.f32 %v3976, %v4203
    %v4266 = vadd.f32 %v3977, %v4206
    %v4267 = vadd.f32 %v3978, %v4209
    %v4268 = vadd.f32 %v3979, %v4212
    %v4269 = vadd.f32 %v3980, %v4215
    %v4270 = vadd.f32 %v3981, %v4218
    %v4271 = vadd.f32 %v3982, %v4221
    %v4272 = vadd.f32 %v3983, %v4224
    %v4273 = vadd.f32 %v3984, %v4227
    %v4274 = vadd.f32 %v3985, %v4230
    %v4275 = vadd.f32 %v3986, %v4233
    %v4276 = vadd.f32 %v3987, %v4236
    %v4277 = vadd.f32 %v3988, %v4239
    %v4278 = vadd.f32 %v3989, %v4242
    %v4279 = vadd.f32 %v3990, %v4245
    %v4280 = vadd.f32 %v3991, %v4248
    %4281 = vrot.lane.b32.xlu0 %v1199, 124
    %v4282 = vpop.permute.xlu0 %4281
    %4283 = vrot.lane.b32.xlu0 %v1204, 124
    %v4284 = vpop.permute.xlu0 %4283
    %4285 = vrot.lane.b32.xlu0 %v1209, 124
    %v4286 = vpop.permute.xlu0 %4285
    %4287 = vrot.lane.b32.xlu0 %v1214, 124
    %v4288 = vpop.permute.xlu0 %4287
    %4289 = vrot.lane.b32.xlu0 %v1219, 124
    %v4290 = vpop.permute.xlu0 %4289
    %4291 = vrot.lane.b32.xlu0 %v1224, 124
    %v4292 = vpop.permute.xlu0 %4291
    %4293 = vrot.lane.b32.xlu0 %v1229, 124
    %v4294 = vpop.permute.xlu0 %4293
    %4295 = vrot.lane.b32.xlu0 %v1234, 124
    %v4296 = vpop.permute.xlu0 %4295
    %4297 = vrot.lane.b32.xlu0 %v1239, 124
    %v4298 = vpop.permute.xlu0 %4297
    %4299 = vrot.lane.b32.xlu0 %v1244, 124
    %v4300 = vpop.permute.xlu0 %4299
    %4301 = vrot.lane.b32.xlu0 %v1249, 124
    %v4302 = vpop.permute.xlu0 %4301
    %4303 = vrot.lane.b32.xlu0 %v1254, 124
    %v4304 = vpop.permute.xlu0 %4303
    %4305 = vrot.lane.b32.xlu0 %v1259, 124
    %v4306 = vpop.permute.xlu0 %4305
    %4307 = vrot.lane.b32.xlu0 %v1264, 124
    %v4308 = vpop.permute.xlu0 %4307
    %4309 = vrot.lane.b32.xlu0 %v1269, 124
    %v4310 = vpop.permute.xlu0 %4309
    %4311 = vrot.lane.b32.xlu0 %v1274, 124
    %v4312 = vpop.permute.xlu0 %4311
    %4313 = vrot.lane.b32.xlu0 %v1279, 124
    %v4314 = vpop.permute.xlu0 %4313
    %4315 = vrot.lane.b32.xlu0 %v1284, 124
    %v4316 = vpop.permute.xlu0 %4315
    %4317 = vrot.lane.b32.xlu0 %v1289, 124
    %v4318 = vpop.permute.xlu0 %4317
    %4319 = vrot.lane.b32.xlu0 %v1294, 124
    %v4320 = vpop.permute.xlu0 %4319
    %4321 = vrot.lane.b32.xlu0 %v1299, 124
    %v4322 = vpop.permute.xlu0 %4321
    %4323 = vrot.lane.b32.xlu0 %v1304, 124
    %v4324 = vpop.permute.xlu0 %4323
    %4325 = vrot.lane.b32.xlu0 %v1309, 124
    %v4326 = vpop.permute.xlu0 %4325
    %4327 = vrot.lane.b32.xlu0 %v1314, 124
    %v4328 = vpop.permute.xlu0 %4327
    %4329 = vrot.lane.b32.xlu0 %v1319, 124
    %v4330 = vpop.permute.xlu0 %4329
    %4331 = vrot.lane.b32.xlu0 %v1324, 124
    %v4332 = vpop.permute.xlu0 %4331
    %4333 = vrot.lane.b32.xlu0 %v1329, 124
    %v4334 = vpop.permute.xlu0 %4333
    %4335 = vrot.lane.b32.xlu0 %v1334, 124
    %v4336 = vpop.permute.xlu0 %4335
    %4337 = vrot.lane.b32.xlu0 %v1339, 124
    %v4338 = vpop.permute.xlu0 %4337
    %4339 = vrot.lane.b32.xlu0 %v1344, 124
    %v4340 = vpop.permute.xlu0 %4339
    %4341 = vrot.lane.b32.xlu0 %v1349, 124
    %v4342 = vpop.permute.xlu0 %4341
    %4343 = vrot.lane.b32.xlu0 %v1354, 124
    %v4344 = vpop.permute.xlu0 %4343
    %v4377 = vmul.f32 %v3802, %v4282
    %v4378 = vmul.f32 %v3807, %v4284
    %v4379 = vmul.f32 %v3812, %v4286
    %v4380 = vmul.f32 %v3817, %v4288
    %v4381 = vmul.f32 %v3822, %v4290
    %v4382 = vmul.f32 %v3827, %v4292
    %v4383 = vmul.f32 %v3832, %v4294
    %v4384 = vmul.f32 %v3837, %v4296
    %v4385 = vmul.f32 %v3842, %v4298
    %v4386 = vmul.f32 %v3847, %v4300
    %v4387 = vmul.f32 %v3852, %v4302
    %v4388 = vmul.f32 %v3857, %v4304
    %v4389 = vmul.f32 %v3862, %v4306
    %v4390 = vmul.f32 %v3867, %v4308
    %v4391 = vmul.f32 %v3872, %v4310
    %v4392 = vmul.f32 %v3877, %v4312
    %v4393 = vmul.f32 %v3882, %v4314
    %v4394 = vmul.f32 %v3887, %v4316
    %v4395 = vmul.f32 %v3892, %v4318
    %v4396 = vmul.f32 %v3897, %v4320
    %v4397 = vmul.f32 %v3902, %v4322
    %v4398 = vmul.f32 %v3907, %v4324
    %v4399 = vmul.f32 %v3912, %v4326
    %v4400 = vmul.f32 %v3917, %v4328
    %v4401 = vmul.f32 %v3922, %v4330
    %v4402 = vmul.f32 %v3927, %v4332
    %v4403 = vmul.f32 %v3932, %v4334
    %v4404 = vmul.f32 %v3937, %v4336
    %v4405 = vmul.f32 %v3942, %v4338
    %v4406 = vmul.f32 %v3947, %v4340
    %v4407 = vmul.f32 %v3952, %v4342
    %v4408 = vmul.f32 %v3957, %v4344
    %v4409 = vsel %vm4152, %v4377, 0.0
    %4410 = vadd.xlane.f32.xlu0 %v4409
    %v4411 = vpop.xlane.xlu0 %4410
    %v4412 = vsel %vm4152, %v4378, 0.0
    %4413 = vadd.xlane.f32.xlu0 %v4412
    %v4414 = vpop.xlane.xlu0 %4413
    %v4415 = vsel %vm4152, %v4379, 0.0
    %4416 = vadd.xlane.f32.xlu0 %v4415
    %v4417 = vpop.xlane.xlu0 %4416
    %v4418 = vsel %vm4152, %v4380, 0.0
    %4419 = vadd.xlane.f32.xlu0 %v4418
    %v4420 = vpop.xlane.xlu0 %4419
    %v4421 = vsel %vm4152, %v4381, 0.0
    %4422 = vadd.xlane.f32.xlu0 %v4421
    %v4423 = vpop.xlane.xlu0 %4422
    %v4424 = vsel %vm4152, %v4382, 0.0
    %4425 = vadd.xlane.f32.xlu0 %v4424
    %v4426 = vpop.xlane.xlu0 %4425
    %v4427 = vsel %vm4152, %v4383, 0.0
    %4428 = vadd.xlane.f32.xlu0 %v4427
    %v4429 = vpop.xlane.xlu0 %4428
    %v4430 = vsel %vm4152, %v4384, 0.0
    %4431 = vadd.xlane.f32.xlu0 %v4430
    %v4432 = vpop.xlane.xlu0 %4431
    %v4433 = vsel %vm4152, %v4385, 0.0
    %4434 = vadd.xlane.f32.xlu0 %v4433
    %v4435 = vpop.xlane.xlu0 %4434
    %v4436 = vsel %vm4152, %v4386, 0.0
    %4437 = vadd.xlane.f32.xlu0 %v4436
    %v4438 = vpop.xlane.xlu0 %4437
    %v4439 = vsel %vm4152, %v4387, 0.0
    %4440 = vadd.xlane.f32.xlu0 %v4439
    %v4441 = vpop.xlane.xlu0 %4440
    %v4442 = vsel %vm4152, %v4388, 0.0
    %4443 = vadd.xlane.f32.xlu0 %v4442
    %v4444 = vpop.xlane.xlu0 %4443
    %v4445 = vsel %vm4152, %v4389, 0.0
    %4446 = vadd.xlane.f32.xlu0 %v4445
    %v4447 = vpop.xlane.xlu0 %4446
    %v4448 = vsel %vm4152, %v4390, 0.0
    %4449 = vadd.xlane.f32.xlu0 %v4448
    %v4450 = vpop.xlane.xlu0 %4449
    %v4451 = vsel %vm4152, %v4391, 0.0
    %4452 = vadd.xlane.f32.xlu0 %v4451
    %v4453 = vpop.xlane.xlu0 %4452
    %v4454 = vsel %vm4152, %v4392, 0.0
    %4455 = vadd.xlane.f32.xlu0 %v4454
    %v4456 = vpop.xlane.xlu0 %4455
    %v4457 = vsel %vm4152, %v4393, 0.0
    %4458 = vadd.xlane.f32.xlu0 %v4457
    %v4459 = vpop.xlane.xlu0 %4458
    %v4460 = vsel %vm4152, %v4394, 0.0
    %4461 = vadd.xlane.f32.xlu0 %v4460
    %v4462 = vpop.xlane.xlu0 %4461
    %v4463 = vsel %vm4152, %v4395, 0.0
    %4464 = vadd.xlane.f32.xlu0 %v4463
    %v4465 = vpop.xlane.xlu0 %4464
    %v4466 = vsel %vm4152, %v4396, 0.0
    %4467 = vadd.xlane.f32.xlu0 %v4466
    %v4468 = vpop.xlane.xlu0 %4467
    %v4469 = vsel %vm4152, %v4397, 0.0
    %4470 = vadd.xlane.f32.xlu0 %v4469
    %v4471 = vpop.xlane.xlu0 %4470
    %v4472 = vsel %vm4152, %v4398, 0.0
    %4473 = vadd.xlane.f32.xlu0 %v4472
    %v4474 = vpop.xlane.xlu0 %4473
    %v4475 = vsel %vm4152, %v4399, 0.0
    %4476 = vadd.xlane.f32.xlu0 %v4475
    %v4477 = vpop.xlane.xlu0 %4476
    %v4478 = vsel %vm4152, %v4400, 0.0
    %4479 = vadd.xlane.f32.xlu0 %v4478
    %v4480 = vpop.xlane.xlu0 %4479
    %v4481 = vsel %vm4152, %v4401, 0.0
    %4482 = vadd.xlane.f32.xlu0 %v4481
    %v4483 = vpop.xlane.xlu0 %4482
    %v4484 = vsel %vm4152, %v4402, 0.0
    %4485 = vadd.xlane.f32.xlu0 %v4484
    %v4486 = vpop.xlane.xlu0 %4485
    %v4487 = vsel %vm4152, %v4403, 0.0
    %4488 = vadd.xlane.f32.xlu0 %v4487
    %v4489 = vpop.xlane.xlu0 %4488
    %v4490 = vsel %vm4152, %v4404, 0.0
    %4491 = vadd.xlane.f32.xlu0 %v4490
    %v4492 = vpop.xlane.xlu0 %4491
    %v4493 = vsel %vm4152, %v4405, 0.0
    %4494 = vadd.xlane.f32.xlu0 %v4493
    %v4495 = vpop.xlane.xlu0 %4494
    %v4496 = vsel %vm4152, %v4406, 0.0
    %4497 = vadd.xlane.f32.xlu0 %v4496
    %v4498 = vpop.xlane.xlu0 %4497
    %v4499 = vsel %vm4152, %v4407, 0.0
    %4500 = vadd.xlane.f32.xlu0 %v4499
    %v4501 = vpop.xlane.xlu0 %4500
    %v4502 = vsel %vm4152, %v4408, 0.0
    %4503 = vadd.xlane.f32.xlu0 %v4502
    %v4504 = vpop.xlane.xlu0 %4503
    %v4505 = vadd.f32 %v4249, %v4411
    %v4506 = vadd.f32 %v4250, %v4414
    %v4507 = vadd.f32 %v4251, %v4417
    %v4508 = vadd.f32 %v4252, %v4420
    %v4509 = vadd.f32 %v4253, %v4423
    %v4510 = vadd.f32 %v4254, %v4426
    %v4511 = vadd.f32 %v4255, %v4429
    %v4512 = vadd.f32 %v4256, %v4432
    %v4513 = vadd.f32 %v4257, %v4435
    %v4514 = vadd.f32 %v4258, %v4438
    %v4515 = vadd.f32 %v4259, %v4441
    %v4516 = vadd.f32 %v4260, %v4444
    %v4517 = vadd.f32 %v4261, %v4447
    %v4518 = vadd.f32 %v4262, %v4450
    %v4519 = vadd.f32 %v4263, %v4453
    %v4520 = vadd.f32 %v4264, %v4456
    %v4521 = vadd.f32 %v4265, %v4459
    %v4522 = vadd.f32 %v4266, %v4462
    %v4523 = vadd.f32 %v4267, %v4465
    %v4524 = vadd.f32 %v4268, %v4468
    %v4525 = vadd.f32 %v4269, %v4471
    %v4526 = vadd.f32 %v4270, %v4474
    %v4527 = vadd.f32 %v4271, %v4477
    %v4528 = vadd.f32 %v4272, %v4480
    %v4529 = vadd.f32 %v4273, %v4483
    %v4530 = vadd.f32 %v4274, %v4486
    %v4531 = vadd.f32 %v4275, %v4489
    %v4532 = vadd.f32 %v4276, %v4492
    %v4533 = vadd.f32 %v4277, %v4495
    %v4534 = vadd.f32 %v4278, %v4498
    %v4535 = vadd.f32 %v4279, %v4501
    %v4536 = vadd.f32 %v4280, %v4504
    %v4537 = vld [vmem:[%s15] sm:$0xff]
    %v4538 = vld [vmem:[%s15 + $0x8] sm:$0xff]
    %4540 = vset.pattern.permute.xlu0 0
    %4541 = vperm.xlu0 %4540, %v4505
    %v4542 = vpop.permute.xlu0 %4541
    %4545 = vset.pattern.permute.xlu0 0
    %4546 = vperm.xlu0 %4545, %v4506
    %v4547 = vpop.permute.xlu0 %4546
    %v4549 = vlaneseq
    %v4550 = vshrl.u32 %v4549, 7
    %v4551 = vsub.s32 0, %v4550
    %v4552 = vrot.slane %v4537, %v4551
    %v4553 = vmul.f32 %v4542, %v4552
    %v4554 = vmul.f32 %v4547, %v4552
    %v4556 = vsel %vm1035, %v1443, 0
    %v4559 = vsel %vm1035, %v1444, 0
    %4561 = vmatprep.subr.mxu0 0.0
    %4562 = vmatpush1.msra.mxu0 %v98
    %4563 = vmatprep.subr.mxu0 0.0
    %4564 = vmatpush1.msra.mxu0 %v99
    %4565 = vmatprep.subr.mxu0 0.0
    %4566 = vmatpush1.msra.mxu0 %v100
    %4567 = vmatprep.subr.mxu0 0.0
    %4568 = vmatpush1.msra.mxu0 %v101
    %4569 = vmatprep.subr.mxu0 0.0
    %4570 = vmatpush1.msra.mxu0 %v102
    %4571 = vmatprep.subr.mxu0 0.0
    %4572 = vmatpush1.msra.mxu0 %v103
    %4573 = vmatprep.subr.mxu0 0.0
    %4574 = vmatpush1.msra.mxu0 %v104
    %4575 = vmatprep.subr.mxu0 0.0
    %4576 = vmatpush1.msra.mxu0 %v105
    %4577 = vmatprep.subr.mxu0 0.0
    %4578 = vmatpush1.msra.mxu0 0.0
    %4579 = vmatprep.subr.mxu0 0.0
    %4580 = vmatpush1.msra.mxu0 0.0
    %4581 = vmatprep.subr.mxu0 0.0
    %4582 = vmatpush1.msra.mxu0 0.0
    %4583 = vmatprep.subr.mxu0 0.0
    %4584 = vmatpush1.msra.mxu0 0.0
    %4585 = vmatprep.subr.mxu0 0.0
    %4586 = vmatpush1.msra.mxu0 0.0
    %4587 = vmatprep.subr.mxu0 0.0
    %4588 = vmatpush1.msra.mxu0 0.0
    %4589 = vmatprep.subr.mxu0 0.0
    %4590 = vmatpush1.msra.mxu0 0.0
    %4591 = vmatprep.subr.mxu0 0.0
    %4592 = vmatpush1.msra.mxu0 0.0
    %4593 = vmatprep.subr.mxu0 0.0
    %4594 = vmatpush1.msra.mxu0 0.0
    %4595 = vmatprep.subr.mxu0 0.0
    %4596 = vmatpush1.msra.mxu0 0.0
    %4597 = vmatprep.subr.mxu0 0.0
    %4598 = vmatpush1.msra.mxu0 0.0
    %4599 = vmatprep.subr.mxu0 0.0
    %4600 = vmatpush1.msra.mxu0 0.0
    %4601 = vmatprep.subr.mxu0 0.0
    %4602 = vmatpush1.msra.mxu0 0.0
    %4603 = vmatprep.subr.mxu0 0.0
    %4604 = vmatpush1.msra.mxu0 0.0
    %4605 = vmatprep.subr.mxu0 0.0
    %4606 = vmatpush1.msra.mxu0 0.0
    %4607 = vmatprep.subr.mxu0 0.0
    %4608 = vmatpush1.msra.mxu0 0.0
    %4609 = vmatprep.subr.mxu0 0.0
    %4610 = vmatpush1.msra.mxu0 0.0
    %4611 = vmatprep.subr.mxu0 0.0
    %4612 = vmatpush1.msra.mxu0 0.0
    %4613 = vmatprep.subr.mxu0 0.0
    %4614 = vmatpush1.msra.mxu0 0.0
    %4615 = vmatprep.subr.mxu0 0.0
    %4616 = vmatpush1.msra.mxu0 0.0
    %4617 = vmatprep.subr.mxu0 0.0
    %4618 = vmatpush1.msra.mxu0 0.0
    %4619 = vmatprep.subr.mxu0 0.0
    %4620 = vmatpush1.msra.mxu0 0.0
    %4621 = vmatprep.subr.mxu0 0.0
    %4622 = vmatpush1.msra.mxu0 0.0
    %4623 = vmatprep.subr.mxu0 0.0
    %4624 = vmatpush1.msra.mxu0 0.0
    %4625 = vmatprep.mubr.f32.mxu0 0.0
    %4626 = vmatmul.mubr.f32.gmra.mrb[0].mxu0 %v4556
    %v4627 = vpop.f32.mrb[0].mxu0
    %v4628 = vadd.f32 %v4553, %v4627
    %v4629 = vpop.f32.mrb[0].mxu0
    %4630 = vmatprep.mubr.f32.mxu0 0.0
    %4631 = vmatmul.mubr.f32.gmra.mrb[0].mxu0 %v4559
    %v4632 = vpop.f32.mrb[0].mxu0
    %v4633 = vadd.f32 %v4554, %v4632
    %v4634 = vpop.f32.mrb[0].mxu0
    %4635 = vdwg.mxu0
    %4637 = vset.pattern.permute.xlu0 0
    %4638 = vperm.xlu0 %4637, %v4507
    %v4639 = vpop.permute.xlu0 %4638
    %4642 = vset.pattern.permute.xlu0 0
    %4643 = vperm.xlu0 %4642, %v4508
    %v4644 = vpop.permute.xlu0 %4643
    %v4646 = vlaneseq
    %v4647 = vshrl.u32 %v4646, 7
    %v4648 = vsub.s32 1, %v4647
    %v4649 = vrot.slane %v4537, %v4648
    %v4650 = vmul.f32 %v4639, %v4649
    %v4651 = vmul.f32 %v4644, %v4649
    %v4652 = vadd.f32 %v4628, %v4650
    %v4653 = vadd.f32 %v4633, %v4651
    %4655 = vset.pattern.permute.xlu0 0
    %4656 = vperm.xlu0 %4655, %v4509
    %v4657 = vpop.permute.xlu0 %4656
    %4660 = vset.pattern.permute.xlu0 0
    %4661 = vperm.xlu0 %4660, %v4510
    %v4662 = vpop.permute.xlu0 %4661
    %v4664 = vlaneseq
    %v4665 = vshrl.u32 %v4664, 7
    %v4666 = vsub.s32 2, %v4665
    %v4667 = vrot.slane %v4537, %v4666
    %v4668 = vmul.f32 %v4657, %v4667
    %v4669 = vmul.f32 %v4662, %v4667
    %v4670 = vadd.f32 %v4652, %v4668
    %v4671 = vadd.f32 %v4653, %v4669
    %4673 = vset.pattern.permute.xlu0 0
    %4674 = vperm.xlu0 %4673, %v4511
    %v4675 = vpop.permute.xlu0 %4674
    %4678 = vset.pattern.permute.xlu0 0
    %4679 = vperm.xlu0 %4678, %v4512
    %v4680 = vpop.permute.xlu0 %4679
    %v4682 = vlaneseq
    %v4683 = vshrl.u32 %v4682, 7
    %v4684 = vsub.s32 3, %v4683
    %v4685 = vrot.slane %v4537, %v4684
    %v4686 = vmul.f32 %v4675, %v4685
    %v4687 = vmul.f32 %v4680, %v4685
    %v4688 = vadd.f32 %v4670, %v4686
    %v4689 = vadd.f32 %v4671, %v4687
    %4691 = vset.pattern.permute.xlu0 0
    %4692 = vperm.xlu0 %4691, %v4513
    %v4693 = vpop.permute.xlu0 %4692
    %4696 = vset.pattern.permute.xlu0 0
    %4697 = vperm.xlu0 %4696, %v4514
    %v4698 = vpop.permute.xlu0 %4697
    %v4700 = vlaneseq
    %v4701 = vshrl.u32 %v4700, 7
    %v4702 = vsub.s32 4, %v4701
    %v4703 = vrot.slane %v4537, %v4702
    %v4704 = vmul.f32 %v4693, %v4703
    %v4705 = vmul.f32 %v4698, %v4703
    %v4706 = vadd.f32 %v4688, %v4704
    %v4707 = vadd.f32 %v4689, %v4705
    %4709 = vset.pattern.permute.xlu0 0
    %4710 = vperm.xlu0 %4709, %v4515
    %v4711 = vpop.permute.xlu0 %4710
    %4714 = vset.pattern.permute.xlu0 0
    %4715 = vperm.xlu0 %4714, %v4516
    %v4716 = vpop.permute.xlu0 %4715
    %v4718 = vlaneseq
    %v4719 = vshrl.u32 %v4718, 7
    %v4720 = vsub.s32 5, %v4719
    %v4721 = vrot.slane %v4537, %v4720
    %v4722 = vmul.f32 %v4711, %v4721
    %v4723 = vmul.f32 %v4716, %v4721
    %v4724 = vadd.f32 %v4706, %v4722
    %v4725 = vadd.f32 %v4707, %v4723
    %4727 = vset.pattern.permute.xlu0 0
    %4728 = vperm.xlu0 %4727, %v4517
    %v4729 = vpop.permute.xlu0 %4728
    %4732 = vset.pattern.permute.xlu0 0
    %4733 = vperm.xlu0 %4732, %v4518
    %v4734 = vpop.permute.xlu0 %4733
    %v4736 = vlaneseq
    %v4737 = vshrl.u32 %v4736, 7
    %v4738 = vsub.s32 6, %v4737
    %v4739 = vrot.slane %v4537, %v4738
    %v4740 = vmul.f32 %v4729, %v4739
    %v4741 = vmul.f32 %v4734, %v4739
    %v4742 = vadd.f32 %v4724, %v4740
    %v4743 = vadd.f32 %v4725, %v4741
    %4745 = vset.pattern.permute.xlu0 0
    %4746 = vperm.xlu0 %4745, %v4519
    %v4747 = vpop.permute.xlu0 %4746
    %4750 = vset.pattern.permute.xlu0 0
    %4751 = vperm.xlu0 %4750, %v4520
    %v4752 = vpop.permute.xlu0 %4751
    %v4754 = vlaneseq
    %v4755 = vshrl.u32 %v4754, 7
    %v4756 = vsub.s32 7, %v4755
    %v4757 = vrot.slane %v4537, %v4756
    %v4758 = vmul.f32 %v4747, %v4757
    %v4759 = vmul.f32 %v4752, %v4757
    %v4760 = vadd.f32 %v4742, %v4758
    %v4761 = vadd.f32 %v4743, %v4759
    %4763 = vset.pattern.permute.xlu0 0
    %4764 = vperm.xlu0 %4763, %v4521
    %v4765 = vpop.permute.xlu0 %4764
    %4768 = vset.pattern.permute.xlu0 0
    %4769 = vperm.xlu0 %4768, %v4522
    %v4770 = vpop.permute.xlu0 %4769
    %v4772 = vlaneseq
    %v4773 = vshrl.u32 %v4772, 7
    %v4774 = vsub.s32 0, %v4773
    %v4775 = vrot.slane %v4538, %v4774
    %v4776 = vmul.f32 %v4765, %v4775
    %v4777 = vmul.f32 %v4770, %v4775
    %v4778 = vadd.f32 %v4760, %v4776
    %v4779 = vadd.f32 %v4761, %v4777
    %4781 = vset.pattern.permute.xlu0 0
    %4782 = vperm.xlu0 %4781, %v4523
    %v4783 = vpop.permute.xlu0 %4782
    %4786 = vset.pattern.permute.xlu0 0
    %4787 = vperm.xlu0 %4786, %v4524
    %v4788 = vpop.permute.xlu0 %4787
    %v4790 = vlaneseq
    %v4791 = vshrl.u32 %v4790, 7
    %v4792 = vsub.s32 1, %v4791
    %v4793 = vrot.slane %v4538, %v4792
    %v4794 = vmul.f32 %v4783, %v4793
    %v4795 = vmul.f32 %v4788, %v4793
    %v4796 = vadd.f32 %v4778, %v4794
    %v4797 = vadd.f32 %v4779, %v4795
    %4799 = vset.pattern.permute.xlu0 0
    %4800 = vperm.xlu0 %4799, %v4525
    %v4801 = vpop.permute.xlu0 %4800
    %4804 = vset.pattern.permute.xlu0 0
    %4805 = vperm.xlu0 %4804, %v4526
    %v4806 = vpop.permute.xlu0 %4805
    %v4808 = vlaneseq
    %v4809 = vshrl.u32 %v4808, 7
    %v4810 = vsub.s32 2, %v4809
    %v4811 = vrot.slane %v4538, %v4810
    %v4812 = vmul.f32 %v4801, %v4811
    %v4813 = vmul.f32 %v4806, %v4811
    %v4814 = vadd.f32 %v4796, %v4812
    %v4815 = vadd.f32 %v4797, %v4813
    %4817 = vset.pattern.permute.xlu0 0
    %4818 = vperm.xlu0 %4817, %v4527
    %v4819 = vpop.permute.xlu0 %4818
    %4822 = vset.pattern.permute.xlu0 0
    %4823 = vperm.xlu0 %4822, %v4528
    %v4824 = vpop.permute.xlu0 %4823
    %v4826 = vlaneseq
    %v4827 = vshrl.u32 %v4826, 7
    %v4828 = vsub.s32 3, %v4827
    %v4829 = vrot.slane %v4538, %v4828
    %v4830 = vmul.f32 %v4819, %v4829
    %v4831 = vmul.f32 %v4824, %v4829
    %v4832 = vadd.f32 %v4814, %v4830
    %v4833 = vadd.f32 %v4815, %v4831
    %4835 = vset.pattern.permute.xlu0 0
    %4836 = vperm.xlu0 %4835, %v4529
    %v4837 = vpop.permute.xlu0 %4836
    %4840 = vset.pattern.permute.xlu0 0
    %4841 = vperm.xlu0 %4840, %v4530
    %v4842 = vpop.permute.xlu0 %4841
    %v4844 = vlaneseq
    %v4845 = vshrl.u32 %v4844, 7
    %v4846 = vsub.s32 4, %v4845
    %v4847 = vrot.slane %v4538, %v4846
    %v4848 = vmul.f32 %v4837, %v4847
    %v4849 = vmul.f32 %v4842, %v4847
    %v4850 = vadd.f32 %v4832, %v4848
    %v4851 = vadd.f32 %v4833, %v4849
    %4853 = vset.pattern.permute.xlu0 0
    %4854 = vperm.xlu0 %4853, %v4531
    %v4855 = vpop.permute.xlu0 %4854
    %4858 = vset.pattern.permute.xlu0 0
    %4859 = vperm.xlu0 %4858, %v4532
    %v4860 = vpop.permute.xlu0 %4859
    %v4862 = vlaneseq
    %v4863 = vshrl.u32 %v4862, 7
    %v4864 = vsub.s32 5, %v4863
    %v4865 = vrot.slane %v4538, %v4864
    %v4866 = vmul.f32 %v4855, %v4865
    %v4867 = vmul.f32 %v4860, %v4865
    %v4868 = vadd.f32 %v4850, %v4866
    %v4869 = vadd.f32 %v4851, %v4867
    %4871 = vset.pattern.permute.xlu0 0
    %4872 = vperm.xlu0 %4871, %v4533
    %v4873 = vpop.permute.xlu0 %4872
    %4876 = vset.pattern.permute.xlu0 0
    %4877 = vperm.xlu0 %4876, %v4534
    %v4878 = vpop.permute.xlu0 %4877
    %v4880 = vlaneseq
    %v4881 = vshrl.u32 %v4880, 7
    %v4882 = vsub.s32 6, %v4881
    %v4883 = vrot.slane %v4538, %v4882
    %v4884 = vmul.f32 %v4873, %v4883
    %v4885 = vmul.f32 %v4878, %v4883
    %v4886 = vadd.f32 %v4868, %v4884
    %v4887 = vadd.f32 %v4869, %v4885
    %4889 = vset.pattern.permute.xlu0 0
    %4890 = vperm.xlu0 %4889, %v4535
    %v4891 = vpop.permute.xlu0 %4890
    %4894 = vset.pattern.permute.xlu0 0
    %4895 = vperm.xlu0 %4894, %v4536
    %v4896 = vpop.permute.xlu0 %4895
    %v4898 = vlaneseq
    %v4899 = vshrl.u32 %v4898, 7
    %v4900 = vsub.s32 7, %v4899
    %v4901 = vrot.slane %v4538, %v4900
    %v4902 = vmul.f32 %v4891, %v4901
    %v4903 = vmul.f32 %v4896, %v4901
    %v4904 = vadd.f32 %v4886, %v4902
    %v4905 = vadd.f32 %v4887, %v4903
    %4906 = vst.msk [vmem:[#allocation3] sm:$0xff] %vm1361, %v4904
    %4907 = vst.msk [vmem:[#allocation3 + $0x8] sm:$0xff] %vm1361, %v4905
    %s4908 = scalar_lea.vmem %s8, 16
    %v4909 = vld [vmem:[%s4908] sm:$0xff]
    %v4910 = vld [vmem:[%s4908 + $0x8] sm:$0xff]
    %v4912 = vsel %vm1361, %v4904, 0
    %v4915 = vsel %vm1361, %v4905, 0
    %4917 = vmatprep.subr.mxu0 0.0
    %4918 = vmatpush1.msra.mxu0 %v4909
    %4919 = vmatprep.subr.mxu0 0.0
    %4920 = vmatpush1.msra.mxu0 %v4910
    %4921 = vmatprep.subr.mxu0 0.0
    %4922 = vmatpush1.msra.mxu0 0.0
    %4923 = vmatprep.subr.mxu0 0.0
    %4924 = vmatpush1.msra.mxu0 0.0
    %4925 = vmatprep.subr.mxu0 0.0
    %4926 = vmatpush1.msra.mxu0 0.0
    %4927 = vmatprep.subr.mxu0 0.0
    %4928 = vmatpush1.msra.mxu0 0.0
    %4929 = vmatprep.subr.mxu0 0.0
    %4930 = vmatpush1.msra.mxu0 0.0
    %4931 = vmatprep.subr.mxu0 0.0
    %4932 = vmatpush1.msra.mxu0 0.0
    %4933 = vmatprep.subr.mxu0 0.0
    %4934 = vmatpush1.msra.mxu0 0.0
    %4935 = vmatprep.subr.mxu0 0.0
    %4936 = vmatpush1.msra.mxu0 0.0
    %4937 = vmatprep.subr.mxu0 0.0
    %4938 = vmatpush1.msra.mxu0 0.0
    %4939 = vmatprep.subr.mxu0 0.0
    %4940 = vmatpush1.msra.mxu0 0.0
    %4941 = vmatprep.subr.mxu0 0.0
    %4942 = vmatpush1.msra.mxu0 0.0
    %4943 = vmatprep.subr.mxu0 0.0
    %4944 = vmatpush1.msra.mxu0 0.0
    %4945 = vmatprep.subr.mxu0 0.0
    %4946 = vmatpush1.msra.mxu0 0.0
    %4947 = vmatprep.subr.mxu0 0.0
    %4948 = vmatpush1.msra.mxu0 0.0
    %4949 = vmatprep.subr.mxu0 0.0
    %4950 = vmatpush1.msra.mxu0 0.0
    %4951 = vmatprep.subr.mxu0 0.0
    %4952 = vmatpush1.msra.mxu0 0.0
    %4953 = vmatprep.subr.mxu0 0.0
    %4954 = vmatpush1.msra.mxu0 0.0
    %4955 = vmatprep.subr.mxu0 0.0
    %4956 = vmatpush1.msra.mxu0 0.0
    %4957 = vmatprep.subr.mxu0 0.0
    %4958 = vmatpush1.msra.mxu0 0.0
    %4959 = vmatprep.subr.mxu0 0.0
    %4960 = vmatpush1.msra.mxu0 0.0
    %4961 = vmatprep.subr.mxu0 0.0
    %4962 = vmatpush1.msra.mxu0 0.0
    %4963 = vmatprep.subr.mxu0 0.0
    %4964 = vmatpush1.msra.mxu0 0.0
    %4965 = vmatprep.subr.mxu0 0.0
    %4966 = vmatpush1.msra.mxu0 0.0
    %4967 = vmatprep.subr.mxu0 0.0
    %4968 = vmatpush1.msra.mxu0 0.0
    %4969 = vmatprep.subr.mxu0 0.0
    %4970 = vmatpush1.msra.mxu0 0.0
    %4971 = vmatprep.subr.mxu0 0.0
    %4972 = vmatpush1.msra.mxu0 0.0
    %4973 = vmatprep.subr.mxu0 0.0
    %4974 = vmatpush1.msra.mxu0 0.0
    %4975 = vmatprep.subr.mxu0 0.0
    %4976 = vmatpush1.msra.mxu0 0.0
    %4977 = vmatprep.subr.mxu0 0.0
    %4978 = vmatpush1.msra.mxu0 0.0
    %4979 = vmatprep.subr.mxu0 0.0
    %4980 = vmatpush1.msra.mxu0 0.0
    %4981 = vmatprep.mubr.f32.mxu0 0.0
    %4982 = vmatmul.mubr.f32.gmra.mrb[0].mxu0 %v4912
    %v4983 = vpop.f32.mrb[0].mxu0
    %v4984 = vadd.f32 0.0, %v4983
    %v4985 = vpop.f32.mrb[0].mxu0
    %4986 = vmatprep.mubr.f32.mxu0 0.0
    %4987 = vmatmul.mubr.f32.gmra.mrb[0].mxu0 %v4915
    %v4988 = vpop.f32.mrb[0].mxu0
    %v4989 = vadd.f32 0.0, %v4988
    %v4990 = vpop.f32.mrb[0].mxu0
    %4991 = vdwg.mxu0
    %v4992 = vmul.f32 %v4984, %v78
    %v4993 = vmul.f32 %v4989, %v79
    %s4994 = scalar_lea.vmem %s7, 16
    %v4995 = vld [vmem:[%s4994] sm:$0xff]
    %v4996 = vld [vmem:[%s4994 + $0x8] sm:$0xff]
    %4997 = vmatprep.subr.mxu0 0.0
    %4998 = vmatpush1.msra.mxu0 %v4995
    %4999 = vmatprep.subr.mxu0 0.0
    %5000 = vmatpush1.msra.mxu0 %v4996
    %5001 = vmatprep.subr.mxu0 0.0
    %5002 = vmatpush1.msra.mxu0 0.0
    %5003 = vmatprep.subr.mxu0 0.0
    %5004 = vmatpush1.msra.mxu0 0.0
    %5005 = vmatprep.subr.mxu0 0.0
    %5006 = vmatpush1.msra.mxu0 0.0
    %5007 = vmatprep.subr.mxu0 0.0
    %5008 = vmatpush1.msra.mxu0 0.0
    %5009 = vmatprep.subr.mxu0 0.0
    %5010 = vmatpush1.msra.mxu0 0.0
    %5011 = vmatprep.subr.mxu0 0.0
    %5012 = vmatpush1.msra.mxu0 0.0
    %5013 = vmatprep.subr.mxu0 0.0
    %5014 = vmatpush1.msra.mxu0 0.0
    %5015 = vmatprep.subr.mxu0 0.0
    %5016 = vmatpush1.msra.mxu0 0.0
    %5017 = vmatprep.subr.mxu0 0.0
    %5018 = vmatpush1.msra.mxu0 0.0
    %5019 = vmatprep.subr.mxu0 0.0
    %5020 = vmatpush1.msra.mxu0 0.0
    %5021 = vmatprep.subr.mxu0 0.0
    %5022 = vmatpush1.msra.mxu0 0.0
    %5023 = vmatprep.subr.mxu0 0.0
    %5024 = vmatpush1.msra.mxu0 0.0
    %5025 = vmatprep.subr.mxu0 0.0
    %5026 = vmatpush1.msra.mxu0 0.0
    %5027 = vmatprep.subr.mxu0 0.0
    %5028 = vmatpush1.msra.mxu0 0.0
    %5029 = vmatprep.subr.mxu0 0.0
    %5030 = vmatpush1.msra.mxu0 0.0
    %5031 = vmatprep.subr.mxu0 0.0
    %5032 = vmatpush1.msra.mxu0 0.0
    %5033 = vmatprep.subr.mxu0 0.0
    %5034 = vmatpush1.msra.mxu0 0.0
    %5035 = vmatprep.subr.mxu0 0.0
    %5036 = vmatpush1.msra.mxu0 0.0
    %5037 = vmatprep.subr.mxu0 0.0
    %5038 = vmatpush1.msra.mxu0 0.0
    %5039 = vmatprep.subr.mxu0 0.0
    %5040 = vmatpush1.msra.mxu0 0.0
    %5041 = vmatprep.subr.mxu0 0.0
    %5042 = vmatpush1.msra.mxu0 0.0
    %5043 = vmatprep.subr.mxu0 0.0
    %5044 = vmatpush1.msra.mxu0 0.0
    %5045 = vmatprep.subr.mxu0 0.0
    %5046 = vmatpush1.msra.mxu0 0.0
    %5047 = vmatprep.subr.mxu0 0.0
    %5048 = vmatpush1.msra.mxu0 0.0
    %5049 = vmatprep.subr.mxu0 0.0
    %5050 = vmatpush1.msra.mxu0 0.0
    %5051 = vmatprep.subr.mxu0 0.0
    %5052 = vmatpush1.msra.mxu0 0.0
    %5053 = vmatprep.subr.mxu0 0.0
    %5054 = vmatpush1.msra.mxu0 0.0
    %5055 = vmatprep.subr.mxu0 0.0
    %5056 = vmatpush1.msra.mxu0 0.0
    %5057 = vmatprep.subr.mxu0 0.0
    %5058 = vmatpush1.msra.mxu0 0.0
    %5059 = vmatprep.subr.mxu0 0.0
    %5060 = vmatpush1.msra.mxu0 0.0
    %5061 = vmatprep.mubr.f32.mxu0 0.0
    %5062 = vmatmul.mubr.f32.gmra.mrb[0].mxu0 %v4912
    %v5063 = vpop.f32.mrb[0].mxu0
    %v5064 = vadd.f32 0.0, %v5063
    %v5065 = vpop.f32.mrb[0].mxu0
    %5066 = vmatprep.mubr.f32.mxu0 0.0
    %5067 = vmatmul.mubr.f32.gmra.mrb[0].mxu0 %v4915
    %v5068 = vpop.f32.mrb[0].mxu0
    %v5069 = vadd.f32 0.0, %v5068
    %v5070 = vpop.f32.mrb[0].mxu0
    %5071 = vdwg.mxu0
    %5072 = vmatprep.subr.mxu0 0.0
    %5073 = vmatpush1.msra.mxu0 %v5064
    %5074 = vmatprep.subr.mxu0 0.0
    %5075 = vmatpush1.msra.mxu0 %v5069
    %5076 = vmatprep.subr.mxu0 0.0
    %5077 = vmatpush1.msra.mxu0 0.0
    %5078 = vmatprep.subr.mxu0 0.0
    %5079 = vmatpush1.msra.mxu0 0.0
    %5080 = vmatprep.subr.mxu0 0.0
    %5081 = vmatpush1.msra.mxu0 0.0
    %5082 = vmatprep.subr.mxu0 0.0
    %5083 = vmatpush1.msra.mxu0 0.0
    %5084 = vmatprep.subr.mxu0 0.0
    %5085 = vmatpush1.msra.mxu0 0.0
    %5086 = vmatprep.subr.mxu0 0.0
    %5087 = vmatpush1.msra.mxu0 0.0
    %5088 = vmatprep.subr.mxu0 0.0
    %5089 = vmatpush1.msra.mxu0 0.0
    %5090 = vmatprep.subr.mxu0 0.0
    %5091 = vmatpush1.msra.mxu0 0.0
    %5092 = vmatprep.subr.mxu0 0.0
    %5093 = vmatpush1.msra.mxu0 0.0
    %5094 = vmatprep.subr.mxu0 0.0
    %5095 = vmatpush1.msra.mxu0 0.0
    %5096 = vmatprep.subr.mxu0 0.0
    %5097 = vmatpush1.msra.mxu0 0.0
    %5098 = vmatprep.subr.mxu0 0.0
    %5099 = vmatpush1.msra.mxu0 0.0
    %5100 = vmatprep.subr.mxu0 0.0
    %5101 = vmatpush1.msra.mxu0 0.0
    %5102 = vmatprep.subr.mxu0 0.0
    %5103 = vmatpush1.msra.mxu0 0.0
    %5104 = vmatprep.subr.mxu0 0.0
    %5105 = vmatpush1.msra.mxu0 0.0
    %5106 = vmatprep.subr.mxu0 0.0
    %5107 = vmatpush1.msra.mxu0 0.0
    %5108 = vmatprep.subr.mxu0 0.0
    %5109 = vmatpush1.msra.mxu0 0.0
    %5110 = vmatprep.subr.mxu0 0.0
    %5111 = vmatpush1.msra.mxu0 0.0
    %5112 = vmatprep.subr.mxu0 0.0
    %5113 = vmatpush1.msra.mxu0 0.0
    %5114 = vmatprep.subr.mxu0 0.0
    %5115 = vmatpush1.msra.mxu0 0.0
    %5116 = vmatprep.subr.mxu0 0.0
    %5117 = vmatpush1.msra.mxu0 0.0
    %5118 = vmatprep.subr.mxu0 0.0
    %5119 = vmatpush1.msra.mxu0 0.0
    %5120 = vmatprep.subr.mxu0 0.0
    %5121 = vmatpush1.msra.mxu0 0.0
    %5122 = vmatprep.subr.mxu0 0.0
    %5123 = vmatpush1.msra.mxu0 0.0
    %5124 = vmatprep.subr.mxu0 0.0
    %5125 = vmatpush1.msra.mxu0 0.0
    %5126 = vmatprep.subr.mxu0 0.0
    %5127 = vmatpush1.msra.mxu0 0.0
    %5128 = vmatprep.subr.mxu0 0.0
    %5129 = vmatpush1.msra.mxu0 0.0
    %5130 = vmatprep.subr.mxu0 0.0
    %5131 = vmatpush1.msra.mxu0 0.0
    %5132 = vmatprep.subr.mxu0 0.0
    %5133 = vmatpush1.msra.mxu0 0.0
    %5134 = vmatprep.subr.mxu0 0.0
    %5135 = vmatpush1.msra.mxu0 0.0
    %5136 = vmatprep.mubr.f32.mxu0 0.0
    %5137 = vmatmul.mubr.f32.gmra.mrb[0].mxu0 %v1523
    %v5138 = vpop.f32.mrb[0].mxu0
    %v5139 = vadd.f32 0.0, %v5138
    %v5140 = vpop.f32.mrb[0].mxu0
    %5141 = vmatprep.mubr.f32.mxu0 0.0
    %5142 = vmatmul.mubr.f32.gmra.mrb[0].mxu0 %v1526
    %v5143 = vpop.f32.mrb[0].mxu0
    %v5144 = vadd.f32 0.0, %v5143
    %v5145 = vpop.f32.mrb[0].mxu0
    %5146 = vmatprep.mubr.f32.mxu0 0.0
    %5147 = vmatmul.mubr.f32.gmra.mrb[0].mxu0 %v1529
    %v5148 = vpop.f32.mrb[0].mxu0
    %v5149 = vadd.f32 0.0, %v5148
    %v5150 = vpop.f32.mrb[0].mxu0
    %5151 = vmatprep.mubr.f32.mxu0 0.0
    %5152 = vmatmul.mubr.f32.gmra.mrb[0].mxu0 %v1532
    %v5153 = vpop.f32.mrb[0].mxu0
    %v5154 = vadd.f32 0.0, %v5153
    %v5155 = vpop.f32.mrb[0].mxu0
    %5156 = vmatprep.mubr.f32.mxu0 0.0
    %5157 = vmatmul.mubr.f32.gmra.mrb[0].mxu0 %v1535
    %v5158 = vpop.f32.mrb[0].mxu0
    %v5159 = vadd.f32 0.0, %v5158
    %v5160 = vpop.f32.mrb[0].mxu0
    %5161 = vmatprep.mubr.f32.mxu0 0.0
    %5162 = vmatmul.mubr.f32.gmra.mrb[0].mxu0 %v1538
    %v5163 = vpop.f32.mrb[0].mxu0
    %v5164 = vadd.f32 0.0, %v5163
    %v5165 = vpop.f32.mrb[0].mxu0
    %5166 = vmatprep.mubr.f32.mxu0 0.0
    %5167 = vmatmul.mubr.f32.gmra.mrb[0].mxu0 %v1541
    %v5168 = vpop.f32.mrb[0].mxu0
    %v5169 = vadd.f32 0.0, %v5168
    %v5170 = vpop.f32.mrb[0].mxu0
    %5171 = vmatprep.mubr.f32.mxu0 0.0
    %5172 = vmatmul.mubr.f32.gmra.mrb[0].mxu0 %v1544
    %v5173 = vpop.f32.mrb[0].mxu0
    %v5174 = vadd.f32 0.0, %v5173
    %v5175 = vpop.f32.mrb[0].mxu0
    %5176 = vdwg.mxu0
    %v5178 = vsel %vm1361, %v5139, 0
    %v5181 = vsel %vm1361, %v5144, 0
    %v5184 = vsel %vm1361, %v5149, 0
    %v5187 = vsel %vm1361, %v5154, 0
    %v5190 = vsel %vm1361, %v5159, 0
    %v5193 = vsel %vm1361, %v5164, 0
    %v5196 = vsel %vm1361, %v5169, 0
    %v5199 = vsel %vm1361, %v5174, 0
    %5201 = vmatprep.subr.mxu0 0.0
    %5202 = vmatpush1.msra.mxu0 %v106
    %5203 = vmatprep.subr.mxu0 0.0
    %5204 = vmatpush1.msra.mxu0 %v107
    %5205 = vmatprep.subr.mxu0 0.0
    %5206 = vmatpush1.msra.mxu0 0.0
    %5207 = vmatprep.subr.mxu0 0.0
    %5208 = vmatpush1.msra.mxu0 0.0
    %5209 = vmatprep.subr.mxu0 0.0
    %5210 = vmatpush1.msra.mxu0 0.0
    %5211 = vmatprep.subr.mxu0 0.0
    %5212 = vmatpush1.msra.mxu0 0.0
    %5213 = vmatprep.subr.mxu0 0.0
    %5214 = vmatpush1.msra.mxu0 0.0
    %5215 = vmatprep.subr.mxu0 0.0
    %5216 = vmatpush1.msra.mxu0 0.0
    %5217 = vmatprep.subr.mxu0 0.0
    %5218 = vmatpush1.msra.mxu0 0.0
    %5219 = vmatprep.subr.mxu0 0.0
    %5220 = vmatpush1.msra.mxu0 0.0
    %5221 = vmatprep.subr.mxu0 0.0
    %5222 = vmatpush1.msra.mxu0 0.0
    %5223 = vmatprep.subr.mxu0 0.0
    %5224 = vmatpush1.msra.mxu0 0.0
    %5225 = vmatprep.subr.mxu0 0.0
    %5226 = vmatpush1.msra.mxu0 0.0
    %5227 = vmatprep.subr.mxu0 0.0
    %5228 = vmatpush1.msra.mxu0 0.0
    %5229 = vmatprep.subr.mxu0 0.0
    %5230 = vmatpush1.msra.mxu0 0.0
    %5231 = vmatprep.subr.mxu0 0.0
    %5232 = vmatpush1.msra.mxu0 0.0
    %5233 = vmatprep.subr.mxu0 0.0
    %5234 = vmatpush1.msra.mxu0 0.0
    %5235 = vmatprep.subr.mxu0 0.0
    %5236 = vmatpush1.msra.mxu0 0.0
    %5237 = vmatprep.subr.mxu0 0.0
    %5238 = vmatpush1.msra.mxu0 0.0
    %5239 = vmatprep.subr.mxu0 0.0
    %5240 = vmatpush1.msra.mxu0 0.0
    %5241 = vmatprep.subr.mxu0 0.0
    %5242 = vmatpush1.msra.mxu0 0.0
    %5243 = vmatprep.subr.mxu0 0.0
    %5244 = vmatpush1.msra.mxu0 0.0
    %5245 = vmatprep.subr.mxu0 0.0
    %5246 = vmatpush1.msra.mxu0 0.0
    %5247 = vmatprep.subr.mxu0 0.0
    %5248 = vmatpush1.msra.mxu0 0.0
    %5249 = vmatprep.subr.mxu0 0.0
    %5250 = vmatpush1.msra.mxu0 0.0
    %5251 = vmatprep.subr.mxu0 0.0
    %5252 = vmatpush1.msra.mxu0 0.0
    %5253 = vmatprep.subr.mxu0 0.0
    %5254 = vmatpush1.msra.mxu0 0.0
    %5255 = vmatprep.subr.mxu0 0.0
    %5256 = vmatpush1.msra.mxu0 0.0
    %5257 = vmatprep.subr.mxu0 0.0
    %5258 = vmatpush1.msra.mxu0 0.0
    %5259 = vmatprep.subr.mxu0 0.0
    %5260 = vmatpush1.msra.mxu0 0.0
    %5261 = vmatprep.subr.mxu0 0.0
    %5262 = vmatpush1.msra.mxu0 0.0
    %5263 = vmatprep.subr.mxu0 0.0
    %5264 = vmatpush1.msra.mxu0 0.0
    %5265 = vmatprep.mubr.f32.mxu0 0.0
    %5266 = vmatmul.mubr.f32.gmra.mrb[0].mxu0 %v5178
    %v5267 = vpop.f32.mrb[0].mxu0
    %v5268 = vadd.f32 0.0, %v5267
    %v5269 = vpop.f32.mrb[0].mxu0
    %5270 = vmatprep.mubr.f32.mxu0 0.0
    %5271 = vmatmul.mubr.f32.gmra.mrb[0].mxu0 %v5181
    %v5272 = vpop.f32.mrb[0].mxu0
    %v5273 = vadd.f32 0.0, %v5272
    %v5274 = vpop.f32.mrb[0].mxu0
    %5275 = vmatprep.mubr.f32.mxu0 0.0
    %5276 = vmatmul.mubr.f32.gmra.mrb[0].mxu0 %v5184
    %v5277 = vpop.f32.mrb[0].mxu0
    %v5278 = vadd.f32 0.0, %v5277
    %v5279 = vpop.f32.mrb[0].mxu0
    %5280 = vmatprep.mubr.f32.mxu0 0.0
    %5281 = vmatmul.mubr.f32.gmra.mrb[0].mxu0 %v5187
    %v5282 = vpop.f32.mrb[0].mxu0
    %v5283 = vadd.f32 0.0, %v5282
    %v5284 = vpop.f32.mrb[0].mxu0
    %5285 = vmatprep.mubr.f32.mxu0 0.0
    %5286 = vmatmul.mubr.f32.gmra.mrb[0].mxu0 %v5190
    %v5287 = vpop.f32.mrb[0].mxu0
    %v5288 = vadd.f32 0.0, %v5287
    %v5289 = vpop.f32.mrb[0].mxu0
    %5290 = vmatprep.mubr.f32.mxu0 0.0
    %5291 = vmatmul.mubr.f32.gmra.mrb[0].mxu0 %v5193
    %v5292 = vpop.f32.mrb[0].mxu0
    %v5293 = vadd.f32 0.0, %v5292
    %v5294 = vpop.f32.mrb[0].mxu0
    %5295 = vmatprep.mubr.f32.mxu0 0.0
    %5296 = vmatmul.mubr.f32.gmra.mrb[0].mxu0 %v5196
    %v5297 = vpop.f32.mrb[0].mxu0
    %v5298 = vadd.f32 0.0, %v5297
    %v5299 = vpop.f32.mrb[0].mxu0
    %5300 = vmatprep.mubr.f32.mxu0 0.0
    %5301 = vmatmul.mubr.f32.gmra.mrb[0].mxu0 %v5199
    %v5302 = vpop.f32.mrb[0].mxu0
    %v5303 = vadd.f32 0.0, %v5302
    %v5304 = vpop.f32.mrb[0].mxu0
    %5305 = vdwg.mxu0
    %5314 = vrot.lane.b32.xlu0 %v5268, 48
    %v5315 = vpop.permute.xlu0 %5314
    %5316 = vrot.lane.b32.xlu0 %v5273, 48
    %v5317 = vpop.permute.xlu0 %5316
    %5318 = vrot.lane.b32.xlu0 %v5278, 48
    %v5319 = vpop.permute.xlu0 %5318
    %5320 = vrot.lane.b32.xlu0 %v5283, 48
    %v5321 = vpop.permute.xlu0 %5320
    %5322 = vrot.lane.b32.xlu0 %v5288, 48
    %v5323 = vpop.permute.xlu0 %5322
    %5324 = vrot.lane.b32.xlu0 %v5293, 48
    %v5325 = vpop.permute.xlu0 %5324
    %5326 = vrot.lane.b32.xlu0 %v5298, 48
    %v5327 = vpop.permute.xlu0 %5326
    %5328 = vrot.lane.b32.xlu0 %v5303, 48
    %v5329 = vpop.permute.xlu0 %5328
    %v5338 = vmul.f32 %v957, %v5315
    %v5339 = vmul.f32 %v962, %v5317
    %v5340 = vmul.f32 %v967, %v5319
    %v5341 = vmul.f32 %v972, %v5321
    %v5342 = vmul.f32 %v977, %v5323
    %v5343 = vmul.f32 %v982, %v5325
    %v5344 = vmul.f32 %v987, %v5327
    %v5345 = vmul.f32 %v992, %v5329
    %5354 = vrot.lane.b32.xlu0 %v5338, 80
    %v5355 = vpop.permute.xlu0 %5354
    %5356 = vrot.lane.b32.xlu0 %v5339, 80
    %v5357 = vpop.permute.xlu0 %5356
    %5358 = vrot.lane.b32.xlu0 %v5340, 80
    %v5359 = vpop.permute.xlu0 %5358
    %5360 = vrot.lane.b32.xlu0 %v5341, 80
    %v5361 = vpop.permute.xlu0 %5360
    %5362 = vrot.lane.b32.xlu0 %v5342, 80
    %v5363 = vpop.permute.xlu0 %5362
    %5364 = vrot.lane.b32.xlu0 %v5343, 80
    %v5365 = vpop.permute.xlu0 %5364
    %5366 = vrot.lane.b32.xlu0 %v5344, 80
    %v5367 = vpop.permute.xlu0 %5366
    %5368 = vrot.lane.b32.xlu0 %v5345, 80
    %v5369 = vpop.permute.xlu0 %5368
    %v5370 = vsel %vm1788, %v5355, 0
    %v5372 = vsel %vm1788, %v5357, 0
    %v5374 = vsel %vm1788, %v5359, 0
    %v5376 = vsel %vm1788, %v5361, 0
    %v5378 = vsel %vm1788, %v5363, 0
    %v5380 = vsel %vm1788, %v5365, 0
    %v5382 = vsel %vm1788, %v5367, 0
    %v5384 = vsel %vm1788, %v5369, 0
    %5386 = vmatprep.subr.mxu0 %v109
    %5387 = vmatpush1.msra.mxu0 %v108
    %5388 = vmatprep.subr.mxu0 %v111
    %5389 = vmatpush1.msra.mxu0 %v110
    %5390 = vmatprep.subr.mxu0 %v113
    %5391 = vmatpush1.msra.mxu0 %v112
    %5392 = vmatprep.subr.mxu0 %v115
    %5393 = vmatpush1.msra.mxu0 %v114
    %5394 = vmatprep.subr.mxu0 %v117
    %5395 = vmatpush1.msra.mxu0 %v116
    %5396 = vmatprep.subr.mxu0 %v119
    %5397 = vmatpush1.msra.mxu0 %v118
    %5398 = vmatprep.subr.mxu0 0.0
    %5399 = vmatpush1.msra.mxu0 0.0
    %5400 = vmatprep.subr.mxu0 0.0
    %5401 = vmatpush1.msra.mxu0 0.0
    %5402 = vmatprep.subr.mxu0 0.0
    %5403 = vmatpush1.msra.mxu0 0.0
    %5404 = vmatprep.subr.mxu0 0.0
    %5405 = vmatpush1.msra.mxu0 0.0
    %5406 = vmatprep.subr.mxu0 0.0
    %5407 = vmatpush1.msra.mxu0 0.0
    %5408 = vmatprep.subr.mxu0 0.0
    %5409 = vmatpush1.msra.mxu0 0.0
    %5410 = vmatprep.subr.mxu0 0.0
    %5411 = vmatpush1.msra.mxu0 0.0
    %5412 = vmatprep.subr.mxu0 0.0
    %5413 = vmatpush1.msra.mxu0 0.0
    %5414 = vmatprep.subr.mxu0 0.0
    %5415 = vmatpush1.msra.mxu0 0.0
    %5416 = vmatprep.subr.mxu0 0.0
    %5417 = vmatpush1.msra.mxu0 0.0
    %5418 = vmatprep.subr.mxu0 0.0
    %5419 = vmatpush1.msra.mxu0 0.0
    %5420 = vmatprep.subr.mxu0 0.0
    %5421 = vmatpush1.msra.mxu0 0.0
    %5422 = vmatprep.subr.mxu0 0.0
    %5423 = vmatpush1.msra.mxu0 0.0
    %5424 = vmatprep.subr.mxu0 0.0
    %5425 = vmatpush1.msra.mxu0 0.0
    %5426 = vmatprep.subr.mxu0 0.0
    %5427 = vmatpush1.msra.mxu0 0.0
    %5428 = vmatprep.subr.mxu0 0.0
    %5429 = vmatpush1.msra.mxu0 0.0
    %5430 = vmatprep.subr.mxu0 0.0
    %5431 = vmatpush1.msra.mxu0 0.0
    %5432 = vmatprep.subr.mxu0 0.0
    %5433 = vmatpush1.msra.mxu0 0.0
    %5434 = vmatprep.subr.mxu0 0.0
    %5435 = vmatpush1.msra.mxu0 0.0
    %5436 = vmatprep.subr.mxu0 0.0
    %5437 = vmatpush1.msra.mxu0 0.0
    %5438 = vmatprep.subr.mxu0 0.0
    %5439 = vmatpush1.msra.mxu0 0.0
    %5440 = vmatprep.subr.mxu0 0.0
    %5441 = vmatpush1.msra.mxu0 0.0
    %5442 = vmatprep.subr.mxu0 0.0
    %5443 = vmatpush1.msra.mxu0 0.0
    %5444 = vmatprep.subr.mxu0 0.0
    %5445 = vmatpush1.msra.mxu0 0.0
    %5446 = vmatprep.subr.mxu0 0.0
    %5447 = vmatpush1.msra.mxu0 0.0
    %5448 = vmatprep.subr.mxu0 0.0
    %5449 = vmatpush1.msra.mxu0 0.0
    %5450 = vmatprep.mubr.f32.mxu0 0.0
    %5451 = vmatmul.mubr.f32.gmra.mrb[0].mxu0 %v5370
    %v5452 = vpop.f32.mrb[0].mxu0
    %v5453 = vadd.f32 0.0, %v5452
    %v5454 = vpop.f32.mrb[0].mxu0
    %v5455 = vadd.f32 0.0, %v5454
    %5456 = vmatprep.mubr.f32.mxu0 0.0
    %5457 = vmatmul.mubr.f32.gmra.mrb[0].mxu0 %v5372
    %v5458 = vpop.f32.mrb[0].mxu0
    %v5459 = vadd.f32 0.0, %v5458
    %v5460 = vpop.f32.mrb[0].mxu0
    %v5461 = vadd.f32 0.0, %v5460
    %5462 = vmatprep.mubr.f32.mxu0 0.0
    %5463 = vmatmul.mubr.f32.gmra.mrb[0].mxu0 %v5374
    %v5464 = vpop.f32.mrb[0].mxu0
    %v5465 = vadd.f32 0.0, %v5464
    %v5466 = vpop.f32.mrb[0].mxu0
    %v5467 = vadd.f32 0.0, %v5466
    %5468 = vmatprep.mubr.f32.mxu0 0.0
    %5469 = vmatmul.mubr.f32.gmra.mrb[0].mxu0 %v5376
    %v5470 = vpop.f32.mrb[0].mxu0
    %v5471 = vadd.f32 0.0, %v5470
    %v5472 = vpop.f32.mrb[0].mxu0
    %v5473 = vadd.f32 0.0, %v5472
    %5474 = vmatprep.mubr.f32.mxu0 0.0
    %5475 = vmatmul.mubr.f32.gmra.mrb[0].mxu0 %v5378
    %v5476 = vpop.f32.mrb[0].mxu0
    %v5477 = vadd.f32 0.0, %v5476
    %v5478 = vpop.f32.mrb[0].mxu0
    %v5479 = vadd.f32 0.0, %v5478
    %5480 = vmatprep.mubr.f32.mxu0 0.0
    %5481 = vmatmul.mubr.f32.gmra.mrb[0].mxu0 %v5380
    %v5482 = vpop.f32.mrb[0].mxu0
    %v5483 = vadd.f32 0.0, %v5482
    %v5484 = vpop.f32.mrb[0].mxu0
    %v5485 = vadd.f32 0.0, %v5484
    %5486 = vmatprep.mubr.f32.mxu0 0.0
    %5487 = vmatmul.mubr.f32.gmra.mrb[0].mxu0 %v5382
    %v5488 = vpop.f32.mrb[0].mxu0
    %v5489 = vadd.f32 0.0, %v5488
    %v5490 = vpop.f32.mrb[0].mxu0
    %v5491 = vadd.f32 0.0, %v5490
    %5492 = vmatprep.mubr.f32.mxu0 0.0
    %5493 = vmatmul.mubr.f32.gmra.mrb[0].mxu0 %v5384
    %v5494 = vpop.f32.mrb[0].mxu0
    %v5495 = vadd.f32 0.0, %v5494
    %v5496 = vpop.f32.mrb[0].mxu0
    %v5497 = vadd.f32 0.0, %v5496
    %5498 = vdwg.mxu0
    %v5499 = vmul.f32 %v5453, %v250
    %v5500 = vmul.f32 %v5455, %v252
    %v5501 = vmul.f32 %v5459, %v256
    %v5502 = vmul.f32 %v5461, %v258
    %v5503 = vmul.f32 %v5465, %v262
    %v5504 = vmul.f32 %v5467, %v264
    %v5505 = vmul.f32 %v5471, %v268
    %v5506 = vmul.f32 %v5473, %v270
    %v5507 = vmul.f32 %v5477, %v274
    %v5508 = vmul.f32 %v5479, %v276
    %v5509 = vmul.f32 %v5483, %v280
    %v5510 = vmul.f32 %v5485, %v282
    %v5511 = vmul.f32 %v5489, %v286
    %v5512 = vmul.f32 %v5491, %v288
    %v5513 = vmul.f32 %v5495, %v292
    %v5514 = vmul.f32 %v5497, %v294
    %5515 = vmatprep.subr.mxu0 %v5500
    %5516 = vmatpush1.msra.mxu0 %v5499
    %5517 = vmatprep.subr.mxu0 %v5502
    %5518 = vmatpush1.msra.mxu0 %v5501
    %5519 = vmatprep.subr.mxu0 %v5504
    %5520 = vmatpush1.msra.mxu0 %v5503
    %5521 = vmatprep.subr.mxu0 %v5506
    %5522 = vmatpush1.msra.mxu0 %v5505
    %5523 = vmatprep.subr.mxu0 %v5508
    %5524 = vmatpush1.msra.mxu0 %v5507
    %5525 = vmatprep.subr.mxu0 %v5510
    %5526 = vmatpush1.msra.mxu0 %v5509
    %5527 = vmatprep.subr.mxu0 %v5512
    %5528 = vmatpush1.msra.mxu0 %v5511
    %5529 = vmatprep.subr.mxu0 %v5514
    %5530 = vmatpush1.msra.mxu0 %v5513
    %5531 = vmatprep.subr.mxu0 0.0
    %5532 = vmatpush1.msra.mxu0 0.0
    %5533 = vmatprep.subr.mxu0 0.0
    %5534 = vmatpush1.msra.mxu0 0.0
    %5535 = vmatprep.subr.mxu0 0.0
    %5536 = vmatpush1.msra.mxu0 0.0
    %5537 = vmatprep.subr.mxu0 0.0
    %5538 = vmatpush1.msra.mxu0 0.0
    %5539 = vmatprep.subr.mxu0 0.0
    %5540 = vmatpush1.msra.mxu0 0.0
    %5541 = vmatprep.subr.mxu0 0.0
    %5542 = vmatpush1.msra.mxu0 0.0
    %5543 = vmatprep.subr.mxu0 0.0
    %5544 = vmatpush1.msra.mxu0 0.0
    %5545 = vmatprep.subr.mxu0 0.0
    %5546 = vmatpush1.msra.mxu0 0.0
    %5547 = vmatprep.subr.mxu0 0.0
    %5548 = vmatpush1.msra.mxu0 0.0
    %5549 = vmatprep.subr.mxu0 0.0
    %5550 = vmatpush1.msra.mxu0 0.0
    %5551 = vmatprep.subr.mxu0 0.0
    %5552 = vmatpush1.msra.mxu0 0.0
    %5553 = vmatprep.subr.mxu0 0.0
    %5554 = vmatpush1.msra.mxu0 0.0
    %5555 = vmatprep.subr.mxu0 0.0
    %5556 = vmatpush1.msra.mxu0 0.0
    %5557 = vmatprep.subr.mxu0 0.0
    %5558 = vmatpush1.msra.mxu0 0.0
    %5559 = vmatprep.subr.mxu0 0.0
    %5560 = vmatpush1.msra.mxu0 0.0
    %5561 = vmatprep.subr.mxu0 0.0
    %5562 = vmatpush1.msra.mxu0 0.0
    %5563 = vmatprep.subr.mxu0 0.0
    %5564 = vmatpush1.msra.mxu0 0.0
    %5565 = vmatprep.subr.mxu0 0.0
    %5566 = vmatpush1.msra.mxu0 0.0
    %5567 = vmatprep.subr.mxu0 0.0
    %5568 = vmatpush1.msra.mxu0 0.0
    %5569 = vmatprep.subr.mxu0 0.0
    %5570 = vmatpush1.msra.mxu0 0.0
    %5571 = vmatprep.subr.mxu0 0.0
    %5572 = vmatpush1.msra.mxu0 0.0
    %5573 = vmatprep.subr.mxu0 0.0
    %5574 = vmatpush1.msra.mxu0 0.0
    %5575 = vmatprep.subr.mxu0 0.0
    %5576 = vmatpush1.msra.mxu0 0.0
    %5577 = vmatprep.subr.mxu0 0.0
    %5578 = vmatpush1.msra.mxu0 0.0
    %5579 = vmatprep.mubr.f32.mxu0 0.0
    %5580 = vmatmul.mubr.f32.gmra.mrb[0].mxu0 %v1943
    %v5581 = vpop.f32.mrb[0].mxu0
    %v5582 = vadd.f32 0.0, %v5581
    %v5583 = vpop.f32.mrb[0].mxu0
    %v5584 = vadd.f32 0.0, %v5583
    %5585 = vmatprep.mubr.f32.mxu0 0.0
    %5586 = vmatmul.mubr.f32.gmra.mrb[0].mxu0 %v1946
    %v5587 = vpop.f32.mrb[0].mxu0
    %v5588 = vadd.f32 0.0, %v5587
    %v5589 = vpop.f32.mrb[0].mxu0
    %v5590 = vadd.f32 0.0, %v5589
    %5591 = vdwg.mxu0
    %s5592 = scalar_lea.vmem %s13, 288
    %v5593 = vld [vmem:[%s5592] sm:$0xff]
    %v5594 = vld [vmem:[%s5592 + $0x8] sm:$0xff]
    %v5595 = vld [vmem:[%s5592 + $0x10] sm:$0xff]
    %v5596 = vld [vmem:[%s5592 + $0x18] sm:$0xff]
    %v5597 = vld [vmem:[%s5592 + $0x20] sm:$0xff]
    %v5598 = vld [vmem:[%s5592 + $0x28] sm:$0xff]
    %v5599 = vld [vmem:[%s5592 + $0x30] sm:$0xff]
    %v5600 = vld [vmem:[%s5592 + $0x38] sm:$0xff]
    %v5601 = vld [vmem:[%s5592 + $0x40] sm:$0xff]
    %v5602 = vld [vmem:[%s5592 + $0x48] sm:$0xff]
    %v5603 = vld [vmem:[%s5592 + $0x50] sm:$0xff]
    %v5604 = vld [vmem:[%s5592 + $0x58] sm:$0xff]
    %v5605 = vld [vmem:[%s5592 + $0x60] sm:$0xff]
    %v5606 = vld [vmem:[%s5592 + $0x68] sm:$0xff]
    %v5607 = vld [vmem:[%s5592 + $0x70] sm:$0xff]
    %v5608 = vld [vmem:[%s5592 + $0x78] sm:$0xff]
    %v5609 = vld [vmem:[%s5592 + $0x80] sm:$0xff]
    %v5610 = vld [vmem:[%s5592 + $0x88] sm:$0xff]
    %v5611 = vld [vmem:[%s5592 + $0x90] sm:$0xff]
    %v5612 = vld [vmem:[%s5592 + $0x98] sm:$0xff]
    %v5613 = vld [vmem:[%s5592 + $0xa0] sm:$0xff]
    %v5614 = vld [vmem:[%s5592 + $0xa8] sm:$0xff]
    %v5615 = vld [vmem:[%s5592 + $0xb0] sm:$0xff]
    %v5616 = vld [vmem:[%s5592 + $0xb8] sm:$0xff]
    %v5617 = vld [vmem:[%s5592 + $0xc0] sm:$0xff]
    %v5618 = vld [vmem:[%s5592 + $0xc8] sm:$0xff]
    %v5619 = vld [vmem:[%s5592 + $0xd0] sm:$0xff]
    %v5620 = vld [vmem:[%s5592 + $0xd8] sm:$0xff]
    %v5621 = vld [vmem:[%s5592 + $0xe0] sm:$0xff]
    %v5622 = vld [vmem:[%s5592 + $0xe8] sm:$0xff]
    %v5623 = vld [vmem:[%s5592 + $0xf0] sm:$0xff]
    %v5624 = vld [vmem:[%s5592 + $0xf8] sm:$0xff]
    %v5625 = vld [vmem:[%s5592 + $0x100] sm:$0xff]
    %v5626 = vld [vmem:[%s5592 + $0x108] sm:$0xff]
    %v5627 = vld [vmem:[%s5592 + $0x110] sm:$0xff]
    %v5628 = vld [vmem:[%s5592 + $0x118] sm:$0xff]
    %v5630 = vsel %vm1361, %v5584, 0
    %v5633 = vsel %vm1361, %v5590, 0
    %5635 = vmatprep.subr.mxu0 %v5594
    %5636 = vmatpush1.msra.mxu0 %v5593
    %5637 = vmatprep.subr.mxu0 %v5596
    %5638 = vmatpush1.msra.mxu0 %v5595
    %5639 = vmatprep.subr.mxu0 %v5598
    %5640 = vmatpush1.msra.mxu0 %v5597
    %5641 = vmatprep.subr.mxu0 %v5600
    %5642 = vmatpush1.msra.mxu0 %v5599
    %5643 = vmatprep.subr.mxu0 %v5602
    %5644 = vmatpush1.msra.mxu0 %v5601
    %5645 = vmatprep.subr.mxu0 %v5604
    %5646 = vmatpush1.msra.mxu0 %v5603
    %5647 = vmatprep.subr.mxu0 %v5606
    %5648 = vmatpush1.msra.mxu0 %v5605
    %5649 = vmatprep.subr.mxu0 %v5608
    %5650 = vmatpush1.msra.mxu0 %v5607
    %5651 = vmatprep.subr.mxu0 %v5610
    %5652 = vmatpush1.msra.mxu0 %v5609
    %5653 = vmatprep.subr.mxu0 %v5612
    %5654 = vmatpush1.msra.mxu0 %v5611
    %5655 = vmatprep.subr.mxu0 %v5614
    %5656 = vmatpush1.msra.mxu0 %v5613
    %5657 = vmatprep.subr.mxu0 %v5616
    %5658 = vmatpush1.msra.mxu0 %v5615
    %5659 = vmatprep.subr.mxu0 %v5618
    %5660 = vmatpush1.msra.mxu0 %v5617
    %5661 = vmatprep.subr.mxu0 %v5620
    %5662 = vmatpush1.msra.mxu0 %v5619
    %5663 = vmatprep.subr.mxu0 %v5622
    %5664 = vmatpush1.msra.mxu0 %v5621
    %5665 = vmatprep.subr.mxu0 %v5624
    %5666 = vmatpush1.msra.mxu0 %v5623
    %5667 = vmatprep.subr.mxu0 %v5626
    %5668 = vmatpush1.msra.mxu0 %v5625
    %5669 = vmatprep.subr.mxu0 %v5628
    %5670 = vmatpush1.msra.mxu0 %v5627
    %5671 = vmatprep.subr.mxu0 0.0
    %5672 = vmatpush1.msra.mxu0 0.0
    %5673 = vmatprep.subr.mxu0 0.0
    %5674 = vmatpush1.msra.mxu0 0.0
    %5675 = vmatprep.subr.mxu0 0.0
    %5676 = vmatpush1.msra.mxu0 0.0
    %5677 = vmatprep.subr.mxu0 0.0
    %5678 = vmatpush1.msra.mxu0 0.0
    %5679 = vmatprep.subr.mxu0 0.0
    %5680 = vmatpush1.msra.mxu0 0.0
    %5681 = vmatprep.subr.mxu0 0.0
    %5682 = vmatpush1.msra.mxu0 0.0
    %5683 = vmatprep.subr.mxu0 0.0
    %5684 = vmatpush1.msra.mxu0 0.0
    %5685 = vmatprep.subr.mxu0 0.0
    %5686 = vmatpush1.msra.mxu0 0.0
    %5687 = vmatprep.subr.mxu0 0.0
    %5688 = vmatpush1.msra.mxu0 0.0
    %5689 = vmatprep.subr.mxu0 0.0
    %5690 = vmatpush1.msra.mxu0 0.0
    %5691 = vmatprep.subr.mxu0 0.0
    %5692 = vmatpush1.msra.mxu0 0.0
    %5693 = vmatprep.subr.mxu0 0.0
    %5694 = vmatpush1.msra.mxu0 0.0
    %5695 = vmatprep.subr.mxu0 0.0
    %5696 = vmatpush1.msra.mxu0 0.0
    %5697 = vmatprep.subr.mxu0 0.0
    %5698 = vmatpush1.msra.mxu0 0.0
    %5699 = vmatprep.mubr.f32.mxu0 %v5630
    %5700 = vmatmul.mubr.f32.gmra.mrb[0].mxu0 %v5582
    %v5701 = vpop.f32.mrb[0].mxu0
    %v5702 = vadd.f32 0.0, %v5701
    %v5703 = vpop.f32.mrb[0].mxu0
    %v5704 = vadd.f32 0.0, %v5703
    %5705 = vmatprep.mubr.f32.mxu0 %v5633
    %5706 = vmatmul.mubr.f32.gmra.mrb[0].mxu0 %v5588
    %v5707 = vpop.f32.mrb[0].mxu0
    %v5708 = vadd.f32 0.0, %v5707
    %v5709 = vpop.f32.mrb[0].mxu0
    %v5710 = vadd.f32 0.0, %v5709
    %5711 = vdwg.mxu0
    %5712 = vst.msk [vmem:[#allocation2] sm:$0xff] %vm151, %v5702
    %5713 = vst.msk [vmem:[#allocation2 + $0x8] sm:$0xff] %vm151, %v5708
    %5716 = vrot.lane.b32.xlu0 %v5702, 119
    %v5717 = vpop.permute.xlu0 %5716
    %5718 = vrot.lane.b32.xlu0 %v5708, 119
    %v5719 = vpop.permute.xlu0 %5718
    %5722 = vst.msk [vmem:[#allocation2 + $0x10] sm:$0xff] %vm151, %v5717
    %5723 = vst.msk [vmem:[#allocation2 + $0x18] sm:$0xff] %vm151, %v5719
    %5724 = vrot.lane.b32.xlu0 %v5702, 110
    %v5725 = vpop.permute.xlu0 %5724
    %5726 = vrot.lane.b32.xlu0 %v5708, 110
    %v5727 = vpop.permute.xlu0 %5726
    %5730 = vst.msk [vmem:[#allocation2 + $0x20] sm:$0xff] %vm151, %v5725
    %5731 = vst.msk [vmem:[#allocation2 + $0x28] sm:$0xff] %vm151, %v5727
    %5732 = vrot.lane.b32.xlu0 %v5702, 101
    %v5733 = vpop.permute.xlu0 %5732
    %5734 = vrot.lane.b32.xlu0 %v5708, 101
    %v5735 = vpop.permute.xlu0 %5734
    %5738 = vst.msk [vmem:[#allocation2 + $0x30] sm:$0xff] %vm151, %v5733
    %5739 = vst.msk [vmem:[#allocation2 + $0x38] sm:$0xff] %vm151, %v5735
    %5740 = vrot.lane.b32.xlu0 %v5702, 92
    %v5741 = vpop.permute.xlu0 %5740
    %5742 = vrot.lane.b32.xlu0 %v5708, 92
    %v5743 = vpop.permute.xlu0 %5742
    %5746 = vst.msk [vmem:[#allocation2 + $0x40] sm:$0xff] %vm151, %v5741
    %5747 = vst.msk [vmem:[#allocation2 + $0x48] sm:$0xff] %vm151, %v5743
    %5748 = vrot.lane.b32.xlu0 %v5702, 83
    %v5749 = vpop.permute.xlu0 %5748
    %5750 = vrot.lane.b32.xlu0 %v5708, 83
    %v5751 = vpop.permute.xlu0 %5750
    %5754 = vst.msk [vmem:[#allocation2 + $0x50] sm:$0xff] %vm151, %v5749
    %5755 = vst.msk [vmem:[#allocation2 + $0x58] sm:$0xff] %vm151, %v5751
    %5756 = vrot.lane.b32.xlu0 %v5702, 74
    %v5757 = vpop.permute.xlu0 %5756
    %5758 = vrot.lane.b32.xlu0 %v5708, 74
    %v5759 = vpop.permute.xlu0 %5758
    %5762 = vst.msk [vmem:[#allocation2 + $0x60] sm:$0xff] %vm151, %v5757
    %5763 = vst.msk [vmem:[#allocation2 + $0x68] sm:$0xff] %vm151, %v5759
    %5764 = vrot.lane.b32.xlu0 %v5702, 65
    %v5765 = vpop.permute.xlu0 %5764
    %5766 = vrot.lane.b32.xlu0 %v5708, 65
    %v5767 = vpop.permute.xlu0 %5766
    %5770 = vst.msk [vmem:[#allocation2 + $0x70] sm:$0xff] %vm151, %v5765
    %5771 = vst.msk [vmem:[#allocation2 + $0x78] sm:$0xff] %vm151, %v5767
    %5772 = vrot.lane.b32.xlu0 %v5702, 56
    %v5773 = vpop.permute.xlu0 %5772
    %5774 = vrot.lane.b32.xlu0 %v5708, 56
    %v5775 = vpop.permute.xlu0 %5774
    %5778 = vst.msk [vmem:[#allocation2 + $0x80] sm:$0xff] %vm151, %v5773
    %5779 = vst.msk [vmem:[#allocation2 + $0x88] sm:$0xff] %vm151, %v5775
    %5780 = vrot.lane.b32.xlu0 %v5702, 47
    %v5781 = vpop.permute.xlu0 %5780
    %5782 = vrot.lane.b32.xlu0 %v5708, 47
    %v5783 = vpop.permute.xlu0 %5782
    %5786 = vst.msk [vmem:[#allocation2 + $0x90] sm:$0xff] %vm151, %v5781
    %5787 = vst.msk [vmem:[#allocation2 + $0x98] sm:$0xff] %vm151, %v5783
    %5788 = vrot.lane.b32.xlu0 %v5702, 38
    %v5789 = vpop.permute.xlu0 %5788
    %5790 = vrot.lane.b32.xlu0 %v5708, 38
    %v5791 = vpop.permute.xlu0 %5790
    %5794 = vst.msk [vmem:[#allocation2 + $0xa0] sm:$0xff] %vm151, %v5789
    %5795 = vst.msk [vmem:[#allocation2 + $0xa8] sm:$0xff] %vm151, %v5791
    %5796 = vrot.lane.b32.xlu0 %v5702, 29
    %v5797 = vpop.permute.xlu0 %5796
    %5798 = vrot.lane.b32.xlu0 %v5708, 29
    %v5799 = vpop.permute.xlu0 %5798
    %5802 = vst.msk [vmem:[#allocation2 + $0xb0] sm:$0xff] %vm151, %v5797
    %5803 = vst.msk [vmem:[#allocation2 + $0xb8] sm:$0xff] %vm151, %v5799
    %5804 = vrot.lane.b32.xlu0 %v5702, 20
    %v5805 = vpop.permute.xlu0 %5804
    %5806 = vrot.lane.b32.xlu0 %v5708, 20
    %v5807 = vpop.permute.xlu0 %5806
    %5810 = vst.msk [vmem:[#allocation2 + $0xc0] sm:$0xff] %vm151, %v5805
    %5811 = vst.msk [vmem:[#allocation2 + $0xc8] sm:$0xff] %vm151, %v5807
    %5812 = vrot.lane.b32.xlu0 %v5702, 11
    %v5813 = vpop.permute.xlu0 %5812
    %5814 = vrot.lane.b32.xlu0 %v5708, 11
    %v5815 = vpop.permute.xlu0 %5814
    %5818 = vst.msk [vmem:[#allocation2 + $0xd0] sm:$0xff] %vm151, %v5813
    %5819 = vst.msk [vmem:[#allocation2 + $0xd8] sm:$0xff] %vm151, %v5815
    %5822 = vrot.lane.b32.xlu0 %v5702, 2
    %v5823 = vpop.permute.xlu0 %5822
    %5824 = vrot.lane.b32.xlu0 %v5704, 2
    %v5825 = vpop.permute.xlu0 %5824
    %5826 = vrot.lane.b32.xlu0 %v5708, 2
    %v5827 = vpop.permute.xlu0 %5826
    %5828 = vrot.lane.b32.xlu0 %v5710, 2
    %v5829 = vpop.permute.xlu0 %5828
    %v5830 = vsel %vm2262, %v5823, %v5825
    %v5831 = vsel %vm2262, %v5827, %v5829
    %5834 = vst.msk [vmem:[#allocation2 + $0xe0] sm:$0xff] %vm151, %v5830
    %5835 = vst.msk [vmem:[#allocation2 + $0xe8] sm:$0xff] %vm151, %v5831
    %5836 = vrot.lane.b32.xlu0 %v5704, 121
    %v5837 = vpop.permute.xlu0 %5836
    %5838 = vrot.lane.b32.xlu0 %v5710, 121
    %v5839 = vpop.permute.xlu0 %5838
    %5842 = vst.msk [vmem:[#allocation2 + $0xf0] sm:$0xff] %vm151, %v5837
    %5843 = vst.msk [vmem:[#allocation2 + $0xf8] sm:$0xff] %vm151, %v5839
    %v5844 = vld [vmem:[#allocation2] sm:$0xff]
    %v5845 = vld [vmem:[#allocation2 + $0x8] sm:$0xff]
    %v5846 = vld [vmem:[#allocation2 + $0x10] sm:$0xff]
    %v5847 = vld [vmem:[#allocation2 + $0x18] sm:$0xff]
    %v5848 = vld [vmem:[#allocation2 + $0x20] sm:$0xff]
    %v5849 = vld [vmem:[#allocation2 + $0x28] sm:$0xff]
    %v5850 = vld [vmem:[#allocation2 + $0x30] sm:$0xff]
    %v5851 = vld [vmem:[#allocation2 + $0x38] sm:$0xff]
    %v5852 = vld [vmem:[#allocation2 + $0x40] sm:$0xff]
    %v5853 = vld [vmem:[#allocation2 + $0x48] sm:$0xff]
    %v5854 = vld [vmem:[#allocation2 + $0x50] sm:$0xff]
    %v5855 = vld [vmem:[#allocation2 + $0x58] sm:$0xff]
    %v5856 = vld [vmem:[#allocation2 + $0x60] sm:$0xff]
    %v5857 = vld [vmem:[#allocation2 + $0x68] sm:$0xff]
    %v5858 = vld [vmem:[#allocation2 + $0x70] sm:$0xff]
    %v5859 = vld [vmem:[#allocation2 + $0x78] sm:$0xff]
    %v5860 = vld [vmem:[#allocation2 + $0x80] sm:$0xff]
    %v5861 = vld [vmem:[#allocation2 + $0x88] sm:$0xff]
    %v5862 = vld [vmem:[#allocation2 + $0x90] sm:$0xff]
    %v5863 = vld [vmem:[#allocation2 + $0x98] sm:$0xff]
    %v5864 = vld [vmem:[#allocation2 + $0xa0] sm:$0xff]
    %v5865 = vld [vmem:[#allocation2 + $0xa8] sm:$0xff]
    %v5866 = vld [vmem:[#allocation2 + $0xb0] sm:$0xff]
    %v5867 = vld [vmem:[#allocation2 + $0xb8] sm:$0xff]
    %v5868 = vld [vmem:[#allocation2 + $0xc0] sm:$0xff]
    %v5869 = vld [vmem:[#allocation2 + $0xc8] sm:$0xff]
    %v5870 = vld [vmem:[#allocation2 + $0xd0] sm:$0xff]
    %v5871 = vld [vmem:[#allocation2 + $0xd8] sm:$0xff]
    %v5872 = vld [vmem:[#allocation2 + $0xe0] sm:$0xff]
    %v5873 = vld [vmem:[#allocation2 + $0xe8] sm:$0xff]
    %v5874 = vld [vmem:[#allocation2 + $0xf0] sm:$0xff]
    %v5875 = vld [vmem:[#allocation2 + $0xf8] sm:$0xff]
    %v5877 = vsel %vm151, %v5844, 0
    %v5880 = vsel %vm151, %v5845, 0
    %v5883 = vsel %vm151, %v5846, 0
    %v5886 = vsel %vm151, %v5847, 0
    %v5889 = vsel %vm151, %v5848, 0
    %v5892 = vsel %vm151, %v5849, 0
    %v5895 = vsel %vm151, %v5850, 0
    %v5898 = vsel %vm151, %v5851, 0
    %v5901 = vsel %vm151, %v5852, 0
    %v5904 = vsel %vm151, %v5853, 0
    %v5907 = vsel %vm151, %v5854, 0
    %v5910 = vsel %vm151, %v5855, 0
    %v5913 = vsel %vm151, %v5856, 0
    %v5916 = vsel %vm151, %v5857, 0
    %v5919 = vsel %vm151, %v5858, 0
    %v5922 = vsel %vm151, %v5859, 0
    %v5925 = vsel %vm151, %v5860, 0
    %v5928 = vsel %vm151, %v5861, 0
    %v5931 = vsel %vm151, %v5862, 0
    %v5934 = vsel %vm151, %v5863, 0
    %v5937 = vsel %vm151, %v5864, 0
    %v5940 = vsel %vm151, %v5865, 0
    %v5943 = vsel %vm151, %v5866, 0
    %v5946 = vsel %vm151, %v5867, 0
    %v5949 = vsel %vm151, %v5868, 0
    %v5952 = vsel %vm151, %v5869, 0
    %v5955 = vsel %vm151, %v5870, 0
    %v5958 = vsel %vm151, %v5871, 0
    %v5961 = vsel %vm151, %v5872, 0
    %v5964 = vsel %vm151, %v5873, 0
    %v5967 = vsel %vm151, %v5874, 0
    %v5970 = vsel %vm151, %v5875, 0
    %5972 = vmatprep.subr.mxu0 0.0
    %5973 = vmatpush1.msra.mxu0 %v120
    %5974 = vmatprep.subr.mxu0 0.0
    %5975 = vmatpush1.msra.mxu0 %v2406
    %5976 = vmatprep.subr.mxu0 0.0
    %5977 = vmatpush1.msra.mxu0 0.0
    %5978 = vmatprep.subr.mxu0 0.0
    %5979 = vmatpush1.msra.mxu0 0.0
    %5980 = vmatprep.subr.mxu0 0.0
    %5981 = vmatpush1.msra.mxu0 0.0
    %5982 = vmatprep.subr.mxu0 0.0
    %5983 = vmatpush1.msra.mxu0 0.0
    %5984 = vmatprep.subr.mxu0 0.0
    %5985 = vmatpush1.msra.mxu0 0.0
    %5986 = vmatprep.subr.mxu0 0.0
    %5987 = vmatpush1.msra.mxu0 0.0
    %5988 = vmatprep.subr.mxu0 0.0
    %5989 = vmatpush1.msra.mxu0 0.0
    %5990 = vmatprep.subr.mxu0 0.0
    %5991 = vmatpush1.msra.mxu0 0.0
    %5992 = vmatprep.subr.mxu0 0.0
    %5993 = vmatpush1.msra.mxu0 0.0
    %5994 = vmatprep.subr.mxu0 0.0
    %5995 = vmatpush1.msra.mxu0 0.0
    %5996 = vmatprep.subr.mxu0 0.0
    %5997 = vmatpush1.msra.mxu0 0.0
    %5998 = vmatprep.subr.mxu0 0.0
    %5999 = vmatpush1.msra.mxu0 0.0
    %6000 = vmatprep.subr.mxu0 0.0
    %6001 = vmatpush1.msra.mxu0 0.0
    %6002 = vmatprep.subr.mxu0 0.0
    %6003 = vmatpush1.msra.mxu0 0.0
    %6004 = vmatprep.subr.mxu0 0.0
    %6005 = vmatpush1.msra.mxu0 0.0
    %6006 = vmatprep.subr.mxu0 0.0
    %6007 = vmatpush1.msra.mxu0 0.0
    %6008 = vmatprep.subr.mxu0 0.0
    %6009 = vmatpush1.msra.mxu0 0.0
    %6010 = vmatprep.subr.mxu0 0.0
    %6011 = vmatpush1.msra.mxu0 0.0
    %6012 = vmatprep.subr.mxu0 0.0
    %6013 = vmatpush1.msra.mxu0 0.0
    %6014 = vmatprep.subr.mxu0 0.0
    %6015 = vmatpush1.msra.mxu0 0.0
    %6016 = vmatprep.subr.mxu0 0.0
    %6017 = vmatpush1.msra.mxu0 0.0
    %6018 = vmatprep.subr.mxu0 0.0
    %6019 = vmatpush1.msra.mxu0 0.0
    %6020 = vmatprep.subr.mxu0 0.0
    %6021 = vmatpush1.msra.mxu0 0.0
    %6022 = vmatprep.subr.mxu0 0.0
    %6023 = vmatpush1.msra.mxu0 0.0
    %6024 = vmatprep.subr.mxu0 0.0
    %6025 = vmatpush1.msra.mxu0 0.0
    %6026 = vmatprep.subr.mxu0 0.0
    %6027 = vmatpush1.msra.mxu0 0.0
    %6028 = vmatprep.subr.mxu0 0.0
    %6029 = vmatpush1.msra.mxu0 0.0
    %6030 = vmatprep.subr.mxu0 0.0
    %6031 = vmatpush1.msra.mxu0 0.0
    %6032 = vmatprep.subr.mxu0 0.0
    %6033 = vmatpush1.msra.mxu0 0.0
    %6034 = vmatprep.subr.mxu0 0.0
    %6035 = vmatpush1.msra.mxu0 0.0
    %6036 = vmatprep.mubr.f32.mxu0 0.0
    %6037 = vmatmul.mubr.f32.gmra.mrb[0].mxu0 %v5877
    %v6038 = vpop.f32.mrb[0].mxu0
    %v6039 = vadd.f32 0.0, %v6038
    %v6040 = vpop.f32.mrb[0].mxu0
    %6041 = vmatprep.mubr.f32.mxu0 0.0
    %6042 = vmatmul.mubr.f32.gmra.mrb[0].mxu0 %v5880
    %v6043 = vpop.f32.mrb[0].mxu0
    %v6044 = vadd.f32 0.0, %v6043
    %v6045 = vpop.f32.mrb[0].mxu0
    %6046 = vmatprep.mubr.f32.mxu0 0.0
    %6047 = vmatmul.mubr.f32.gmra.mrb[0].mxu0 %v5883
    %v6048 = vpop.f32.mrb[0].mxu0
    %v6049 = vadd.f32 0.0, %v6048
    %v6050 = vpop.f32.mrb[0].mxu0
    %6051 = vmatprep.mubr.f32.mxu0 0.0
    %6052 = vmatmul.mubr.f32.gmra.mrb[0].mxu0 %v5886
    %v6053 = vpop.f32.mrb[0].mxu0
    %v6054 = vadd.f32 0.0, %v6053
    %v6055 = vpop.f32.mrb[0].mxu0
    %6056 = vmatprep.mubr.f32.mxu0 0.0
    %6057 = vmatmul.mubr.f32.gmra.mrb[0].mxu0 %v5889
    %v6058 = vpop.f32.mrb[0].mxu0
    %v6059 = vadd.f32 0.0, %v6058
    %v6060 = vpop.f32.mrb[0].mxu0
    %6061 = vmatprep.mubr.f32.mxu0 0.0
    %6062 = vmatmul.mubr.f32.gmra.mrb[0].mxu0 %v5892
    %v6063 = vpop.f32.mrb[0].mxu0
    %v6064 = vadd.f32 0.0, %v6063
    %v6065 = vpop.f32.mrb[0].mxu0
    %6066 = vmatprep.mubr.f32.mxu0 0.0
    %6067 = vmatmul.mubr.f32.gmra.mrb[0].mxu0 %v5895
    %v6068 = vpop.f32.mrb[0].mxu0
    %v6069 = vadd.f32 0.0, %v6068
    %v6070 = vpop.f32.mrb[0].mxu0
    %6071 = vmatprep.mubr.f32.mxu0 0.0
    %6072 = vmatmul.mubr.f32.gmra.mrb[0].mxu0 %v5898
    %v6073 = vpop.f32.mrb[0].mxu0
    %v6074 = vadd.f32 0.0, %v6073
    %v6075 = vpop.f32.mrb[0].mxu0
    %6076 = vmatprep.mubr.f32.mxu0 0.0
    %6077 = vmatmul.mubr.f32.gmra.mrb[0].mxu0 %v5901
    %v6078 = vpop.f32.mrb[0].mxu0
    %v6079 = vadd.f32 0.0, %v6078
    %v6080 = vpop.f32.mrb[0].mxu0
    %6081 = vmatprep.mubr.f32.mxu0 0.0
    %6082 = vmatmul.mubr.f32.gmra.mrb[0].mxu0 %v5904
    %v6083 = vpop.f32.mrb[0].mxu0
    %v6084 = vadd.f32 0.0, %v6083
    %v6085 = vpop.f32.mrb[0].mxu0
    %6086 = vmatprep.mubr.f32.mxu0 0.0
    %6087 = vmatmul.mubr.f32.gmra.mrb[0].mxu0 %v5907
    %v6088 = vpop.f32.mrb[0].mxu0
    %v6089 = vadd.f32 0.0, %v6088
    %v6090 = vpop.f32.mrb[0].mxu0
    %6091 = vmatprep.mubr.f32.mxu0 0.0
    %6092 = vmatmul.mubr.f32.gmra.mrb[0].mxu0 %v5910
    %v6093 = vpop.f32.mrb[0].mxu0
    %v6094 = vadd.f32 0.0, %v6093
    %v6095 = vpop.f32.mrb[0].mxu0
    %6096 = vmatprep.mubr.f32.mxu0 0.0
    %6097 = vmatmul.mubr.f32.gmra.mrb[0].mxu0 %v5913
    %v6098 = vpop.f32.mrb[0].mxu0
    %v6099 = vadd.f32 0.0, %v6098
    %v6100 = vpop.f32.mrb[0].mxu0
    %6101 = vmatprep.mubr.f32.mxu0 0.0
    %6102 = vmatmul.mubr.f32.gmra.mrb[0].mxu0 %v5916
    %v6103 = vpop.f32.mrb[0].mxu0
    %v6104 = vadd.f32 0.0, %v6103
    %v6105 = vpop.f32.mrb[0].mxu0
    %6106 = vmatprep.mubr.f32.mxu0 0.0
    %6107 = vmatmul.mubr.f32.gmra.mrb[0].mxu0 %v5919
    %v6108 = vpop.f32.mrb[0].mxu0
    %v6109 = vadd.f32 0.0, %v6108
    %v6110 = vpop.f32.mrb[0].mxu0
    %6111 = vmatprep.mubr.f32.mxu0 0.0
    %6112 = vmatmul.mubr.f32.gmra.mrb[0].mxu0 %v5922
    %v6113 = vpop.f32.mrb[0].mxu0
    %v6114 = vadd.f32 0.0, %v6113
    %v6115 = vpop.f32.mrb[0].mxu0
    %6116 = vmatprep.mubr.f32.mxu0 0.0
    %6117 = vmatmul.mubr.f32.gmra.mrb[0].mxu0 %v5925
    %v6118 = vpop.f32.mrb[0].mxu0
    %v6119 = vadd.f32 0.0, %v6118
    %v6120 = vpop.f32.mrb[0].mxu0
    %6121 = vmatprep.mubr.f32.mxu0 0.0
    %6122 = vmatmul.mubr.f32.gmra.mrb[0].mxu0 %v5928
    %v6123 = vpop.f32.mrb[0].mxu0
    %v6124 = vadd.f32 0.0, %v6123
    %v6125 = vpop.f32.mrb[0].mxu0
    %6126 = vmatprep.mubr.f32.mxu0 0.0
    %6127 = vmatmul.mubr.f32.gmra.mrb[0].mxu0 %v5931
    %v6128 = vpop.f32.mrb[0].mxu0
    %v6129 = vadd.f32 0.0, %v6128
    %v6130 = vpop.f32.mrb[0].mxu0
    %6131 = vmatprep.mubr.f32.mxu0 0.0
    %6132 = vmatmul.mubr.f32.gmra.mrb[0].mxu0 %v5934
    %v6133 = vpop.f32.mrb[0].mxu0
    %v6134 = vadd.f32 0.0, %v6133
    %v6135 = vpop.f32.mrb[0].mxu0
    %6136 = vmatprep.mubr.f32.mxu0 0.0
    %6137 = vmatmul.mubr.f32.gmra.mrb[0].mxu0 %v5937
    %v6138 = vpop.f32.mrb[0].mxu0
    %v6139 = vadd.f32 0.0, %v6138
    %v6140 = vpop.f32.mrb[0].mxu0
    %6141 = vmatprep.mubr.f32.mxu0 0.0
    %6142 = vmatmul.mubr.f32.gmra.mrb[0].mxu0 %v5940
    %v6143 = vpop.f32.mrb[0].mxu0
    %v6144 = vadd.f32 0.0, %v6143
    %v6145 = vpop.f32.mrb[0].mxu0
    %6146 = vmatprep.mubr.f32.mxu0 0.0
    %6147 = vmatmul.mubr.f32.gmra.mrb[0].mxu0 %v5943
    %v6148 = vpop.f32.mrb[0].mxu0
    %v6149 = vadd.f32 0.0, %v6148
    %v6150 = vpop.f32.mrb[0].mxu0
    %6151 = vmatprep.mubr.f32.mxu0 0.0
    %6152 = vmatmul.mubr.f32.gmra.mrb[0].mxu0 %v5946
    %v6153 = vpop.f32.mrb[0].mxu0
    %v6154 = vadd.f32 0.0, %v6153
    %v6155 = vpop.f32.mrb[0].mxu0
    %6156 = vmatprep.mubr.f32.mxu0 0.0
    %6157 = vmatmul.mubr.f32.gmra.mrb[0].mxu0 %v5949
    %v6158 = vpop.f32.mrb[0].mxu0
    %v6159 = vadd.f32 0.0, %v6158
    %v6160 = vpop.f32.mrb[0].mxu0
    %6161 = vmatprep.mubr.f32.mxu0 0.0
    %6162 = vmatmul.mubr.f32.gmra.mrb[0].mxu0 %v5952
    %v6163 = vpop.f32.mrb[0].mxu0
    %v6164 = vadd.f32 0.0, %v6163
    %v6165 = vpop.f32.mrb[0].mxu0
    %6166 = vmatprep.mubr.f32.mxu0 0.0
    %6167 = vmatmul.mubr.f32.gmra.mrb[0].mxu0 %v5955
    %v6168 = vpop.f32.mrb[0].mxu0
    %v6169 = vadd.f32 0.0, %v6168
    %v6170 = vpop.f32.mrb[0].mxu0
    %6171 = vmatprep.mubr.f32.mxu0 0.0
    %6172 = vmatmul.mubr.f32.gmra.mrb[0].mxu0 %v5958
    %v6173 = vpop.f32.mrb[0].mxu0
    %v6174 = vadd.f32 0.0, %v6173
    %v6175 = vpop.f32.mrb[0].mxu0
    %6176 = vmatprep.mubr.f32.mxu0 0.0
    %6177 = vmatmul.mubr.f32.gmra.mrb[0].mxu0 %v5961
    %v6178 = vpop.f32.mrb[0].mxu0
    %v6179 = vadd.f32 0.0, %v6178
    %v6180 = vpop.f32.mrb[0].mxu0
    %6181 = vmatprep.mubr.f32.mxu0 0.0
    %6182 = vmatmul.mubr.f32.gmra.mrb[0].mxu0 %v5964
    %v6183 = vpop.f32.mrb[0].mxu0
    %v6184 = vadd.f32 0.0, %v6183
    %v6185 = vpop.f32.mrb[0].mxu0
    %6186 = vmatprep.mubr.f32.mxu0 0.0
    %6187 = vmatmul.mubr.f32.gmra.mrb[0].mxu0 %v5967
    %v6188 = vpop.f32.mrb[0].mxu0
    %v6189 = vadd.f32 0.0, %v6188
    %v6190 = vpop.f32.mrb[0].mxu0
    %6191 = vmatprep.mubr.f32.mxu0 0.0
    %6192 = vmatmul.mubr.f32.gmra.mrb[0].mxu0 %v5970
    %v6193 = vpop.f32.mrb[0].mxu0
    %v6194 = vadd.f32 0.0, %v6193
    %v6195 = vpop.f32.mrb[0].mxu0
    %6196 = vdwg.mxu0
    %6197 = vmatprep.subr.mxu0 0.0
    %6198 = vmatpush1.msra.mxu0 %v122
    %6199 = vmatprep.subr.mxu0 0.0
    %6200 = vmatpush1.msra.mxu0 %v2634
    %6201 = vmatprep.subr.mxu0 0.0
    %6202 = vmatpush1.msra.mxu0 0.0
    %6203 = vmatprep.subr.mxu0 0.0
    %6204 = vmatpush1.msra.mxu0 0.0
    %6205 = vmatprep.subr.mxu0 0.0
    %6206 = vmatpush1.msra.mxu0 0.0
    %6207 = vmatprep.subr.mxu0 0.0
    %6208 = vmatpush1.msra.mxu0 0.0
    %6209 = vmatprep.subr.mxu0 0.0
    %6210 = vmatpush1.msra.mxu0 0.0
    %6211 = vmatprep.subr.mxu0 0.0
    %6212 = vmatpush1.msra.mxu0 0.0
    %6213 = vmatprep.subr.mxu0 0.0
    %6214 = vmatpush1.msra.mxu0 0.0
    %6215 = vmatprep.subr.mxu0 0.0
    %6216 = vmatpush1.msra.mxu0 0.0
    %6217 = vmatprep.subr.mxu0 0.0
    %6218 = vmatpush1.msra.mxu0 0.0
    %6219 = vmatprep.subr.mxu0 0.0
    %6220 = vmatpush1.msra.mxu0 0.0
    %6221 = vmatprep.subr.mxu0 0.0
    %6222 = vmatpush1.msra.mxu0 0.0
    %6223 = vmatprep.subr.mxu0 0.0
    %6224 = vmatpush1.msra.mxu0 0.0
    %6225 = vmatprep.subr.mxu0 0.0
    %6226 = vmatpush1.msra.mxu0 0.0
    %6227 = vmatprep.subr.mxu0 0.0
    %6228 = vmatpush1.msra.mxu0 0.0
    %6229 = vmatprep.subr.mxu0 0.0
    %6230 = vmatpush1.msra.mxu0 0.0
    %6231 = vmatprep.subr.mxu0 0.0
    %6232 = vmatpush1.msra.mxu0 0.0
    %6233 = vmatprep.subr.mxu0 0.0
    %6234 = vmatpush1.msra.mxu0 0.0
    %6235 = vmatprep.subr.mxu0 0.0
    %6236 = vmatpush1.msra.mxu0 0.0
    %6237 = vmatprep.subr.mxu0 0.0
    %6238 = vmatpush1.msra.mxu0 0.0
    %6239 = vmatprep.subr.mxu0 0.0
    %6240 = vmatpush1.msra.mxu0 0.0
    %6241 = vmatprep.subr.mxu0 0.0
    %6242 = vmatpush1.msra.mxu0 0.0
    %6243 = vmatprep.subr.mxu0 0.0
    %6244 = vmatpush1.msra.mxu0 0.0
    %6245 = vmatprep.subr.mxu0 0.0
    %6246 = vmatpush1.msra.mxu0 0.0
    %6247 = vmatprep.subr.mxu0 0.0
    %6248 = vmatpush1.msra.mxu0 0.0
    %6249 = vmatprep.subr.mxu0 0.0
    %6250 = vmatpush1.msra.mxu0 0.0
    %6251 = vmatprep.subr.mxu0 0.0
    %6252 = vmatpush1.msra.mxu0 0.0
    %6253 = vmatprep.subr.mxu0 0.0
    %6254 = vmatpush1.msra.mxu0 0.0
    %6255 = vmatprep.subr.mxu0 0.0
    %6256 = vmatpush1.msra.mxu0 0.0
    %6257 = vmatprep.subr.mxu0 0.0
    %6258 = vmatpush1.msra.mxu0 0.0
    %6259 = vmatprep.subr.mxu0 0.0
    %6260 = vmatpush1.msra.mxu0 0.0
    %6261 = vmatprep.mubr.f32.mxu0 0.0
    %6262 = vmatmul.mubr.f32.gmra.mrb[0].mxu0 %v5877
    %v6263 = vpop.f32.mrb[0].mxu0
    %v6264 = vadd.f32 0.0, %v6263
    %v6265 = vpop.f32.mrb[0].mxu0
    %6266 = vmatprep.mubr.f32.mxu0 0.0
    %6267 = vmatmul.mubr.f32.gmra.mrb[0].mxu0 %v5880
    %v6268 = vpop.f32.mrb[0].mxu0
    %v6269 = vadd.f32 0.0, %v6268
    %v6270 = vpop.f32.mrb[0].mxu0
    %6271 = vmatprep.mubr.f32.mxu0 0.0
    %6272 = vmatmul.mubr.f32.gmra.mrb[0].mxu0 %v5883
    %v6273 = vpop.f32.mrb[0].mxu0
    %v6274 = vadd.f32 0.0, %v6273
    %v6275 = vpop.f32.mrb[0].mxu0
    %6276 = vmatprep.mubr.f32.mxu0 0.0
    %6277 = vmatmul.mubr.f32.gmra.mrb[0].mxu0 %v5886
    %v6278 = vpop.f32.mrb[0].mxu0
    %v6279 = vadd.f32 0.0, %v6278
    %v6280 = vpop.f32.mrb[0].mxu0
    %6281 = vmatprep.mubr.f32.mxu0 0.0
    %6282 = vmatmul.mubr.f32.gmra.mrb[0].mxu0 %v5889
    %v6283 = vpop.f32.mrb[0].mxu0
    %v6284 = vadd.f32 0.0, %v6283
    %v6285 = vpop.f32.mrb[0].mxu0
    %6286 = vmatprep.mubr.f32.mxu0 0.0
    %6287 = vmatmul.mubr.f32.gmra.mrb[0].mxu0 %v5892
    %v6288 = vpop.f32.mrb[0].mxu0
    %v6289 = vadd.f32 0.0, %v6288
    %v6290 = vpop.f32.mrb[0].mxu0
    %6291 = vmatprep.mubr.f32.mxu0 0.0
    %6292 = vmatmul.mubr.f32.gmra.mrb[0].mxu0 %v5895
    %v6293 = vpop.f32.mrb[0].mxu0
    %v6294 = vadd.f32 0.0, %v6293
    %v6295 = vpop.f32.mrb[0].mxu0
    %6296 = vmatprep.mubr.f32.mxu0 0.0
    %6297 = vmatmul.mubr.f32.gmra.mrb[0].mxu0 %v5898
    %v6298 = vpop.f32.mrb[0].mxu0
    %v6299 = vadd.f32 0.0, %v6298
    %v6300 = vpop.f32.mrb[0].mxu0
    %6301 = vmatprep.mubr.f32.mxu0 0.0
    %6302 = vmatmul.mubr.f32.gmra.mrb[0].mxu0 %v5901
    %v6303 = vpop.f32.mrb[0].mxu0
    %v6304 = vadd.f32 0.0, %v6303
    %v6305 = vpop.f32.mrb[0].mxu0
    %6306 = vmatprep.mubr.f32.mxu0 0.0
    %6307 = vmatmul.mubr.f32.gmra.mrb[0].mxu0 %v5904
    %v6308 = vpop.f32.mrb[0].mxu0
    %v6309 = vadd.f32 0.0, %v6308
    %v6310 = vpop.f32.mrb[0].mxu0
    %6311 = vmatprep.mubr.f32.mxu0 0.0
    %6312 = vmatmul.mubr.f32.gmra.mrb[0].mxu0 %v5907
    %v6313 = vpop.f32.mrb[0].mxu0
    %v6314 = vadd.f32 0.0, %v6313
    %v6315 = vpop.f32.mrb[0].mxu0
    %6316 = vmatprep.mubr.f32.mxu0 0.0
    %6317 = vmatmul.mubr.f32.gmra.mrb[0].mxu0 %v5910
    %v6318 = vpop.f32.mrb[0].mxu0
    %v6319 = vadd.f32 0.0, %v6318
    %v6320 = vpop.f32.mrb[0].mxu0
    %6321 = vmatprep.mubr.f32.mxu0 0.0
    %6322 = vmatmul.mubr.f32.gmra.mrb[0].mxu0 %v5913
    %v6323 = vpop.f32.mrb[0].mxu0
    %v6324 = vadd.f32 0.0, %v6323
    %v6325 = vpop.f32.mrb[0].mxu0
    %6326 = vmatprep.mubr.f32.mxu0 0.0
    %6327 = vmatmul.mubr.f32.gmra.mrb[0].mxu0 %v5916
    %v6328 = vpop.f32.mrb[0].mxu0
    %v6329 = vadd.f32 0.0, %v6328
    %v6330 = vpop.f32.mrb[0].mxu0
    %6331 = vmatprep.mubr.f32.mxu0 0.0
    %6332 = vmatmul.mubr.f32.gmra.mrb[0].mxu0 %v5919
    %v6333 = vpop.f32.mrb[0].mxu0
    %v6334 = vadd.f32 0.0, %v6333
    %v6335 = vpop.f32.mrb[0].mxu0
    %6336 = vmatprep.mubr.f32.mxu0 0.0
    %6337 = vmatmul.mubr.f32.gmra.mrb[0].mxu0 %v5922
    %v6338 = vpop.f32.mrb[0].mxu0
    %v6339 = vadd.f32 0.0, %v6338
    %v6340 = vpop.f32.mrb[0].mxu0
    %6341 = vmatprep.mubr.f32.mxu0 0.0
    %6342 = vmatmul.mubr.f32.gmra.mrb[0].mxu0 %v5925
    %v6343 = vpop.f32.mrb[0].mxu0
    %v6344 = vadd.f32 0.0, %v6343
    %v6345 = vpop.f32.mrb[0].mxu0
    %6346 = vmatprep.mubr.f32.mxu0 0.0
    %6347 = vmatmul.mubr.f32.gmra.mrb[0].mxu0 %v5928
    %v6348 = vpop.f32.mrb[0].mxu0
    %v6349 = vadd.f32 0.0, %v6348
    %v6350 = vpop.f32.mrb[0].mxu0
    %6351 = vmatprep.mubr.f32.mxu0 0.0
    %6352 = vmatmul.mubr.f32.gmra.mrb[0].mxu0 %v5931
    %v6353 = vpop.f32.mrb[0].mxu0
    %v6354 = vadd.f32 0.0, %v6353
    %v6355 = vpop.f32.mrb[0].mxu0
    %6356 = vmatprep.mubr.f32.mxu0 0.0
    %6357 = vmatmul.mubr.f32.gmra.mrb[0].mxu0 %v5934
    %v6358 = vpop.f32.mrb[0].mxu0
    %v6359 = vadd.f32 0.0, %v6358
    %v6360 = vpop.f32.mrb[0].mxu0
    %6361 = vmatprep.mubr.f32.mxu0 0.0
    %6362 = vmatmul.mubr.f32.gmra.mrb[0].mxu0 %v5937
    %v6363 = vpop.f32.mrb[0].mxu0
    %v6364 = vadd.f32 0.0, %v6363
    %v6365 = vpop.f32.mrb[0].mxu0
    %6366 = vmatprep.mubr.f32.mxu0 0.0
    %6367 = vmatmul.mubr.f32.gmra.mrb[0].mxu0 %v5940
    %v6368 = vpop.f32.mrb[0].mxu0
    %v6369 = vadd.f32 0.0, %v6368
    %v6370 = vpop.f32.mrb[0].mxu0
    %6371 = vmatprep.mubr.f32.mxu0 0.0
    %6372 = vmatmul.mubr.f32.gmra.mrb[0].mxu0 %v5943
    %v6373 = vpop.f32.mrb[0].mxu0
    %v6374 = vadd.f32 0.0, %v6373
    %v6375 = vpop.f32.mrb[0].mxu0
    %6376 = vmatprep.mubr.f32.mxu0 0.0
    %6377 = vmatmul.mubr.f32.gmra.mrb[0].mxu0 %v5946
    %v6378 = vpop.f32.mrb[0].mxu0
    %v6379 = vadd.f32 0.0, %v6378
    %v6380 = vpop.f32.mrb[0].mxu0
    %6381 = vmatprep.mubr.f32.mxu0 0.0
    %6382 = vmatmul.mubr.f32.gmra.mrb[0].mxu0 %v5949
    %v6383 = vpop.f32.mrb[0].mxu0
    %v6384 = vadd.f32 0.0, %v6383
    %v6385 = vpop.f32.mrb[0].mxu0
    %6386 = vmatprep.mubr.f32.mxu0 0.0
    %6387 = vmatmul.mubr.f32.gmra.mrb[0].mxu0 %v5952
    %v6388 = vpop.f32.mrb[0].mxu0
    %v6389 = vadd.f32 0.0, %v6388
    %v6390 = vpop.f32.mrb[0].mxu0
    %6391 = vmatprep.mubr.f32.mxu0 0.0
    %6392 = vmatmul.mubr.f32.gmra.mrb[0].mxu0 %v5955
    %v6393 = vpop.f32.mrb[0].mxu0
    %v6394 = vadd.f32 0.0, %v6393
    %v6395 = vpop.f32.mrb[0].mxu0
    %6396 = vmatprep.mubr.f32.mxu0 0.0
    %6397 = vmatmul.mubr.f32.gmra.mrb[0].mxu0 %v5958
    %v6398 = vpop.f32.mrb[0].mxu0
    %v6399 = vadd.f32 0.0, %v6398
    %v6400 = vpop.f32.mrb[0].mxu0
    %6401 = vmatprep.mubr.f32.mxu0 0.0
    %6402 = vmatmul.mubr.f32.gmra.mrb[0].mxu0 %v5961
    %v6403 = vpop.f32.mrb[0].mxu0
    %v6404 = vadd.f32 0.0, %v6403
    %v6405 = vpop.f32.mrb[0].mxu0
    %6406 = vmatprep.mubr.f32.mxu0 0.0
    %6407 = vmatmul.mubr.f32.gmra.mrb[0].mxu0 %v5964
    %v6408 = vpop.f32.mrb[0].mxu0
    %v6409 = vadd.f32 0.0, %v6408
    %v6410 = vpop.f32.mrb[0].mxu0
    %6411 = vmatprep.mubr.f32.mxu0 0.0
    %6412 = vmatmul.mubr.f32.gmra.mrb[0].mxu0 %v5967
    %v6413 = vpop.f32.mrb[0].mxu0
    %v6414 = vadd.f32 0.0, %v6413
    %v6415 = vpop.f32.mrb[0].mxu0
    %6416 = vmatprep.mubr.f32.mxu0 0.0
    %6417 = vmatmul.mubr.f32.gmra.mrb[0].mxu0 %v5970
    %v6418 = vpop.f32.mrb[0].mxu0
    %v6419 = vadd.f32 0.0, %v6418
    %v6420 = vpop.f32.mrb[0].mxu0
    %6421 = vdwg.mxu0
    %6454 = vrot.lane.b32.xlu0 %v6264, 28
    %v6455 = vpop.permute.xlu0 %6454
    %6456 = vrot.lane.b32.xlu0 %v6269, 28
    %v6457 = vpop.permute.xlu0 %6456
    %6458 = vrot.lane.b32.xlu0 %v6274, 28
    %v6459 = vpop.permute.xlu0 %6458
    %6460 = vrot.lane.b32.xlu0 %v6279, 28
    %v6461 = vpop.permute.xlu0 %6460
    %6462 = vrot.lane.b32.xlu0 %v6284, 28
    %v6463 = vpop.permute.xlu0 %6462
    %6464 = vrot.lane.b32.xlu0 %v6289, 28
    %v6465 = vpop.permute.xlu0 %6464
    %6466 = vrot.lane.b32.xlu0 %v6294, 28
    %v6467 = vpop.permute.xlu0 %6466
    %6468 = vrot.lane.b32.xlu0 %v6299, 28
    %v6469 = vpop.permute.xlu0 %6468
    %6470 = vrot.lane.b32.xlu0 %v6304, 28
    %v6471 = vpop.permute.xlu0 %6470
    %6472 = vrot.lane.b32.xlu0 %v6309, 28
    %v6473 = vpop.permute.xlu0 %6472
    %6474 = vrot.lane.b32.xlu0 %v6314, 28
    %v6475 = vpop.permute.xlu0 %6474
    %6476 = vrot.lane.b32.xlu0 %v6319, 28
    %v6477 = vpop.permute.xlu0 %6476
    %6478 = vrot.lane.b32.xlu0 %v6324, 28
    %v6479 = vpop.permute.xlu0 %6478
    %6480 = vrot.lane.b32.xlu0 %v6329, 28
    %v6481 = vpop.permute.xlu0 %6480
    %6482 = vrot.lane.b32.xlu0 %v6334, 28
    %v6483 = vpop.permute.xlu0 %6482
    %6484 = vrot.lane.b32.xlu0 %v6339, 28
    %v6485 = vpop.permute.xlu0 %6484
    %6486 = vrot.lane.b32.xlu0 %v6344, 28
    %v6487 = vpop.permute.xlu0 %6486
    %6488 = vrot.lane.b32.xlu0 %v6349, 28
    %v6489 = vpop.permute.xlu0 %6488
    %6490 = vrot.lane.b32.xlu0 %v6354, 28
    %v6491 = vpop.permute.xlu0 %6490
    %6492 = vrot.lane.b32.xlu0 %v6359, 28
    %v6493 = vpop.permute.xlu0 %6492
    %6494 = vrot.lane.b32.xlu0 %v6364, 28
    %v6495 = vpop.permute.xlu0 %6494
    %6496 = vrot.lane.b32.xlu0 %v6369, 28
    %v6497 = vpop.permute.xlu0 %6496
    %6498 = vrot.lane.b32.xlu0 %v6374, 28
    %v6499 = vpop.permute.xlu0 %6498
    %6500 = vrot.lane.b32.xlu0 %v6379, 28
    %v6501 = vpop.permute.xlu0 %6500
    %6502 = vrot.lane.b32.xlu0 %v6384, 28
    %v6503 = vpop.permute.xlu0 %6502
    %6504 = vrot.lane.b32.xlu0 %v6389, 28
    %v6505 = vpop.permute.xlu0 %6504
    %6506 = vrot.lane.b32.xlu0 %v6394, 28
    %v6507 = vpop.permute.xlu0 %6506
    %6508 = vrot.lane.b32.xlu0 %v6399, 28
    %v6509 = vpop.permute.xlu0 %6508
    %6510 = vrot.lane.b32.xlu0 %v6404, 28
    %v6511 = vpop.permute.xlu0 %6510
    %6512 = vrot.lane.b32.xlu0 %v6409, 28
    %v6513 = vpop.permute.xlu0 %6512
    %6514 = vrot.lane.b32.xlu0 %v6414, 28
    %v6515 = vpop.permute.xlu0 %6514
    %6516 = vrot.lane.b32.xlu0 %v6419, 28
    %v6517 = vpop.permute.xlu0 %6516
    %v6550 = vmul.f32 %v6039, %v6455
    %v6551 = vmul.f32 %v6044, %v6457
    %v6552 = vmul.f32 %v6049, %v6459
    %v6553 = vmul.f32 %v6054, %v6461
    %v6554 = vmul.f32 %v6059, %v6463
    %v6555 = vmul.f32 %v6064, %v6465
    %v6556 = vmul.f32 %v6069, %v6467
    %v6557 = vmul.f32 %v6074, %v6469
    %v6558 = vmul.f32 %v6079, %v6471
    %v6559 = vmul.f32 %v6084, %v6473
    %v6560 = vmul.f32 %v6089, %v6475
    %v6561 = vmul.f32 %v6094, %v6477
    %v6562 = vmul.f32 %v6099, %v6479
    %v6563 = vmul.f32 %v6104, %v6481
    %v6564 = vmul.f32 %v6109, %v6483
    %v6565 = vmul.f32 %v6114, %v6485
    %v6566 = vmul.f32 %v6119, %v6487
    %v6567 = vmul.f32 %v6124, %v6489
    %v6568 = vmul.f32 %v6129, %v6491
    %v6569 = vmul.f32 %v6134, %v6493
    %v6570 = vmul.f32 %v6139, %v6495
    %v6571 = vmul.f32 %v6144, %v6497
    %v6572 = vmul.f32 %v6149, %v6499
    %v6573 = vmul.f32 %v6154, %v6501
    %v6574 = vmul.f32 %v6159, %v6503
    %v6575 = vmul.f32 %v6164, %v6505
    %v6576 = vmul.f32 %v6169, %v6507
    %v6577 = vmul.f32 %v6174, %v6509
    %v6578 = vmul.f32 %v6179, %v6511
    %v6579 = vmul.f32 %v6184, %v6513
    %v6580 = vmul.f32 %v6189, %v6515
    %v6581 = vmul.f32 %v6194, %v6517
    %6614 = vrot.lane.b32.xlu0 %v6550, 100
    %v6615 = vpop.permute.xlu0 %6614
    %6616 = vrot.lane.b32.xlu0 %v6551, 100
    %v6617 = vpop.permute.xlu0 %6616
    %6618 = vrot.lane.b32.xlu0 %v6552, 100
    %v6619 = vpop.permute.xlu0 %6618
    %6620 = vrot.lane.b32.xlu0 %v6553, 100
    %v6621 = vpop.permute.xlu0 %6620
    %6622 = vrot.lane.b32.xlu0 %v6554, 100
    %v6623 = vpop.permute.xlu0 %6622
    %6624 = vrot.lane.b32.xlu0 %v6555, 100
    %v6625 = vpop.permute.xlu0 %6624
    %6626 = vrot.lane.b32.xlu0 %v6556, 100
    %v6627 = vpop.permute.xlu0 %6626
    %6628 = vrot.lane.b32.xlu0 %v6557, 100
    %v6629 = vpop.permute.xlu0 %6628
    %6630 = vrot.lane.b32.xlu0 %v6558, 100
    %v6631 = vpop.permute.xlu0 %6630
    %6632 = vrot.lane.b32.xlu0 %v6559, 100
    %v6633 = vpop.permute.xlu0 %6632
    %6634 = vrot.lane.b32.xlu0 %v6560, 100
    %v6635 = vpop.permute.xlu0 %6634
    %6636 = vrot.lane.b32.xlu0 %v6561, 100
    %v6637 = vpop.permute.xlu0 %6636
    %6638 = vrot.lane.b32.xlu0 %v6562, 100
    %v6639 = vpop.permute.xlu0 %6638
    %6640 = vrot.lane.b32.xlu0 %v6563, 100
    %v6641 = vpop.permute.xlu0 %6640
    %6642 = vrot.lane.b32.xlu0 %v6564, 100
    %v6643 = vpop.permute.xlu0 %6642
    %6644 = vrot.lane.b32.xlu0 %v6565, 100
    %v6645 = vpop.permute.xlu0 %6644
    %6646 = vrot.lane.b32.xlu0 %v6566, 100
    %v6647 = vpop.permute.xlu0 %6646
    %6648 = vrot.lane.b32.xlu0 %v6567, 100
    %v6649 = vpop.permute.xlu0 %6648
    %6650 = vrot.lane.b32.xlu0 %v6568, 100
    %v6651 = vpop.permute.xlu0 %6650
    %6652 = vrot.lane.b32.xlu0 %v6569, 100
    %v6653 = vpop.permute.xlu0 %6652
    %6654 = vrot.lane.b32.xlu0 %v6570, 100
    %v6655 = vpop.permute.xlu0 %6654
    %6656 = vrot.lane.b32.xlu0 %v6571, 100
    %v6657 = vpop.permute.xlu0 %6656
    %6658 = vrot.lane.b32.xlu0 %v6572, 100
    %v6659 = vpop.permute.xlu0 %6658
    %6660 = vrot.lane.b32.xlu0 %v6573, 100
    %v6661 = vpop.permute.xlu0 %6660
    %6662 = vrot.lane.b32.xlu0 %v6574, 100
    %v6663 = vpop.permute.xlu0 %6662
    %6664 = vrot.lane.b32.xlu0 %v6575, 100
    %v6665 = vpop.permute.xlu0 %6664
    %6666 = vrot.lane.b32.xlu0 %v6576, 100
    %v6667 = vpop.permute.xlu0 %6666
    %6668 = vrot.lane.b32.xlu0 %v6577, 100
    %v6669 = vpop.permute.xlu0 %6668
    %6670 = vrot.lane.b32.xlu0 %v6578, 100
    %v6671 = vpop.permute.xlu0 %6670
    %6672 = vrot.lane.b32.xlu0 %v6579, 100
    %v6673 = vpop.permute.xlu0 %6672
    %6674 = vrot.lane.b32.xlu0 %v6580, 100
    %v6675 = vpop.permute.xlu0 %6674
    %6676 = vrot.lane.b32.xlu0 %v6581, 100
    %v6677 = vpop.permute.xlu0 %6676
    %v6678 = vsel %vm3117, %v6615, 0
    %v6680 = vsel %vm3117, %v6617, 0
    %v6682 = vsel %vm3117, %v6619, 0
    %v6684 = vsel %vm3117, %v6621, 0
    %v6686 = vsel %vm3117, %v6623, 0
    %v6688 = vsel %vm3117, %v6625, 0
    %v6690 = vsel %vm3117, %v6627, 0
    %v6692 = vsel %vm3117, %v6629, 0
    %v6694 = vsel %vm3117, %v6631, 0
    %v6696 = vsel %vm3117, %v6633, 0
    %v6698 = vsel %vm3117, %v6635, 0
    %v6700 = vsel %vm3117, %v6637, 0
    %v6702 = vsel %vm3117, %v6639, 0
    %v6704 = vsel %vm3117, %v6641, 0
    %v6706 = vsel %vm3117, %v6643, 0
    %v6708 = vsel %vm3117, %v6645, 0
    %v6710 = vsel %vm3117, %v6647, 0
    %v6712 = vsel %vm3117, %v6649, 0
    %v6714 = vsel %vm3117, %v6651, 0
    %v6716 = vsel %vm3117, %v6653, 0
    %v6718 = vsel %vm3117, %v6655, 0
    %v6720 = vsel %vm3117, %v6657, 0
    %v6722 = vsel %vm3117, %v6659, 0
    %v6724 = vsel %vm3117, %v6661, 0
    %v6726 = vsel %vm3117, %v6663, 0
    %v6728 = vsel %vm3117, %v6665, 0
    %v6730 = vsel %vm3117, %v6667, 0
    %v6732 = vsel %vm3117, %v6669, 0
    %v6734 = vsel %vm3117, %v6671, 0
    %v6736 = vsel %vm3117, %v6673, 0
    %v6738 = vsel %vm3117, %v6675, 0
    %v6740 = vsel %vm3117, %v6677, 0
    %6742 = vmatprep.subr.mxu0 0.0
    %6743 = vmatpush1.msra.mxu0 %v124
    %6744 = vmatprep.subr.mxu0 0.0
    %6745 = vmatpush1.msra.mxu0 %v125
    %6746 = vmatprep.subr.mxu0 0.0
    %6747 = vmatpush1.msra.mxu0 %v126
    %6748 = vmatprep.subr.mxu0 0.0
    %6749 = vmatpush1.msra.mxu0 %v127
    %6750 = vmatprep.subr.mxu0 0.0
    %6751 = vmatpush1.msra.mxu0 %v128
    %6752 = vmatprep.subr.mxu0 0.0
    %6753 = vmatpush1.msra.mxu0 %v129
    %6754 = vmatprep.subr.mxu0 0.0
    %6755 = vmatpush1.msra.mxu0 %v130
    %6756 = vmatprep.subr.mxu0 0.0
    %6757 = vmatpush1.msra.mxu0 %v131
    %6758 = vmatprep.subr.mxu0 0.0
    %6759 = vmatpush1.msra.mxu0 %v132
    %6760 = vmatprep.subr.mxu0 0.0
    %6761 = vmatpush1.msra.mxu0 %v133
    %6762 = vmatprep.subr.mxu0 0.0
    %6763 = vmatpush1.msra.mxu0 %v3183
    %6764 = vmatprep.subr.mxu0 0.0
    %6765 = vmatpush1.msra.mxu0 0.0
    %6766 = vmatprep.subr.mxu0 0.0
    %6767 = vmatpush1.msra.mxu0 0.0
    %6768 = vmatprep.subr.mxu0 0.0
    %6769 = vmatpush1.msra.mxu0 0.0
    %6770 = vmatprep.subr.mxu0 0.0
    %6771 = vmatpush1.msra.mxu0 0.0
    %6772 = vmatprep.subr.mxu0 0.0
    %6773 = vmatpush1.msra.mxu0 0.0
    %6774 = vmatprep.subr.mxu0 0.0
    %6775 = vmatpush1.msra.mxu0 0.0
    %6776 = vmatprep.subr.mxu0 0.0
    %6777 = vmatpush1.msra.mxu0 0.0
    %6778 = vmatprep.subr.mxu0 0.0
    %6779 = vmatpush1.msra.mxu0 0.0
    %6780 = vmatprep.subr.mxu0 0.0
    %6781 = vmatpush1.msra.mxu0 0.0
    %6782 = vmatprep.subr.mxu0 0.0
    %6783 = vmatpush1.msra.mxu0 0.0
    %6784 = vmatprep.subr.mxu0 0.0
    %6785 = vmatpush1.msra.mxu0 0.0
    %6786 = vmatprep.subr.mxu0 0.0
    %6787 = vmatpush1.msra.mxu0 0.0
    %6788 = vmatprep.subr.mxu0 0.0
    %6789 = vmatpush1.msra.mxu0 0.0
    %6790 = vmatprep.subr.mxu0 0.0
    %6791 = vmatpush1.msra.mxu0 0.0
    %6792 = vmatprep.subr.mxu0 0.0
    %6793 = vmatpush1.msra.mxu0 0.0
    %6794 = vmatprep.subr.mxu0 0.0
    %6795 = vmatpush1.msra.mxu0 0.0
    %6796 = vmatprep.subr.mxu0 0.0
    %6797 = vmatpush1.msra.mxu0 0.0
    %6798 = vmatprep.subr.mxu0 0.0
    %6799 = vmatpush1.msra.mxu0 0.0
    %6800 = vmatprep.subr.mxu0 0.0
    %6801 = vmatpush1.msra.mxu0 0.0
    %6802 = vmatprep.subr.mxu0 0.0
    %6803 = vmatpush1.msra.mxu0 0.0
    %6804 = vmatprep.subr.mxu0 0.0
    %6805 = vmatpush1.msra.mxu0 0.0
    %6806 = vmatprep.mubr.f32.mxu0 0.0
    %6807 = vmatmul.mubr.f32.gmra.mrb[0].mxu0 %v6678
    %v6808 = vpop.f32.mrb[0].mxu0
    %v6809 = vadd.f32 0.0, %v6808
    %v6810 = vpop.f32.mrb[0].mxu0
    %6811 = vmatprep.mubr.f32.mxu0 0.0
    %6812 = vmatmul.mubr.f32.gmra.mrb[0].mxu0 %v6680
    %v6813 = vpop.f32.mrb[0].mxu0
    %v6814 = vadd.f32 0.0, %v6813
    %v6815 = vpop.f32.mrb[0].mxu0
    %6816 = vmatprep.mubr.f32.mxu0 0.0
    %6817 = vmatmul.mubr.f32.gmra.mrb[0].mxu0 %v6682
    %v6818 = vpop.f32.mrb[0].mxu0
    %v6819 = vadd.f32 0.0, %v6818
    %v6820 = vpop.f32.mrb[0].mxu0
    %6821 = vmatprep.mubr.f32.mxu0 0.0
    %6822 = vmatmul.mubr.f32.gmra.mrb[0].mxu0 %v6684
    %v6823 = vpop.f32.mrb[0].mxu0
    %v6824 = vadd.f32 0.0, %v6823
    %v6825 = vpop.f32.mrb[0].mxu0
    %6826 = vmatprep.mubr.f32.mxu0 0.0
    %6827 = vmatmul.mubr.f32.gmra.mrb[0].mxu0 %v6686
    %v6828 = vpop.f32.mrb[0].mxu0
    %v6829 = vadd.f32 0.0, %v6828
    %v6830 = vpop.f32.mrb[0].mxu0
    %6831 = vmatprep.mubr.f32.mxu0 0.0
    %6832 = vmatmul.mubr.f32.gmra.mrb[0].mxu0 %v6688
    %v6833 = vpop.f32.mrb[0].mxu0
    %v6834 = vadd.f32 0.0, %v6833
    %v6835 = vpop.f32.mrb[0].mxu0
    %6836 = vmatprep.mubr.f32.mxu0 0.0
    %6837 = vmatmul.mubr.f32.gmra.mrb[0].mxu0 %v6690
    %v6838 = vpop.f32.mrb[0].mxu0
    %v6839 = vadd.f32 0.0, %v6838
    %v6840 = vpop.f32.mrb[0].mxu0
    %6841 = vmatprep.mubr.f32.mxu0 0.0
    %6842 = vmatmul.mubr.f32.gmra.mrb[0].mxu0 %v6692
    %v6843 = vpop.f32.mrb[0].mxu0
    %v6844 = vadd.f32 0.0, %v6843
    %v6845 = vpop.f32.mrb[0].mxu0
    %6846 = vmatprep.mubr.f32.mxu0 0.0
    %6847 = vmatmul.mubr.f32.gmra.mrb[0].mxu0 %v6694
    %v6848 = vpop.f32.mrb[0].mxu0
    %v6849 = vadd.f32 0.0, %v6848
    %v6850 = vpop.f32.mrb[0].mxu0
    %6851 = vmatprep.mubr.f32.mxu0 0.0
    %6852 = vmatmul.mubr.f32.gmra.mrb[0].mxu0 %v6696
    %v6853 = vpop.f32.mrb[0].mxu0
    %v6854 = vadd.f32 0.0, %v6853
    %v6855 = vpop.f32.mrb[0].mxu0
    %6856 = vmatprep.mubr.f32.mxu0 0.0
    %6857 = vmatmul.mubr.f32.gmra.mrb[0].mxu0 %v6698
    %v6858 = vpop.f32.mrb[0].mxu0
    %v6859 = vadd.f32 0.0, %v6858
    %v6860 = vpop.f32.mrb[0].mxu0
    %6861 = vmatprep.mubr.f32.mxu0 0.0
    %6862 = vmatmul.mubr.f32.gmra.mrb[0].mxu0 %v6700
    %v6863 = vpop.f32.mrb[0].mxu0
    %v6864 = vadd.f32 0.0, %v6863
    %v6865 = vpop.f32.mrb[0].mxu0
    %6866 = vmatprep.mubr.f32.mxu0 0.0
    %6867 = vmatmul.mubr.f32.gmra.mrb[0].mxu0 %v6702
    %v6868 = vpop.f32.mrb[0].mxu0
    %v6869 = vadd.f32 0.0, %v6868
    %v6870 = vpop.f32.mrb[0].mxu0
    %6871 = vmatprep.mubr.f32.mxu0 0.0
    %6872 = vmatmul.mubr.f32.gmra.mrb[0].mxu0 %v6704
    %v6873 = vpop.f32.mrb[0].mxu0
    %v6874 = vadd.f32 0.0, %v6873
    %v6875 = vpop.f32.mrb[0].mxu0
    %6876 = vmatprep.mubr.f32.mxu0 0.0
    %6877 = vmatmul.mubr.f32.gmra.mrb[0].mxu0 %v6706
    %v6878 = vpop.f32.mrb[0].mxu0
    %v6879 = vadd.f32 0.0, %v6878
    %v6880 = vpop.f32.mrb[0].mxu0
    %6881 = vmatprep.mubr.f32.mxu0 0.0
    %6882 = vmatmul.mubr.f32.gmra.mrb[0].mxu0 %v6708
    %v6883 = vpop.f32.mrb[0].mxu0
    %v6884 = vadd.f32 0.0, %v6883
    %v6885 = vpop.f32.mrb[0].mxu0
    %6886 = vmatprep.mubr.f32.mxu0 0.0
    %6887 = vmatmul.mubr.f32.gmra.mrb[0].mxu0 %v6710
    %v6888 = vpop.f32.mrb[0].mxu0
    %v6889 = vadd.f32 0.0, %v6888
    %v6890 = vpop.f32.mrb[0].mxu0
    %6891 = vmatprep.mubr.f32.mxu0 0.0
    %6892 = vmatmul.mubr.f32.gmra.mrb[0].mxu0 %v6712
    %v6893 = vpop.f32.mrb[0].mxu0
    %v6894 = vadd.f32 0.0, %v6893
    %v6895 = vpop.f32.mrb[0].mxu0
    %6896 = vmatprep.mubr.f32.mxu0 0.0
    %6897 = vmatmul.mubr.f32.gmra.mrb[0].mxu0 %v6714
    %v6898 = vpop.f32.mrb[0].mxu0
    %v6899 = vadd.f32 0.0, %v6898
    %v6900 = vpop.f32.mrb[0].mxu0
    %6901 = vmatprep.mubr.f32.mxu0 0.0
    %6902 = vmatmul.mubr.f32.gmra.mrb[0].mxu0 %v6716
    %v6903 = vpop.f32.mrb[0].mxu0
    %v6904 = vadd.f32 0.0, %v6903
    %v6905 = vpop.f32.mrb[0].mxu0
    %6906 = vmatprep.mubr.f32.mxu0 0.0
    %6907 = vmatmul.mubr.f32.gmra.mrb[0].mxu0 %v6718
    %v6908 = vpop.f32.mrb[0].mxu0
    %v6909 = vadd.f32 0.0, %v6908
    %v6910 = vpop.f32.mrb[0].mxu0
    %6911 = vmatprep.mubr.f32.mxu0 0.0
    %6912 = vmatmul.mubr.f32.gmra.mrb[0].mxu0 %v6720
    %v6913 = vpop.f32.mrb[0].mxu0
    %v6914 = vadd.f32 0.0, %v6913
    %v6915 = vpop.f32.mrb[0].mxu0
    %6916 = vmatprep.mubr.f32.mxu0 0.0
    %6917 = vmatmul.mubr.f32.gmra.mrb[0].mxu0 %v6722
    %v6918 = vpop.f32.mrb[0].mxu0
    %v6919 = vadd.f32 0.0, %v6918
    %v6920 = vpop.f32.mrb[0].mxu0
    %6921 = vmatprep.mubr.f32.mxu0 0.0
    %6922 = vmatmul.mubr.f32.gmra.mrb[0].mxu0 %v6724
    %v6923 = vpop.f32.mrb[0].mxu0
    %v6924 = vadd.f32 0.0, %v6923
    %v6925 = vpop.f32.mrb[0].mxu0
    %6926 = vmatprep.mubr.f32.mxu0 0.0
    %6927 = vmatmul.mubr.f32.gmra.mrb[0].mxu0 %v6726
    %v6928 = vpop.f32.mrb[0].mxu0
    %v6929 = vadd.f32 0.0, %v6928
    %v6930 = vpop.f32.mrb[0].mxu0
    %6931 = vmatprep.mubr.f32.mxu0 0.0
    %6932 = vmatmul.mubr.f32.gmra.mrb[0].mxu0 %v6728
    %v6933 = vpop.f32.mrb[0].mxu0
    %v6934 = vadd.f32 0.0, %v6933
    %v6935 = vpop.f32.mrb[0].mxu0
    %6936 = vmatprep.mubr.f32.mxu0 0.0
    %6937 = vmatmul.mubr.f32.gmra.mrb[0].mxu0 %v6730
    %v6938 = vpop.f32.mrb[0].mxu0
    %v6939 = vadd.f32 0.0, %v6938
    %v6940 = vpop.f32.mrb[0].mxu0
    %6941 = vmatprep.mubr.f32.mxu0 0.0
    %6942 = vmatmul.mubr.f32.gmra.mrb[0].mxu0 %v6732
    %v6943 = vpop.f32.mrb[0].mxu0
    %v6944 = vadd.f32 0.0, %v6943
    %v6945 = vpop.f32.mrb[0].mxu0
    %6946 = vmatprep.mubr.f32.mxu0 0.0
    %6947 = vmatmul.mubr.f32.gmra.mrb[0].mxu0 %v6734
    %v6948 = vpop.f32.mrb[0].mxu0
    %v6949 = vadd.f32 0.0, %v6948
    %v6950 = vpop.f32.mrb[0].mxu0
    %6951 = vmatprep.mubr.f32.mxu0 0.0
    %6952 = vmatmul.mubr.f32.gmra.mrb[0].mxu0 %v6736
    %v6953 = vpop.f32.mrb[0].mxu0
    %v6954 = vadd.f32 0.0, %v6953
    %v6955 = vpop.f32.mrb[0].mxu0
    %6956 = vmatprep.mubr.f32.mxu0 0.0
    %6957 = vmatmul.mubr.f32.gmra.mrb[0].mxu0 %v6738
    %v6958 = vpop.f32.mrb[0].mxu0
    %v6959 = vadd.f32 0.0, %v6958
    %v6960 = vpop.f32.mrb[0].mxu0
    %6961 = vmatprep.mubr.f32.mxu0 0.0
    %6962 = vmatmul.mubr.f32.gmra.mrb[0].mxu0 %v6740
    %v6963 = vpop.f32.mrb[0].mxu0
    %v6964 = vadd.f32 0.0, %v6963
    %v6965 = vpop.f32.mrb[0].mxu0
    %6966 = vdwg.mxu0
    %6999 = vrot.lane.b32.xlu0 %v6809, 126
    %v7000 = vpop.permute.xlu0 %6999
    %7001 = vrot.lane.b32.xlu0 %v6814, 126
    %v7002 = vpop.permute.xlu0 %7001
    %7003 = vrot.lane.b32.xlu0 %v6819, 126
    %v7004 = vpop.permute.xlu0 %7003
    %7005 = vrot.lane.b32.xlu0 %v6824, 126
    %v7006 = vpop.permute.xlu0 %7005
    %7007 = vrot.lane.b32.xlu0 %v6829, 126
    %v7008 = vpop.permute.xlu0 %7007
    %7009 = vrot.lane.b32.xlu0 %v6834, 126
    %v7010 = vpop.permute.xlu0 %7009
    %7011 = vrot.lane.b32.xlu0 %v6839, 126
    %v7012 = vpop.permute.xlu0 %7011
    %7013 = vrot.lane.b32.xlu0 %v6844, 126
    %v7014 = vpop.permute.xlu0 %7013
    %7015 = vrot.lane.b32.xlu0 %v6849, 126
    %v7016 = vpop.permute.xlu0 %7015
    %7017 = vrot.lane.b32.xlu0 %v6854, 126
    %v7018 = vpop.permute.xlu0 %7017
    %7019 = vrot.lane.b32.xlu0 %v6859, 126
    %v7020 = vpop.permute.xlu0 %7019
    %7021 = vrot.lane.b32.xlu0 %v6864, 126
    %v7022 = vpop.permute.xlu0 %7021
    %7023 = vrot.lane.b32.xlu0 %v6869, 126
    %v7024 = vpop.permute.xlu0 %7023
    %7025 = vrot.lane.b32.xlu0 %v6874, 126
    %v7026 = vpop.permute.xlu0 %7025
    %7027 = vrot.lane.b32.xlu0 %v6879, 126
    %v7028 = vpop.permute.xlu0 %7027
    %7029 = vrot.lane.b32.xlu0 %v6884, 126
    %v7030 = vpop.permute.xlu0 %7029
    %7031 = vrot.lane.b32.xlu0 %v6889, 126
    %v7032 = vpop.permute.xlu0 %7031
    %7033 = vrot.lane.b32.xlu0 %v6894, 126
    %v7034 = vpop.permute.xlu0 %7033
    %7035 = vrot.lane.b32.xlu0 %v6899, 126
    %v7036 = vpop.permute.xlu0 %7035
    %7037 = vrot.lane.b32.xlu0 %v6904, 126
    %v7038 = vpop.permute.xlu0 %7037
    %7039 = vrot.lane.b32.xlu0 %v6909, 126
    %v7040 = vpop.permute.xlu0 %7039
    %7041 = vrot.lane.b32.xlu0 %v6914, 126
    %v7042 = vpop.permute.xlu0 %7041
    %7043 = vrot.lane.b32.xlu0 %v6919, 126
    %v7044 = vpop.permute.xlu0 %7043
    %7045 = vrot.lane.b32.xlu0 %v6924, 126
    %v7046 = vpop.permute.xlu0 %7045
    %7047 = vrot.lane.b32.xlu0 %v6929, 126
    %v7048 = vpop.permute.xlu0 %7047
    %7049 = vrot.lane.b32.xlu0 %v6934, 126
    %v7050 = vpop.permute.xlu0 %7049
    %7051 = vrot.lane.b32.xlu0 %v6939, 126
    %v7052 = vpop.permute.xlu0 %7051
    %7053 = vrot.lane.b32.xlu0 %v6944, 126
    %v7054 = vpop.permute.xlu0 %7053
    %7055 = vrot.lane.b32.xlu0 %v6949, 126
    %v7056 = vpop.permute.xlu0 %7055
    %7057 = vrot.lane.b32.xlu0 %v6954, 126
    %v7058 = vpop.permute.xlu0 %7057
    %7059 = vrot.lane.b32.xlu0 %v6959, 126
    %v7060 = vpop.permute.xlu0 %7059
    %7061 = vrot.lane.b32.xlu0 %v6964, 126
    %v7062 = vpop.permute.xlu0 %7061
    %v7095 = vmul.f32 %v6039, %v7000
    %v7096 = vmul.f32 %v6044, %v7002
    %v7097 = vmul.f32 %v6049, %v7004
    %v7098 = vmul.f32 %v6054, %v7006
    %v7099 = vmul.f32 %v6059, %v7008
    %v7100 = vmul.f32 %v6064, %v7010
    %v7101 = vmul.f32 %v6069, %v7012
    %v7102 = vmul.f32 %v6074, %v7014
    %v7103 = vmul.f32 %v6079, %v7016
    %v7104 = vmul.f32 %v6084, %v7018
    %v7105 = vmul.f32 %v6089, %v7020
    %v7106 = vmul.f32 %v6094, %v7022
    %v7107 = vmul.f32 %v6099, %v7024
    %v7108 = vmul.f32 %v6104, %v7026
    %v7109 = vmul.f32 %v6109, %v7028
    %v7110 = vmul.f32 %v6114, %v7030
    %v7111 = vmul.f32 %v6119, %v7032
    %v7112 = vmul.f32 %v6124, %v7034
    %v7113 = vmul.f32 %v6129, %v7036
    %v7114 = vmul.f32 %v6134, %v7038
    %v7115 = vmul.f32 %v6139, %v7040
    %v7116 = vmul.f32 %v6144, %v7042
    %v7117 = vmul.f32 %v6149, %v7044
    %v7118 = vmul.f32 %v6154, %v7046
    %v7119 = vmul.f32 %v6159, %v7048
    %v7120 = vmul.f32 %v6164, %v7050
    %v7121 = vmul.f32 %v6169, %v7052
    %v7122 = vmul.f32 %v6174, %v7054
    %v7123 = vmul.f32 %v6179, %v7056
    %v7124 = vmul.f32 %v6184, %v7058
    %v7125 = vmul.f32 %v6189, %v7060
    %v7126 = vmul.f32 %v6194, %v7062
    %7159 = vrot.lane.b32.xlu0 %v7095, 127
    %v7160 = vpop.permute.xlu0 %7159
    %7161 = vrot.lane.b32.xlu0 %v7096, 127
    %v7162 = vpop.permute.xlu0 %7161
    %7163 = vrot.lane.b32.xlu0 %v7097, 127
    %v7164 = vpop.permute.xlu0 %7163
    %7165 = vrot.lane.b32.xlu0 %v7098, 127
    %v7166 = vpop.permute.xlu0 %7165
    %7167 = vrot.lane.b32.xlu0 %v7099, 127
    %v7168 = vpop.permute.xlu0 %7167
    %7169 = vrot.lane.b32.xlu0 %v7100, 127
    %v7170 = vpop.permute.xlu0 %7169
    %7171 = vrot.lane.b32.xlu0 %v7101, 127
    %v7172 = vpop.permute.xlu0 %7171
    %7173 = vrot.lane.b32.xlu0 %v7102, 127
    %v7174 = vpop.permute.xlu0 %7173
    %7175 = vrot.lane.b32.xlu0 %v7103, 127
    %v7176 = vpop.permute.xlu0 %7175
    %7177 = vrot.lane.b32.xlu0 %v7104, 127
    %v7178 = vpop.permute.xlu0 %7177
    %7179 = vrot.lane.b32.xlu0 %v7105, 127
    %v7180 = vpop.permute.xlu0 %7179
    %7181 = vrot.lane.b32.xlu0 %v7106, 127
    %v7182 = vpop.permute.xlu0 %7181
    %7183 = vrot.lane.b32.xlu0 %v7107, 127
    %v7184 = vpop.permute.xlu0 %7183
    %7185 = vrot.lane.b32.xlu0 %v7108, 127
    %v7186 = vpop.permute.xlu0 %7185
    %7187 = vrot.lane.b32.xlu0 %v7109, 127
    %v7188 = vpop.permute.xlu0 %7187
    %7189 = vrot.lane.b32.xlu0 %v7110, 127
    %v7190 = vpop.permute.xlu0 %7189
    %7191 = vrot.lane.b32.xlu0 %v7111, 127
    %v7192 = vpop.permute.xlu0 %7191
    %7193 = vrot.lane.b32.xlu0 %v7112, 127
    %v7194 = vpop.permute.xlu0 %7193
    %7195 = vrot.lane.b32.xlu0 %v7113, 127
    %v7196 = vpop.permute.xlu0 %7195
    %7197 = vrot.lane.b32.xlu0 %v7114, 127
    %v7198 = vpop.permute.xlu0 %7197
    %7199 = vrot.lane.b32.xlu0 %v7115, 127
    %v7200 = vpop.permute.xlu0 %7199
    %7201 = vrot.lane.b32.xlu0 %v7116, 127
    %v7202 = vpop.permute.xlu0 %7201
    %7203 = vrot.lane.b32.xlu0 %v7117, 127
    %v7204 = vpop.permute.xlu0 %7203
    %7205 = vrot.lane.b32.xlu0 %v7118, 127
    %v7206 = vpop.permute.xlu0 %7205
    %7207 = vrot.lane.b32.xlu0 %v7119, 127
    %v7208 = vpop.permute.xlu0 %7207
    %7209 = vrot.lane.b32.xlu0 %v7120, 127
    %v7210 = vpop.permute.xlu0 %7209
    %7211 = vrot.lane.b32.xlu0 %v7121, 127
    %v7212 = vpop.permute.xlu0 %7211
    %7213 = vrot.lane.b32.xlu0 %v7122, 127
    %v7214 = vpop.permute.xlu0 %7213
    %7215 = vrot.lane.b32.xlu0 %v7123, 127
    %v7216 = vpop.permute.xlu0 %7215
    %7217 = vrot.lane.b32.xlu0 %v7124, 127
    %v7218 = vpop.permute.xlu0 %7217
    %7219 = vrot.lane.b32.xlu0 %v7125, 127
    %v7220 = vpop.permute.xlu0 %7219
    %7221 = vrot.lane.b32.xlu0 %v7126, 127
    %v7222 = vpop.permute.xlu0 %7221
    %v7223 = vsel %vm3666, %v7160, 0
    %v7225 = vsel %vm3666, %v7162, 0
    %v7227 = vsel %vm3666, %v7164, 0
    %v7229 = vsel %vm3666, %v7166, 0
    %v7231 = vsel %vm3666, %v7168, 0
    %v7233 = vsel %vm3666, %v7170, 0
    %v7235 = vsel %vm3666, %v7172, 0
    %v7237 = vsel %vm3666, %v7174, 0
    %v7239 = vsel %vm3666, %v7176, 0
    %v7241 = vsel %vm3666, %v7178, 0
    %v7243 = vsel %vm3666, %v7180, 0
    %v7245 = vsel %vm3666, %v7182, 0
    %v7247 = vsel %vm3666, %v7184, 0
    %v7249 = vsel %vm3666, %v7186, 0
    %v7251 = vsel %vm3666, %v7188, 0
    %v7253 = vsel %vm3666, %v7190, 0
    %v7255 = vsel %vm3666, %v7192, 0
    %v7257 = vsel %vm3666, %v7194, 0
    %v7259 = vsel %vm3666, %v7196, 0
    %v7261 = vsel %vm3666, %v7198, 0
    %v7263 = vsel %vm3666, %v7200, 0
    %v7265 = vsel %vm3666, %v7202, 0
    %v7267 = vsel %vm3666, %v7204, 0
    %v7269 = vsel %vm3666, %v7206, 0
    %v7271 = vsel %vm3666, %v7208, 0
    %v7273 = vsel %vm3666, %v7210, 0
    %v7275 = vsel %vm3666, %v7212, 0
    %v7277 = vsel %vm3666, %v7214, 0
    %v7279 = vsel %vm3666, %v7216, 0
    %v7281 = vsel %vm3666, %v7218, 0
    %v7283 = vsel %vm3666, %v7220, 0
    %v7285 = vsel %vm3666, %v7222, 0
    %7287 = vmatprep.subr.mxu0 0.0
    %7288 = vmatpush1.msra.mxu0 %v135
    %7289 = vmatprep.subr.mxu0 0.0
    %7290 = vmatpush1.msra.mxu0 %v136
    %7291 = vmatprep.subr.mxu0 0.0
    %7292 = vmatpush1.msra.mxu0 %v137
    %7293 = vmatprep.subr.mxu0 0.0
    %7294 = vmatpush1.msra.mxu0 %v3733
    %7295 = vmatprep.subr.mxu0 0.0
    %7296 = vmatpush1.msra.mxu0 0.0
    %7297 = vmatprep.subr.mxu0 0.0
    %7298 = vmatpush1.msra.mxu0 0.0
    %7299 = vmatprep.subr.mxu0 0.0
    %7300 = vmatpush1.msra.mxu0 0.0
    %7301 = vmatprep.subr.mxu0 0.0
    %7302 = vmatpush1.msra.mxu0 0.0
    %7303 = vmatprep.subr.mxu0 0.0
    %7304 = vmatpush1.msra.mxu0 0.0
    %7305 = vmatprep.subr.mxu0 0.0
    %7306 = vmatpush1.msra.mxu0 0.0
    %7307 = vmatprep.subr.mxu0 0.0
    %7308 = vmatpush1.msra.mxu0 0.0
    %7309 = vmatprep.subr.mxu0 0.0
    %7310 = vmatpush1.msra.mxu0 0.0
    %7311 = vmatprep.subr.mxu0 0.0
    %7312 = vmatpush1.msra.mxu0 0.0
    %7313 = vmatprep.subr.mxu0 0.0
    %7314 = vmatpush1.msra.mxu0 0.0
    %7315 = vmatprep.subr.mxu0 0.0
    %7316 = vmatpush1.msra.mxu0 0.0
    %7317 = vmatprep.subr.mxu0 0.0
    %7318 = vmatpush1.msra.mxu0 0.0
    %7319 = vmatprep.subr.mxu0 0.0
    %7320 = vmatpush1.msra.mxu0 0.0
    %7321 = vmatprep.subr.mxu0 0.0
    %7322 = vmatpush1.msra.mxu0 0.0
    %7323 = vmatprep.subr.mxu0 0.0
    %7324 = vmatpush1.msra.mxu0 0.0
    %7325 = vmatprep.subr.mxu0 0.0
    %7326 = vmatpush1.msra.mxu0 0.0
    %7327 = vmatprep.subr.mxu0 0.0
    %7328 = vmatpush1.msra.mxu0 0.0
    %7329 = vmatprep.subr.mxu0 0.0
    %7330 = vmatpush1.msra.mxu0 0.0
    %7331 = vmatprep.subr.mxu0 0.0
    %7332 = vmatpush1.msra.mxu0 0.0
    %7333 = vmatprep.subr.mxu0 0.0
    %7334 = vmatpush1.msra.mxu0 0.0
    %7335 = vmatprep.subr.mxu0 0.0
    %7336 = vmatpush1.msra.mxu0 0.0
    %7337 = vmatprep.subr.mxu0 0.0
    %7338 = vmatpush1.msra.mxu0 0.0
    %7339 = vmatprep.subr.mxu0 0.0
    %7340 = vmatpush1.msra.mxu0 0.0
    %7341 = vmatprep.subr.mxu0 0.0
    %7342 = vmatpush1.msra.mxu0 0.0
    %7343 = vmatprep.subr.mxu0 0.0
    %7344 = vmatpush1.msra.mxu0 0.0
    %7345 = vmatprep.subr.mxu0 0.0
    %7346 = vmatpush1.msra.mxu0 0.0
    %7347 = vmatprep.subr.mxu0 0.0
    %7348 = vmatpush1.msra.mxu0 0.0
    %7349 = vmatprep.subr.mxu0 0.0
    %7350 = vmatpush1.msra.mxu0 0.0
    %7351 = vmatprep.mubr.f32.mxu0 0.0
    %7352 = vmatmul.mubr.f32.gmra.mrb[0].mxu0 %v7223
    %v7353 = vpop.f32.mrb[0].mxu0
    %v7354 = vadd.f32 0.0, %v7353
    %v7355 = vpop.f32.mrb[0].mxu0
    %7356 = vmatprep.mubr.f32.mxu0 0.0
    %7357 = vmatmul.mubr.f32.gmra.mrb[0].mxu0 %v7225
    %v7358 = vpop.f32.mrb[0].mxu0
    %v7359 = vadd.f32 0.0, %v7358
    %v7360 = vpop.f32.mrb[0].mxu0
    %7361 = vmatprep.mubr.f32.mxu0 0.0
    %7362 = vmatmul.mubr.f32.gmra.mrb[0].mxu0 %v7227
    %v7363 = vpop.f32.mrb[0].mxu0
    %v7364 = vadd.f32 0.0, %v7363
    %v7365 = vpop.f32.mrb[0].mxu0
    %7366 = vmatprep.mubr.f32.mxu0 0.0
    %7367 = vmatmul.mubr.f32.gmra.mrb[0].mxu0 %v7229
    %v7368 = vpop.f32.mrb[0].mxu0
    %v7369 = vadd.f32 0.0, %v7368
    %v7370 = vpop.f32.mrb[0].mxu0
    %7371 = vmatprep.mubr.f32.mxu0 0.0
    %7372 = vmatmul.mubr.f32.gmra.mrb[0].mxu0 %v7231
    %v7373 = vpop.f32.mrb[0].mxu0
    %v7374 = vadd.f32 0.0, %v7373
    %v7375 = vpop.f32.mrb[0].mxu0
    %7376 = vmatprep.mubr.f32.mxu0 0.0
    %7377 = vmatmul.mubr.f32.gmra.mrb[0].mxu0 %v7233
    %v7378 = vpop.f32.mrb[0].mxu0
    %v7379 = vadd.f32 0.0, %v7378
    %v7380 = vpop.f32.mrb[0].mxu0
    %7381 = vmatprep.mubr.f32.mxu0 0.0
    %7382 = vmatmul.mubr.f32.gmra.mrb[0].mxu0 %v7235
    %v7383 = vpop.f32.mrb[0].mxu0
    %v7384 = vadd.f32 0.0, %v7383
    %v7385 = vpop.f32.mrb[0].mxu0
    %7386 = vmatprep.mubr.f32.mxu0 0.0
    %7387 = vmatmul.mubr.f32.gmra.mrb[0].mxu0 %v7237
    %v7388 = vpop.f32.mrb[0].mxu0
    %v7389 = vadd.f32 0.0, %v7388
    %v7390 = vpop.f32.mrb[0].mxu0
    %7391 = vmatprep.mubr.f32.mxu0 0.0
    %7392 = vmatmul.mubr.f32.gmra.mrb[0].mxu0 %v7239
    %v7393 = vpop.f32.mrb[0].mxu0
    %v7394 = vadd.f32 0.0, %v7393
    %v7395 = vpop.f32.mrb[0].mxu0
    %7396 = vmatprep.mubr.f32.mxu0 0.0
    %7397 = vmatmul.mubr.f32.gmra.mrb[0].mxu0 %v7241
    %v7398 = vpop.f32.mrb[0].mxu0
    %v7399 = vadd.f32 0.0, %v7398
    %v7400 = vpop.f32.mrb[0].mxu0
    %7401 = vmatprep.mubr.f32.mxu0 0.0
    %7402 = vmatmul.mubr.f32.gmra.mrb[0].mxu0 %v7243
    %v7403 = vpop.f32.mrb[0].mxu0
    %v7404 = vadd.f32 0.0, %v7403
    %v7405 = vpop.f32.mrb[0].mxu0
    %7406 = vmatprep.mubr.f32.mxu0 0.0
    %7407 = vmatmul.mubr.f32.gmra.mrb[0].mxu0 %v7245
    %v7408 = vpop.f32.mrb[0].mxu0
    %v7409 = vadd.f32 0.0, %v7408
    %v7410 = vpop.f32.mrb[0].mxu0
    %7411 = vmatprep.mubr.f32.mxu0 0.0
    %7412 = vmatmul.mubr.f32.gmra.mrb[0].mxu0 %v7247
    %v7413 = vpop.f32.mrb[0].mxu0
    %v7414 = vadd.f32 0.0, %v7413
    %v7415 = vpop.f32.mrb[0].mxu0
    %7416 = vmatprep.mubr.f32.mxu0 0.0
    %7417 = vmatmul.mubr.f32.gmra.mrb[0].mxu0 %v7249
    %v7418 = vpop.f32.mrb[0].mxu0
    %v7419 = vadd.f32 0.0, %v7418
    %v7420 = vpop.f32.mrb[0].mxu0
    %7421 = vmatprep.mubr.f32.mxu0 0.0
    %7422 = vmatmul.mubr.f32.gmra.mrb[0].mxu0 %v7251
    %v7423 = vpop.f32.mrb[0].mxu0
    %v7424 = vadd.f32 0.0, %v7423
    %v7425 = vpop.f32.mrb[0].mxu0
    %7426 = vmatprep.mubr.f32.mxu0 0.0
    %7427 = vmatmul.mubr.f32.gmra.mrb[0].mxu0 %v7253
    %v7428 = vpop.f32.mrb[0].mxu0
    %v7429 = vadd.f32 0.0, %v7428
    %v7430 = vpop.f32.mrb[0].mxu0
    %7431 = vmatprep.mubr.f32.mxu0 0.0
    %7432 = vmatmul.mubr.f32.gmra.mrb[0].mxu0 %v7255
    %v7433 = vpop.f32.mrb[0].mxu0
    %v7434 = vadd.f32 0.0, %v7433
    %v7435 = vpop.f32.mrb[0].mxu0
    %7436 = vmatprep.mubr.f32.mxu0 0.0
    %7437 = vmatmul.mubr.f32.gmra.mrb[0].mxu0 %v7257
    %v7438 = vpop.f32.mrb[0].mxu0
    %v7439 = vadd.f32 0.0, %v7438
    %v7440 = vpop.f32.mrb[0].mxu0
    %7441 = vmatprep.mubr.f32.mxu0 0.0
    %7442 = vmatmul.mubr.f32.gmra.mrb[0].mxu0 %v7259
    %v7443 = vpop.f32.mrb[0].mxu0
    %v7444 = vadd.f32 0.0, %v7443
    %v7445 = vpop.f32.mrb[0].mxu0
    %7446 = vmatprep.mubr.f32.mxu0 0.0
    %7447 = vmatmul.mubr.f32.gmra.mrb[0].mxu0 %v7261
    %v7448 = vpop.f32.mrb[0].mxu0
    %v7449 = vadd.f32 0.0, %v7448
    %v7450 = vpop.f32.mrb[0].mxu0
    %7451 = vmatprep.mubr.f32.mxu0 0.0
    %7452 = vmatmul.mubr.f32.gmra.mrb[0].mxu0 %v7263
    %v7453 = vpop.f32.mrb[0].mxu0
    %v7454 = vadd.f32 0.0, %v7453
    %v7455 = vpop.f32.mrb[0].mxu0
    %7456 = vmatprep.mubr.f32.mxu0 0.0
    %7457 = vmatmul.mubr.f32.gmra.mrb[0].mxu0 %v7265
    %v7458 = vpop.f32.mrb[0].mxu0
    %v7459 = vadd.f32 0.0, %v7458
    %v7460 = vpop.f32.mrb[0].mxu0
    %7461 = vmatprep.mubr.f32.mxu0 0.0
    %7462 = vmatmul.mubr.f32.gmra.mrb[0].mxu0 %v7267
    %v7463 = vpop.f32.mrb[0].mxu0
    %v7464 = vadd.f32 0.0, %v7463
    %v7465 = vpop.f32.mrb[0].mxu0
    %7466 = vmatprep.mubr.f32.mxu0 0.0
    %7467 = vmatmul.mubr.f32.gmra.mrb[0].mxu0 %v7269
    %v7468 = vpop.f32.mrb[0].mxu0
    %v7469 = vadd.f32 0.0, %v7468
    %v7470 = vpop.f32.mrb[0].mxu0
    %7471 = vmatprep.mubr.f32.mxu0 0.0
    %7472 = vmatmul.mubr.f32.gmra.mrb[0].mxu0 %v7271
    %v7473 = vpop.f32.mrb[0].mxu0
    %v7474 = vadd.f32 0.0, %v7473
    %v7475 = vpop.f32.mrb[0].mxu0
    %7476 = vmatprep.mubr.f32.mxu0 0.0
    %7477 = vmatmul.mubr.f32.gmra.mrb[0].mxu0 %v7273
    %v7478 = vpop.f32.mrb[0].mxu0
    %v7479 = vadd.f32 0.0, %v7478
    %v7480 = vpop.f32.mrb[0].mxu0
    %7481 = vmatprep.mubr.f32.mxu0 0.0
    %7482 = vmatmul.mubr.f32.gmra.mrb[0].mxu0 %v7275
    %v7483 = vpop.f32.mrb[0].mxu0
    %v7484 = vadd.f32 0.0, %v7483
    %v7485 = vpop.f32.mrb[0].mxu0
    %7486 = vmatprep.mubr.f32.mxu0 0.0
    %7487 = vmatmul.mubr.f32.gmra.mrb[0].mxu0 %v7277
    %v7488 = vpop.f32.mrb[0].mxu0
    %v7489 = vadd.f32 0.0, %v7488
    %v7490 = vpop.f32.mrb[0].mxu0
    %7491 = vmatprep.mubr.f32.mxu0 0.0
    %7492 = vmatmul.mubr.f32.gmra.mrb[0].mxu0 %v7279
    %v7493 = vpop.f32.mrb[0].mxu0
    %v7494 = vadd.f32 0.0, %v7493
    %v7495 = vpop.f32.mrb[0].mxu0
    %7496 = vmatprep.mubr.f32.mxu0 0.0
    %7497 = vmatmul.mubr.f32.gmra.mrb[0].mxu0 %v7281
    %v7498 = vpop.f32.mrb[0].mxu0
    %v7499 = vadd.f32 0.0, %v7498
    %v7500 = vpop.f32.mrb[0].mxu0
    %7501 = vmatprep.mubr.f32.mxu0 0.0
    %7502 = vmatmul.mubr.f32.gmra.mrb[0].mxu0 %v7283
    %v7503 = vpop.f32.mrb[0].mxu0
    %v7504 = vadd.f32 0.0, %v7503
    %v7505 = vpop.f32.mrb[0].mxu0
    %7506 = vmatprep.mubr.f32.mxu0 0.0
    %7507 = vmatmul.mubr.f32.gmra.mrb[0].mxu0 %v7285
    %v7508 = vpop.f32.mrb[0].mxu0
    %v7509 = vadd.f32 0.0, %v7508
    %v7510 = vpop.f32.mrb[0].mxu0
    %7511 = vdwg.mxu0
    %7512 = vrot.lane.b32.xlu0 %v1199, 121
    %v7513 = vpop.permute.xlu0 %7512
    %7514 = vrot.lane.b32.xlu0 %v1204, 121
    %v7515 = vpop.permute.xlu0 %7514
    %7516 = vrot.lane.b32.xlu0 %v1209, 121
    %v7517 = vpop.permute.xlu0 %7516
    %7518 = vrot.lane.b32.xlu0 %v1214, 121
    %v7519 = vpop.permute.xlu0 %7518
    %7520 = vrot.lane.b32.xlu0 %v1219, 121
    %v7521 = vpop.permute.xlu0 %7520
    %7522 = vrot.lane.b32.xlu0 %v1224, 121
    %v7523 = vpop.permute.xlu0 %7522
    %7524 = vrot.lane.b32.xlu0 %v1229, 121
    %v7525 = vpop.permute.xlu0 %7524
    %7526 = vrot.lane.b32.xlu0 %v1234, 121
    %v7527 = vpop.permute.xlu0 %7526
    %7528 = vrot.lane.b32.xlu0 %v1239, 121
    %v7529 = vpop.permute.xlu0 %7528
    %7530 = vrot.lane.b32.xlu0 %v1244, 121
    %v7531 = vpop.permute.xlu0 %7530
    %7532 = vrot.lane.b32.xlu0 %v1249, 121
    %v7533 = vpop.permute.xlu0 %7532
    %7534 = vrot.lane.b32.xlu0 %v1254, 121
    %v7535 = vpop.permute.xlu0 %7534
    %7536 = vrot.lane.b32.xlu0 %v1259, 121
    %v7537 = vpop.permute.xlu0 %7536
    %7538 = vrot.lane.b32.xlu0 %v1264, 121
    %v7539 = vpop.permute.xlu0 %7538
    %7540 = vrot.lane.b32.xlu0 %v1269, 121
    %v7541 = vpop.permute.xlu0 %7540
    %7542 = vrot.lane.b32.xlu0 %v1274, 121
    %v7543 = vpop.permute.xlu0 %7542
    %7544 = vrot.lane.b32.xlu0 %v1279, 121
    %v7545 = vpop.permute.xlu0 %7544
    %7546 = vrot.lane.b32.xlu0 %v1284, 121
    %v7547 = vpop.permute.xlu0 %7546
    %7548 = vrot.lane.b32.xlu0 %v1289, 121
    %v7549 = vpop.permute.xlu0 %7548
    %7550 = vrot.lane.b32.xlu0 %v1294, 121
    %v7551 = vpop.permute.xlu0 %7550
    %7552 = vrot.lane.b32.xlu0 %v1299, 121
    %v7553 = vpop.permute.xlu0 %7552
    %7554 = vrot.lane.b32.xlu0 %v1304, 121
    %v7555 = vpop.permute.xlu0 %7554
    %7556 = vrot.lane.b32.xlu0 %v1309, 121
    %v7557 = vpop.permute.xlu0 %7556
    %7558 = vrot.lane.b32.xlu0 %v1314, 121
    %v7559 = vpop.permute.xlu0 %7558
    %7560 = vrot.lane.b32.xlu0 %v1319, 121
    %v7561 = vpop.permute.xlu0 %7560
    %7562 = vrot.lane.b32.xlu0 %v1324, 121
    %v7563 = vpop.permute.xlu0 %7562
    %7564 = vrot.lane.b32.xlu0 %v1329, 121
    %v7565 = vpop.permute.xlu0 %7564
    %7566 = vrot.lane.b32.xlu0 %v1334, 121
    %v7567 = vpop.permute.xlu0 %7566
    %7568 = vrot.lane.b32.xlu0 %v1339, 121
    %v7569 = vpop.permute.xlu0 %7568
    %7570 = vrot.lane.b32.xlu0 %v1344, 121
    %v7571 = vpop.permute.xlu0 %7570
    %7572 = vrot.lane.b32.xlu0 %v1349, 121
    %v7573 = vpop.permute.xlu0 %7572
    %7574 = vrot.lane.b32.xlu0 %v1354, 121
    %v7575 = vpop.permute.xlu0 %7574
    %v7608 = vmul.f32 %v6039, %v7513
    %v7609 = vmul.f32 %v6044, %v7515
    %v7610 = vmul.f32 %v6049, %v7517
    %v7611 = vmul.f32 %v6054, %v7519
    %v7612 = vmul.f32 %v6059, %v7521
    %v7613 = vmul.f32 %v6064, %v7523
    %v7614 = vmul.f32 %v6069, %v7525
    %v7615 = vmul.f32 %v6074, %v7527
    %v7616 = vmul.f32 %v6079, %v7529
    %v7617 = vmul.f32 %v6084, %v7531
    %v7618 = vmul.f32 %v6089, %v7533
    %v7619 = vmul.f32 %v6094, %v7535
    %v7620 = vmul.f32 %v6099, %v7537
    %v7621 = vmul.f32 %v6104, %v7539
    %v7622 = vmul.f32 %v6109, %v7541
    %v7623 = vmul.f32 %v6114, %v7543
    %v7624 = vmul.f32 %v6119, %v7545
    %v7625 = vmul.f32 %v6124, %v7547
    %v7626 = vmul.f32 %v6129, %v7549
    %v7627 = vmul.f32 %v6134, %v7551
    %v7628 = vmul.f32 %v6139, %v7553
    %v7629 = vmul.f32 %v6144, %v7555
    %v7630 = vmul.f32 %v6149, %v7557
    %v7631 = vmul.f32 %v6154, %v7559
    %v7632 = vmul.f32 %v6159, %v7561
    %v7633 = vmul.f32 %v6164, %v7563
    %v7634 = vmul.f32 %v6169, %v7565
    %v7635 = vmul.f32 %v6174, %v7567
    %v7636 = vmul.f32 %v6179, %v7569
    %v7637 = vmul.f32 %v6184, %v7571
    %v7638 = vmul.f32 %v6189, %v7573
    %v7639 = vmul.f32 %v6194, %v7575
    %7640 = vrot.lane.b32.xlu0 %v1199, 120
    %v7641 = vpop.permute.xlu0 %7640
    %7642 = vrot.lane.b32.xlu0 %v1204, 120
    %v7643 = vpop.permute.xlu0 %7642
    %7644 = vrot.lane.b32.xlu0 %v1209, 120
    %v7645 = vpop.permute.xlu0 %7644
    %7646 = vrot.lane.b32.xlu0 %v1214, 120
    %v7647 = vpop.permute.xlu0 %7646
    %7648 = vrot.lane.b32.xlu0 %v1219, 120
    %v7649 = vpop.permute.xlu0 %7648
    %7650 = vrot.lane.b32.xlu0 %v1224, 120
    %v7651 = vpop.permute.xlu0 %7650
    %7652 = vrot.lane.b32.xlu0 %v1229, 120
    %v7653 = vpop.permute.xlu0 %7652
    %7654 = vrot.lane.b32.xlu0 %v1234, 120
    %v7655 = vpop.permute.xlu0 %7654
    %7656 = vrot.lane.b32.xlu0 %v1239, 120
    %v7657 = vpop.permute.xlu0 %7656
    %7658 = vrot.lane.b32.xlu0 %v1244, 120
    %v7659 = vpop.permute.xlu0 %7658
    %7660 = vrot.lane.b32.xlu0 %v1249, 120
    %v7661 = vpop.permute.xlu0 %7660
    %7662 = vrot.lane.b32.xlu0 %v1254, 120
    %v7663 = vpop.permute.xlu0 %7662
    %7664 = vrot.lane.b32.xlu0 %v1259, 120
    %v7665 = vpop.permute.xlu0 %7664
    %7666 = vrot.lane.b32.xlu0 %v1264, 120
    %v7667 = vpop.permute.xlu0 %7666
    %7668 = vrot.lane.b32.xlu0 %v1269, 120
    %v7669 = vpop.permute.xlu0 %7668
    %7670 = vrot.lane.b32.xlu0 %v1274, 120
    %v7671 = vpop.permute.xlu0 %7670
    %7672 = vrot.lane.b32.xlu0 %v1279, 120
    %v7673 = vpop.permute.xlu0 %7672
    %7674 = vrot.lane.b32.xlu0 %v1284, 120
    %v7675 = vpop.permute.xlu0 %7674
    %7676 = vrot.lane.b32.xlu0 %v1289, 120
    %v7677 = vpop.permute.xlu0 %7676
    %7678 = vrot.lane.b32.xlu0 %v1294, 120
    %v7679 = vpop.permute.xlu0 %7678
    %7680 = vrot.lane.b32.xlu0 %v1299, 120
    %v7681 = vpop.permute.xlu0 %7680
    %7682 = vrot.lane.b32.xlu0 %v1304, 120
    %v7683 = vpop.permute.xlu0 %7682
    %7684 = vrot.lane.b32.xlu0 %v1309, 120
    %v7685 = vpop.permute.xlu0 %7684
    %7686 = vrot.lane.b32.xlu0 %v1314, 120
    %v7687 = vpop.permute.xlu0 %7686
    %7688 = vrot.lane.b32.xlu0 %v1319, 120
    %v7689 = vpop.permute.xlu0 %7688
    %7690 = vrot.lane.b32.xlu0 %v1324, 120
    %v7691 = vpop.permute.xlu0 %7690
    %7692 = vrot.lane.b32.xlu0 %v1329, 120
    %v7693 = vpop.permute.xlu0 %7692
    %7694 = vrot.lane.b32.xlu0 %v1334, 120
    %v7695 = vpop.permute.xlu0 %7694
    %7696 = vrot.lane.b32.xlu0 %v1339, 120
    %v7697 = vpop.permute.xlu0 %7696
    %7698 = vrot.lane.b32.xlu0 %v1344, 120
    %v7699 = vpop.permute.xlu0 %7698
    %7700 = vrot.lane.b32.xlu0 %v1349, 120
    %v7701 = vpop.permute.xlu0 %7700
    %7702 = vrot.lane.b32.xlu0 %v1354, 120
    %v7703 = vpop.permute.xlu0 %7702
    %v7736 = vmul.f32 %v6809, %v7641
    %v7737 = vmul.f32 %v6814, %v7643
    %v7738 = vmul.f32 %v6819, %v7645
    %v7739 = vmul.f32 %v6824, %v7647
    %v7740 = vmul.f32 %v6829, %v7649
    %v7741 = vmul.f32 %v6834, %v7651
    %v7742 = vmul.f32 %v6839, %v7653
    %v7743 = vmul.f32 %v6844, %v7655
    %v7744 = vmul.f32 %v6849, %v7657
    %v7745 = vmul.f32 %v6854, %v7659
    %v7746 = vmul.f32 %v6859, %v7661
    %v7747 = vmul.f32 %v6864, %v7663
    %v7748 = vmul.f32 %v6869, %v7665
    %v7749 = vmul.f32 %v6874, %v7667
    %v7750 = vmul.f32 %v6879, %v7669
    %v7751 = vmul.f32 %v6884, %v7671
    %v7752 = vmul.f32 %v6889, %v7673
    %v7753 = vmul.f32 %v6894, %v7675
    %v7754 = vmul.f32 %v6899, %v7677
    %v7755 = vmul.f32 %v6904, %v7679
    %v7756 = vmul.f32 %v6909, %v7681
    %v7757 = vmul.f32 %v6914, %v7683
    %v7758 = vmul.f32 %v6919, %v7685
    %v7759 = vmul.f32 %v6924, %v7687
    %v7760 = vmul.f32 %v6929, %v7689
    %v7761 = vmul.f32 %v6934, %v7691
    %v7762 = vmul.f32 %v6939, %v7693
    %v7763 = vmul.f32 %v6944, %v7695
    %v7764 = vmul.f32 %v6949, %v7697
    %v7765 = vmul.f32 %v6954, %v7699
    %v7766 = vmul.f32 %v6959, %v7701
    %v7767 = vmul.f32 %v6964, %v7703
    %v7768 = vsel %vm4152, %v7736, 0.0
    %7769 = vadd.xlane.f32.xlu0 %v7768
    %v7770 = vpop.xlane.xlu0 %7769
    %v7771 = vsel %vm4152, %v7737, 0.0
    %7772 = vadd.xlane.f32.xlu0 %v7771
    %v7773 = vpop.xlane.xlu0 %7772
    %v7774 = vsel %vm4152, %v7738, 0.0
    %7775 = vadd.xlane.f32.xlu0 %v7774
    %v7776 = vpop.xlane.xlu0 %7775
    %v7777 = vsel %vm4152, %v7739, 0.0
    %7778 = vadd.xlane.f32.xlu0 %v7777
    %v7779 = vpop.xlane.xlu0 %7778
    %v7780 = vsel %vm4152, %v7740, 0.0
    %7781 = vadd.xlane.f32.xlu0 %v7780
    %v7782 = vpop.xlane.xlu0 %7781
    %v7783 = vsel %vm4152, %v7741, 0.0
    %7784 = vadd.xlane.f32.xlu0 %v7783
    %v7785 = vpop.xlane.xlu0 %7784
    %v7786 = vsel %vm4152, %v7742, 0.0
    %7787 = vadd.xlane.f32.xlu0 %v7786
    %v7788 = vpop.xlane.xlu0 %7787
    %v7789 = vsel %vm4152, %v7743, 0.0
    %7790 = vadd.xlane.f32.xlu0 %v7789
    %v7791 = vpop.xlane.xlu0 %7790
    %v7792 = vsel %vm4152, %v7744, 0.0
    %7793 = vadd.xlane.f32.xlu0 %v7792
    %v7794 = vpop.xlane.xlu0 %7793
    %v7795 = vsel %vm4152, %v7745, 0.0
    %7796 = vadd.xlane.f32.xlu0 %v7795
    %v7797 = vpop.xlane.xlu0 %7796
    %v7798 = vsel %vm4152, %v7746, 0.0
    %7799 = vadd.xlane.f32.xlu0 %v7798
    %v7800 = vpop.xlane.xlu0 %7799
    %v7801 = vsel %vm4152, %v7747, 0.0
    %7802 = vadd.xlane.f32.xlu0 %v7801
    %v7803 = vpop.xlane.xlu0 %7802
    %v7804 = vsel %vm4152, %v7748, 0.0
    %7805 = vadd.xlane.f32.xlu0 %v7804
    %v7806 = vpop.xlane.xlu0 %7805
    %v7807 = vsel %vm4152, %v7749, 0.0
    %7808 = vadd.xlane.f32.xlu0 %v7807
    %v7809 = vpop.xlane.xlu0 %7808
    %v7810 = vsel %vm4152, %v7750, 0.0
    %7811 = vadd.xlane.f32.xlu0 %v7810
    %v7812 = vpop.xlane.xlu0 %7811
    %v7813 = vsel %vm4152, %v7751, 0.0
    %7814 = vadd.xlane.f32.xlu0 %v7813
    %v7815 = vpop.xlane.xlu0 %7814
    %v7816 = vsel %vm4152, %v7752, 0.0
    %7817 = vadd.xlane.f32.xlu0 %v7816
    %v7818 = vpop.xlane.xlu0 %7817
    %v7819 = vsel %vm4152, %v7753, 0.0
    %7820 = vadd.xlane.f32.xlu0 %v7819
    %v7821 = vpop.xlane.xlu0 %7820
    %v7822 = vsel %vm4152, %v7754, 0.0
    %7823 = vadd.xlane.f32.xlu0 %v7822
    %v7824 = vpop.xlane.xlu0 %7823
    %v7825 = vsel %vm4152, %v7755, 0.0
    %7826 = vadd.xlane.f32.xlu0 %v7825
    %v7827 = vpop.xlane.xlu0 %7826
    %v7828 = vsel %vm4152, %v7756, 0.0
    %7829 = vadd.xlane.f32.xlu0 %v7828
    %v7830 = vpop.xlane.xlu0 %7829
    %v7831 = vsel %vm4152, %v7757, 0.0
    %7832 = vadd.xlane.f32.xlu0 %v7831
    %v7833 = vpop.xlane.xlu0 %7832
    %v7834 = vsel %vm4152, %v7758, 0.0
    %7835 = vadd.xlane.f32.xlu0 %v7834
    %v7836 = vpop.xlane.xlu0 %7835
    %v7837 = vsel %vm4152, %v7759, 0.0
    %7838 = vadd.xlane.f32.xlu0 %v7837
    %v7839 = vpop.xlane.xlu0 %7838
    %v7840 = vsel %vm4152, %v7760, 0.0
    %7841 = vadd.xlane.f32.xlu0 %v7840
    %v7842 = vpop.xlane.xlu0 %7841
    %v7843 = vsel %vm4152, %v7761, 0.0
    %7844 = vadd.xlane.f32.xlu0 %v7843
    %v7845 = vpop.xlane.xlu0 %7844
    %v7846 = vsel %vm4152, %v7762, 0.0
    %7847 = vadd.xlane.f32.xlu0 %v7846
    %v7848 = vpop.xlane.xlu0 %7847
    %v7849 = vsel %vm4152, %v7763, 0.0
    %7850 = vadd.xlane.f32.xlu0 %v7849
    %v7851 = vpop.xlane.xlu0 %7850
    %v7852 = vsel %vm4152, %v7764, 0.0
    %7853 = vadd.xlane.f32.xlu0 %v7852
    %v7854 = vpop.xlane.xlu0 %7853
    %v7855 = vsel %vm4152, %v7765, 0.0
    %7856 = vadd.xlane.f32.xlu0 %v7855
    %v7857 = vpop.xlane.xlu0 %7856
    %v7858 = vsel %vm4152, %v7766, 0.0
    %7859 = vadd.xlane.f32.xlu0 %v7858
    %v7860 = vpop.xlane.xlu0 %7859
    %v7861 = vsel %vm4152, %v7767, 0.0
    %7862 = vadd.xlane.f32.xlu0 %v7861
    %v7863 = vpop.xlane.xlu0 %7862
    %v7864 = vadd.f32 %v7608, %v7770
    %v7865 = vadd.f32 %v7609, %v7773
    %v7866 = vadd.f32 %v7610, %v7776
    %v7867 = vadd.f32 %v7611, %v7779
    %v7868 = vadd.f32 %v7612, %v7782
    %v7869 = vadd.f32 %v7613, %v7785
    %v7870 = vadd.f32 %v7614, %v7788
    %v7871 = vadd.f32 %v7615, %v7791
    %v7872 = vadd.f32 %v7616, %v7794
    %v7873 = vadd.f32 %v7617, %v7797
    %v7874 = vadd.f32 %v7618, %v7800
    %v7875 = vadd.f32 %v7619, %v7803
    %v7876 = vadd.f32 %v7620, %v7806
    %v7877 = vadd.f32 %v7621, %v7809
    %v7878 = vadd.f32 %v7622, %v7812
    %v7879 = vadd.f32 %v7623, %v7815
    %v7880 = vadd.f32 %v7624, %v7818
    %v7881 = vadd.f32 %v7625, %v7821
    %v7882 = vadd.f32 %v7626, %v7824
    %v7883 = vadd.f32 %v7627, %v7827
    %v7884 = vadd.f32 %v7628, %v7830
    %v7885 = vadd.f32 %v7629, %v7833
    %v7886 = vadd.f32 %v7630, %v7836
    %v7887 = vadd.f32 %v7631, %v7839
    %v7888 = vadd.f32 %v7632, %v7842
    %v7889 = vadd.f32 %v7633, %v7845
    %v7890 = vadd.f32 %v7634, %v7848
    %v7891 = vadd.f32 %v7635, %v7851
    %v7892 = vadd.f32 %v7636, %v7854
    %v7893 = vadd.f32 %v7637, %v7857
    %v7894 = vadd.f32 %v7638, %v7860
    %v7895 = vadd.f32 %v7639, %v7863
    %7896 = vrot.lane.b32.xlu0 %v1199, 117
    %v7897 = vpop.permute.xlu0 %7896
    %7898 = vrot.lane.b32.xlu0 %v1204, 117
    %v7899 = vpop.permute.xlu0 %7898
    %7900 = vrot.lane.b32.xlu0 %v1209, 117
    %v7901 = vpop.permute.xlu0 %7900
    %7902 = vrot.lane.b32.xlu0 %v1214, 117
    %v7903 = vpop.permute.xlu0 %7902
    %7904 = vrot.lane.b32.xlu0 %v1219, 117
    %v7905 = vpop.permute.xlu0 %7904
    %7906 = vrot.lane.b32.xlu0 %v1224, 117
    %v7907 = vpop.permute.xlu0 %7906
    %7908 = vrot.lane.b32.xlu0 %v1229, 117
    %v7909 = vpop.permute.xlu0 %7908
    %7910 = vrot.lane.b32.xlu0 %v1234, 117
    %v7911 = vpop.permute.xlu0 %7910
    %7912 = vrot.lane.b32.xlu0 %v1239, 117
    %v7913 = vpop.permute.xlu0 %7912
    %7914 = vrot.lane.b32.xlu0 %v1244, 117
    %v7915 = vpop.permute.xlu0 %7914
    %7916 = vrot.lane.b32.xlu0 %v1249, 117
    %v7917 = vpop.permute.xlu0 %7916
    %7918 = vrot.lane.b32.xlu0 %v1254, 117
    %v7919 = vpop.permute.xlu0 %7918
    %7920 = vrot.lane.b32.xlu0 %v1259, 117
    %v7921 = vpop.permute.xlu0 %7920
    %7922 = vrot.lane.b32.xlu0 %v1264, 117
    %v7923 = vpop.permute.xlu0 %7922
    %7924 = vrot.lane.b32.xlu0 %v1269, 117
    %v7925 = vpop.permute.xlu0 %7924
    %7926 = vrot.lane.b32.xlu0 %v1274, 117
    %v7927 = vpop.permute.xlu0 %7926
    %7928 = vrot.lane.b32.xlu0 %v1279, 117
    %v7929 = vpop.permute.xlu0 %7928
    %7930 = vrot.lane.b32.xlu0 %v1284, 117
    %v7931 = vpop.permute.xlu0 %7930
    %7932 = vrot.lane.b32.xlu0 %v1289, 117
    %v7933 = vpop.permute.xlu0 %7932
    %7934 = vrot.lane.b32.xlu0 %v1294, 117
    %v7935 = vpop.permute.xlu0 %7934
    %7936 = vrot.lane.b32.xlu0 %v1299, 117
    %v7937 = vpop.permute.xlu0 %7936
    %7938 = vrot.lane.b32.xlu0 %v1304, 117
    %v7939 = vpop.permute.xlu0 %7938
    %7940 = vrot.lane.b32.xlu0 %v1309, 117
    %v7941 = vpop.permute.xlu0 %7940
    %7942 = vrot.lane.b32.xlu0 %v1314, 117
    %v7943 = vpop.permute.xlu0 %7942
    %7944 = vrot.lane.b32.xlu0 %v1319, 117
    %v7945 = vpop.permute.xlu0 %7944
    %7946 = vrot.lane.b32.xlu0 %v1324, 117
    %v7947 = vpop.permute.xlu0 %7946
    %7948 = vrot.lane.b32.xlu0 %v1329, 117
    %v7949 = vpop.permute.xlu0 %7948
    %7950 = vrot.lane.b32.xlu0 %v1334, 117
    %v7951 = vpop.permute.xlu0 %7950
    %7952 = vrot.lane.b32.xlu0 %v1339, 117
    %v7953 = vpop.permute.xlu0 %7952
    %7954 = vrot.lane.b32.xlu0 %v1344, 117
    %v7955 = vpop.permute.xlu0 %7954
    %7956 = vrot.lane.b32.xlu0 %v1349, 117
    %v7957 = vpop.permute.xlu0 %7956
    %7958 = vrot.lane.b32.xlu0 %v1354, 117
    %v7959 = vpop.permute.xlu0 %7958
    %v7992 = vmul.f32 %v7354, %v7897
    %v7993 = vmul.f32 %v7359, %v7899
    %v7994 = vmul.f32 %v7364, %v7901
    %v7995 = vmul.f32 %v7369, %v7903
    %v7996 = vmul.f32 %v7374, %v7905
    %v7997 = vmul.f32 %v7379, %v7907
    %v7998 = vmul.f32 %v7384, %v7909
    %v7999 = vmul.f32 %v7389, %v7911
    %v8000 = vmul.f32 %v7394, %v7913
    %v8001 = vmul.f32 %v7399, %v7915
    %v8002 = vmul.f32 %v7404, %v7917
    %v8003 = vmul.f32 %v7409, %v7919
    %v8004 = vmul.f32 %v7414, %v7921
    %v8005 = vmul.f32 %v7419, %v7923
    %v8006 = vmul.f32 %v7424, %v7925
    %v8007 = vmul.f32 %v7429, %v7927
    %v8008 = vmul.f32 %v7434, %v7929
    %v8009 = vmul.f32 %v7439, %v7931
    %v8010 = vmul.f32 %v7444, %v7933
    %v8011 = vmul.f32 %v7449, %v7935
    %v8012 = vmul.f32 %v7454, %v7937
    %v8013 = vmul.f32 %v7459, %v7939
    %v8014 = vmul.f32 %v7464, %v7941
    %v8015 = vmul.f32 %v7469, %v7943
    %v8016 = vmul.f32 %v7474, %v7945
    %v8017 = vmul.f32 %v7479, %v7947
    %v8018 = vmul.f32 %v7484, %v7949
    %v8019 = vmul.f32 %v7489, %v7951
    %v8020 = vmul.f32 %v7494, %v7953
    %v8021 = vmul.f32 %v7499, %v7955
    %v8022 = vmul.f32 %v7504, %v7957
    %v8023 = vmul.f32 %v7509, %v7959
    %v8024 = vsel %vm4152, %v7992, 0.0
    %8025 = vadd.xlane.f32.xlu0 %v8024
    %v8026 = vpop.xlane.xlu0 %8025
    %v8027 = vsel %vm4152, %v7993, 0.0
    %8028 = vadd.xlane.f32.xlu0 %v8027
    %v8029 = vpop.xlane.xlu0 %8028
    %v8030 = vsel %vm4152, %v7994, 0.0
    %8031 = vadd.xlane.f32.xlu0 %v8030
    %v8032 = vpop.xlane.xlu0 %8031
    %v8033 = vsel %vm4152, %v7995, 0.0
    %8034 = vadd.xlane.f32.xlu0 %v8033
    %v8035 = vpop.xlane.xlu0 %8034
    %v8036 = vsel %vm4152, %v7996, 0.0
    %8037 = vadd.xlane.f32.xlu0 %v8036
    %v8038 = vpop.xlane.xlu0 %8037
    %v8039 = vsel %vm4152, %v7997, 0.0
    %8040 = vadd.xlane.f32.xlu0 %v8039
    %v8041 = vpop.xlane.xlu0 %8040
    %v8042 = vsel %vm4152, %v7998, 0.0
    %8043 = vadd.xlane.f32.xlu0 %v8042
    %v8044 = vpop.xlane.xlu0 %8043
    %v8045 = vsel %vm4152, %v7999, 0.0
    %8046 = vadd.xlane.f32.xlu0 %v8045
    %v8047 = vpop.xlane.xlu0 %8046
    %v8048 = vsel %vm4152, %v8000, 0.0
    %8049 = vadd.xlane.f32.xlu0 %v8048
    %v8050 = vpop.xlane.xlu0 %8049
    %v8051 = vsel %vm4152, %v8001, 0.0
    %8052 = vadd.xlane.f32.xlu0 %v8051
    %v8053 = vpop.xlane.xlu0 %8052
    %v8054 = vsel %vm4152, %v8002, 0.0
    %8055 = vadd.xlane.f32.xlu0 %v8054
    %v8056 = vpop.xlane.xlu0 %8055
    %v8057 = vsel %vm4152, %v8003, 0.0
    %8058 = vadd.xlane.f32.xlu0 %v8057
    %v8059 = vpop.xlane.xlu0 %8058
    %v8060 = vsel %vm4152, %v8004, 0.0
    %8061 = vadd.xlane.f32.xlu0 %v8060
    %v8062 = vpop.xlane.xlu0 %8061
    %v8063 = vsel %vm4152, %v8005, 0.0
    %8064 = vadd.xlane.f32.xlu0 %v8063
    %v8065 = vpop.xlane.xlu0 %8064
    %v8066 = vsel %vm4152, %v8006, 0.0
    %8067 = vadd.xlane.f32.xlu0 %v8066
    %v8068 = vpop.xlane.xlu0 %8067
    %v8069 = vsel %vm4152, %v8007, 0.0
    %8070 = vadd.xlane.f32.xlu0 %v8069
    %v8071 = vpop.xlane.xlu0 %8070
    %v8072 = vsel %vm4152, %v8008, 0.0
    %8073 = vadd.xlane.f32.xlu0 %v8072
    %v8074 = vpop.xlane.xlu0 %8073
    %v8075 = vsel %vm4152, %v8009, 0.0
    %8076 = vadd.xlane.f32.xlu0 %v8075
    %v8077 = vpop.xlane.xlu0 %8076
    %v8078 = vsel %vm4152, %v8010, 0.0
    %8079 = vadd.xlane.f32.xlu0 %v8078
    %v8080 = vpop.xlane.xlu0 %8079
    %v8081 = vsel %vm4152, %v8011, 0.0
    %8082 = vadd.xlane.f32.xlu0 %v8081
    %v8083 = vpop.xlane.xlu0 %8082
    %v8084 = vsel %vm4152, %v8012, 0.0
    %8085 = vadd.xlane.f32.xlu0 %v8084
    %v8086 = vpop.xlane.xlu0 %8085
    %v8087 = vsel %vm4152, %v8013, 0.0
    %8088 = vadd.xlane.f32.xlu0 %v8087
    %v8089 = vpop.xlane.xlu0 %8088
    %v8090 = vsel %vm4152, %v8014, 0.0
    %8091 = vadd.xlane.f32.xlu0 %v8090
    %v8092 = vpop.xlane.xlu0 %8091
    %v8093 = vsel %vm4152, %v8015, 0.0
    %8094 = vadd.xlane.f32.xlu0 %v8093
    %v8095 = vpop.xlane.xlu0 %8094
    %v8096 = vsel %vm4152, %v8016, 0.0
    %8097 = vadd.xlane.f32.xlu0 %v8096
    %v8098 = vpop.xlane.xlu0 %8097
    %v8099 = vsel %vm4152, %v8017, 0.0
    %8100 = vadd.xlane.f32.xlu0 %v8099
    %v8101 = vpop.xlane.xlu0 %8100
    %v8102 = vsel %vm4152, %v8018, 0.0
    %8103 = vadd.xlane.f32.xlu0 %v8102
    %v8104 = vpop.xlane.xlu0 %8103
    %v8105 = vsel %vm4152, %v8019, 0.0
    %8106 = vadd.xlane.f32.xlu0 %v8105
    %v8107 = vpop.xlane.xlu0 %8106
    %v8108 = vsel %vm4152, %v8020, 0.0
    %8109 = vadd.xlane.f32.xlu0 %v8108
    %v8110 = vpop.xlane.xlu0 %8109
    %v8111 = vsel %vm4152, %v8021, 0.0
    %8112 = vadd.xlane.f32.xlu0 %v8111
    %v8113 = vpop.xlane.xlu0 %8112
    %v8114 = vsel %vm4152, %v8022, 0.0
    %8115 = vadd.xlane.f32.xlu0 %v8114
    %v8116 = vpop.xlane.xlu0 %8115
    %v8117 = vsel %vm4152, %v8023, 0.0
    %8118 = vadd.xlane.f32.xlu0 %v8117
    %v8119 = vpop.xlane.xlu0 %8118
    %v8120 = vadd.f32 %v7864, %v8026
    %v8121 = vadd.f32 %v7865, %v8029
    %v8122 = vadd.f32 %v7866, %v8032
    %v8123 = vadd.f32 %v7867, %v8035
    %v8124 = vadd.f32 %v7868, %v8038
    %v8125 = vadd.f32 %v7869, %v8041
    %v8126 = vadd.f32 %v7870, %v8044
    %v8127 = vadd.f32 %v7871, %v8047
    %v8128 = vadd.f32 %v7872, %v8050
    %v8129 = vadd.f32 %v7873, %v8053
    %v8130 = vadd.f32 %v7874, %v8056
    %v8131 = vadd.f32 %v7875, %v8059
    %v8132 = vadd.f32 %v7876, %v8062
    %v8133 = vadd.f32 %v7877, %v8065
    %v8134 = vadd.f32 %v7878, %v8068
    %v8135 = vadd.f32 %v7879, %v8071
    %v8136 = vadd.f32 %v7880, %v8074
    %v8137 = vadd.f32 %v7881, %v8077
    %v8138 = vadd.f32 %v7882, %v8080
    %v8139 = vadd.f32 %v7883, %v8083
    %v8140 = vadd.f32 %v7884, %v8086
    %v8141 = vadd.f32 %v7885, %v8089
    %v8142 = vadd.f32 %v7886, %v8092
    %v8143 = vadd.f32 %v7887, %v8095
    %v8144 = vadd.f32 %v7888, %v8098
    %v8145 = vadd.f32 %v7889, %v8101
    %v8146 = vadd.f32 %v7890, %v8104
    %v8147 = vadd.f32 %v7891, %v8107
    %v8148 = vadd.f32 %v7892, %v8110
    %v8149 = vadd.f32 %v7893, %v8113
    %v8150 = vadd.f32 %v7894, %v8116
    %v8151 = vadd.f32 %v7895, %v8119
    %s8152 = scalar_lea.vmem %s15, 16
    %v8153 = vld [vmem:[%s8152] sm:$0xff]
    %v8154 = vld [vmem:[%s8152 + $0x8] sm:$0xff]
    %8156 = vset.pattern.permute.xlu0 0
    %8157 = vperm.xlu0 %8156, %v8120
    %v8158 = vpop.permute.xlu0 %8157
    %8161 = vset.pattern.permute.xlu0 0
    %8162 = vperm.xlu0 %8161, %v8121
    %v8163 = vpop.permute.xlu0 %8162
    %v8165 = vlaneseq
    %v8166 = vshrl.u32 %v8165, 7
    %v8167 = vsub.s32 0, %v8166
    %v8168 = vrot.slane %v8153, %v8167
    %v8169 = vmul.f32 %v8158, %v8168
    %v8170 = vmul.f32 %v8163, %v8168
    %v8172 = vsel %vm1035, %v4992, 0
    %v8175 = vsel %vm1035, %v4993, 0
    %8177 = vmatprep.subr.mxu0 0.0
    %8178 = vmatpush1.msra.mxu0 %v98
    %8179 = vmatprep.subr.mxu0 0.0
    %8180 = vmatpush1.msra.mxu0 %v99
    %8181 = vmatprep.subr.mxu0 0.0
    %8182 = vmatpush1.msra.mxu0 %v100
    %8183 = vmatprep.subr.mxu0 0.0
    %8184 = vmatpush1.msra.mxu0 %v101
    %8185 = vmatprep.subr.mxu0 0.0
    %8186 = vmatpush1.msra.mxu0 %v102
    %8187 = vmatprep.subr.mxu0 0.0
    %8188 = vmatpush1.msra.mxu0 %v103
    %8189 = vmatprep.subr.mxu0 0.0
    %8190 = vmatpush1.msra.mxu0 %v104
    %8191 = vmatprep.subr.mxu0 0.0
    %8192 = vmatpush1.msra.mxu0 %v105
    %8193 = vmatprep.subr.mxu0 0.0
    %8194 = vmatpush1.msra.mxu0 0.0
    %8195 = vmatprep.subr.mxu0 0.0
    %8196 = vmatpush1.msra.mxu0 0.0
    %8197 = vmatprep.subr.mxu0 0.0
    %8198 = vmatpush1.msra.mxu0 0.0
    %8199 = vmatprep.subr.mxu0 0.0
    %8200 = vmatpush1.msra.mxu0 0.0
    %8201 = vmatprep.subr.mxu0 0.0
    %8202 = vmatpush1.msra.mxu0 0.0
    %8203 = vmatprep.subr.mxu0 0.0
    %8204 = vmatpush1.msra.mxu0 0.0
    %8205 = vmatprep.subr.mxu0 0.0
    %8206 = vmatpush1.msra.mxu0 0.0
    %8207 = vmatprep.subr.mxu0 0.0
    %8208 = vmatpush1.msra.mxu0 0.0
    %8209 = vmatprep.subr.mxu0 0.0
    %8210 = vmatpush1.msra.mxu0 0.0
    %8211 = vmatprep.subr.mxu0 0.0
    %8212 = vmatpush1.msra.mxu0 0.0
    %8213 = vmatprep.subr.mxu0 0.0
    %8214 = vmatpush1.msra.mxu0 0.0
    %8215 = vmatprep.subr.mxu0 0.0
    %8216 = vmatpush1.msra.mxu0 0.0
    %8217 = vmatprep.subr.mxu0 0.0
    %8218 = vmatpush1.msra.mxu0 0.0
    %8219 = vmatprep.subr.mxu0 0.0
    %8220 = vmatpush1.msra.mxu0 0.0
    %8221 = vmatprep.subr.mxu0 0.0
    %8222 = vmatpush1.msra.mxu0 0.0
    %8223 = vmatprep.subr.mxu0 0.0
    %8224 = vmatpush1.msra.mxu0 0.0
    %8225 = vmatprep.subr.mxu0 0.0
    %8226 = vmatpush1.msra.mxu0 0.0
    %8227 = vmatprep.subr.mxu0 0.0
    %8228 = vmatpush1.msra.mxu0 0.0
    %8229 = vmatprep.subr.mxu0 0.0
    %8230 = vmatpush1.msra.mxu0 0.0
    %8231 = vmatprep.subr.mxu0 0.0
    %8232 = vmatpush1.msra.mxu0 0.0
    %8233 = vmatprep.subr.mxu0 0.0
    %8234 = vmatpush1.msra.mxu0 0.0
    %8235 = vmatprep.subr.mxu0 0.0
    %8236 = vmatpush1.msra.mxu0 0.0
    %8237 = vmatprep.subr.mxu0 0.0
    %8238 = vmatpush1.msra.mxu0 0.0
    %8239 = vmatprep.subr.mxu0 0.0
    %8240 = vmatpush1.msra.mxu0 0.0
    %8241 = vmatprep.mubr.f32.mxu0 0.0
    %8242 = vmatmul.mubr.f32.gmra.mrb[0].mxu0 %v8172
    %v8243 = vpop.f32.mrb[0].mxu0
    %v8244 = vadd.f32 %v8169, %v8243
    %v8245 = vpop.f32.mrb[0].mxu0
    %8246 = vmatprep.mubr.f32.mxu0 0.0
    %8247 = vmatmul.mubr.f32.gmra.mrb[0].mxu0 %v8175
    %v8248 = vpop.f32.mrb[0].mxu0
    %v8249 = vadd.f32 %v8170, %v8248
    %v8250 = vpop.f32.mrb[0].mxu0
    %8251 = vdwg.mxu0
    %8253 = vset.pattern.permute.xlu0 0
    %8254 = vperm.xlu0 %8253, %v8122
    %v8255 = vpop.permute.xlu0 %8254
    %8258 = vset.pattern.permute.xlu0 0
    %8259 = vperm.xlu0 %8258, %v8123
    %v8260 = vpop.permute.xlu0 %8259
    %v8262 = vlaneseq
    %v8263 = vshrl.u32 %v8262, 7
    %v8264 = vsub.s32 1, %v8263
    %v8265 = vrot.slane %v8153, %v8264
    %v8266 = vmul.f32 %v8255, %v8265
    %v8267 = vmul.f32 %v8260, %v8265
    %v8268 = vadd.f32 %v8244, %v8266
    %v8269 = vadd.f32 %v8249, %v8267
    %8271 = vset.pattern.permute.xlu0 0
    %8272 = vperm.xlu0 %8271, %v8124
    %v8273 = vpop.permute.xlu0 %8272
    %8276 = vset.pattern.permute.xlu0 0
    %8277 = vperm.xlu0 %8276, %v8125
    %v8278 = vpop.permute.xlu0 %8277
    %v8280 = vlaneseq
    %v8281 = vshrl.u32 %v8280, 7
    %v8282 = vsub.s32 2, %v8281
    %v8283 = vrot.slane %v8153, %v8282
    %v8284 = vmul.f32 %v8273, %v8283
    %v8285 = vmul.f32 %v8278, %v8283
    %v8286 = vadd.f32 %v8268, %v8284
    %v8287 = vadd.f32 %v8269, %v8285
    %8289 = vset.pattern.permute.xlu0 0
    %8290 = vperm.xlu0 %8289, %v8126
    %v8291 = vpop.permute.xlu0 %8290
    %8294 = vset.pattern.permute.xlu0 0
    %8295 = vperm.xlu0 %8294, %v8127
    %v8296 = vpop.permute.xlu0 %8295
    %v8298 = vlaneseq
    %v8299 = vshrl.u32 %v8298, 7
    %v8300 = vsub.s32 3, %v8299
    %v8301 = vrot.slane %v8153, %v8300
    %v8302 = vmul.f32 %v8291, %v8301
    %v8303 = vmul.f32 %v8296, %v8301
    %v8304 = vadd.f32 %v8286, %v8302
    %v8305 = vadd.f32 %v8287, %v8303
    %8307 = vset.pattern.permute.xlu0 0
    %8308 = vperm.xlu0 %8307, %v8128
    %v8309 = vpop.permute.xlu0 %8308
    %8312 = vset.pattern.permute.xlu0 0
    %8313 = vperm.xlu0 %8312, %v8129
    %v8314 = vpop.permute.xlu0 %8313
    %v8316 = vlaneseq
    %v8317 = vshrl.u32 %v8316, 7
    %v8318 = vsub.s32 4, %v8317
    %v8319 = vrot.slane %v8153, %v8318
    %v8320 = vmul.f32 %v8309, %v8319
    %v8321 = vmul.f32 %v8314, %v8319
    %v8322 = vadd.f32 %v8304, %v8320
    %v8323 = vadd.f32 %v8305, %v8321
    %8325 = vset.pattern.permute.xlu0 0
    %8326 = vperm.xlu0 %8325, %v8130
    %v8327 = vpop.permute.xlu0 %8326
    %8330 = vset.pattern.permute.xlu0 0
    %8331 = vperm.xlu0 %8330, %v8131
    %v8332 = vpop.permute.xlu0 %8331
    %v8334 = vlaneseq
    %v8335 = vshrl.u32 %v8334, 7
    %v8336 = vsub.s32 5, %v8335
    %v8337 = vrot.slane %v8153, %v8336
    %v8338 = vmul.f32 %v8327, %v8337
    %v8339 = vmul.f32 %v8332, %v8337
    %v8340 = vadd.f32 %v8322, %v8338
    %v8341 = vadd.f32 %v8323, %v8339
    %8343 = vset.pattern.permute.xlu0 0
    %8344 = vperm.xlu0 %8343, %v8132
    %v8345 = vpop.permute.xlu0 %8344
    %8348 = vset.pattern.permute.xlu0 0
    %8349 = vperm.xlu0 %8348, %v8133
    %v8350 = vpop.permute.xlu0 %8349
    %v8352 = vlaneseq
    %v8353 = vshrl.u32 %v8352, 7
    %v8354 = vsub.s32 6, %v8353
    %v8355 = vrot.slane %v8153, %v8354
    %v8356 = vmul.f32 %v8345, %v8355
    %v8357 = vmul.f32 %v8350, %v8355
    %v8358 = vadd.f32 %v8340, %v8356
    %v8359 = vadd.f32 %v8341, %v8357
    %8361 = vset.pattern.permute.xlu0 0
    %8362 = vperm.xlu0 %8361, %v8134
    %v8363 = vpop.permute.xlu0 %8362
    %8366 = vset.pattern.permute.xlu0 0
    %8367 = vperm.xlu0 %8366, %v8135
    %v8368 = vpop.permute.xlu0 %8367
    %v8370 = vlaneseq
    %v8371 = vshrl.u32 %v8370, 7
    %v8372 = vsub.s32 7, %v8371
    %v8373 = vrot.slane %v8153, %v8372
    %v8374 = vmul.f32 %v8363, %v8373
    %v8375 = vmul.f32 %v8368, %v8373
    %v8376 = vadd.f32 %v8358, %v8374
    %v8377 = vadd.f32 %v8359, %v8375
    %8379 = vset.pattern.permute.xlu0 0
    %8380 = vperm.xlu0 %8379, %v8136
    %v8381 = vpop.permute.xlu0 %8380
    %8384 = vset.pattern.permute.xlu0 0
    %8385 = vperm.xlu0 %8384, %v8137
    %v8386 = vpop.permute.xlu0 %8385
    %v8388 = vlaneseq
    %v8389 = vshrl.u32 %v8388, 7
    %v8390 = vsub.s32 0, %v8389
    %v8391 = vrot.slane %v8154, %v8390
    %v8392 = vmul.f32 %v8381, %v8391
    %v8393 = vmul.f32 %v8386, %v8391
    %v8394 = vadd.f32 %v8376, %v8392
    %v8395 = vadd.f32 %v8377, %v8393
    %8397 = vset.pattern.permute.xlu0 0
    %8398 = vperm.xlu0 %8397, %v8138
    %v8399 = vpop.permute.xlu0 %8398
    %8402 = vset.pattern.permute.xlu0 0
    %8403 = vperm.xlu0 %8402, %v8139
    %v8404 = vpop.permute.xlu0 %8403
    %v8406 = vlaneseq
    %v8407 = vshrl.u32 %v8406, 7
    %v8408 = vsub.s32 1, %v8407
    %v8409 = vrot.slane %v8154, %v8408
    %v8410 = vmul.f32 %v8399, %v8409
    %v8411 = vmul.f32 %v8404, %v8409
    %v8412 = vadd.f32 %v8394, %v8410
    %v8413 = vadd.f32 %v8395, %v8411
    %8415 = vset.pattern.permute.xlu0 0
    %8416 = vperm.xlu0 %8415, %v8140
    %v8417 = vpop.permute.xlu0 %8416
    %8420 = vset.pattern.permute.xlu0 0
    %8421 = vperm.xlu0 %8420, %v8141
    %v8422 = vpop.permute.xlu0 %8421
    %v8424 = vlaneseq
    %v8425 = vshrl.u32 %v8424, 7
    %v8426 = vsub.s32 2, %v8425
    %v8427 = vrot.slane %v8154, %v8426
    %v8428 = vmul.f32 %v8417, %v8427
    %v8429 = vmul.f32 %v8422, %v8427
    %v8430 = vadd.f32 %v8412, %v8428
    %v8431 = vadd.f32 %v8413, %v8429
    %8433 = vset.pattern.permute.xlu0 0
    %8434 = vperm.xlu0 %8433, %v8142
    %v8435 = vpop.permute.xlu0 %8434
    %8438 = vset.pattern.permute.xlu0 0
    %8439 = vperm.xlu0 %8438, %v8143
    %v8440 = vpop.permute.xlu0 %8439
    %v8442 = vlaneseq
    %v8443 = vshrl.u32 %v8442, 7
    %v8444 = vsub.s32 3, %v8443
    %v8445 = vrot.slane %v8154, %v8444
    %v8446 = vmul.f32 %v8435, %v8445
    %v8447 = vmul.f32 %v8440, %v8445
    %v8448 = vadd.f32 %v8430, %v8446
    %v8449 = vadd.f32 %v8431, %v8447
    %8451 = vset.pattern.permute.xlu0 0
    %8452 = vperm.xlu0 %8451, %v8144
    %v8453 = vpop.permute.xlu0 %8452
    %8456 = vset.pattern.permute.xlu0 0
    %8457 = vperm.xlu0 %8456, %v8145
    %v8458 = vpop.permute.xlu0 %8457
    %v8460 = vlaneseq
    %v8461 = vshrl.u32 %v8460, 7
    %v8462 = vsub.s32 4, %v8461
    %v8463 = vrot.slane %v8154, %v8462
    %v8464 = vmul.f32 %v8453, %v8463
    %v8465 = vmul.f32 %v8458, %v8463
    %v8466 = vadd.f32 %v8448, %v8464
    %v8467 = vadd.f32 %v8449, %v8465
    %8469 = vset.pattern.permute.xlu0 0
    %8470 = vperm.xlu0 %8469, %v8146
    %v8471 = vpop.permute.xlu0 %8470
    %8474 = vset.pattern.permute.xlu0 0
    %8475 = vperm.xlu0 %8474, %v8147
    %v8476 = vpop.permute.xlu0 %8475
    %v8478 = vlaneseq
    %v8479 = vshrl.u32 %v8478, 7
    %v8480 = vsub.s32 5, %v8479
    %v8481 = vrot.slane %v8154, %v8480
    %v8482 = vmul.f32 %v8471, %v8481
    %v8483 = vmul.f32 %v8476, %v8481
    %v8484 = vadd.f32 %v8466, %v8482
    %v8485 = vadd.f32 %v8467, %v8483
    %8487 = vset.pattern.permute.xlu0 0
    %8488 = vperm.xlu0 %8487, %v8148
    %v8489 = vpop.permute.xlu0 %8488
    %8492 = vset.pattern.permute.xlu0 0
    %8493 = vperm.xlu0 %8492, %v8149
    %v8494 = vpop.permute.xlu0 %8493
    %v8496 = vlaneseq
    %v8497 = vshrl.u32 %v8496, 7
    %v8498 = vsub.s32 6, %v8497
    %v8499 = vrot.slane %v8154, %v8498
    %v8500 = vmul.f32 %v8489, %v8499
    %v8501 = vmul.f32 %v8494, %v8499
    %v8502 = vadd.f32 %v8484, %v8500
    %v8503 = vadd.f32 %v8485, %v8501
    %8505 = vset.pattern.permute.xlu0 0
    %8506 = vperm.xlu0 %8505, %v8150
    %v8507 = vpop.permute.xlu0 %8506
    %8510 = vset.pattern.permute.xlu0 0
    %8511 = vperm.xlu0 %8510, %v8151
    %v8512 = vpop.permute.xlu0 %8511
    %v8514 = vlaneseq
    %v8515 = vshrl.u32 %v8514, 7
    %v8516 = vsub.s32 7, %v8515
    %v8517 = vrot.slane %v8154, %v8516
    %v8518 = vmul.f32 %v8507, %v8517
    %v8519 = vmul.f32 %v8512, %v8517
    %v8520 = vadd.f32 %v8502, %v8518
    %v8521 = vadd.f32 %v8503, %v8519
    %8524 = vrot.lane.b32.xlu0 %v8520, 16
    %v8525 = vpop.permute.xlu0 %8524
    %8526 = vrot.lane.b32.xlu0 %v8521, 16
    %v8527 = vpop.permute.xlu0 %8526
    %vm8530 = vcmask 261248
    %8531 = vst.msk [vmem:[#allocation3] sm:$0xff] %vm8530, %v8525
    %8532 = vst.msk [vmem:[#allocation3 + $0x8] sm:$0xff] %vm8530, %v8527
    // Predicated region
    $region98: #{mace_descriptor_forward.1} parent=1 // pred_check
      _
    $region99: #{mace_descriptor_forward.1} parent=1 // pred_check_branch
      %8534 = sbr.rel (0) target = $region101
    $region100: #{mace_descriptor_forward.1} parent=1 // pred_region
      %s8536 = ssub.s32 256, 256
      %8537 = vsyncadd [#allocation4], %s8536
      %s8538 = sshll.u32 [#allocation3], 4
      %s8539 = int_to_ptr.vmem [resolvable:$true] %s8538
      %8544 = dma.vmem_to_hbm [thread:$0]  %s8539, 256, %s24, [#allocation4], 128, 128, 8
    $region101: #{mace_descriptor_forward.1} parent=1 // pred_fallthru
      _
    // Predicated region
    $region102: #{mace_descriptor_forward.1} parent=1 // pred_check
      _
    $region103: #{mace_descriptor_forward.1} parent=1 // pred_check_branch
      %8546 = sbr.rel (0) target = $region105
    $region104: #{mace_descriptor_forward.1} parent=1 // pred_region
      %8547 = dma.done [#allocation4], 256
    $region105: #{mace_descriptor_forward.1} parent=1 // pred_fallthru
      _
    %8548 = vsyncpa [#allocation4], 1

</llo_original>
